<compile_context>
chip_gen: v7x
topology: tpu7x:2x2x1
jax: 0.10.0
libtpu: 0.0.40
codegen_flags: <defaults>
</compile_context>

<pallas_src>
import jax
import jax.numpy as jnp
from jax.experimental import pallas as pl
from jax.experimental.pallas import tpu as pltpu


# ----------------------------- model dims -----------------------------------
IN_CH = 16       # in_channels  (x_i / x_j feature dim)
ATTR = 16        # attr_dim     (edge_attr feature dim)  -- equals IN_CH here
HID = 128        # hidden_channels
OUT = 1          # out_channels
LN_EPS = 1e-5    # torch.nn.LayerNorm default eps
MAX_TILE = 1024  # max edge rows per grid step


def _layernorm(x, gamma, beta):
    # One-pass stats: mean and E[x^2] from x; var clamped at 0 before rsqrt.
    mu = jnp.mean(x, axis=-1, keepdims=True)
    ex2 = jnp.mean(x * x, axis=-1, keepdims=True)
    var = jnp.maximum(ex2 - mu * mu, 0.0)
    return (x - mu) * jax.lax.rsqrt(var + LN_EPS) * gamma + beta


def _relu(x):
    return jnp.maximum(x, 0.0)


# ----------------------------- fused kernel ----------------------------------
def link_predictor_kernel(
    ein_ref,     # (T, 32) f32: [xij | edge_attr] (xij already sign-corrected)
    scal_ref,    # SMEM (1,): [bl2]
    vecs_ref,    # (6, 256) f32 packed biases / LN params
    w_in_ref,    # (32, 256) bf16: blockdiag(wij1, wcn1)
    w_mid_ref,   # (256, 256) bf16: blockdiag(wij2, wcn2)
    w_sq_ref,    # (2, 128, 128) bf16: [beta*wcn3, wl1]
    w_out_ref,   # (128, 1) f32: wl2
    out_ref,     # (1, T) f32 lane-dense sigmoid output
):
    f32 = jnp.float32
    bf16 = jnp.bfloat16

    V = vecs_ref[...]                                   # (6, 2*HID) f32
    b_in = V[0:1, :]                                    # [bij1 | bcn1]
    b_mid = V[1:2, :]                                   # [bij2 | bcn2]
    gij, bln_ij = V[2:3, 0:HID], V[2:3, HID:2 * HID]
    gcn, bln_cn = V[3:4, 0:HID], V[3:4, HID:2 * HID]
    gl, bln_l = V[4:5, 0:HID], V[4:5, HID:2 * HID]
    bcn3, bl1 = V[5:6, 0:HID], V[5:6, HID:2 * HID]      # bcn3 pre-scaled by beta

    # ---------- fused first layers: (T,32) x (32,256) bf16 MXU / f32 accum ----
    z0 = jnp.dot(ein_ref[...].astype(bf16), w_in_ref[...],
                 preferred_element_type=f32) + b_in              # [h_ij | a1]

    h_ij = _relu(_layernorm(z0[:, 0:HID], gij, bln_ij))   # xijlin: Lin->LN->ReLU
    a1 = _relu(z0[:, HID:2 * HID])                        # xcnlin: Lin->ReLU

    # ---------- fused second layers: [h_ij | a1] @ blockdiag(wij2, wcn2) ------
    # bf16 stitch, 128-lane aligned.
    z1 = jnp.concatenate([h_ij.astype(bf16), a1.astype(bf16)], axis=-1)
    h1 = jnp.dot(z1, w_mid_ref[...], preferred_element_type=f32) + b_mid

    xij_h = h1[:, 0:HID]                                         # xijlin output
    a2 = _relu(_layernorm(h1[:, HID:2 * HID], gcn, bln_cn))      # xcnlin LN/ReLU
    xcn_h = jnp.dot(a2.astype(bf16), w_sq_ref[0],
                    preferred_element_type=f32) + bcn3           # beta folded in

    # ---------- combine + lins ------------------------------------------------
    x = xcn_h + xij_h
    h2 = jnp.dot(x.astype(bf16), w_sq_ref[1],
                 preferred_element_type=f32) + bl1
    h2 = _relu(_layernorm(h2, gl, bln_l))                        # (T, HID) f32

    # ---------- final HID -> 1 projection on VPU/XLU --------------------------
    # Transpose + sublane-reduce; result is a lane-dense (1, T) row so the
    # output store is unmasked.
    h2t = h2.T                                                   # (HID, T)
    logits = jnp.sum(h2t * w_out_ref[...], axis=0, keepdims=True) + scal_ref[0]
    out_ref[...] = jax.nn.sigmoid(logits)


# ----------------------------- wrapper ----------------------------------------
def _choose_tiling(n):
    """(tile_rows, num_tiles): rows are 128-multiples, tile <= MAX_TILE, and the
    grid length is even whenever >1 so a v7x megacore gets a balanced split."""
    n128 = ((n + 127) // 128) * 128
    if n128 <= 128:
        return 128, 1
    num_tiles = max(2, -(-n128 // MAX_TILE))
    if num_tiles % 2:
        num_tiles += 1
    tile = ((-(-n128 // num_tiles) + 127) // 128) * 128   # always <= MAX_TILE
    return int(tile), int(num_tiles)


def _const_spec(shape):
    zeros = (0,) * len(shape)
    return pl.BlockSpec(shape, lambda i, _z=zeros: _z)


@jax.jit
def link_predictor(x_i, x_j, edge_attr, p):
    n = x_i.shape[0]
    tile, num_tiles = _choose_tiling(n)
    n_pad = tile * num_tiles
    pad = n_pad - n

    f32 = jnp.float32
    bf16 = jnp.bfloat16

    # ---- xij sign-flip + lane concat with edge_attr, fused with the pad ------
    # torch: rows with x_i[:,-1] < x_j[:,-1] get x_i/x_j swapped; downstream only
    # the difference is used, so the swap is exactly a sign flip of (x_i - x_j).
    mask = x_i[:, -1:] < x_j[:, -1:]
    diff = x_i - x_j
    xij = jnp.where(mask, -diff, diff)
    ein = jnp.concatenate([xij, edge_attr], axis=-1).astype(f32)   # (n, 32)
    if pad:
        ein = jnp.pad(ein, ((0, pad), (0, 0)))

    # ---- pack / cast parameters (tiny one-time XLA ops) -----------------------
    beta = p["beta"].reshape(()).astype(f32)
    z_in = jnp.zeros((IN_CH, HID), f32)
    w_in = jnp.concatenate([
        jnp.concatenate([p["wij1"], z_in], axis=1),
        jnp.concatenate([z_in, p["wcn1"]], axis=1),
    ], axis=0).astype(bf16)                                        # (32, 256)
    z_hh = jnp.zeros((HID, HID), f32)
    w_mid = jnp.concatenate([
        jnp.concatenate([p["wij2"], z_hh], axis=1),
        jnp.concatenate([z_hh, p["wcn2"]], axis=1),
    ], axis=0).astype(bf16)                                        # (256, 256)
    w_sq = jnp.stack([p["wcn3"] * beta, p["wl1"]]).astype(bf16)    # (2,128,128)
    w_out = p["wl2"].astype(f32)                                   # (128, 1)
    vecs = jnp.concatenate([
        jnp.concatenate([p["bij1"], p["bcn1"]], axis=1),
        jnp.concatenate([p["bij2"], p["bcn2"]], axis=1),
        jnp.concatenate([p["gij"], p["bij_ln"]], axis=1),
        jnp.concatenate([p["gcn"], p["bcn_ln"]], axis=1),
        jnp.concatenate([p["gl"], p["bl_ln"]], axis=1),
        jnp.concatenate([p["bcn3"] * beta, p["bl1"]], axis=1),
    ], axis=0).astype(f32)                                         # (6, 256)
    scalars = p["bl2"].reshape(-1).astype(f32)                     # (1,): bl2

    in_specs = [
        pl.BlockSpec((tile, IN_CH + ATTR), lambda i: (i, 0)),      # ein
        pl.BlockSpec(memory_space=pltpu.MemorySpace.SMEM),         # scalars
        _const_spec((6, 2 * HID)),                                 # vecs
        _const_spec((IN_CH + ATTR, 2 * HID)),                      # w_in
        _const_spec((2 * HID, 2 * HID)),                           # w_mid
        _const_spec((2, HID, HID)),                                # w_sq
        _const_spec((HID, OUT)),                                   # w_out
    ]
    out_spec = pl.BlockSpec((1, tile), lambda i: (0, i))           # lane-dense row

    # Advisory cost estimate so XLA schedules neighbouring ops sensibly.
    flops_per_edge = 2 * ((IN_CH + ATTR) * 2 * HID + (2 * HID) * (2 * HID)
                          + 2 * HID * HID + HID)
    cost = pl.CostEstimate(
        flops=n_pad * flops_per_edge,
        transcendentals=n_pad * 4,                 # 3x LN rsqrt + sigmoid per edge
        bytes_accessed=n_pad * ((IN_CH + ATTR) * 4 + 4) + 256 * 1024,
    )

    out_row = pl.pallas_call(
        link_predictor_kernel,
        out_shape=jax.ShapeDtypeStruct((1, n_pad), jnp.float32),
        grid_spec=pltpu.PrefetchScalarGridSpec(
            num_scalar_prefetch=0,
            grid=(num_tiles,),
            in_specs=in_specs,
            out_specs=out_spec,
        ),
        compiler_params=pltpu.CompilerParams(
            dimension_semantics=("parallel",),
        ),
        cost_estimate=cost,
    )(ein, scalars, vecs, w_in, w_mid, w_sq, w_out)

    return out_row[0, :n].reshape(n, OUT)


# ----------------------------- reference (pure JAX, f32) ----------------------
def link_predictor_ref(x_i, x_j, edge_attr, p):
    mask = x_i[:, -1:] < x_j[:, -1:]
    diff = x_i - x_j
    xij = jnp.where(mask, -diff, diff)

    h = xij @ p["wij1"] + p["bij1"]
    h = _relu(_layernorm(h, p["gij"], p["bij_ln"]))
    xij_h = h @ p["wij2"] + p["bij2"]

    a = _relu(edge_attr @ p["wcn1"] + p["bcn1"])
    a = a @ p["wcn2"] + p["bcn2"]
    a = _relu(_layernorm(a, p["gcn"], p["bcn_ln"]))
    xcn_h = a @ p["wcn3"] + p["bcn3"]

    x = xcn_h * p["beta"] + xij_h
    h = _relu(_layernorm(x @ p["wl1"] + p["bl1"], p["gl"], p["bl_ln"]))
    return jax.nn.sigmoid(h @ p["wl2"] + p["bl2"])


# ----------------------------- param init -------------------------------------
def init_params(key):
    ks = jax.random.split(key, 8)
    scale = 0.1

    def lin(k, fan_in, fan_out):
        kw, kb = jax.random.split(k)
        w = scale * jax.random.normal(kw, (fan_in, fan_out), jnp.float32)
        b = scale * jax.random.normal(kb, (1, fan_out), jnp.float32)
        return w, b

    p = {}
    p["beta"] = jnp.ones((1,), jnp.float32)   # Parameter(beta * torch.ones(1)), beta=1.0

    # xijlin: Linear(IN,H) -> LN -> ReLU -> Linear(H,H)
    p["wij1"], p["bij1"] = lin(ks[0], IN_CH, HID)
    p["gij"] = jnp.ones((1, HID), jnp.float32)
    p["bij_ln"] = jnp.zeros((1, HID), jnp.float32)
    p["wij2"], p["bij2"] = lin(ks[1], HID, HID)

    # xcnlin: Linear(ATTR,H) -> ReLU -> Linear(H,H) -> LN -> ReLU -> Linear(H,H)
    p["wcn1"], p["bcn1"] = lin(ks[2], ATTR, HID)
    p["wcn2"], p["bcn2"] = lin(ks[3], HID, HID)
    p["gcn"] = jnp.ones((1, HID), jnp.float32)
    p["bcn_ln"] = jnp.zeros((1, HID), jnp.float32)
    p["wcn3"], p["bcn3"] = lin(ks[4], HID, HID)

    # lins: Linear(H,H) -> LN -> ReLU -> Linear(H,OUT)
    p["wl1"], p["bl1"] = lin(ks[5], HID, HID)
    p["gl"] = jnp.ones((1, HID), jnp.float32)
    p["bl_ln"] = jnp.zeros((1, HID), jnp.float32)
    p["wl2"], p["bl2"] = lin(ks[6], HID, OUT)
    return p


if __name__ == "__main__":
    key = jax.random.PRNGKey(0)
    k_i, k_j, k_a, k_p = jax.random.split(key, 4)

    N_EDGES = 2500   # non-multiple of the tile -> exercises even grid + padded tail
    x_i = jax.random.normal(k_i, (N_EDGES, IN_CH), jnp.float32)
    x_j = jax.random.normal(k_j, (N_EDGES, IN_CH), jnp.float32)
    edge_attr = jax.random.normal(k_a, (N_EDGES, ATTR), jnp.float32)
    params = init_params(k_p)

    out = jax.block_until_ready(link_predictor(x_i, x_j, edge_attr, params))
    ref = link_predictor_ref(x_i, x_j, edge_attr, params)

    assert out.shape == (N_EDGES, OUT)
    max_err = float(jnp.max(jnp.abs(out - ref)))
    # bf16 MXU matmuls (f32 accumulation) vs. the pure-f32 reference.
    assert jnp.allclose(out, ref, rtol=2e-2, atol=2e-2), (
        f"mismatch vs pure-JAX reference, max|err|={max_err}")
    print("KERNEL_OK")
</pallas_src>

<mosaic_0001>
module attributes {stable_mosaic.version = 11 : i64} {
  func.func @link_predictor_kernel(%arg0: i32, %arg1: memref<640x32xf32, #tpu.memory_space<vmem>>, %arg2: memref<1xf32, #tpu.memory_space<smem>>, %arg3: memref<6x256xf32, #tpu.memory_space<vmem>>, %arg4: memref<32x256xbf16, #tpu.memory_space<vmem>>, %arg5: memref<256x256xbf16, #tpu.memory_space<vmem>>, %arg6: memref<2x128x128xbf16, #tpu.memory_space<vmem>>, %arg7: memref<128x1xf32, #tpu.memory_space<vmem>>, %arg8: memref<1x640xf32, #tpu.memory_space<vmem>>) attributes {dimension_semantics = [#tpu.dimension_semantics<parallel>], iteration_bounds = array<i64: 4>, scalar_prefetch = 0 : i64, scratch_operands = 0 : i64, tpu.core_type = #tpu.core_type<tc>, window_params = [{transform_indices = @transform_0, window_bounds = array<i64: 640, 32>}, {transform_indices = @transform_1, window_bounds = array<i64: 1>}, {pipeline_mode = #tpu.pipeline_mode<synchronous>, transform_indices = @transform_2, window_bounds = array<i64: 6, 256>}, {pipeline_mode = #tpu.pipeline_mode<synchronous>, transform_indices = @transform_3, window_bounds = array<i64: 32, 256>}, {pipeline_mode = #tpu.pipeline_mode<synchronous>, transform_indices = @transform_4, window_bounds = array<i64: 256, 256>}, {pipeline_mode = #tpu.pipeline_mode<synchronous>, transform_indices = @transform_5, window_bounds = array<i64: 2, 128, 128>}, {pipeline_mode = #tpu.pipeline_mode<synchronous>, transform_indices = @transform_6, window_bounds = array<i64: 128, 1>}, {transform_indices = @transform_7, window_bounds = array<i64: 1, 640>}]} {
    %c0 = arith.constant 0 : index
    %c0_0 = arith.constant 0 : index
    %0 = vector.load %arg3[%c0, %c0_0] : memref<6x256xf32, #tpu.memory_space<vmem>>, vector<6x256xf32>
    %1 = vector.extract_strided_slice %0 {offsets = [0, 0], sizes = [1, 256], strides = [1, 1]} : vector<6x256xf32> to vector<1x256xf32>
    %2 = vector.extract_strided_slice %0 {offsets = [1, 0], sizes = [1, 256], strides = [1, 1]} : vector<6x256xf32> to vector<1x256xf32>
    %3 = vector.extract_strided_slice %0 {offsets = [2, 0], sizes = [1, 128], strides = [1, 1]} : vector<6x256xf32> to vector<1x128xf32>
    %4 = vector.extract_strided_slice %0 {offsets = [2, 128], sizes = [1, 128], strides = [1, 1]} : vector<6x256xf32> to vector<1x128xf32>
    %5 = vector.extract_strided_slice %0 {offsets = [3, 0], sizes = [1, 128], strides = [1, 1]} : vector<6x256xf32> to vector<1x128xf32>
    %6 = vector.extract_strided_slice %0 {offsets = [3, 128], sizes = [1, 128], strides = [1, 1]} : vector<6x256xf32> to vector<1x128xf32>
    %7 = vector.extract_strided_slice %0 {offsets = [4, 0], sizes = [1, 128], strides = [1, 1]} : vector<6x256xf32> to vector<1x128xf32>
    %8 = vector.extract_strided_slice %0 {offsets = [4, 128], sizes = [1, 128], strides = [1, 1]} : vector<6x256xf32> to vector<1x128xf32>
    %9 = vector.extract_strided_slice %0 {offsets = [5, 0], sizes = [1, 128], strides = [1, 1]} : vector<6x256xf32> to vector<1x128xf32>
    %10 = vector.extract_strided_slice %0 {offsets = [5, 128], sizes = [1, 128], strides = [1, 1]} : vector<6x256xf32> to vector<1x128xf32>
    %c0_1 = arith.constant 0 : index
    %c0_2 = arith.constant 0 : index
    %11 = vector.load %arg1[%c0_1, %c0_2] : memref<640x32xf32, #tpu.memory_space<vmem>>, vector<640x32xf32>
    %12 = arith.truncf %11 : vector<640x32xf32> to vector<640x32xbf16>
    %c0_3 = arith.constant 0 : index
    %c0_4 = arith.constant 0 : index
    %13 = vector.load %arg4[%c0_3, %c0_4] : memref<32x256xbf16, #tpu.memory_space<vmem>>, vector<32x256xbf16>
    %cst = arith.constant dense<0.000000e+00> : vector<640x256xf32>
    %14 = tpu.matmul %12, %13, %cst {dimension_numbers = #tpu.dot_dimension_numbers<[1], [0], [0], [1], [0, 0, 1, 1], [], []>} : vector<640x32xbf16>, vector<32x256xbf16>, vector<640x256xf32> -> vector<640x256xf32>
    %15 = vector.broadcast %1 : vector<1x256xf32> to vector<640x256xf32>
    %16 = arith.addf %14, %15 : vector<640x256xf32>
    %17 = vector.extract_strided_slice %16 {offsets = [0, 0], sizes = [640, 128], strides = [1, 1]} : vector<640x256xf32> to vector<640x128xf32>
    %cst_5 = arith.constant dense<0.000000e+00> : vector<640xf32>
    %18 = vector.multi_reduction <add>, %17, %cst_5 [1] : vector<640x128xf32> to vector<640xf32>
    %19 = vector.shape_cast %18 : vector<640xf32> to vector<640x1xf32>
    %cst_6 = arith.constant 1.280000e+02 : f32
    %20 = vector.broadcast %cst_6 : f32 to vector<640x1xf32>
    %21 = arith.divf %19, %20 : vector<640x1xf32>
    %22 = arith.mulf %17, %17 : vector<640x128xf32>
    %cst_7 = arith.constant dense<0.000000e+00> : vector<640xf32>
    %23 = vector.multi_reduction <add>, %22, %cst_7 [1] : vector<640x128xf32> to vector<640xf32>
    %24 = vector.shape_cast %23 : vector<640xf32> to vector<640x1xf32>
    %cst_8 = arith.constant 1.280000e+02 : f32
    %25 = vector.broadcast %cst_8 : f32 to vector<640x1xf32>
    %26 = arith.divf %24, %25 : vector<640x1xf32>
    %27 = arith.mulf %21, %21 : vector<640x1xf32>
    %28 = arith.subf %26, %27 : vector<640x1xf32>
    %cst_9 = arith.constant 0.000000e+00 : f32
    %29 = vector.broadcast %cst_9 : f32 to vector<640x1xf32>
    %30 = arith.maximumf %28, %29 : vector<640x1xf32>
    %31 = vector.broadcast %21 : vector<640x1xf32> to vector<640x128xf32>
    %32 = arith.subf %17, %31 : vector<640x128xf32>
    %cst_10 = arith.constant 9.99999974E-6 : f32
    %33 = vector.broadcast %cst_10 : f32 to vector<640x1xf32>
    %34 = arith.addf %30, %33 : vector<640x1xf32>
    %35 = math.rsqrt %34 : vector<640x1xf32>
    %36 = vector.broadcast %35 : vector<640x1xf32> to vector<640x128xf32>
    %37 = arith.mulf %32, %36 : vector<640x128xf32>
    %38 = vector.broadcast %3 : vector<1x128xf32> to vector<640x128xf32>
    %39 = arith.mulf %37, %38 : vector<640x128xf32>
    %40 = vector.broadcast %4 : vector<1x128xf32> to vector<640x128xf32>
    %41 = arith.addf %39, %40 : vector<640x128xf32>
    %cst_11 = arith.constant 0.000000e+00 : f32
    %42 = vector.broadcast %cst_11 : f32 to vector<640x128xf32>
    %43 = arith.maximumf %41, %42 : vector<640x128xf32>
    %44 = vector.extract_strided_slice %16 {offsets = [0, 128], sizes = [640, 128], strides = [1, 1]} : vector<640x256xf32> to vector<640x128xf32>
    %cst_12 = arith.constant 0.000000e+00 : f32
    %45 = vector.broadcast %cst_12 : f32 to vector<640x128xf32>
    %46 = arith.maximumf %44, %45 : vector<640x128xf32>
    %47 = arith.truncf %43 : vector<640x128xf32> to vector<640x128xbf16>
    %48 = arith.truncf %46 : vector<640x128xf32> to vector<640x128xbf16>
    %49 = tpu.concatenate %47, %48 in 1 : vector<640x128xbf16>, vector<640x128xbf16> -> vector<640x256xbf16>
    %c0_13 = arith.constant 0 : index
    %c0_14 = arith.constant 0 : index
    %50 = vector.load %arg5[%c0_13, %c0_14] : memref<256x256xbf16, #tpu.memory_space<vmem>>, vector<256x256xbf16>
    %cst_15 = arith.constant dense<0.000000e+00> : vector<640x256xf32>
    %51 = tpu.matmul %49, %50, %cst_15 {dimension_numbers = #tpu.dot_dimension_numbers<[1], [0], [0], [1], [0, 0, 1, 1], [], []>} : vector<640x256xbf16>, vector<256x256xbf16>, vector<640x256xf32> -> vector<640x256xf32>
    %52 = vector.broadcast %2 : vector<1x256xf32> to vector<640x256xf32>
    %53 = arith.addf %51, %52 : vector<640x256xf32>
    %54 = vector.extract_strided_slice %53 {offsets = [0, 0], sizes = [640, 128], strides = [1, 1]} : vector<640x256xf32> to vector<640x128xf32>
    %55 = vector.extract_strided_slice %53 {offsets = [0, 128], sizes = [640, 128], strides = [1, 1]} : vector<640x256xf32> to vector<640x128xf32>
    %cst_16 = arith.constant dense<0.000000e+00> : vector<640xf32>
    %56 = vector.multi_reduction <add>, %55, %cst_16 [1] : vector<640x128xf32> to vector<640xf32>
    %57 = vector.shape_cast %56 : vector<640xf32> to vector<640x1xf32>
    %cst_17 = arith.constant 1.280000e+02 : f32
    %58 = vector.broadcast %cst_17 : f32 to vector<640x1xf32>
    %59 = arith.divf %57, %58 : vector<640x1xf32>
    %60 = arith.mulf %55, %55 : vector<640x128xf32>
    %cst_18 = arith.constant dense<0.000000e+00> : vector<640xf32>
    %61 = vector.multi_reduction <add>, %60, %cst_18 [1] : vector<640x128xf32> to vector<640xf32>
    %62 = vector.shape_cast %61 : vector<640xf32> to vector<640x1xf32>
    %cst_19 = arith.constant 1.280000e+02 : f32
    %63 = vector.broadcast %cst_19 : f32 to vector<640x1xf32>
    %64 = arith.divf %62, %63 : vector<640x1xf32>
    %65 = arith.mulf %59, %59 : vector<640x1xf32>
    %66 = arith.subf %64, %65 : vector<640x1xf32>
    %cst_20 = arith.constant 0.000000e+00 : f32
    %67 = vector.broadcast %cst_20 : f32 to vector<640x1xf32>
    %68 = arith.maximumf %66, %67 : vector<640x1xf32>
    %69 = vector.broadcast %59 : vector<640x1xf32> to vector<640x128xf32>
    %70 = arith.subf %55, %69 : vector<640x128xf32>
    %cst_21 = arith.constant 9.99999974E-6 : f32
    %71 = vector.broadcast %cst_21 : f32 to vector<640x1xf32>
    %72 = arith.addf %68, %71 : vector<640x1xf32>
    %73 = math.rsqrt %72 : vector<640x1xf32>
    %74 = vector.broadcast %73 : vector<640x1xf32> to vector<640x128xf32>
    %75 = arith.mulf %70, %74 : vector<640x128xf32>
    %76 = vector.broadcast %5 : vector<1x128xf32> to vector<640x128xf32>
    %77 = arith.mulf %75, %76 : vector<640x128xf32>
    %78 = vector.broadcast %6 : vector<1x128xf32> to vector<640x128xf32>
    %79 = arith.addf %77, %78 : vector<640x128xf32>
    %cst_22 = arith.constant 0.000000e+00 : f32
    %80 = vector.broadcast %cst_22 : f32 to vector<640x128xf32>
    %81 = arith.maximumf %79, %80 : vector<640x128xf32>
    %82 = arith.truncf %81 : vector<640x128xf32> to vector<640x128xbf16>
    %c0_23 = arith.constant 0 : index
    %c0_24 = arith.constant 0 : index
    %c0_25 = arith.constant 0 : index
    %83 = vector.load %arg6[%c0_23, %c0_24, %c0_25] : memref<2x128x128xbf16, #tpu.memory_space<vmem>>, vector<1x128x128xbf16>
    %84 = vector.shape_cast %83 : vector<1x128x128xbf16> to vector<128x128xbf16>
    %cst_26 = arith.constant dense<0.000000e+00> : vector<640x128xf32>
    %85 = tpu.matmul %82, %84, %cst_26 {dimension_numbers = #tpu.dot_dimension_numbers<[1], [0], [0], [1], [0, 0, 1, 1], [], []>} : vector<640x128xbf16>, vector<128x128xbf16>, vector<640x128xf32> -> vector<640x128xf32>
    %86 = vector.broadcast %9 : vector<1x128xf32> to vector<640x128xf32>
    %87 = arith.addf %85, %86 : vector<640x128xf32>
    %88 = arith.addf %87, %54 : vector<640x128xf32>
    %89 = arith.truncf %88 : vector<640x128xf32> to vector<640x128xbf16>
    %c1 = arith.constant 1 : index
    %c0_27 = arith.constant 0 : index
    %c0_28 = arith.constant 0 : index
    %90 = vector.load %arg6[%c1, %c0_27, %c0_28] : memref<2x128x128xbf16, #tpu.memory_space<vmem>>, vector<1x128x128xbf16>
    %91 = vector.shape_cast %90 : vector<1x128x128xbf16> to vector<128x128xbf16>
    %cst_29 = arith.constant dense<0.000000e+00> : vector<640x128xf32>
    %92 = tpu.matmul %89, %91, %cst_29 {dimension_numbers = #tpu.dot_dimension_numbers<[1], [0], [0], [1], [0, 0, 1, 1], [], []>} : vector<640x128xbf16>, vector<128x128xbf16>, vector<640x128xf32> -> vector<640x128xf32>
    %93 = vector.broadcast %10 : vector<1x128xf32> to vector<640x128xf32>
    %94 = arith.addf %92, %93 : vector<640x128xf32>
    %cst_30 = arith.constant dense<0.000000e+00> : vector<640xf32>
    %95 = vector.multi_reduction <add>, %94, %cst_30 [1] : vector<640x128xf32> to vector<640xf32>
    %96 = vector.shape_cast %95 : vector<640xf32> to vector<640x1xf32>
    %cst_31 = arith.constant 1.280000e+02 : f32
    %97 = vector.broadcast %cst_31 : f32 to vector<640x1xf32>
    %98 = arith.divf %96, %97 : vector<640x1xf32>
    %99 = arith.mulf %94, %94 : vector<640x128xf32>
    %cst_32 = arith.constant dense<0.000000e+00> : vector<640xf32>
    %100 = vector.multi_reduction <add>, %99, %cst_32 [1] : vector<640x128xf32> to vector<640xf32>
    %101 = vector.shape_cast %100 : vector<640xf32> to vector<640x1xf32>
    %cst_33 = arith.constant 1.280000e+02 : f32
    %102 = vector.broadcast %cst_33 : f32 to vector<640x1xf32>
    %103 = arith.divf %101, %102 : vector<640x1xf32>
    %104 = arith.mulf %98, %98 : vector<640x1xf32>
    %105 = arith.subf %103, %104 : vector<640x1xf32>
    %cst_34 = arith.constant 0.000000e+00 : f32
    %106 = vector.broadcast %cst_34 : f32 to vector<640x1xf32>
    %107 = arith.maximumf %105, %106 : vector<640x1xf32>
    %108 = vector.broadcast %98 : vector<640x1xf32> to vector<640x128xf32>
    %109 = arith.subf %94, %108 : vector<640x128xf32>
    %cst_35 = arith.constant 9.99999974E-6 : f32
    %110 = vector.broadcast %cst_35 : f32 to vector<640x1xf32>
    %111 = arith.addf %107, %110 : vector<640x1xf32>
    %112 = math.rsqrt %111 : vector<640x1xf32>
    %113 = vector.broadcast %112 : vector<640x1xf32> to vector<640x128xf32>
    %114 = arith.mulf %109, %113 : vector<640x128xf32>
    %115 = vector.broadcast %7 : vector<1x128xf32> to vector<640x128xf32>
    %116 = arith.mulf %114, %115 : vector<640x128xf32>
    %117 = vector.broadcast %8 : vector<1x128xf32> to vector<640x128xf32>
    %118 = arith.addf %116, %117 : vector<640x128xf32>
    %cst_36 = arith.constant 0.000000e+00 : f32
    %119 = vector.broadcast %cst_36 : f32 to vector<640x128xf32>
    %120 = arith.maximumf %118, %119 : vector<640x128xf32>
    %121 = tpu.transpose %120, [1, 0] : vector<640x128xf32> -> vector<128x640xf32>
    %c0_37 = arith.constant 0 : index
    %c0_38 = arith.constant 0 : index
    %122 = vector.load %arg7[%c0_37, %c0_38] : memref<128x1xf32, #tpu.memory_space<vmem>>, vector<128x1xf32>
    %123 = vector.broadcast %122 : vector<128x1xf32> to vector<128x640xf32>
    %124 = arith.mulf %121, %123 : vector<128x640xf32>
    %cst_39 = arith.constant dense<0.000000e+00> : vector<640xf32>
    %125 = vector.multi_reduction <add>, %124, %cst_39 [0] : vector<128x640xf32> to vector<640xf32>
    %126 = vector.shape_cast %125 : vector<640xf32> to vector<1x640xf32>
    %c0_40 = arith.constant 0 : index
    %127 = memref.load %arg2[%c0_40] : memref<1xf32, #tpu.memory_space<smem>>
    %128 = vector.broadcast %127 : f32 to vector<1x640xf32>
    %129 = arith.addf %126, %128 : vector<1x640xf32>
    %130 = arith.negf %129 : vector<1x640xf32>
    %131 = math.exp %130 : vector<1x640xf32>
    %cst_41 = arith.constant 1.000000e+00 : f32
    %132 = vector.broadcast %cst_41 : f32 to vector<1x640xf32>
    %133 = arith.addf %132, %131 : vector<1x640xf32>
    %134 = arith.divf %132, %133 : vector<1x640xf32>
    %c0_42 = arith.constant 0 : index
    %c0_43 = arith.constant 0 : index
    %135 = vector.load %arg8[%c0_42, %c0_43] : memref<1x640xf32, #tpu.memory_space<vmem>>, vector<1x640xf32>
    tpu.vector_store %arg8[%c0_42, %c0_43], %134 {strides = array<i32>} : memref<1x640xf32, #tpu.memory_space<vmem>>, vector<1x640xf32>,
    return
  }
  func.func @transform_0(%arg0: i32) -> (i32, i32) {
    %c0_i32 = arith.constant 0 : i32
    %c0_i32_0 = arith.constant 0 : i32
    return %arg0, %c0_i32 : i32, i32
  }
  func.func @transform_1(%arg0: i32) -> i32 {
    %c0_i32 = arith.constant 0 : i32
    %c0_i32_0 = arith.constant 0 : i32
    return %c0_i32 : i32
  }
  func.func @transform_2(%arg0: i32) -> (i32, i32) {
    %c0_i32 = arith.constant 0 : i32
    %c0_i32_0 = arith.constant 0 : i32
    %c0_i32_1 = arith.constant 0 : i32
    return %c0_i32, %c0_i32_0 : i32, i32
  }
  func.func @transform_3(%arg0: i32) -> (i32, i32) {
    %c0_i32 = arith.constant 0 : i32
    %c0_i32_0 = arith.constant 0 : i32
    %c0_i32_1 = arith.constant 0 : i32
    return %c0_i32, %c0_i32_0 : i32, i32
  }
  func.func @transform_4(%arg0: i32) -> (i32, i32) {
    %c0_i32 = arith.constant 0 : i32
    %c0_i32_0 = arith.constant 0 : i32
    %c0_i32_1 = arith.constant 0 : i32
    return %c0_i32, %c0_i32_0 : i32, i32
  }
  func.func @transform_5(%arg0: i32) -> (i32, i32, i32) {
    %c0_i32 = arith.constant 0 : i32
    %c0_i32_0 = arith.constant 0 : i32
    %c0_i32_1 = arith.constant 0 : i32
    %c0_i32_2 = arith.constant 0 : i32
    return %c0_i32, %c0_i32_0, %c0_i32_1 : i32, i32, i32
  }
  func.func @transform_6(%arg0: i32) -> (i32, i32) {
    %c0_i32 = arith.constant 0 : i32
    %c0_i32_0 = arith.constant 0 : i32
    %c0_i32_1 = arith.constant 0 : i32
    return %c0_i32, %c0_i32_0 : i32, i32
  }
  func.func @transform_7(%arg0: i32) -> (i32, i32) {
    %c0_i32 = arith.constant 0 : i32
    %c0_i32_0 = arith.constant 0 : i32
    return %c0_i32, %arg0 : i32, i32
  }
}

</mosaic_0001>

<llo_original>
// kernel: link_predictor.1
$region0: #{link_predictor.1}
  #allocation0 [shape = 'u32[]', space=smem, size = 0x4, offset = 0x4, fixed_abs, tag = 'smem constant byte address 0x4 - core index']
  #allocation1 [shape = 'u32[144,128]{1,0:T(1,128)}', space=vmem, size = 0x12000, scoped, tag = 'internal scratch']
  #allocation2 [shape = 'f32[1]{0:T(128)S(6)}', space=smem, size = 0x200, scoped, tag = 'scoped memory for link_predictor.1']
  %s0 = inlined_call_operand.vmem [shape: f32[2560,32], index: 0, kind: input, shape index: {}]
  %s1 = inlined_call_operand.<no memory space> [shape: f32[1], index: 1, kind: input, shape index: {}]
  %s2 = inlined_call_operand.vmem [shape: f32[6,256], index: 2, kind: input, shape index: {}]
  %s3 = inlined_call_operand.vmem [shape: bf16[32,256], index: 3, kind: input, shape index: {}]
  %s4 = inlined_call_operand.vmem [shape: bf16[256,256], index: 4, kind: input, shape index: {}]
  %s5 = inlined_call_operand.vmem [shape: bf16[2,128,128], index: 5, kind: input, shape index: {}]
  %s6 = inlined_call_operand.vmem [shape: f32[128,1], index: 6, kind: input, shape index: {}]
  %s7 = inlined_call_operand.vmem [shape: f32[1,2560], index: 7, kind: output, shape index: {}]
  %s8 = sld [smem:[#allocation0]]
  $region61: #{link_predictor.1} parent=0
    _
  %s10 = ssub.s32 1, %s8
  %s11 = scalar_select 0, %s10, %s8
  %12 = sst [smem:[#allocation2]] %s1
  loop: start=0, step=1, limit=6
  $region2: #{link_predictor.1} parent=0 // loop_pre_header
    _
  $region3: #{link_predictor.1} parent=0 // loop_header
    %s14 = sphi 0, %s18
    %p15 = scmp.ge.s32.totalorder %s14, 6
    %s24 = sphi 0, %s26
    %s27 = sphi 0, %s24
    %s28 = sphi 0, %s27
    %s44 = sphi 0, %s28
    %s48 = sphi 0, %s48
    %s50 = sphi 0, %s48
    %s51 = sphi 0, %s50
    %s65 = sphi 0, %s51
    %s69 = sphi 0, %s69
    %s71 = sphi 0, %s69
    %s72 = sphi 0, %s71
    %s86 = sphi 0, %s72
    %s90 = sphi 0, %s90
    %s92 = sphi 0, %s90
    %s93 = sphi 0, %s92
    %s107 = sphi 0, %s93
    %s111 = sphi 0, %s111
    %s113 = sphi 0, %s111
    %s114 = sphi 0, %s113
    %s128 = sphi 0, %s114
    %s132 = sphi 0, %s132
    %s134 = sphi 0, %s132
    %s135 = sphi 0, %s134
    %s149 = sphi 0, %s135
    %s153 = sphi 0, %s153
    %s155 = sphi 0, %s153
    %s156 = sphi 0, %s155
    %s170 = sphi 0, %s156
    %s176 = sphi 0, %s178
    %s179 = sphi 0, %s176
    %s180 = sphi 0, %s179
    %s196 = sphi 0, %s180
  $region4: #{link_predictor.1} parent=0 // loop_header_branch
    %17 = sbr.rel (%p15) target = $region8
  $region5: #{link_predictor.1} parent=0 // loop_body
    %s19 = ssub.s32 %s14, 1
    %s20 = ssub.s32 %s14, 2
    %s21 = sadd.s32 %s14, 1
    %s22 = ssub.s32 %s14, %s21
    %p23 = scmp.eq.s32.totalorder %s22, 0
    %s25 = sadd.s32 %s24, 1
    %s26 = scalar_select %p23, %s24, %s25
    %p29 = pneg %p23
    %p30 = scmp.eq.s32.totalorder %s14, 3
    %p31 = por %p29, %p30
    %p32 = scmp.ne.s32.totalorder %s24, %s27
    %p33 = scmp.eq.s32.totalorder %s14, 0
    %p34 = por %p32, %p33
    %p35 = scmp.ne.s32.totalorder %s24, %s27
    %p36 = scmp.eq.s32.totalorder %s19, 3
    %p37 = por %p35, %p36
    %p38 = scmp.ne.s32.totalorder %s27, %s28
    %p39 = scmp.eq.s32.totalorder %s19, 0
    %p40 = por %p38, %p39
    %p41 = scmp.ne.s32.totalorder %s27, %s28
    %p42 = scmp.eq.s32.totalorder %s20, 3
    %p43 = por %p41, %p42
    %p45 = scmp.ne.s32.totalorder %s28, %s44
    %p46 = scmp.eq.s32.totalorder %s20, 0
    %p47 = por %p45, %p46
    %s49 = sadd.s32 %s48, 1
    %p52 = scmp.eq.s32.totalorder %s14, 3
    %p53 = scmp.ne.s32.totalorder %s48, %s50
    %p54 = scmp.eq.s32.totalorder %s14, 0
    %p55 = por %p53, %p54
    %p56 = scmp.ne.s32.totalorder %s48, %s50
    %p57 = scmp.eq.s32.totalorder %s19, 3
    %p58 = por %p56, %p57
    %p59 = scmp.ne.s32.totalorder %s50, %s51
    %p60 = scmp.eq.s32.totalorder %s19, 0
    %p61 = por %p59, %p60
    %p62 = scmp.ne.s32.totalorder %s50, %s51
    %p63 = scmp.eq.s32.totalorder %s20, 3
    %p64 = por %p62, %p63
    %p66 = scmp.ne.s32.totalorder %s51, %s65
    %p67 = scmp.eq.s32.totalorder %s20, 0
    %p68 = por %p66, %p67
    %s70 = sadd.s32 %s69, 1
    %p73 = scmp.eq.s32.totalorder %s14, 3
    %p74 = scmp.ne.s32.totalorder %s69, %s71
    %p75 = scmp.eq.s32.totalorder %s14, 0
    %p76 = por %p74, %p75
    %p77 = scmp.ne.s32.totalorder %s69, %s71
    %p78 = scmp.eq.s32.totalorder %s19, 3
    %p79 = por %p77, %p78
    %p80 = scmp.ne.s32.totalorder %s71, %s72
    %p81 = scmp.eq.s32.totalorder %s19, 0
    %p82 = por %p80, %p81
    %p83 = scmp.ne.s32.totalorder %s71, %s72
    %p84 = scmp.eq.s32.totalorder %s20, 3
    %p85 = por %p83, %p84
    %p87 = scmp.ne.s32.totalorder %s72, %s86
    %p88 = scmp.eq.s32.totalorder %s20, 0
    %p89 = por %p87, %p88
    %s91 = sadd.s32 %s90, 1
    %p94 = scmp.eq.s32.totalorder %s14, 3
    %p95 = scmp.ne.s32.totalorder %s90, %s92
    %p96 = scmp.eq.s32.totalorder %s14, 0
    %p97 = por %p95, %p96
    %p98 = scmp.ne.s32.totalorder %s90, %s92
    %p99 = scmp.eq.s32.totalorder %s19, 3
    %p100 = por %p98, %p99
    %p101 = scmp.ne.s32.totalorder %s92, %s93
    %p102 = scmp.eq.s32.totalorder %s19, 0
    %p103 = por %p101, %p102
    %p104 = scmp.ne.s32.totalorder %s92, %s93
    %p105 = scmp.eq.s32.totalorder %s20, 3
    %p106 = por %p104, %p105
    %p108 = scmp.ne.s32.totalorder %s93, %s107
    %p109 = scmp.eq.s32.totalorder %s20, 0
    %p110 = por %p108, %p109
    %s112 = sadd.s32 %s111, 1
    %p115 = scmp.eq.s32.totalorder %s14, 3
    %p116 = scmp.ne.s32.totalorder %s111, %s113
    %p117 = scmp.eq.s32.totalorder %s14, 0
    %p118 = por %p116, %p117
    %p119 = scmp.ne.s32.totalorder %s111, %s113
    %p120 = scmp.eq.s32.totalorder %s19, 3
    %p121 = por %p119, %p120
    %p122 = scmp.ne.s32.totalorder %s113, %s114
    %p123 = scmp.eq.s32.totalorder %s19, 0
    %p124 = por %p122, %p123
    %p125 = scmp.ne.s32.totalorder %s113, %s114
    %p126 = scmp.eq.s32.totalorder %s20, 3
    %p127 = por %p125, %p126
    %p129 = scmp.ne.s32.totalorder %s114, %s128
    %p130 = scmp.eq.s32.totalorder %s20, 0
    %p131 = por %p129, %p130
    %s133 = sadd.s32 %s132, 1
    %p136 = scmp.eq.s32.totalorder %s14, 3
    %p137 = scmp.ne.s32.totalorder %s132, %s134
    %p138 = scmp.eq.s32.totalorder %s14, 0
    %p139 = por %p137, %p138
    %p140 = scmp.ne.s32.totalorder %s132, %s134
    %p141 = scmp.eq.s32.totalorder %s19, 3
    %p142 = por %p140, %p141
    %p143 = scmp.ne.s32.totalorder %s134, %s135
    %p144 = scmp.eq.s32.totalorder %s19, 0
    %p145 = por %p143, %p144
    %p146 = scmp.ne.s32.totalorder %s134, %s135
    %p147 = scmp.eq.s32.totalorder %s20, 3
    %p148 = por %p146, %p147
    %p150 = scmp.ne.s32.totalorder %s135, %s149
    %p151 = scmp.eq.s32.totalorder %s20, 0
    %p152 = por %p150, %p151
    %s154 = sadd.s32 %s153, 1
    %p157 = scmp.eq.s32.totalorder %s14, 3
    %p158 = scmp.ne.s32.totalorder %s153, %s155
    %p159 = scmp.eq.s32.totalorder %s14, 0
    %p160 = por %p158, %p159
    %p161 = scmp.ne.s32.totalorder %s153, %s155
    %p162 = scmp.eq.s32.totalorder %s19, 3
    %p163 = por %p161, %p162
    %p164 = scmp.ne.s32.totalorder %s155, %s156
    %p165 = scmp.eq.s32.totalorder %s19, 0
    %p166 = por %p164, %p165
    %p167 = scmp.ne.s32.totalorder %s155, %s156
    %p168 = scmp.eq.s32.totalorder %s20, 3
    %p169 = por %p167, %p168
    %p171 = scmp.ne.s32.totalorder %s156, %s170
    %p172 = scmp.eq.s32.totalorder %s20, 0
    %p173 = por %p171, %p172
    %s174 = ssub.s32 %s14, %s21
    %p175 = scmp.eq.s32.totalorder %s174, 0
    %s177 = sadd.s32 %s176, 1
    %s178 = scalar_select %p175, %s176, %s177
    %p181 = pneg %p175
    %p182 = scmp.eq.s32.totalorder %s14, 3
    %p183 = por %p181, %p182
    %p184 = scmp.ne.s32.totalorder %s176, %s179
    %p185 = scmp.eq.s32.totalorder %s14, 0
    %p186 = por %p184, %p185
    %p187 = scmp.ne.s32.totalorder %s176, %s179
    %p188 = scmp.eq.s32.totalorder %s19, 3
    %p189 = por %p187, %p188
    %p190 = scmp.ne.s32.totalorder %s179, %s180
    %p191 = scmp.eq.s32.totalorder %s19, 0
    %p192 = por %p190, %p191
    %p193 = scmp.ne.s32.totalorder %s179, %s180
    %p194 = scmp.eq.s32.totalorder %s20, 3
    %p195 = por %p193, %p194
    %p197 = scmp.ne.s32.totalorder %s180, %s196
    %p198 = scmp.eq.s32.totalorder %s20, 0
    %p199 = por %p197, %p198
    %p200 = scmp.le.s32.totalorder 1, %s14
    %p201 = scmp.lt.s32.totalorder %s14, 5
    %p202 = pnand %p200, %p201
    %p203 = pneg %p202
    // Predicated region
    $region9: #{link_predictor.1} parent=5 // pred_check
      _
    $region10: #{link_predictor.1} parent=5 // pred_check_branch
      %205 = sbr.rel (%p202) target = $region12
    $region11: #{link_predictor.1} parent=5 // pred_region
      %s206 = ssub.s32 %s14, 1
      // Predicated region
      $region13: #{link_predictor.1} parent=11 // pred_check
        %p207 = pneg %p61
      $region14: #{link_predictor.1} parent=11 // pred_check_branch
        %209 = sbr.rel (%p207) target = $region16
      $region15: #{link_predictor.1} parent=11 // pred_region
        _
      $region16: #{link_predictor.1} parent=11 // pred_fallthru
        _
      // Predicated region
      $region17: #{link_predictor.1} parent=11 // pred_check
        %p210 = pneg %p82
      $region18: #{link_predictor.1} parent=11 // pred_check_branch
        %212 = sbr.rel (%p210) target = $region20
      $region19: #{link_predictor.1} parent=11 // pred_region
        _
      $region20: #{link_predictor.1} parent=11 // pred_fallthru
        _
      // Predicated region
      $region21: #{link_predictor.1} parent=11 // pred_check
        %p213 = pneg %p103
      $region22: #{link_predictor.1} parent=11 // pred_check_branch
        %215 = sbr.rel (%p213) target = $region24
      $region23: #{link_predictor.1} parent=11 // pred_region
        _
      $region24: #{link_predictor.1} parent=11 // pred_fallthru
        _
      // Predicated region
      $region25: #{link_predictor.1} parent=11 // pred_check
        %p216 = pneg %p124
      $region26: #{link_predictor.1} parent=11 // pred_check_branch
        %218 = sbr.rel (%p216) target = $region28
      $region27: #{link_predictor.1} parent=11 // pred_region
        _
      $region28: #{link_predictor.1} parent=11 // pred_fallthru
        _
      // Predicated region
      $region29: #{link_predictor.1} parent=11 // pred_check
        %p219 = pneg %p145
      $region30: #{link_predictor.1} parent=11 // pred_check_branch
        %221 = sbr.rel (%p219) target = $region32
      $region31: #{link_predictor.1} parent=11 // pred_region
        _
      $region32: #{link_predictor.1} parent=11 // pred_fallthru
        _
      // Predicated region
      $region33: #{link_predictor.1} parent=11 // pred_check
        %p222 = pneg %p166
      $region34: #{link_predictor.1} parent=11 // pred_check_branch
        %224 = sbr.rel (%p222) target = $region36
      $region35: #{link_predictor.1} parent=11 // pred_region
        _
      $region36: #{link_predictor.1} parent=11 // pred_fallthru
        _
    $region12: #{link_predictor.1} parent=5 // pred_fallthru
      _
    %p225 = scmp.lt.s32.totalorder %s14, 4
    // Predicated region
    $region37: #{link_predictor.1} parent=5 // pred_check
      %p226 = pneg %p225
    $region38: #{link_predictor.1} parent=5 // pred_check_branch
      %228 = sbr.rel (%p226) target = $region40
    $region39: #{link_predictor.1} parent=5 // pred_region
      // Predicated region
      $region41: #{link_predictor.1} parent=39 // pred_check
        %p229 = pneg %p34
      $region42: #{link_predictor.1} parent=39 // pred_check_branch
        %231 = sbr.rel (%p229) target = $region44
      $region43: #{link_predictor.1} parent=39 // pred_region
        %s232 = smul.u32 80, %s14
        %p233 = scmp.lt.s32.totalorder %s232, 319
        %s234 = scalar_select %p233, %s232, 319
        %s235 = smul.addr %s234, 8
        %s236 = scalar_lea.vmem %s0, %s235
        %s237 = smul.u32 80, %s14
      $region44: #{link_predictor.1} parent=39 // pred_fallthru
        _
    $region40: #{link_predictor.1} parent=5 // pred_fallthru
      _
    %p238 = scmp.le.s32.totalorder 1, %s14
    %p239 = scmp.lt.s32.totalorder %s14, 5
    %p240 = pnand %p238, %p239
    %p241 = pneg %p240
    // Predicated region
    $region45: #{link_predictor.1} parent=5 // pred_check
      _
    $region46: #{link_predictor.1} parent=5 // pred_check_branch
      %243 = sbr.rel (%p240) target = $region48
    $region47: #{link_predictor.1} parent=5 // pred_region
      %s244 = ssub.s32 %s14, 1
      %s245 = smul.u32 80, %s19
      %p246 = scmp.lt.s32.totalorder %s245, 319
      %s247 = scalar_select %p246, %s245, 319
      %s248 = smul.addr %s247, 8
      %s249 = scalar_lea.vmem %s0, %s248
      %p250 = pneg %p40
      %p251 = pneg %p37
      %p252 = pneg %p61
      %p253 = pneg %p58
      %p254 = pneg %p82
      %p255 = pneg %p79
      %p256 = pneg %p103
      %p257 = pneg %p100
      %p258 = pneg %p124
      %p259 = pneg %p121
      %p260 = pneg %p145
      %p261 = pneg %p142
      %p262 = pneg %p166
      %p263 = pneg %p163
      %p264 = pneg %p192
      %p265 = pneg %p189
      %s266 = smul.u32 5, %s19
      %p267 = scmp.lt.s32.totalorder %s266, 19
      %s268 = scalar_select %p267, %s266, 19
      %s269 = scalar_lea.vmem %s7, %s268
      %s270 = smul.u32 80, %s19
      %p271 = scmp.lt.s32.totalorder %s270, 319
      %s272 = scalar_select %p271, %s270, 319
      %s273 = smul.addr %s272, 8
      %s274 = scalar_lea.vmem %s0, %s273
      %s275 = smul.u32 80, %s19
      %s276 = smul.u32 5, %s19
      %p277 = scmp.lt.s32.totalorder %s276, 19
      %s278 = scalar_select %p277, %s276, 19
      %s279 = scalar_lea.vmem %s7, %s278
      %s280 = smul.u32 5, %s19
      %v282 = vld [vmem:[%s2] sm:$0x3f]
      %v283 = vld [vmem:[%s2 + $0x8] sm:$0x3f]
      %v284 = vld [vmem:[%s274] sm:$0xff]
      %v285 = vld [vmem:[%s274 + $0x8] sm:$0xff]
      %v286 = vld [vmem:[%s274 + $0x10] sm:$0xff]
      %v287 = vld [vmem:[%s274 + $0x18] sm:$0xff]
      %v288 = vld [vmem:[%s274 + $0x20] sm:$0xff]
      %v289 = vld [vmem:[%s274 + $0x28] sm:$0xff]
      %v290 = vld [vmem:[%s274 + $0x30] sm:$0xff]
      %v291 = vld [vmem:[%s274 + $0x38] sm:$0xff]
      %v292 = vld [vmem:[%s274 + $0x40] sm:$0xff]
      %v293 = vld [vmem:[%s274 + $0x48] sm:$0xff]
      %v294 = vld [vmem:[%s274 + $0x50] sm:$0xff]
      %v295 = vld [vmem:[%s274 + $0x58] sm:$0xff]
      %v296 = vld [vmem:[%s274 + $0x60] sm:$0xff]
      %v297 = vld [vmem:[%s274 + $0x68] sm:$0xff]
      %v298 = vld [vmem:[%s274 + $0x70] sm:$0xff]
      %v299 = vld [vmem:[%s274 + $0x78] sm:$0xff]
      %v300 = vld [vmem:[%s274 + $0x80] sm:$0xff]
      %v301 = vld [vmem:[%s274 + $0x88] sm:$0xff]
      %v302 = vld [vmem:[%s274 + $0x90] sm:$0xff]
      %v303 = vld [vmem:[%s274 + $0x98] sm:$0xff]
      %v304 = vld [vmem:[%s274 + $0xa0] sm:$0xff]
      %v305 = vld [vmem:[%s274 + $0xa8] sm:$0xff]
      %v306 = vld [vmem:[%s274 + $0xb0] sm:$0xff]
      %v307 = vld [vmem:[%s274 + $0xb8] sm:$0xff]
      %v308 = vld [vmem:[%s274 + $0xc0] sm:$0xff]
      %v309 = vld [vmem:[%s274 + $0xc8] sm:$0xff]
      %v310 = vld [vmem:[%s274 + $0xd0] sm:$0xff]
      %v311 = vld [vmem:[%s274 + $0xd8] sm:$0xff]
      %v312 = vld [vmem:[%s274 + $0xe0] sm:$0xff]
      %v313 = vld [vmem:[%s274 + $0xe8] sm:$0xff]
      %v314 = vld [vmem:[%s274 + $0xf0] sm:$0xff]
      %v315 = vld [vmem:[%s274 + $0xf8] sm:$0xff]
      %v316 = vld [vmem:[%s274 + $0x100] sm:$0xff]
      %v317 = vld [vmem:[%s274 + $0x108] sm:$0xff]
      %v318 = vld [vmem:[%s274 + $0x110] sm:$0xff]
      %v319 = vld [vmem:[%s274 + $0x118] sm:$0xff]
      %v320 = vld [vmem:[%s274 + $0x120] sm:$0xff]
      %v321 = vld [vmem:[%s274 + $0x128] sm:$0xff]
      %v322 = vld [vmem:[%s274 + $0x130] sm:$0xff]
      %v323 = vld [vmem:[%s274 + $0x138] sm:$0xff]
      %v324 = vld [vmem:[%s274 + $0x140] sm:$0xff]
      %v325 = vld [vmem:[%s274 + $0x148] sm:$0xff]
      %v326 = vld [vmem:[%s274 + $0x150] sm:$0xff]
      %v327 = vld [vmem:[%s274 + $0x158] sm:$0xff]
      %v328 = vld [vmem:[%s274 + $0x160] sm:$0xff]
      %v329 = vld [vmem:[%s274 + $0x168] sm:$0xff]
      %v330 = vld [vmem:[%s274 + $0x170] sm:$0xff]
      %v331 = vld [vmem:[%s274 + $0x178] sm:$0xff]
      %v332 = vld [vmem:[%s274 + $0x180] sm:$0xff]
      %v333 = vld [vmem:[%s274 + $0x188] sm:$0xff]
      %v334 = vld [vmem:[%s274 + $0x190] sm:$0xff]
      %v335 = vld [vmem:[%s274 + $0x198] sm:$0xff]
      %v336 = vld [vmem:[%s274 + $0x1a0] sm:$0xff]
      %v337 = vld [vmem:[%s274 + $0x1a8] sm:$0xff]
      %v338 = vld [vmem:[%s274 + $0x1b0] sm:$0xff]
      %v339 = vld [vmem:[%s274 + $0x1b8] sm:$0xff]
      %v340 = vld [vmem:[%s274 + $0x1c0] sm:$0xff]
      %v341 = vld [vmem:[%s274 + $0x1c8] sm:$0xff]
      %v342 = vld [vmem:[%s274 + $0x1d0] sm:$0xff]
      %v343 = vld [vmem:[%s274 + $0x1d8] sm:$0xff]
      %v344 = vld [vmem:[%s274 + $0x1e0] sm:$0xff]
      %v345 = vld [vmem:[%s274 + $0x1e8] sm:$0xff]
      %v346 = vld [vmem:[%s274 + $0x1f0] sm:$0xff]
      %v347 = vld [vmem:[%s274 + $0x1f8] sm:$0xff]
      %v348 = vld [vmem:[%s274 + $0x200] sm:$0xff]
      %v349 = vld [vmem:[%s274 + $0x208] sm:$0xff]
      %v350 = vld [vmem:[%s274 + $0x210] sm:$0xff]
      %v351 = vld [vmem:[%s274 + $0x218] sm:$0xff]
      %v352 = vld [vmem:[%s274 + $0x220] sm:$0xff]
      %v353 = vld [vmem:[%s274 + $0x228] sm:$0xff]
      %v354 = vld [vmem:[%s274 + $0x230] sm:$0xff]
      %v355 = vld [vmem:[%s274 + $0x238] sm:$0xff]
      %v356 = vld [vmem:[%s274 + $0x240] sm:$0xff]
      %v357 = vld [vmem:[%s274 + $0x248] sm:$0xff]
      %v358 = vld [vmem:[%s274 + $0x250] sm:$0xff]
      %v359 = vld [vmem:[%s274 + $0x258] sm:$0xff]
      %v360 = vld [vmem:[%s274 + $0x260] sm:$0xff]
      %v361 = vld [vmem:[%s274 + $0x268] sm:$0xff]
      %v362 = vld [vmem:[%s274 + $0x270] sm:$0xff]
      %v363 = vld [vmem:[%s274 + $0x278] sm:$0xff]
      %v364 = vpack.c.bf16 %v285, %v284
      %v365 = vpack.c.bf16 %v287, %v286
      %v366 = vpack.c.bf16 %v289, %v288
      %v367 = vpack.c.bf16 %v291, %v290
      %v368 = vpack.c.bf16 %v293, %v292
      %v369 = vpack.c.bf16 %v295, %v294
      %v370 = vpack.c.bf16 %v297, %v296
      %v371 = vpack.c.bf16 %v299, %v298
      %v372 = vpack.c.bf16 %v301, %v300
      %v373 = vpack.c.bf16 %v303, %v302
      %v374 = vpack.c.bf16 %v305, %v304
      %v375 = vpack.c.bf16 %v307, %v306
      %v376 = vpack.c.bf16 %v309, %v308
      %v377 = vpack.c.bf16 %v311, %v310
      %v378 = vpack.c.bf16 %v313, %v312
      %v379 = vpack.c.bf16 %v315, %v314
      %v380 = vpack.c.bf16 %v317, %v316
      %v381 = vpack.c.bf16 %v319, %v318
      %v382 = vpack.c.bf16 %v321, %v320
      %v383 = vpack.c.bf16 %v323, %v322
      %v384 = vpack.c.bf16 %v325, %v324
      %v385 = vpack.c.bf16 %v327, %v326
      %v386 = vpack.c.bf16 %v329, %v328
      %v387 = vpack.c.bf16 %v331, %v330
      %v388 = vpack.c.bf16 %v333, %v332
      %v389 = vpack.c.bf16 %v335, %v334
      %v390 = vpack.c.bf16 %v337, %v336
      %v391 = vpack.c.bf16 %v339, %v338
      %v392 = vpack.c.bf16 %v341, %v340
      %v393 = vpack.c.bf16 %v343, %v342
      %v394 = vpack.c.bf16 %v345, %v344
      %v395 = vpack.c.bf16 %v347, %v346
      %v396 = vpack.c.bf16 %v349, %v348
      %v397 = vpack.c.bf16 %v351, %v350
      %v398 = vpack.c.bf16 %v353, %v352
      %v399 = vpack.c.bf16 %v355, %v354
      %v400 = vpack.c.bf16 %v357, %v356
      %v401 = vpack.c.bf16 %v359, %v358
      %v402 = vpack.c.bf16 %v361, %v360
      %v403 = vpack.c.bf16 %v363, %v362
      %v404 = vld [vmem:[%s3] sm:$0xff]
      %v405 = vld [vmem:[%s3 + $0x8] sm:$0xff]
      %v406 = vld [vmem:[%s3 + $0x10] sm:$0xff]
      %v407 = vld [vmem:[%s3 + $0x18] sm:$0xff]
      %v408 = vlaneseq
      %v409 = vshrl.u32 %v408, 7
      %v410 = vsub.s32 0, %v409
      %v411 = vrot.slane %v282, %v410
      %v412 = vlaneseq
      %v413 = vshrl.u32 %v412, 7
      %v414 = vsub.s32 0, %v413
      %v415 = vrot.slane %v283, %v414
      %v420 = vunpack.c.l.b16 %v404
      %v421 = vunpack.c.h.b16 %v404
      %v422 = vunpack.c.l.b16 %v405
      %v423 = vunpack.c.h.b16 %v405
      %v424 = vunpack.c.l.b16 %v406
      %v425 = vunpack.c.h.b16 %v406
      %v426 = vunpack.c.l.b16 %v407
      %v427 = vunpack.c.h.b16 %v407
      %v428 = vpack.c.b16 %v422, %v420
      %v429 = vpack.c.b16 %v423, %v421
      %v430 = vpack.c.b16 %v426, %v424
      %v431 = vpack.c.b16 %v427, %v425
      %vm436 = vcmask 261120
      %v438 = vsel %vm436, %v364, 0
      %v441 = vsel %vm436, %v365, 0
      %v444 = vsel %vm436, %v366, 0
      %v447 = vsel %vm436, %v367, 0
      %v450 = vsel %vm436, %v368, 0
      %v453 = vsel %vm436, %v369, 0
      %v456 = vsel %vm436, %v370, 0
      %v459 = vsel %vm436, %v371, 0
      %v462 = vsel %vm436, %v372, 0
      %v465 = vsel %vm436, %v373, 0
      %v468 = vsel %vm436, %v374, 0
      %v471 = vsel %vm436, %v375, 0
      %v474 = vsel %vm436, %v376, 0
      %v477 = vsel %vm436, %v377, 0
      %v480 = vsel %vm436, %v378, 0
      %v483 = vsel %vm436, %v379, 0
      %v486 = vsel %vm436, %v380, 0
      %v489 = vsel %vm436, %v381, 0
      %v492 = vsel %vm436, %v382, 0
      %v495 = vsel %vm436, %v383, 0
      %v498 = vsel %vm436, %v384, 0
      %v501 = vsel %vm436, %v385, 0
      %v504 = vsel %vm436, %v386, 0
      %v507 = vsel %vm436, %v387, 0
      %v510 = vsel %vm436, %v388, 0
      %v513 = vsel %vm436, %v389, 0
      %v516 = vsel %vm436, %v390, 0
      %v519 = vsel %vm436, %v391, 0
      %v522 = vsel %vm436, %v392, 0
      %v525 = vsel %vm436, %v393, 0
      %v528 = vsel %vm436, %v394, 0
      %v531 = vsel %vm436, %v395, 0
      %v534 = vsel %vm436, %v396, 0
      %v537 = vsel %vm436, %v397, 0
      %v540 = vsel %vm436, %v398, 0
      %v543 = vsel %vm436, %v399, 0
      %v546 = vsel %vm436, %v400, 0
      %v549 = vsel %vm436, %v401, 0
      %v552 = vsel %vm436, %v402, 0
      %v555 = vsel %vm436, %v403, 0
      %557 = vmatprep.subr.bf16.mxu0 %v429
      %558 = vmatpush1.bf16.msra.mxu0 %v428
      %559 = vmatprep.subr.bf16.mxu0 %v431
      %560 = vmatpush1.bf16.msra.mxu0 %v430
      %561 = vmatprep.subr.bf16.mxu0 0
      %562 = vmatpush1.bf16.msra.mxu0 0
      %563 = vmatprep.subr.bf16.mxu0 0
      %564 = vmatpush1.bf16.msra.mxu0 0
      %565 = vmatprep.subr.bf16.mxu0 0
      %566 = vmatpush1.bf16.msra.mxu0 0
      %567 = vmatprep.subr.bf16.mxu0 0
      %568 = vmatpush1.bf16.msra.mxu0 0
      %569 = vmatprep.subr.bf16.mxu0 0
      %570 = vmatpush1.bf16.msra.mxu0 0
      %571 = vmatprep.subr.bf16.mxu0 0
      %572 = vmatpush1.bf16.msra.mxu0 0
      %573 = vmatprep.subr.bf16.mxu0 0
      %574 = vmatpush1.bf16.msra.mxu0 0
      %575 = vmatprep.subr.bf16.mxu0 0
      %576 = vmatpush1.bf16.msra.mxu0 0
      %577 = vmatprep.subr.bf16.mxu0 0
      %578 = vmatpush1.bf16.msra.mxu0 0
      %579 = vmatprep.subr.bf16.mxu0 0
      %580 = vmatpush1.bf16.msra.mxu0 0
      %581 = vmatprep.subr.bf16.mxu0 0
      %582 = vmatpush1.bf16.msra.mxu0 0
      %583 = vmatprep.subr.bf16.mxu0 0
      %584 = vmatpush1.bf16.msra.mxu0 0
      %585 = vmatprep.subr.bf16.mxu0 0
      %586 = vmatpush1.bf16.msra.mxu0 0
      %587 = vmatprep.subr.bf16.mxu0 0
      %588 = vmatpush1.bf16.msra.mxu0 0
      %589 = vmatprep.mubr.bf16.mxu0 0
      %590 = vmatmul.mubr.bf16.gmra.mrb[0].mxu0 %v438
      %v591 = vpop.f32.mrb[0].mxu0
      %v592 = vadd.f32 %v411, %v591
      %v593 = vpop.f32.mrb[0].mxu0
      %v594 = vadd.f32 %v415, %v593
      %v595 = vpop.f32.mrb[0].mxu0
      %v596 = vadd.f32 %v411, %v595
      %v597 = vpop.f32.mrb[0].mxu0
      %v598 = vadd.f32 %v415, %v597
      %599 = vmatprep.mubr.bf16.mxu0 0
      %600 = vmatmul.mubr.bf16.gmra.mrb[0].mxu0 %v441
      %v601 = vpop.f32.mrb[0].mxu0
      %v602 = vadd.f32 %v411, %v601
      %v603 = vpop.f32.mrb[0].mxu0
      %v604 = vadd.f32 %v415, %v603
      %v605 = vpop.f32.mrb[0].mxu0
      %v606 = vadd.f32 %v411, %v605
      %v607 = vpop.f32.mrb[0].mxu0
      %v608 = vadd.f32 %v415, %v607
      %609 = vmatprep.mubr.bf16.mxu0 0
      %610 = vmatmul.mubr.bf16.gmra.mrb[0].mxu0 %v444
      %v611 = vpop.f32.mrb[0].mxu0
      %v612 = vadd.f32 %v411, %v611
      %v613 = vpop.f32.mrb[0].mxu0
      %v614 = vadd.f32 %v415, %v613
      %v615 = vpop.f32.mrb[0].mxu0
      %v616 = vadd.f32 %v411, %v615
      %v617 = vpop.f32.mrb[0].mxu0
      %v618 = vadd.f32 %v415, %v617
      %619 = vmatprep.mubr.bf16.mxu0 0
      %620 = vmatmul.mubr.bf16.gmra.mrb[0].mxu0 %v447
      %v621 = vpop.f32.mrb[0].mxu0
      %v622 = vadd.f32 %v411, %v621
      %v623 = vpop.f32.mrb[0].mxu0
      %v624 = vadd.f32 %v415, %v623
      %v625 = vpop.f32.mrb[0].mxu0
      %v626 = vadd.f32 %v411, %v625
      %v627 = vpop.f32.mrb[0].mxu0
      %v628 = vadd.f32 %v415, %v627
      %629 = vmatprep.mubr.bf16.mxu0 0
      %630 = vmatmul.mubr.bf16.gmra.mrb[0].mxu0 %v450
      %v631 = vpop.f32.mrb[0].mxu0
      %v632 = vadd.f32 %v411, %v631
      %v633 = vpop.f32.mrb[0].mxu0
      %v634 = vadd.f32 %v415, %v633
      %v635 = vpop.f32.mrb[0].mxu0
      %v636 = vadd.f32 %v411, %v635
      %v637 = vpop.f32.mrb[0].mxu0
      %v638 = vadd.f32 %v415, %v637
      %639 = vmatprep.mubr.bf16.mxu0 0
      %640 = vmatmul.mubr.bf16.gmra.mrb[0].mxu0 %v453
      %v641 = vpop.f32.mrb[0].mxu0
      %v642 = vadd.f32 %v411, %v641
      %v643 = vpop.f32.mrb[0].mxu0
      %v644 = vadd.f32 %v415, %v643
      %v645 = vpop.f32.mrb[0].mxu0
      %v646 = vadd.f32 %v411, %v645
      %v647 = vpop.f32.mrb[0].mxu0
      %v648 = vadd.f32 %v415, %v647
      %649 = vmatprep.mubr.bf16.mxu0 0
      %650 = vmatmul.mubr.bf16.gmra.mrb[0].mxu0 %v456
      %v651 = vpop.f32.mrb[0].mxu0
      %v652 = vadd.f32 %v411, %v651
      %v653 = vpop.f32.mrb[0].mxu0
      %v654 = vadd.f32 %v415, %v653
      %v655 = vpop.f32.mrb[0].mxu0
      %v656 = vadd.f32 %v411, %v655
      %v657 = vpop.f32.mrb[0].mxu0
      %v658 = vadd.f32 %v415, %v657
      %659 = vmatprep.mubr.bf16.mxu0 0
      %660 = vmatmul.mubr.bf16.gmra.mrb[0].mxu0 %v459
      %v661 = vpop.f32.mrb[0].mxu0
      %v662 = vadd.f32 %v411, %v661
      %v663 = vpop.f32.mrb[0].mxu0
      %v664 = vadd.f32 %v415, %v663
      %v665 = vpop.f32.mrb[0].mxu0
      %v666 = vadd.f32 %v411, %v665
      %v667 = vpop.f32.mrb[0].mxu0
      %v668 = vadd.f32 %v415, %v667
      %669 = vmatprep.mubr.bf16.mxu0 0
      %670 = vmatmul.mubr.bf16.gmra.mrb[0].mxu0 %v462
      %v671 = vpop.f32.mrb[0].mxu0
      %v672 = vadd.f32 %v411, %v671
      %v673 = vpop.f32.mrb[0].mxu0
      %v674 = vadd.f32 %v415, %v673
      %v675 = vpop.f32.mrb[0].mxu0
      %v676 = vadd.f32 %v411, %v675
      %v677 = vpop.f32.mrb[0].mxu0
      %v678 = vadd.f32 %v415, %v677
      %679 = vmatprep.mubr.bf16.mxu0 0
      %680 = vmatmul.mubr.bf16.gmra.mrb[0].mxu0 %v465
      %v681 = vpop.f32.mrb[0].mxu0
      %v682 = vadd.f32 %v411, %v681
      %v683 = vpop.f32.mrb[0].mxu0
      %v684 = vadd.f32 %v415, %v683
      %v685 = vpop.f32.mrb[0].mxu0
      %v686 = vadd.f32 %v411, %v685
      %v687 = vpop.f32.mrb[0].mxu0
      %v688 = vadd.f32 %v415, %v687
      %689 = vmatprep.mubr.bf16.mxu0 0
      %690 = vmatmul.mubr.bf16.gmra.mrb[0].mxu0 %v468
      %v691 = vpop.f32.mrb[0].mxu0
      %v692 = vadd.f32 %v411, %v691
      %v693 = vpop.f32.mrb[0].mxu0
      %v694 = vadd.f32 %v415, %v693
      %v695 = vpop.f32.mrb[0].mxu0
      %v696 = vadd.f32 %v411, %v695
      %v697 = vpop.f32.mrb[0].mxu0
      %v698 = vadd.f32 %v415, %v697
      %699 = vmatprep.mubr.bf16.mxu0 0
      %700 = vmatmul.mubr.bf16.gmra.mrb[0].mxu0 %v471
      %v701 = vpop.f32.mrb[0].mxu0
      %v702 = vadd.f32 %v411, %v701
      %v703 = vpop.f32.mrb[0].mxu0
      %v704 = vadd.f32 %v415, %v703
      %v705 = vpop.f32.mrb[0].mxu0
      %v706 = vadd.f32 %v411, %v705
      %v707 = vpop.f32.mrb[0].mxu0
      %v708 = vadd.f32 %v415, %v707
      %709 = vmatprep.mubr.bf16.mxu0 0
      %710 = vmatmul.mubr.bf16.gmra.mrb[0].mxu0 %v474
      %v711 = vpop.f32.mrb[0].mxu0
      %v712 = vadd.f32 %v411, %v711
      %v713 = vpop.f32.mrb[0].mxu0
      %v714 = vadd.f32 %v415, %v713
      %v715 = vpop.f32.mrb[0].mxu0
      %v716 = vadd.f32 %v411, %v715
      %v717 = vpop.f32.mrb[0].mxu0
      %v718 = vadd.f32 %v415, %v717
      %719 = vmatprep.mubr.bf16.mxu0 0
      %720 = vmatmul.mubr.bf16.gmra.mrb[0].mxu0 %v477
      %v721 = vpop.f32.mrb[0].mxu0
      %v722 = vadd.f32 %v411, %v721
      %v723 = vpop.f32.mrb[0].mxu0
      %v724 = vadd.f32 %v415, %v723
      %v725 = vpop.f32.mrb[0].mxu0
      %v726 = vadd.f32 %v411, %v725
      %v727 = vpop.f32.mrb[0].mxu0
      %v728 = vadd.f32 %v415, %v727
      %729 = vmatprep.mubr.bf16.mxu0 0
      %730 = vmatmul.mubr.bf16.gmra.mrb[0].mxu0 %v480
      %v731 = vpop.f32.mrb[0].mxu0
      %v732 = vadd.f32 %v411, %v731
      %v733 = vpop.f32.mrb[0].mxu0
      %v734 = vadd.f32 %v415, %v733
      %v735 = vpop.f32.mrb[0].mxu0
      %v736 = vadd.f32 %v411, %v735
      %v737 = vpop.f32.mrb[0].mxu0
      %v738 = vadd.f32 %v415, %v737
      %739 = vmatprep.mubr.bf16.mxu0 0
      %740 = vmatmul.mubr.bf16.gmra.mrb[0].mxu0 %v483
      %v741 = vpop.f32.mrb[0].mxu0
      %v742 = vadd.f32 %v411, %v741
      %v743 = vpop.f32.mrb[0].mxu0
      %v744 = vadd.f32 %v415, %v743
      %v745 = vpop.f32.mrb[0].mxu0
      %v746 = vadd.f32 %v411, %v745
      %v747 = vpop.f32.mrb[0].mxu0
      %v748 = vadd.f32 %v415, %v747
      %749 = vmatprep.mubr.bf16.mxu0 0
      %750 = vmatmul.mubr.bf16.gmra.mrb[0].mxu0 %v486
      %v751 = vpop.f32.mrb[0].mxu0
      %v752 = vadd.f32 %v411, %v751
      %v753 = vpop.f32.mrb[0].mxu0
      %v754 = vadd.f32 %v415, %v753
      %v755 = vpop.f32.mrb[0].mxu0
      %v756 = vadd.f32 %v411, %v755
      %v757 = vpop.f32.mrb[0].mxu0
      %v758 = vadd.f32 %v415, %v757
      %759 = vmatprep.mubr.bf16.mxu0 0
      %760 = vmatmul.mubr.bf16.gmra.mrb[0].mxu0 %v489
      %v761 = vpop.f32.mrb[0].mxu0
      %v762 = vadd.f32 %v411, %v761
      %v763 = vpop.f32.mrb[0].mxu0
      %v764 = vadd.f32 %v415, %v763
      %v765 = vpop.f32.mrb[0].mxu0
      %v766 = vadd.f32 %v411, %v765
      %v767 = vpop.f32.mrb[0].mxu0
      %v768 = vadd.f32 %v415, %v767
      %769 = vmatprep.mubr.bf16.mxu0 0
      %770 = vmatmul.mubr.bf16.gmra.mrb[0].mxu0 %v492
      %v771 = vpop.f32.mrb[0].mxu0
      %v772 = vadd.f32 %v411, %v771
      %v773 = vpop.f32.mrb[0].mxu0
      %v774 = vadd.f32 %v415, %v773
      %v775 = vpop.f32.mrb[0].mxu0
      %v776 = vadd.f32 %v411, %v775
      %v777 = vpop.f32.mrb[0].mxu0
      %v778 = vadd.f32 %v415, %v777
      %779 = vmatprep.mubr.bf16.mxu0 0
      %780 = vmatmul.mubr.bf16.gmra.mrb[0].mxu0 %v495
      %v781 = vpop.f32.mrb[0].mxu0
      %v782 = vadd.f32 %v411, %v781
      %v783 = vpop.f32.mrb[0].mxu0
      %v784 = vadd.f32 %v415, %v783
      %v785 = vpop.f32.mrb[0].mxu0
      %v786 = vadd.f32 %v411, %v785
      %v787 = vpop.f32.mrb[0].mxu0
      %v788 = vadd.f32 %v415, %v787
      %789 = vmatprep.mubr.bf16.mxu0 0
      %790 = vmatmul.mubr.bf16.gmra.mrb[0].mxu0 %v498
      %v791 = vpop.f32.mrb[0].mxu0
      %v792 = vadd.f32 %v411, %v791
      %v793 = vpop.f32.mrb[0].mxu0
      %v794 = vadd.f32 %v415, %v793
      %v795 = vpop.f32.mrb[0].mxu0
      %v796 = vadd.f32 %v411, %v795
      %v797 = vpop.f32.mrb[0].mxu0
      %v798 = vadd.f32 %v415, %v797
      %799 = vmatprep.mubr.bf16.mxu0 0
      %800 = vmatmul.mubr.bf16.gmra.mrb[0].mxu0 %v501
      %v801 = vpop.f32.mrb[0].mxu0
      %v802 = vadd.f32 %v411, %v801
      %v803 = vpop.f32.mrb[0].mxu0
      %v804 = vadd.f32 %v415, %v803
      %v805 = vpop.f32.mrb[0].mxu0
      %v806 = vadd.f32 %v411, %v805
      %v807 = vpop.f32.mrb[0].mxu0
      %v808 = vadd.f32 %v415, %v807
      %809 = vmatprep.mubr.bf16.mxu0 0
      %810 = vmatmul.mubr.bf16.gmra.mrb[0].mxu0 %v504
      %v811 = vpop.f32.mrb[0].mxu0
      %v812 = vadd.f32 %v411, %v811
      %v813 = vpop.f32.mrb[0].mxu0
      %v814 = vadd.f32 %v415, %v813
      %v815 = vpop.f32.mrb[0].mxu0
      %v816 = vadd.f32 %v411, %v815
      %v817 = vpop.f32.mrb[0].mxu0
      %v818 = vadd.f32 %v415, %v817
      %819 = vmatprep.mubr.bf16.mxu0 0
      %820 = vmatmul.mubr.bf16.gmra.mrb[0].mxu0 %v507
      %v821 = vpop.f32.mrb[0].mxu0
      %v822 = vadd.f32 %v411, %v821
      %v823 = vpop.f32.mrb[0].mxu0
      %v824 = vadd.f32 %v415, %v823
      %v825 = vpop.f32.mrb[0].mxu0
      %v826 = vadd.f32 %v411, %v825
      %v827 = vpop.f32.mrb[0].mxu0
      %v828 = vadd.f32 %v415, %v827
      %829 = vmatprep.mubr.bf16.mxu0 0
      %830 = vmatmul.mubr.bf16.gmra.mrb[0].mxu0 %v510
      %v831 = vpop.f32.mrb[0].mxu0
      %v832 = vadd.f32 %v411, %v831
      %v833 = vpop.f32.mrb[0].mxu0
      %v834 = vadd.f32 %v415, %v833
      %v835 = vpop.f32.mrb[0].mxu0
      %v836 = vadd.f32 %v411, %v835
      %v837 = vpop.f32.mrb[0].mxu0
      %v838 = vadd.f32 %v415, %v837
      %839 = vmatprep.mubr.bf16.mxu0 0
      %840 = vmatmul.mubr.bf16.gmra.mrb[0].mxu0 %v513
      %v841 = vpop.f32.mrb[0].mxu0
      %v842 = vadd.f32 %v411, %v841
      %v843 = vpop.f32.mrb[0].mxu0
      %v844 = vadd.f32 %v415, %v843
      %v845 = vpop.f32.mrb[0].mxu0
      %v846 = vadd.f32 %v411, %v845
      %v847 = vpop.f32.mrb[0].mxu0
      %v848 = vadd.f32 %v415, %v847
      %849 = vmatprep.mubr.bf16.mxu0 0
      %850 = vmatmul.mubr.bf16.gmra.mrb[0].mxu0 %v516
      %v851 = vpop.f32.mrb[0].mxu0
      %v852 = vadd.f32 %v411, %v851
      %v853 = vpop.f32.mrb[0].mxu0
      %v854 = vadd.f32 %v415, %v853
      %v855 = vpop.f32.mrb[0].mxu0
      %v856 = vadd.f32 %v411, %v855
      %v857 = vpop.f32.mrb[0].mxu0
      %v858 = vadd.f32 %v415, %v857
      %859 = vmatprep.mubr.bf16.mxu0 0
      %860 = vmatmul.mubr.bf16.gmra.mrb[0].mxu0 %v519
      %v861 = vpop.f32.mrb[0].mxu0
      %v862 = vadd.f32 %v411, %v861
      %v863 = vpop.f32.mrb[0].mxu0
      %v864 = vadd.f32 %v415, %v863
      %v865 = vpop.f32.mrb[0].mxu0
      %v866 = vadd.f32 %v411, %v865
      %v867 = vpop.f32.mrb[0].mxu0
      %v868 = vadd.f32 %v415, %v867
      %869 = vmatprep.mubr.bf16.mxu0 0
      %870 = vmatmul.mubr.bf16.gmra.mrb[0].mxu0 %v522
      %v871 = vpop.f32.mrb[0].mxu0
      %v872 = vadd.f32 %v411, %v871
      %v873 = vpop.f32.mrb[0].mxu0
      %v874 = vadd.f32 %v415, %v873
      %v875 = vpop.f32.mrb[0].mxu0
      %v876 = vadd.f32 %v411, %v875
      %v877 = vpop.f32.mrb[0].mxu0
      %v878 = vadd.f32 %v415, %v877
      %879 = vmatprep.mubr.bf16.mxu0 0
      %880 = vmatmul.mubr.bf16.gmra.mrb[0].mxu0 %v525
      %v881 = vpop.f32.mrb[0].mxu0
      %v882 = vadd.f32 %v411, %v881
      %v883 = vpop.f32.mrb[0].mxu0
      %v884 = vadd.f32 %v415, %v883
      %v885 = vpop.f32.mrb[0].mxu0
      %v886 = vadd.f32 %v411, %v885
      %v887 = vpop.f32.mrb[0].mxu0
      %v888 = vadd.f32 %v415, %v887
      %889 = vmatprep.mubr.bf16.mxu0 0
      %890 = vmatmul.mubr.bf16.gmra.mrb[0].mxu0 %v528
      %v891 = vpop.f32.mrb[0].mxu0
      %v892 = vadd.f32 %v411, %v891
      %v893 = vpop.f32.mrb[0].mxu0
      %v894 = vadd.f32 %v415, %v893
      %v895 = vpop.f32.mrb[0].mxu0
      %v896 = vadd.f32 %v411, %v895
      %v897 = vpop.f32.mrb[0].mxu0
      %v898 = vadd.f32 %v415, %v897
      %899 = vmatprep.mubr.bf16.mxu0 0
      %900 = vmatmul.mubr.bf16.gmra.mrb[0].mxu0 %v531
      %v901 = vpop.f32.mrb[0].mxu0
      %v902 = vadd.f32 %v411, %v901
      %v903 = vpop.f32.mrb[0].mxu0
      %v904 = vadd.f32 %v415, %v903
      %v905 = vpop.f32.mrb[0].mxu0
      %v906 = vadd.f32 %v411, %v905
      %v907 = vpop.f32.mrb[0].mxu0
      %v908 = vadd.f32 %v415, %v907
      %909 = vmatprep.mubr.bf16.mxu0 0
      %910 = vmatmul.mubr.bf16.gmra.mrb[0].mxu0 %v534
      %v911 = vpop.f32.mrb[0].mxu0
      %v912 = vadd.f32 %v411, %v911
      %v913 = vpop.f32.mrb[0].mxu0
      %v914 = vadd.f32 %v415, %v913
      %v915 = vpop.f32.mrb[0].mxu0
      %v916 = vadd.f32 %v411, %v915
      %v917 = vpop.f32.mrb[0].mxu0
      %v918 = vadd.f32 %v415, %v917
      %919 = vmatprep.mubr.bf16.mxu0 0
      %920 = vmatmul.mubr.bf16.gmra.mrb[0].mxu0 %v537
      %v921 = vpop.f32.mrb[0].mxu0
      %v922 = vadd.f32 %v411, %v921
      %v923 = vpop.f32.mrb[0].mxu0
      %v924 = vadd.f32 %v415, %v923
      %v925 = vpop.f32.mrb[0].mxu0
      %v926 = vadd.f32 %v411, %v925
      %v927 = vpop.f32.mrb[0].mxu0
      %v928 = vadd.f32 %v415, %v927
      %929 = vmatprep.mubr.bf16.mxu0 0
      %930 = vmatmul.mubr.bf16.gmra.mrb[0].mxu0 %v540
      %v931 = vpop.f32.mrb[0].mxu0
      %v932 = vadd.f32 %v411, %v931
      %v933 = vpop.f32.mrb[0].mxu0
      %v934 = vadd.f32 %v415, %v933
      %v935 = vpop.f32.mrb[0].mxu0
      %v936 = vadd.f32 %v411, %v935
      %v937 = vpop.f32.mrb[0].mxu0
      %v938 = vadd.f32 %v415, %v937
      %939 = vmatprep.mubr.bf16.mxu0 0
      %940 = vmatmul.mubr.bf16.gmra.mrb[0].mxu0 %v543
      %v941 = vpop.f32.mrb[0].mxu0
      %v942 = vadd.f32 %v411, %v941
      %v943 = vpop.f32.mrb[0].mxu0
      %v944 = vadd.f32 %v415, %v943
      %v945 = vpop.f32.mrb[0].mxu0
      %v946 = vadd.f32 %v411, %v945
      %v947 = vpop.f32.mrb[0].mxu0
      %v948 = vadd.f32 %v415, %v947
      %949 = vmatprep.mubr.bf16.mxu0 0
      %950 = vmatmul.mubr.bf16.gmra.mrb[0].mxu0 %v546
      %v951 = vpop.f32.mrb[0].mxu0
      %v952 = vadd.f32 %v411, %v951
      %v953 = vpop.f32.mrb[0].mxu0
      %v954 = vadd.f32 %v415, %v953
      %v955 = vpop.f32.mrb[0].mxu0
      %v956 = vadd.f32 %v411, %v955
      %v957 = vpop.f32.mrb[0].mxu0
      %v958 = vadd.f32 %v415, %v957
      %959 = vmatprep.mubr.bf16.mxu0 0
      %960 = vmatmul.mubr.bf16.gmra.mrb[0].mxu0 %v549
      %v961 = vpop.f32.mrb[0].mxu0
      %v962 = vadd.f32 %v411, %v961
      %v963 = vpop.f32.mrb[0].mxu0
      %v964 = vadd.f32 %v415, %v963
      %v965 = vpop.f32.mrb[0].mxu0
      %v966 = vadd.f32 %v411, %v965
      %v967 = vpop.f32.mrb[0].mxu0
      %v968 = vadd.f32 %v415, %v967
      %969 = vmatprep.mubr.bf16.mxu0 0
      %970 = vmatmul.mubr.bf16.gmra.mrb[0].mxu0 %v552
      %v971 = vpop.f32.mrb[0].mxu0
      %v972 = vadd.f32 %v411, %v971
      %v973 = vpop.f32.mrb[0].mxu0
      %v974 = vadd.f32 %v415, %v973
      %v975 = vpop.f32.mrb[0].mxu0
      %v976 = vadd.f32 %v411, %v975
      %v977 = vpop.f32.mrb[0].mxu0
      %v978 = vadd.f32 %v415, %v977
      %979 = vmatprep.mubr.bf16.mxu0 0
      %980 = vmatmul.mubr.bf16.gmra.mrb[0].mxu0 %v555
      %v981 = vpop.f32.mrb[0].mxu0
      %v982 = vadd.f32 %v411, %v981
      %v983 = vpop.f32.mrb[0].mxu0
      %v984 = vadd.f32 %v415, %v983
      %v985 = vpop.f32.mrb[0].mxu0
      %v986 = vadd.f32 %v411, %v985
      %v987 = vpop.f32.mrb[0].mxu0
      %v988 = vadd.f32 %v415, %v987
      %989 = vdwg.mxu0
      %990 = vadd.xlane.f32.xlu0 %v592
      %v991 = vpop.xlane.xlu0 %990
      %992 = vadd.xlane.f32.xlu0 %v596
      %v993 = vpop.xlane.xlu0 %992
      %994 = vadd.xlane.f32.xlu0 %v602
      %v995 = vpop.xlane.xlu0 %994
      %996 = vadd.xlane.f32.xlu0 %v606
      %v997 = vpop.xlane.xlu0 %996
      %998 = vadd.xlane.f32.xlu0 %v612
      %v999 = vpop.xlane.xlu0 %998
      %1000 = vadd.xlane.f32.xlu0 %v616
      %v1001 = vpop.xlane.xlu0 %1000
      %1002 = vadd.xlane.f32.xlu0 %v622
      %v1003 = vpop.xlane.xlu0 %1002
      %1004 = vadd.xlane.f32.xlu0 %v626
      %v1005 = vpop.xlane.xlu0 %1004
      %1006 = vadd.xlane.f32.xlu0 %v632
      %v1007 = vpop.xlane.xlu0 %1006
      %1008 = vadd.xlane.f32.xlu0 %v636
      %v1009 = vpop.xlane.xlu0 %1008
      %1010 = vadd.xlane.f32.xlu0 %v642
      %v1011 = vpop.xlane.xlu0 %1010
      %1012 = vadd.xlane.f32.xlu0 %v646
      %v1013 = vpop.xlane.xlu0 %1012
      %1014 = vadd.xlane.f32.xlu0 %v652
      %v1015 = vpop.xlane.xlu0 %1014
      %1016 = vadd.xlane.f32.xlu0 %v656
      %v1017 = vpop.xlane.xlu0 %1016
      %1018 = vadd.xlane.f32.xlu0 %v662
      %v1019 = vpop.xlane.xlu0 %1018
      %1020 = vadd.xlane.f32.xlu0 %v666
      %v1021 = vpop.xlane.xlu0 %1020
      %1022 = vadd.xlane.f32.xlu0 %v672
      %v1023 = vpop.xlane.xlu0 %1022
      %1024 = vadd.xlane.f32.xlu0 %v676
      %v1025 = vpop.xlane.xlu0 %1024
      %1026 = vadd.xlane.f32.xlu0 %v682
      %v1027 = vpop.xlane.xlu0 %1026
      %1028 = vadd.xlane.f32.xlu0 %v686
      %v1029 = vpop.xlane.xlu0 %1028
      %1030 = vadd.xlane.f32.xlu0 %v692
      %v1031 = vpop.xlane.xlu0 %1030
      %1032 = vadd.xlane.f32.xlu0 %v696
      %v1033 = vpop.xlane.xlu0 %1032
      %1034 = vadd.xlane.f32.xlu0 %v702
      %v1035 = vpop.xlane.xlu0 %1034
      %1036 = vadd.xlane.f32.xlu0 %v706
      %v1037 = vpop.xlane.xlu0 %1036
      %1038 = vadd.xlane.f32.xlu0 %v712
      %v1039 = vpop.xlane.xlu0 %1038
      %1040 = vadd.xlane.f32.xlu0 %v716
      %v1041 = vpop.xlane.xlu0 %1040
      %1042 = vadd.xlane.f32.xlu0 %v722
      %v1043 = vpop.xlane.xlu0 %1042
      %1044 = vadd.xlane.f32.xlu0 %v726
      %v1045 = vpop.xlane.xlu0 %1044
      %1046 = vadd.xlane.f32.xlu0 %v732
      %v1047 = vpop.xlane.xlu0 %1046
      %1048 = vadd.xlane.f32.xlu0 %v736
      %v1049 = vpop.xlane.xlu0 %1048
      %1050 = vadd.xlane.f32.xlu0 %v742
      %v1051 = vpop.xlane.xlu0 %1050
      %1052 = vadd.xlane.f32.xlu0 %v746
      %v1053 = vpop.xlane.xlu0 %1052
      %1054 = vadd.xlane.f32.xlu0 %v752
      %v1055 = vpop.xlane.xlu0 %1054
      %1056 = vadd.xlane.f32.xlu0 %v756
      %v1057 = vpop.xlane.xlu0 %1056
      %1058 = vadd.xlane.f32.xlu0 %v762
      %v1059 = vpop.xlane.xlu0 %1058
      %1060 = vadd.xlane.f32.xlu0 %v766
      %v1061 = vpop.xlane.xlu0 %1060
      %1062 = vadd.xlane.f32.xlu0 %v772
      %v1063 = vpop.xlane.xlu0 %1062
      %1064 = vadd.xlane.f32.xlu0 %v776
      %v1065 = vpop.xlane.xlu0 %1064
      %1066 = vadd.xlane.f32.xlu0 %v782
      %v1067 = vpop.xlane.xlu0 %1066
      %1068 = vadd.xlane.f32.xlu0 %v786
      %v1069 = vpop.xlane.xlu0 %1068
      %1070 = vadd.xlane.f32.xlu0 %v792
      %v1071 = vpop.xlane.xlu0 %1070
      %1072 = vadd.xlane.f32.xlu0 %v796
      %v1073 = vpop.xlane.xlu0 %1072
      %1074 = vadd.xlane.f32.xlu0 %v802
      %v1075 = vpop.xlane.xlu0 %1074
      %1076 = vadd.xlane.f32.xlu0 %v806
      %v1077 = vpop.xlane.xlu0 %1076
      %1078 = vadd.xlane.f32.xlu0 %v812
      %v1079 = vpop.xlane.xlu0 %1078
      %1080 = vadd.xlane.f32.xlu0 %v816
      %v1081 = vpop.xlane.xlu0 %1080
      %1082 = vadd.xlane.f32.xlu0 %v822
      %v1083 = vpop.xlane.xlu0 %1082
      %1084 = vadd.xlane.f32.xlu0 %v826
      %v1085 = vpop.xlane.xlu0 %1084
      %1086 = vadd.xlane.f32.xlu0 %v832
      %v1087 = vpop.xlane.xlu0 %1086
      %1088 = vadd.xlane.f32.xlu0 %v836
      %v1089 = vpop.xlane.xlu0 %1088
      %1090 = vadd.xlane.f32.xlu0 %v842
      %v1091 = vpop.xlane.xlu0 %1090
      %1092 = vadd.xlane.f32.xlu0 %v846
      %v1093 = vpop.xlane.xlu0 %1092
      %1094 = vadd.xlane.f32.xlu0 %v852
      %v1095 = vpop.xlane.xlu0 %1094
      %1096 = vadd.xlane.f32.xlu0 %v856
      %v1097 = vpop.xlane.xlu0 %1096
      %1098 = vadd.xlane.f32.xlu0 %v862
      %v1099 = vpop.xlane.xlu0 %1098
      %1100 = vadd.xlane.f32.xlu0 %v866
      %v1101 = vpop.xlane.xlu0 %1100
      %1102 = vadd.xlane.f32.xlu0 %v872
      %v1103 = vpop.xlane.xlu0 %1102
      %1104 = vadd.xlane.f32.xlu0 %v876
      %v1105 = vpop.xlane.xlu0 %1104
      %1106 = vadd.xlane.f32.xlu0 %v882
      %v1107 = vpop.xlane.xlu0 %1106
      %1108 = vadd.xlane.f32.xlu0 %v886
      %v1109 = vpop.xlane.xlu0 %1108
      %1110 = vadd.xlane.f32.xlu0 %v892
      %v1111 = vpop.xlane.xlu0 %1110
      %1112 = vadd.xlane.f32.xlu0 %v896
      %v1113 = vpop.xlane.xlu0 %1112
      %1114 = vadd.xlane.f32.xlu0 %v902
      %v1115 = vpop.xlane.xlu0 %1114
      %1116 = vadd.xlane.f32.xlu0 %v906
      %v1117 = vpop.xlane.xlu0 %1116
      %1118 = vadd.xlane.f32.xlu0 %v912
      %v1119 = vpop.xlane.xlu0 %1118
      %1120 = vadd.xlane.f32.xlu0 %v916
      %v1121 = vpop.xlane.xlu0 %1120
      %1122 = vadd.xlane.f32.xlu0 %v922
      %v1123 = vpop.xlane.xlu0 %1122
      %1124 = vadd.xlane.f32.xlu0 %v926
      %v1125 = vpop.xlane.xlu0 %1124
      %1126 = vadd.xlane.f32.xlu0 %v932
      %v1127 = vpop.xlane.xlu0 %1126
      %1128 = vadd.xlane.f32.xlu0 %v936
      %v1129 = vpop.xlane.xlu0 %1128
      %1130 = vadd.xlane.f32.xlu0 %v942
      %v1131 = vpop.xlane.xlu0 %1130
      %1132 = vadd.xlane.f32.xlu0 %v946
      %v1133 = vpop.xlane.xlu0 %1132
      %1134 = vadd.xlane.f32.xlu0 %v952
      %v1135 = vpop.xlane.xlu0 %1134
      %1136 = vadd.xlane.f32.xlu0 %v956
      %v1137 = vpop.xlane.xlu0 %1136
      %1138 = vadd.xlane.f32.xlu0 %v962
      %v1139 = vpop.xlane.xlu0 %1138
      %1140 = vadd.xlane.f32.xlu0 %v966
      %v1141 = vpop.xlane.xlu0 %1140
      %1142 = vadd.xlane.f32.xlu0 %v972
      %v1143 = vpop.xlane.xlu0 %1142
      %1144 = vadd.xlane.f32.xlu0 %v976
      %v1145 = vpop.xlane.xlu0 %1144
      %1146 = vadd.xlane.f32.xlu0 %v982
      %v1147 = vpop.xlane.xlu0 %1146
      %1148 = vadd.xlane.f32.xlu0 %v986
      %v1149 = vpop.xlane.xlu0 %1148
      %v1150 = vrcp.pop 128.0
      %v1151 = vmul.f32 %v991, %v1150
      %v1152 = vmul.f32 %v993, %v1150
      %v1153 = vmul.f32 %v995, %v1150
      %v1154 = vmul.f32 %v997, %v1150
      %v1155 = vmul.f32 %v999, %v1150
      %v1156 = vmul.f32 %v1001, %v1150
      %v1157 = vmul.f32 %v1003, %v1150
      %v1158 = vmul.f32 %v1005, %v1150
      %v1159 = vmul.f32 %v1007, %v1150
      %v1160 = vmul.f32 %v1009, %v1150
      %v1161 = vmul.f32 %v1011, %v1150
      %v1162 = vmul.f32 %v1013, %v1150
      %v1163 = vmul.f32 %v1015, %v1150
      %v1164 = vmul.f32 %v1017, %v1150
      %v1165 = vmul.f32 %v1019, %v1150
      %v1166 = vmul.f32 %v1021, %v1150
      %v1167 = vmul.f32 %v1023, %v1150
      %v1168 = vmul.f32 %v1025, %v1150
      %v1169 = vmul.f32 %v1027, %v1150
      %v1170 = vmul.f32 %v1029, %v1150
      %v1171 = vmul.f32 %v1031, %v1150
      %v1172 = vmul.f32 %v1033, %v1150
      %v1173 = vmul.f32 %v1035, %v1150
      %v1174 = vmul.f32 %v1037, %v1150
      %v1175 = vmul.f32 %v1039, %v1150
      %v1176 = vmul.f32 %v1041, %v1150
      %v1177 = vmul.f32 %v1043, %v1150
      %v1178 = vmul.f32 %v1045, %v1150
      %v1179 = vmul.f32 %v1047, %v1150
      %v1180 = vmul.f32 %v1049, %v1150
      %v1181 = vmul.f32 %v1051, %v1150
      %v1182 = vmul.f32 %v1053, %v1150
      %v1183 = vmul.f32 %v1055, %v1150
      %v1184 = vmul.f32 %v1057, %v1150
      %v1185 = vmul.f32 %v1059, %v1150
      %v1186 = vmul.f32 %v1061, %v1150
      %v1187 = vmul.f32 %v1063, %v1150
      %v1188 = vmul.f32 %v1065, %v1150
      %v1189 = vmul.f32 %v1067, %v1150
      %v1190 = vmul.f32 %v1069, %v1150
      %v1191 = vmul.f32 %v1071, %v1150
      %v1192 = vmul.f32 %v1073, %v1150
      %v1193 = vmul.f32 %v1075, %v1150
      %v1194 = vmul.f32 %v1077, %v1150
      %v1195 = vmul.f32 %v1079, %v1150
      %v1196 = vmul.f32 %v1081, %v1150
      %v1197 = vmul.f32 %v1083, %v1150
      %v1198 = vmul.f32 %v1085, %v1150
      %v1199 = vmul.f32 %v1087, %v1150
      %v1200 = vmul.f32 %v1089, %v1150
      %v1201 = vmul.f32 %v1091, %v1150
      %v1202 = vmul.f32 %v1093, %v1150
      %v1203 = vmul.f32 %v1095, %v1150
      %v1204 = vmul.f32 %v1097, %v1150
      %v1205 = vmul.f32 %v1099, %v1150
      %v1206 = vmul.f32 %v1101, %v1150
      %v1207 = vmul.f32 %v1103, %v1150
      %v1208 = vmul.f32 %v1105, %v1150
      %v1209 = vmul.f32 %v1107, %v1150
      %v1210 = vmul.f32 %v1109, %v1150
      %v1211 = vmul.f32 %v1111, %v1150
      %v1212 = vmul.f32 %v1113, %v1150
      %v1213 = vmul.f32 %v1115, %v1150
      %v1214 = vmul.f32 %v1117, %v1150
      %v1215 = vmul.f32 %v1119, %v1150
      %v1216 = vmul.f32 %v1121, %v1150
      %v1217 = vmul.f32 %v1123, %v1150
      %v1218 = vmul.f32 %v1125, %v1150
      %v1219 = vmul.f32 %v1127, %v1150
      %v1220 = vmul.f32 %v1129, %v1150
      %v1221 = vmul.f32 %v1131, %v1150
      %v1222 = vmul.f32 %v1133, %v1150
      %v1223 = vmul.f32 %v1135, %v1150
      %v1224 = vmul.f32 %v1137, %v1150
      %v1225 = vmul.f32 %v1139, %v1150
      %v1226 = vmul.f32 %v1141, %v1150
      %v1227 = vmul.f32 %v1143, %v1150
      %v1228 = vmul.f32 %v1145, %v1150
      %v1229 = vmul.f32 %v1147, %v1150
      %v1230 = vmul.f32 %v1149, %v1150
      %v1231 = vmul.f32 %v592, %v592
      %v1232 = vmul.f32 %v596, %v596
      %v1233 = vmul.f32 %v602, %v602
      %v1234 = vmul.f32 %v606, %v606
      %v1235 = vmul.f32 %v612, %v612
      %v1236 = vmul.f32 %v616, %v616
      %v1237 = vmul.f32 %v622, %v622
      %v1238 = vmul.f32 %v626, %v626
      %v1239 = vmul.f32 %v632, %v632
      %v1240 = vmul.f32 %v636, %v636
      %v1241 = vmul.f32 %v642, %v642
      %v1242 = vmul.f32 %v646, %v646
      %v1243 = vmul.f32 %v652, %v652
      %v1244 = vmul.f32 %v656, %v656
      %v1245 = vmul.f32 %v662, %v662
      %v1246 = vmul.f32 %v666, %v666
      %v1247 = vmul.f32 %v672, %v672
      %v1248 = vmul.f32 %v676, %v676
      %v1249 = vmul.f32 %v682, %v682
      %v1250 = vmul.f32 %v686, %v686
      %v1251 = vmul.f32 %v692, %v692
      %v1252 = vmul.f32 %v696, %v696
      %v1253 = vmul.f32 %v702, %v702
      %v1254 = vmul.f32 %v706, %v706
      %v1255 = vmul.f32 %v712, %v712
      %v1256 = vmul.f32 %v716, %v716
      %v1257 = vmul.f32 %v722, %v722
      %v1258 = vmul.f32 %v726, %v726
      %v1259 = vmul.f32 %v732, %v732
      %v1260 = vmul.f32 %v736, %v736
      %v1261 = vmul.f32 %v742, %v742
      %v1262 = vmul.f32 %v746, %v746
      %v1263 = vmul.f32 %v752, %v752
      %v1264 = vmul.f32 %v756, %v756
      %v1265 = vmul.f32 %v762, %v762
      %v1266 = vmul.f32 %v766, %v766
      %v1267 = vmul.f32 %v772, %v772
      %v1268 = vmul.f32 %v776, %v776
      %v1269 = vmul.f32 %v782, %v782
      %v1270 = vmul.f32 %v786, %v786
      %v1271 = vmul.f32 %v792, %v792
      %v1272 = vmul.f32 %v796, %v796
      %v1273 = vmul.f32 %v802, %v802
      %v1274 = vmul.f32 %v806, %v806
      %v1275 = vmul.f32 %v812, %v812
      %v1276 = vmul.f32 %v816, %v816
      %v1277 = vmul.f32 %v822, %v822
      %v1278 = vmul.f32 %v826, %v826
      %v1279 = vmul.f32 %v832, %v832
      %v1280 = vmul.f32 %v836, %v836
      %v1281 = vmul.f32 %v842, %v842
      %v1282 = vmul.f32 %v846, %v846
      %v1283 = vmul.f32 %v852, %v852
      %v1284 = vmul.f32 %v856, %v856
      %v1285 = vmul.f32 %v862, %v862
      %v1286 = vmul.f32 %v866, %v866
      %v1287 = vmul.f32 %v872, %v872
      %v1288 = vmul.f32 %v876, %v876
      %v1289 = vmul.f32 %v882, %v882
      %v1290 = vmul.f32 %v886, %v886
      %v1291 = vmul.f32 %v892, %v892
      %v1292 = vmul.f32 %v896, %v896
      %v1293 = vmul.f32 %v902, %v902
      %v1294 = vmul.f32 %v906, %v906
      %v1295 = vmul.f32 %v912, %v912
      %v1296 = vmul.f32 %v916, %v916
      %v1297 = vmul.f32 %v922, %v922
      %v1298 = vmul.f32 %v926, %v926
      %v1299 = vmul.f32 %v932, %v932
      %v1300 = vmul.f32 %v936, %v936
      %v1301 = vmul.f32 %v942, %v942
      %v1302 = vmul.f32 %v946, %v946
      %v1303 = vmul.f32 %v952, %v952
      %v1304 = vmul.f32 %v956, %v956
      %v1305 = vmul.f32 %v962, %v962
      %v1306 = vmul.f32 %v966, %v966
      %v1307 = vmul.f32 %v972, %v972
      %v1308 = vmul.f32 %v976, %v976
      %v1309 = vmul.f32 %v982, %v982
      %v1310 = vmul.f32 %v986, %v986
      %1311 = vadd.xlane.f32.xlu0 %v1231
      %v1312 = vpop.xlane.xlu0 %1311
      %1313 = vadd.xlane.f32.xlu0 %v1232
      %v1314 = vpop.xlane.xlu0 %1313
      %1315 = vadd.xlane.f32.xlu0 %v1233
      %v1316 = vpop.xlane.xlu0 %1315
      %1317 = vadd.xlane.f32.xlu0 %v1234
      %v1318 = vpop.xlane.xlu0 %1317
      %1319 = vadd.xlane.f32.xlu0 %v1235
      %v1320 = vpop.xlane.xlu0 %1319
      %1321 = vadd.xlane.f32.xlu0 %v1236
      %v1322 = vpop.xlane.xlu0 %1321
      %1323 = vadd.xlane.f32.xlu0 %v1237
      %v1324 = vpop.xlane.xlu0 %1323
      %1325 = vadd.xlane.f32.xlu0 %v1238
      %v1326 = vpop.xlane.xlu0 %1325
      %1327 = vadd.xlane.f32.xlu0 %v1239
      %v1328 = vpop.xlane.xlu0 %1327
      %1329 = vadd.xlane.f32.xlu0 %v1240
      %v1330 = vpop.xlane.xlu0 %1329
      %1331 = vadd.xlane.f32.xlu0 %v1241
      %v1332 = vpop.xlane.xlu0 %1331
      %1333 = vadd.xlane.f32.xlu0 %v1242
      %v1334 = vpop.xlane.xlu0 %1333
      %1335 = vadd.xlane.f32.xlu0 %v1243
      %v1336 = vpop.xlane.xlu0 %1335
      %1337 = vadd.xlane.f32.xlu0 %v1244
      %v1338 = vpop.xlane.xlu0 %1337
      %1339 = vadd.xlane.f32.xlu0 %v1245
      %v1340 = vpop.xlane.xlu0 %1339
      %1341 = vadd.xlane.f32.xlu0 %v1246
      %v1342 = vpop.xlane.xlu0 %1341
      %1343 = vadd.xlane.f32.xlu0 %v1247
      %v1344 = vpop.xlane.xlu0 %1343
      %1345 = vadd.xlane.f32.xlu0 %v1248
      %v1346 = vpop.xlane.xlu0 %1345
      %1347 = vadd.xlane.f32.xlu0 %v1249
      %v1348 = vpop.xlane.xlu0 %1347
      %1349 = vadd.xlane.f32.xlu0 %v1250
      %v1350 = vpop.xlane.xlu0 %1349
      %1351 = vadd.xlane.f32.xlu0 %v1251
      %v1352 = vpop.xlane.xlu0 %1351
      %1353 = vadd.xlane.f32.xlu0 %v1252
      %v1354 = vpop.xlane.xlu0 %1353
      %1355 = vadd.xlane.f32.xlu0 %v1253
      %v1356 = vpop.xlane.xlu0 %1355
      %1357 = vadd.xlane.f32.xlu0 %v1254
      %v1358 = vpop.xlane.xlu0 %1357
      %1359 = vadd.xlane.f32.xlu0 %v1255
      %v1360 = vpop.xlane.xlu0 %1359
      %1361 = vadd.xlane.f32.xlu0 %v1256
      %v1362 = vpop.xlane.xlu0 %1361
      %1363 = vadd.xlane.f32.xlu0 %v1257
      %v1364 = vpop.xlane.xlu0 %1363
      %1365 = vadd.xlane.f32.xlu0 %v1258
      %v1366 = vpop.xlane.xlu0 %1365
      %1367 = vadd.xlane.f32.xlu0 %v1259
      %v1368 = vpop.xlane.xlu0 %1367
      %1369 = vadd.xlane.f32.xlu0 %v1260
      %v1370 = vpop.xlane.xlu0 %1369
      %1371 = vadd.xlane.f32.xlu0 %v1261
      %v1372 = vpop.xlane.xlu0 %1371
      %1373 = vadd.xlane.f32.xlu0 %v1262
      %v1374 = vpop.xlane.xlu0 %1373
      %1375 = vadd.xlane.f32.xlu0 %v1263
      %v1376 = vpop.xlane.xlu0 %1375
      %1377 = vadd.xlane.f32.xlu0 %v1264
      %v1378 = vpop.xlane.xlu0 %1377
      %1379 = vadd.xlane.f32.xlu0 %v1265
      %v1380 = vpop.xlane.xlu0 %1379
      %1381 = vadd.xlane.f32.xlu0 %v1266
      %v1382 = vpop.xlane.xlu0 %1381
      %1383 = vadd.xlane.f32.xlu0 %v1267
      %v1384 = vpop.xlane.xlu0 %1383
      %1385 = vadd.xlane.f32.xlu0 %v1268
      %v1386 = vpop.xlane.xlu0 %1385
      %1387 = vadd.xlane.f32.xlu0 %v1269
      %v1388 = vpop.xlane.xlu0 %1387
      %1389 = vadd.xlane.f32.xlu0 %v1270
      %v1390 = vpop.xlane.xlu0 %1389
      %1391 = vadd.xlane.f32.xlu0 %v1271
      %v1392 = vpop.xlane.xlu0 %1391
      %1393 = vadd.xlane.f32.xlu0 %v1272
      %v1394 = vpop.xlane.xlu0 %1393
      %1395 = vadd.xlane.f32.xlu0 %v1273
      %v1396 = vpop.xlane.xlu0 %1395
      %1397 = vadd.xlane.f32.xlu0 %v1274
      %v1398 = vpop.xlane.xlu0 %1397
      %1399 = vadd.xlane.f32.xlu0 %v1275
      %v1400 = vpop.xlane.xlu0 %1399
      %1401 = vadd.xlane.f32.xlu0 %v1276
      %v1402 = vpop.xlane.xlu0 %1401
      %1403 = vadd.xlane.f32.xlu0 %v1277
      %v1404 = vpop.xlane.xlu0 %1403
      %1405 = vadd.xlane.f32.xlu0 %v1278
      %v1406 = vpop.xlane.xlu0 %1405
      %1407 = vadd.xlane.f32.xlu0 %v1279
      %v1408 = vpop.xlane.xlu0 %1407
      %1409 = vadd.xlane.f32.xlu0 %v1280
      %v1410 = vpop.xlane.xlu0 %1409
      %1411 = vadd.xlane.f32.xlu0 %v1281
      %v1412 = vpop.xlane.xlu0 %1411
      %1413 = vadd.xlane.f32.xlu0 %v1282
      %v1414 = vpop.xlane.xlu0 %1413
      %1415 = vadd.xlane.f32.xlu0 %v1283
      %v1416 = vpop.xlane.xlu0 %1415
      %1417 = vadd.xlane.f32.xlu0 %v1284
      %v1418 = vpop.xlane.xlu0 %1417
      %1419 = vadd.xlane.f32.xlu0 %v1285
      %v1420 = vpop.xlane.xlu0 %1419
      %1421 = vadd.xlane.f32.xlu0 %v1286
      %v1422 = vpop.xlane.xlu0 %1421
      %1423 = vadd.xlane.f32.xlu0 %v1287
      %v1424 = vpop.xlane.xlu0 %1423
      %1425 = vadd.xlane.f32.xlu0 %v1288
      %v1426 = vpop.xlane.xlu0 %1425
      %1427 = vadd.xlane.f32.xlu0 %v1289
      %v1428 = vpop.xlane.xlu0 %1427
      %1429 = vadd.xlane.f32.xlu0 %v1290
      %v1430 = vpop.xlane.xlu0 %1429
      %1431 = vadd.xlane.f32.xlu0 %v1291
      %v1432 = vpop.xlane.xlu0 %1431
      %1433 = vadd.xlane.f32.xlu0 %v1292
      %v1434 = vpop.xlane.xlu0 %1433
      %1435 = vadd.xlane.f32.xlu0 %v1293
      %v1436 = vpop.xlane.xlu0 %1435
      %1437 = vadd.xlane.f32.xlu0 %v1294
      %v1438 = vpop.xlane.xlu0 %1437
      %1439 = vadd.xlane.f32.xlu0 %v1295
      %v1440 = vpop.xlane.xlu0 %1439
      %1441 = vadd.xlane.f32.xlu0 %v1296
      %v1442 = vpop.xlane.xlu0 %1441
      %1443 = vadd.xlane.f32.xlu0 %v1297
      %v1444 = vpop.xlane.xlu0 %1443
      %1445 = vadd.xlane.f32.xlu0 %v1298
      %v1446 = vpop.xlane.xlu0 %1445
      %1447 = vadd.xlane.f32.xlu0 %v1299
      %v1448 = vpop.xlane.xlu0 %1447
      %1449 = vadd.xlane.f32.xlu0 %v1300
      %v1450 = vpop.xlane.xlu0 %1449
      %1451 = vadd.xlane.f32.xlu0 %v1301
      %v1452 = vpop.xlane.xlu0 %1451
      %1453 = vadd.xlane.f32.xlu0 %v1302
      %v1454 = vpop.xlane.xlu0 %1453
      %1455 = vadd.xlane.f32.xlu0 %v1303
      %v1456 = vpop.xlane.xlu0 %1455
      %1457 = vadd.xlane.f32.xlu0 %v1304
      %v1458 = vpop.xlane.xlu0 %1457
      %1459 = vadd.xlane.f32.xlu0 %v1305
      %v1460 = vpop.xlane.xlu0 %1459
      %1461 = vadd.xlane.f32.xlu0 %v1306
      %v1462 = vpop.xlane.xlu0 %1461
      %1463 = vadd.xlane.f32.xlu0 %v1307
      %v1464 = vpop.xlane.xlu0 %1463
      %1465 = vadd.xlane.f32.xlu0 %v1308
      %v1466 = vpop.xlane.xlu0 %1465
      %1467 = vadd.xlane.f32.xlu0 %v1309
      %v1468 = vpop.xlane.xlu0 %1467
      %1469 = vadd.xlane.f32.xlu0 %v1310
      %v1470 = vpop.xlane.xlu0 %1469
      %v1471 = vmul.f32 %v1312, %v1150
      %v1472 = vmul.f32 %v1314, %v1150
      %v1473 = vmul.f32 %v1316, %v1150
      %v1474 = vmul.f32 %v1318, %v1150
      %v1475 = vmul.f32 %v1320, %v1150
      %v1476 = vmul.f32 %v1322, %v1150
      %v1477 = vmul.f32 %v1324, %v1150
      %v1478 = vmul.f32 %v1326, %v1150
      %v1479 = vmul.f32 %v1328, %v1150
      %v1480 = vmul.f32 %v1330, %v1150
      %v1481 = vmul.f32 %v1332, %v1150
      %v1482 = vmul.f32 %v1334, %v1150
      %v1483 = vmul.f32 %v1336, %v1150
      %v1484 = vmul.f32 %v1338, %v1150
      %v1485 = vmul.f32 %v1340, %v1150
      %v1486 = vmul.f32 %v1342, %v1150
      %v1487 = vmul.f32 %v1344, %v1150
      %v1488 = vmul.f32 %v1346, %v1150
      %v1489 = vmul.f32 %v1348, %v1150
      %v1490 = vmul.f32 %v1350, %v1150
      %v1491 = vmul.f32 %v1352, %v1150
      %v1492 = vmul.f32 %v1354, %v1150
      %v1493 = vmul.f32 %v1356, %v1150
      %v1494 = vmul.f32 %v1358, %v1150
      %v1495 = vmul.f32 %v1360, %v1150
      %v1496 = vmul.f32 %v1362, %v1150
      %v1497 = vmul.f32 %v1364, %v1150
      %v1498 = vmul.f32 %v1366, %v1150
      %v1499 = vmul.f32 %v1368, %v1150
      %v1500 = vmul.f32 %v1370, %v1150
      %v1501 = vmul.f32 %v1372, %v1150
      %v1502 = vmul.f32 %v1374, %v1150
      %v1503 = vmul.f32 %v1376, %v1150
      %v1504 = vmul.f32 %v1378, %v1150
      %v1505 = vmul.f32 %v1380, %v1150
      %v1506 = vmul.f32 %v1382, %v1150
      %v1507 = vmul.f32 %v1384, %v1150
      %v1508 = vmul.f32 %v1386, %v1150
      %v1509 = vmul.f32 %v1388, %v1150
      %v1510 = vmul.f32 %v1390, %v1150
      %v1511 = vmul.f32 %v1392, %v1150
      %v1512 = vmul.f32 %v1394, %v1150
      %v1513 = vmul.f32 %v1396, %v1150
      %v1514 = vmul.f32 %v1398, %v1150
      %v1515 = vmul.f32 %v1400, %v1150
      %v1516 = vmul.f32 %v1402, %v1150
      %v1517 = vmul.f32 %v1404, %v1150
      %v1518 = vmul.f32 %v1406, %v1150
      %v1519 = vmul.f32 %v1408, %v1150
      %v1520 = vmul.f32 %v1410, %v1150
      %v1521 = vmul.f32 %v1412, %v1150
      %v1522 = vmul.f32 %v1414, %v1150
      %v1523 = vmul.f32 %v1416, %v1150
      %v1524 = vmul.f32 %v1418, %v1150
      %v1525 = vmul.f32 %v1420, %v1150
      %v1526 = vmul.f32 %v1422, %v1150
      %v1527 = vmul.f32 %v1424, %v1150
      %v1528 = vmul.f32 %v1426, %v1150
      %v1529 = vmul.f32 %v1428, %v1150
      %v1530 = vmul.f32 %v1430, %v1150
      %v1531 = vmul.f32 %v1432, %v1150
      %v1532 = vmul.f32 %v1434, %v1150
      %v1533 = vmul.f32 %v1436, %v1150
      %v1534 = vmul.f32 %v1438, %v1150
      %v1535 = vmul.f32 %v1440, %v1150
      %v1536 = vmul.f32 %v1442, %v1150
      %v1537 = vmul.f32 %v1444, %v1150
      %v1538 = vmul.f32 %v1446, %v1150
      %v1539 = vmul.f32 %v1448, %v1150
      %v1540 = vmul.f32 %v1450, %v1150
      %v1541 = vmul.f32 %v1452, %v1150
      %v1542 = vmul.f32 %v1454, %v1150
      %v1543 = vmul.f32 %v1456, %v1150
      %v1544 = vmul.f32 %v1458, %v1150
      %v1545 = vmul.f32 %v1460, %v1150
      %v1546 = vmul.f32 %v1462, %v1150
      %v1547 = vmul.f32 %v1464, %v1150
      %v1548 = vmul.f32 %v1466, %v1150
      %v1549 = vmul.f32 %v1468, %v1150
      %v1550 = vmul.f32 %v1470, %v1150
      %v1551 = vmul.f32 %v1151, %v1151
      %v1552 = vmul.f32 %v1152, %v1152
      %v1553 = vmul.f32 %v1153, %v1153
      %v1554 = vmul.f32 %v1154, %v1154
      %v1555 = vmul.f32 %v1155, %v1155
      %v1556 = vmul.f32 %v1156, %v1156
      %v1557 = vmul.f32 %v1157, %v1157
      %v1558 = vmul.f32 %v1158, %v1158
      %v1559 = vmul.f32 %v1159, %v1159
      %v1560 = vmul.f32 %v1160, %v1160
      %v1561 = vmul.f32 %v1161, %v1161
      %v1562 = vmul.f32 %v1162, %v1162
      %v1563 = vmul.f32 %v1163, %v1163
      %v1564 = vmul.f32 %v1164, %v1164
      %v1565 = vmul.f32 %v1165, %v1165
      %v1566 = vmul.f32 %v1166, %v1166
      %v1567 = vmul.f32 %v1167, %v1167
      %v1568 = vmul.f32 %v1168, %v1168
      %v1569 = vmul.f32 %v1169, %v1169
      %v1570 = vmul.f32 %v1170, %v1170
      %v1571 = vmul.f32 %v1171, %v1171
      %v1572 = vmul.f32 %v1172, %v1172
      %v1573 = vmul.f32 %v1173, %v1173
      %v1574 = vmul.f32 %v1174, %v1174
      %v1575 = vmul.f32 %v1175, %v1175
      %v1576 = vmul.f32 %v1176, %v1176
      %v1577 = vmul.f32 %v1177, %v1177
      %v1578 = vmul.f32 %v1178, %v1178
      %v1579 = vmul.f32 %v1179, %v1179
      %v1580 = vmul.f32 %v1180, %v1180
      %v1581 = vmul.f32 %v1181, %v1181
      %v1582 = vmul.f32 %v1182, %v1182
      %v1583 = vmul.f32 %v1183, %v1183
      %v1584 = vmul.f32 %v1184, %v1184
      %v1585 = vmul.f32 %v1185, %v1185
      %v1586 = vmul.f32 %v1186, %v1186
      %v1587 = vmul.f32 %v1187, %v1187
      %v1588 = vmul.f32 %v1188, %v1188
      %v1589 = vmul.f32 %v1189, %v1189
      %v1590 = vmul.f32 %v1190, %v1190
      %v1591 = vmul.f32 %v1191, %v1191
      %v1592 = vmul.f32 %v1192, %v1192
      %v1593 = vmul.f32 %v1193, %v1193
      %v1594 = vmul.f32 %v1194, %v1194
      %v1595 = vmul.f32 %v1195, %v1195
      %v1596 = vmul.f32 %v1196, %v1196
      %v1597 = vmul.f32 %v1197, %v1197
      %v1598 = vmul.f32 %v1198, %v1198
      %v1599 = vmul.f32 %v1199, %v1199
      %v1600 = vmul.f32 %v1200, %v1200
      %v1601 = vmul.f32 %v1201, %v1201
      %v1602 = vmul.f32 %v1202, %v1202
      %v1603 = vmul.f32 %v1203, %v1203
      %v1604 = vmul.f32 %v1204, %v1204
      %v1605 = vmul.f32 %v1205, %v1205
      %v1606 = vmul.f32 %v1206, %v1206
      %v1607 = vmul.f32 %v1207, %v1207
      %v1608 = vmul.f32 %v1208, %v1208
      %v1609 = vmul.f32 %v1209, %v1209
      %v1610 = vmul.f32 %v1210, %v1210
      %v1611 = vmul.f32 %v1211, %v1211
      %v1612 = vmul.f32 %v1212, %v1212
      %v1613 = vmul.f32 %v1213, %v1213
      %v1614 = vmul.f32 %v1214, %v1214
      %v1615 = vmul.f32 %v1215, %v1215
      %v1616 = vmul.f32 %v1216, %v1216
      %v1617 = vmul.f32 %v1217, %v1217
      %v1618 = vmul.f32 %v1218, %v1218
      %v1619 = vmul.f32 %v1219, %v1219
      %v1620 = vmul.f32 %v1220, %v1220
      %v1621 = vmul.f32 %v1221, %v1221
      %v1622 = vmul.f32 %v1222, %v1222
      %v1623 = vmul.f32 %v1223, %v1223
      %v1624 = vmul.f32 %v1224, %v1224
      %v1625 = vmul.f32 %v1225, %v1225
      %v1626 = vmul.f32 %v1226, %v1226
      %v1627 = vmul.f32 %v1227, %v1227
      %v1628 = vmul.f32 %v1228, %v1228
      %v1629 = vmul.f32 %v1229, %v1229
      %v1630 = vmul.f32 %v1230, %v1230
      %v1631 = vsub.f32 %v1471, %v1551
      %v1632 = vsub.f32 %v1472, %v1552
      %v1633 = vsub.f32 %v1473, %v1553
      %v1634 = vsub.f32 %v1474, %v1554
      %v1635 = vsub.f32 %v1475, %v1555
      %v1636 = vsub.f32 %v1476, %v1556
      %v1637 = vsub.f32 %v1477, %v1557
      %v1638 = vsub.f32 %v1478, %v1558
      %v1639 = vsub.f32 %v1479, %v1559
      %v1640 = vsub.f32 %v1480, %v1560
      %v1641 = vsub.f32 %v1481, %v1561
      %v1642 = vsub.f32 %v1482, %v1562
      %v1643 = vsub.f32 %v1483, %v1563
      %v1644 = vsub.f32 %v1484, %v1564
      %v1645 = vsub.f32 %v1485, %v1565
      %v1646 = vsub.f32 %v1486, %v1566
      %v1647 = vsub.f32 %v1487, %v1567
      %v1648 = vsub.f32 %v1488, %v1568
      %v1649 = vsub.f32 %v1489, %v1569
      %v1650 = vsub.f32 %v1490, %v1570
      %v1651 = vsub.f32 %v1491, %v1571
      %v1652 = vsub.f32 %v1492, %v1572
      %v1653 = vsub.f32 %v1493, %v1573
      %v1654 = vsub.f32 %v1494, %v1574
      %v1655 = vsub.f32 %v1495, %v1575
      %v1656 = vsub.f32 %v1496, %v1576
      %v1657 = vsub.f32 %v1497, %v1577
      %v1658 = vsub.f32 %v1498, %v1578
      %v1659 = vsub.f32 %v1499, %v1579
      %v1660 = vsub.f32 %v1500, %v1580
      %v1661 = vsub.f32 %v1501, %v1581
      %v1662 = vsub.f32 %v1502, %v1582
      %v1663 = vsub.f32 %v1503, %v1583
      %v1664 = vsub.f32 %v1504, %v1584
      %v1665 = vsub.f32 %v1505, %v1585
      %v1666 = vsub.f32 %v1506, %v1586
      %v1667 = vsub.f32 %v1507, %v1587
      %v1668 = vsub.f32 %v1508, %v1588
      %v1669 = vsub.f32 %v1509, %v1589
      %v1670 = vsub.f32 %v1510, %v1590
      %v1671 = vsub.f32 %v1511, %v1591
      %v1672 = vsub.f32 %v1512, %v1592
      %v1673 = vsub.f32 %v1513, %v1593
      %v1674 = vsub.f32 %v1514, %v1594
      %v1675 = vsub.f32 %v1515, %v1595
      %v1676 = vsub.f32 %v1516, %v1596
      %v1677 = vsub.f32 %v1517, %v1597
      %v1678 = vsub.f32 %v1518, %v1598
      %v1679 = vsub.f32 %v1519, %v1599
      %v1680 = vsub.f32 %v1520, %v1600
      %v1681 = vsub.f32 %v1521, %v1601
      %v1682 = vsub.f32 %v1522, %v1602
      %v1683 = vsub.f32 %v1523, %v1603
      %v1684 = vsub.f32 %v1524, %v1604
      %v1685 = vsub.f32 %v1525, %v1605
      %v1686 = vsub.f32 %v1526, %v1606
      %v1687 = vsub.f32 %v1527, %v1607
      %v1688 = vsub.f32 %v1528, %v1608
      %v1689 = vsub.f32 %v1529, %v1609
      %v1690 = vsub.f32 %v1530, %v1610
      %v1691 = vsub.f32 %v1531, %v1611
      %v1692 = vsub.f32 %v1532, %v1612
      %v1693 = vsub.f32 %v1533, %v1613
      %v1694 = vsub.f32 %v1534, %v1614
      %v1695 = vsub.f32 %v1535, %v1615
      %v1696 = vsub.f32 %v1536, %v1616
      %v1697 = vsub.f32 %v1537, %v1617
      %v1698 = vsub.f32 %v1538, %v1618
      %v1699 = vsub.f32 %v1539, %v1619
      %v1700 = vsub.f32 %v1540, %v1620
      %v1701 = vsub.f32 %v1541, %v1621
      %v1702 = vsub.f32 %v1542, %v1622
      %v1703 = vsub.f32 %v1543, %v1623
      %v1704 = vsub.f32 %v1544, %v1624
      %v1705 = vsub.f32 %v1545, %v1625
      %v1706 = vsub.f32 %v1546, %v1626
      %v1707 = vsub.f32 %v1547, %v1627
      %v1708 = vsub.f32 %v1548, %v1628
      %v1709 = vsub.f32 %v1549, %v1629
      %v1710 = vsub.f32 %v1550, %v1630
      %v1711 = vmax.f32 %v1631, 0.0
      %v1712 = vmax.f32 %v1632, 0.0
      %v1713 = vmax.f32 %v1633, 0.0
      %v1714 = vmax.f32 %v1634, 0.0
      %v1715 = vmax.f32 %v1635, 0.0
      %v1716 = vmax.f32 %v1636, 0.0
      %v1717 = vmax.f32 %v1637, 0.0
      %v1718 = vmax.f32 %v1638, 0.0
      %v1719 = vmax.f32 %v1639, 0.0
      %v1720 = vmax.f32 %v1640, 0.0
      %v1721 = vmax.f32 %v1641, 0.0
      %v1722 = vmax.f32 %v1642, 0.0
      %v1723 = vmax.f32 %v1643, 0.0
      %v1724 = vmax.f32 %v1644, 0.0
      %v1725 = vmax.f32 %v1645, 0.0
      %v1726 = vmax.f32 %v1646, 0.0
      %v1727 = vmax.f32 %v1647, 0.0
      %v1728 = vmax.f32 %v1648, 0.0
      %v1729 = vmax.f32 %v1649, 0.0
      %v1730 = vmax.f32 %v1650, 0.0
      %v1731 = vmax.f32 %v1651, 0.0
      %v1732 = vmax.f32 %v1652, 0.0
      %v1733 = vmax.f32 %v1653, 0.0
      %v1734 = vmax.f32 %v1654, 0.0
      %v1735 = vmax.f32 %v1655, 0.0
      %v1736 = vmax.f32 %v1656, 0.0
      %v1737 = vmax.f32 %v1657, 0.0
      %v1738 = vmax.f32 %v1658, 0.0
      %v1739 = vmax.f32 %v1659, 0.0
      %v1740 = vmax.f32 %v1660, 0.0
      %v1741 = vmax.f32 %v1661, 0.0
      %v1742 = vmax.f32 %v1662, 0.0
      %v1743 = vmax.f32 %v1663, 0.0
      %v1744 = vmax.f32 %v1664, 0.0
      %v1745 = vmax.f32 %v1665, 0.0
      %v1746 = vmax.f32 %v1666, 0.0
      %v1747 = vmax.f32 %v1667, 0.0
      %v1748 = vmax.f32 %v1668, 0.0
      %v1749 = vmax.f32 %v1669, 0.0
      %v1750 = vmax.f32 %v1670, 0.0
      %v1751 = vmax.f32 %v1671, 0.0
      %v1752 = vmax.f32 %v1672, 0.0
      %v1753 = vmax.f32 %v1673, 0.0
      %v1754 = vmax.f32 %v1674, 0.0
      %v1755 = vmax.f32 %v1675, 0.0
      %v1756 = vmax.f32 %v1676, 0.0
      %v1757 = vmax.f32 %v1677, 0.0
      %v1758 = vmax.f32 %v1678, 0.0
      %v1759 = vmax.f32 %v1679, 0.0
      %v1760 = vmax.f32 %v1680, 0.0
      %v1761 = vmax.f32 %v1681, 0.0
      %v1762 = vmax.f32 %v1682, 0.0
      %v1763 = vmax.f32 %v1683, 0.0
      %v1764 = vmax.f32 %v1684, 0.0
      %v1765 = vmax.f32 %v1685, 0.0
      %v1766 = vmax.f32 %v1686, 0.0
      %v1767 = vmax.f32 %v1687, 0.0
      %v1768 = vmax.f32 %v1688, 0.0
      %v1769 = vmax.f32 %v1689, 0.0
      %v1770 = vmax.f32 %v1690, 0.0
      %v1771 = vmax.f32 %v1691, 0.0
      %v1772 = vmax.f32 %v1692, 0.0
      %v1773 = vmax.f32 %v1693, 0.0
      %v1774 = vmax.f32 %v1694, 0.0
      %v1775 = vmax.f32 %v1695, 0.0
      %v1776 = vmax.f32 %v1696, 0.0
      %v1777 = vmax.f32 %v1697, 0.0
      %v1778 = vmax.f32 %v1698, 0.0
      %v1779 = vmax.f32 %v1699, 0.0
      %v1780 = vmax.f32 %v1700, 0.0
      %v1781 = vmax.f32 %v1701, 0.0
      %v1782 = vmax.f32 %v1702, 0.0
      %v1783 = vmax.f32 %v1703, 0.0
      %v1784 = vmax.f32 %v1704, 0.0
      %v1785 = vmax.f32 %v1705, 0.0
      %v1786 = vmax.f32 %v1706, 0.0
      %v1787 = vmax.f32 %v1707, 0.0
      %v1788 = vmax.f32 %v1708, 0.0
      %v1789 = vmax.f32 %v1709, 0.0
      %v1790 = vmax.f32 %v1710, 0.0
      %v1791 = vsub.f32 %v592, %v1151
      %v1792 = vsub.f32 %v596, %v1152
      %v1793 = vsub.f32 %v602, %v1153
      %v1794 = vsub.f32 %v606, %v1154
      %v1795 = vsub.f32 %v612, %v1155
      %v1796 = vsub.f32 %v616, %v1156
      %v1797 = vsub.f32 %v622, %v1157
      %v1798 = vsub.f32 %v626, %v1158
      %v1799 = vsub.f32 %v632, %v1159
      %v1800 = vsub.f32 %v636, %v1160
      %v1801 = vsub.f32 %v642, %v1161
      %v1802 = vsub.f32 %v646, %v1162
      %v1803 = vsub.f32 %v652, %v1163
      %v1804 = vsub.f32 %v656, %v1164
      %v1805 = vsub.f32 %v662, %v1165
      %v1806 = vsub.f32 %v666, %v1166
      %v1807 = vsub.f32 %v672, %v1167
      %v1808 = vsub.f32 %v676, %v1168
      %v1809 = vsub.f32 %v682, %v1169
      %v1810 = vsub.f32 %v686, %v1170
      %v1811 = vsub.f32 %v692, %v1171
      %v1812 = vsub.f32 %v696, %v1172
      %v1813 = vsub.f32 %v702, %v1173
      %v1814 = vsub.f32 %v706, %v1174
      %v1815 = vsub.f32 %v712, %v1175
      %v1816 = vsub.f32 %v716, %v1176
      %v1817 = vsub.f32 %v722, %v1177
      %v1818 = vsub.f32 %v726, %v1178
      %v1819 = vsub.f32 %v732, %v1179
      %v1820 = vsub.f32 %v736, %v1180
      %v1821 = vsub.f32 %v742, %v1181
      %v1822 = vsub.f32 %v746, %v1182
      %v1823 = vsub.f32 %v752, %v1183
      %v1824 = vsub.f32 %v756, %v1184
      %v1825 = vsub.f32 %v762, %v1185
      %v1826 = vsub.f32 %v766, %v1186
      %v1827 = vsub.f32 %v772, %v1187
      %v1828 = vsub.f32 %v776, %v1188
      %v1829 = vsub.f32 %v782, %v1189
      %v1830 = vsub.f32 %v786, %v1190
      %v1831 = vsub.f32 %v792, %v1191
      %v1832 = vsub.f32 %v796, %v1192
      %v1833 = vsub.f32 %v802, %v1193
      %v1834 = vsub.f32 %v806, %v1194
      %v1835 = vsub.f32 %v812, %v1195
      %v1836 = vsub.f32 %v816, %v1196
      %v1837 = vsub.f32 %v822, %v1197
      %v1838 = vsub.f32 %v826, %v1198
      %v1839 = vsub.f32 %v832, %v1199
      %v1840 = vsub.f32 %v836, %v1200
      %v1841 = vsub.f32 %v842, %v1201
      %v1842 = vsub.f32 %v846, %v1202
      %v1843 = vsub.f32 %v852, %v1203
      %v1844 = vsub.f32 %v856, %v1204
      %v1845 = vsub.f32 %v862, %v1205
      %v1846 = vsub.f32 %v866, %v1206
      %v1847 = vsub.f32 %v872, %v1207
      %v1848 = vsub.f32 %v876, %v1208
      %v1849 = vsub.f32 %v882, %v1209
      %v1850 = vsub.f32 %v886, %v1210
      %v1851 = vsub.f32 %v892, %v1211
      %v1852 = vsub.f32 %v896, %v1212
      %v1853 = vsub.f32 %v902, %v1213
      %v1854 = vsub.f32 %v906, %v1214
      %v1855 = vsub.f32 %v912, %v1215
      %v1856 = vsub.f32 %v916, %v1216
      %v1857 = vsub.f32 %v922, %v1217
      %v1858 = vsub.f32 %v926, %v1218
      %v1859 = vsub.f32 %v932, %v1219
      %v1860 = vsub.f32 %v936, %v1220
      %v1861 = vsub.f32 %v942, %v1221
      %v1862 = vsub.f32 %v946, %v1222
      %v1863 = vsub.f32 %v952, %v1223
      %v1864 = vsub.f32 %v956, %v1224
      %v1865 = vsub.f32 %v962, %v1225
      %v1866 = vsub.f32 %v966, %v1226
      %v1867 = vsub.f32 %v972, %v1227
      %v1868 = vsub.f32 %v976, %v1228
      %v1869 = vsub.f32 %v982, %v1229
      %v1870 = vsub.f32 %v986, %v1230
      %v1871 = vadd.f32 %v1711, 1e-05
      %v1872 = vadd.f32 %v1712, 1e-05
      %v1873 = vadd.f32 %v1713, 1e-05
      %v1874 = vadd.f32 %v1714, 1e-05
      %v1875 = vadd.f32 %v1715, 1e-05
      %v1876 = vadd.f32 %v1716, 1e-05
      %v1877 = vadd.f32 %v1717, 1e-05
      %v1878 = vadd.f32 %v1718, 1e-05
      %v1879 = vadd.f32 %v1719, 1e-05
      %v1880 = vadd.f32 %v1720, 1e-05
      %v1881 = vadd.f32 %v1721, 1e-05
      %v1882 = vadd.f32 %v1722, 1e-05
      %v1883 = vadd.f32 %v1723, 1e-05
      %v1884 = vadd.f32 %v1724, 1e-05
      %v1885 = vadd.f32 %v1725, 1e-05
      %v1886 = vadd.f32 %v1726, 1e-05
      %v1887 = vadd.f32 %v1727, 1e-05
      %v1888 = vadd.f32 %v1728, 1e-05
      %v1889 = vadd.f32 %v1729, 1e-05
      %v1890 = vadd.f32 %v1730, 1e-05
      %v1891 = vadd.f32 %v1731, 1e-05
      %v1892 = vadd.f32 %v1732, 1e-05
      %v1893 = vadd.f32 %v1733, 1e-05
      %v1894 = vadd.f32 %v1734, 1e-05
      %v1895 = vadd.f32 %v1735, 1e-05
      %v1896 = vadd.f32 %v1736, 1e-05
      %v1897 = vadd.f32 %v1737, 1e-05
      %v1898 = vadd.f32 %v1738, 1e-05
      %v1899 = vadd.f32 %v1739, 1e-05
      %v1900 = vadd.f32 %v1740, 1e-05
      %v1901 = vadd.f32 %v1741, 1e-05
      %v1902 = vadd.f32 %v1742, 1e-05
      %v1903 = vadd.f32 %v1743, 1e-05
      %v1904 = vadd.f32 %v1744, 1e-05
      %v1905 = vadd.f32 %v1745, 1e-05
      %v1906 = vadd.f32 %v1746, 1e-05
      %v1907 = vadd.f32 %v1747, 1e-05
      %v1908 = vadd.f32 %v1748, 1e-05
      %v1909 = vadd.f32 %v1749, 1e-05
      %v1910 = vadd.f32 %v1750, 1e-05
      %v1911 = vadd.f32 %v1751, 1e-05
      %v1912 = vadd.f32 %v1752, 1e-05
      %v1913 = vadd.f32 %v1753, 1e-05
      %v1914 = vadd.f32 %v1754, 1e-05
      %v1915 = vadd.f32 %v1755, 1e-05
      %v1916 = vadd.f32 %v1756, 1e-05
      %v1917 = vadd.f32 %v1757, 1e-05
      %v1918 = vadd.f32 %v1758, 1e-05
      %v1919 = vadd.f32 %v1759, 1e-05
      %v1920 = vadd.f32 %v1760, 1e-05
      %v1921 = vadd.f32 %v1761, 1e-05
      %v1922 = vadd.f32 %v1762, 1e-05
      %v1923 = vadd.f32 %v1763, 1e-05
      %v1924 = vadd.f32 %v1764, 1e-05
      %v1925 = vadd.f32 %v1765, 1e-05
      %v1926 = vadd.f32 %v1766, 1e-05
      %v1927 = vadd.f32 %v1767, 1e-05
      %v1928 = vadd.f32 %v1768, 1e-05
      %v1929 = vadd.f32 %v1769, 1e-05
      %v1930 = vadd.f32 %v1770, 1e-05
      %v1931 = vadd.f32 %v1771, 1e-05
      %v1932 = vadd.f32 %v1772, 1e-05
      %v1933 = vadd.f32 %v1773, 1e-05
      %v1934 = vadd.f32 %v1774, 1e-05
      %v1935 = vadd.f32 %v1775, 1e-05
      %v1936 = vadd.f32 %v1776, 1e-05
      %v1937 = vadd.f32 %v1777, 1e-05
      %v1938 = vadd.f32 %v1778, 1e-05
      %v1939 = vadd.f32 %v1779, 1e-05
      %v1940 = vadd.f32 %v1780, 1e-05
      %v1941 = vadd.f32 %v1781, 1e-05
      %v1942 = vadd.f32 %v1782, 1e-05
      %v1943 = vadd.f32 %v1783, 1e-05
      %v1944 = vadd.f32 %v1784, 1e-05
      %v1945 = vadd.f32 %v1785, 1e-05
      %v1946 = vadd.f32 %v1786, 1e-05
      %v1947 = vadd.f32 %v1787, 1e-05
      %v1948 = vadd.f32 %v1788, 1e-05
      %v1949 = vadd.f32 %v1789, 1e-05
      %v1950 = vadd.f32 %v1790, 1e-05
      %v1951 = vrsqrt.pop %v1871
      %v1952 = vrsqrt.pop %v1872
      %v1953 = vrsqrt.pop %v1873
      %v1954 = vrsqrt.pop %v1874
      %v1955 = vrsqrt.pop %v1875
      %v1956 = vrsqrt.pop %v1876
      %v1957 = vrsqrt.pop %v1877
      %v1958 = vrsqrt.pop %v1878
      %v1959 = vrsqrt.pop %v1879
      %v1960 = vrsqrt.pop %v1880
      %v1961 = vrsqrt.pop %v1881
      %v1962 = vrsqrt.pop %v1882
      %v1963 = vrsqrt.pop %v1883
      %v1964 = vrsqrt.pop %v1884
      %v1965 = vrsqrt.pop %v1885
      %v1966 = vrsqrt.pop %v1886
      %v1967 = vrsqrt.pop %v1887
      %v1968 = vrsqrt.pop %v1888
      %v1969 = vrsqrt.pop %v1889
      %v1970 = vrsqrt.pop %v1890
      %v1971 = vrsqrt.pop %v1891
      %v1972 = vrsqrt.pop %v1892
      %v1973 = vrsqrt.pop %v1893
      %v1974 = vrsqrt.pop %v1894
      %v1975 = vrsqrt.pop %v1895
      %v1976 = vrsqrt.pop %v1896
      %v1977 = vrsqrt.pop %v1897
      %v1978 = vrsqrt.pop %v1898
      %v1979 = vrsqrt.pop %v1899
      %v1980 = vrsqrt.pop %v1900
      %v1981 = vrsqrt.pop %v1901
      %v1982 = vrsqrt.pop %v1902
      %v1983 = vrsqrt.pop %v1903
      %v1984 = vrsqrt.pop %v1904
      %v1985 = vrsqrt.pop %v1905
      %v1986 = vrsqrt.pop %v1906
      %v1987 = vrsqrt.pop %v1907
      %v1988 = vrsqrt.pop %v1908
      %v1989 = vrsqrt.pop %v1909
      %v1990 = vrsqrt.pop %v1910
      %v1991 = vrsqrt.pop %v1911
      %v1992 = vrsqrt.pop %v1912
      %v1993 = vrsqrt.pop %v1913
      %v1994 = vrsqrt.pop %v1914
      %v1995 = vrsqrt.pop %v1915
      %v1996 = vrsqrt.pop %v1916
      %v1997 = vrsqrt.pop %v1917
      %v1998 = vrsqrt.pop %v1918
      %v1999 = vrsqrt.pop %v1919
      %v2000 = vrsqrt.pop %v1920
      %v2001 = vrsqrt.pop %v1921
      %v2002 = vrsqrt.pop %v1922
      %v2003 = vrsqrt.pop %v1923
      %v2004 = vrsqrt.pop %v1924
      %v2005 = vrsqrt.pop %v1925
      %v2006 = vrsqrt.pop %v1926
      %v2007 = vrsqrt.pop %v1927
      %v2008 = vrsqrt.pop %v1928
      %v2009 = vrsqrt.pop %v1929
      %v2010 = vrsqrt.pop %v1930
      %v2011 = vrsqrt.pop %v1931
      %v2012 = vrsqrt.pop %v1932
      %v2013 = vrsqrt.pop %v1933
      %v2014 = vrsqrt.pop %v1934
      %v2015 = vrsqrt.pop %v1935
      %v2016 = vrsqrt.pop %v1936
      %v2017 = vrsqrt.pop %v1937
      %v2018 = vrsqrt.pop %v1938
      %v2019 = vrsqrt.pop %v1939
      %v2020 = vrsqrt.pop %v1940
      %v2021 = vrsqrt.pop %v1941
      %v2022 = vrsqrt.pop %v1942
      %v2023 = vrsqrt.pop %v1943
      %v2024 = vrsqrt.pop %v1944
      %v2025 = vrsqrt.pop %v1945
      %v2026 = vrsqrt.pop %v1946
      %v2027 = vrsqrt.pop %v1947
      %v2028 = vrsqrt.pop %v1948
      %v2029 = vrsqrt.pop %v1949
      %v2030 = vrsqrt.pop %v1950
      %v2031 = vmul.f32 %v1791, %v1951
      %v2032 = vmul.f32 %v1792, %v1952
      %v2033 = vmul.f32 %v1793, %v1953
      %v2034 = vmul.f32 %v1794, %v1954
      %v2035 = vmul.f32 %v1795, %v1955
      %v2036 = vmul.f32 %v1796, %v1956
      %v2037 = vmul.f32 %v1797, %v1957
      %v2038 = vmul.f32 %v1798, %v1958
      %v2039 = vmul.f32 %v1799, %v1959
      %v2040 = vmul.f32 %v1800, %v1960
      %v2041 = vmul.f32 %v1801, %v1961
      %v2042 = vmul.f32 %v1802, %v1962
      %v2043 = vmul.f32 %v1803, %v1963
      %v2044 = vmul.f32 %v1804, %v1964
      %v2045 = vmul.f32 %v1805, %v1965
      %v2046 = vmul.f32 %v1806, %v1966
      %v2047 = vmul.f32 %v1807, %v1967
      %v2048 = vmul.f32 %v1808, %v1968
      %v2049 = vmul.f32 %v1809, %v1969
      %v2050 = vmul.f32 %v1810, %v1970
      %v2051 = vmul.f32 %v1811, %v1971
      %v2052 = vmul.f32 %v1812, %v1972
      %v2053 = vmul.f32 %v1813, %v1973
      %v2054 = vmul.f32 %v1814, %v1974
      %v2055 = vmul.f32 %v1815, %v1975
      %v2056 = vmul.f32 %v1816, %v1976
      %v2057 = vmul.f32 %v1817, %v1977
      %v2058 = vmul.f32 %v1818, %v1978
      %v2059 = vmul.f32 %v1819, %v1979
      %v2060 = vmul.f32 %v1820, %v1980
      %v2061 = vmul.f32 %v1821, %v1981
      %v2062 = vmul.f32 %v1822, %v1982
      %v2063 = vmul.f32 %v1823, %v1983
      %v2064 = vmul.f32 %v1824, %v1984
      %v2065 = vmul.f32 %v1825, %v1985
      %v2066 = vmul.f32 %v1826, %v1986
      %v2067 = vmul.f32 %v1827, %v1987
      %v2068 = vmul.f32 %v1828, %v1988
      %v2069 = vmul.f32 %v1829, %v1989
      %v2070 = vmul.f32 %v1830, %v1990
      %v2071 = vmul.f32 %v1831, %v1991
      %v2072 = vmul.f32 %v1832, %v1992
      %v2073 = vmul.f32 %v1833, %v1993
      %v2074 = vmul.f32 %v1834, %v1994
      %v2075 = vmul.f32 %v1835, %v1995
      %v2076 = vmul.f32 %v1836, %v1996
      %v2077 = vmul.f32 %v1837, %v1997
      %v2078 = vmul.f32 %v1838, %v1998
      %v2079 = vmul.f32 %v1839, %v1999
      %v2080 = vmul.f32 %v1840, %v2000
      %v2081 = vmul.f32 %v1841, %v2001
      %v2082 = vmul.f32 %v1842, %v2002
      %v2083 = vmul.f32 %v1843, %v2003
      %v2084 = vmul.f32 %v1844, %v2004
      %v2085 = vmul.f32 %v1845, %v2005
      %v2086 = vmul.f32 %v1846, %v2006
      %v2087 = vmul.f32 %v1847, %v2007
      %v2088 = vmul.f32 %v1848, %v2008
      %v2089 = vmul.f32 %v1849, %v2009
      %v2090 = vmul.f32 %v1850, %v2010
      %v2091 = vmul.f32 %v1851, %v2011
      %v2092 = vmul.f32 %v1852, %v2012
      %v2093 = vmul.f32 %v1853, %v2013
      %v2094 = vmul.f32 %v1854, %v2014
      %v2095 = vmul.f32 %v1855, %v2015
      %v2096 = vmul.f32 %v1856, %v2016
      %v2097 = vmul.f32 %v1857, %v2017
      %v2098 = vmul.f32 %v1858, %v2018
      %v2099 = vmul.f32 %v1859, %v2019
      %v2100 = vmul.f32 %v1860, %v2020
      %v2101 = vmul.f32 %v1861, %v2021
      %v2102 = vmul.f32 %v1862, %v2022
      %v2103 = vmul.f32 %v1863, %v2023
      %v2104 = vmul.f32 %v1864, %v2024
      %v2105 = vmul.f32 %v1865, %v2025
      %v2106 = vmul.f32 %v1866, %v2026
      %v2107 = vmul.f32 %v1867, %v2027
      %v2108 = vmul.f32 %v1868, %v2028
      %v2109 = vmul.f32 %v1869, %v2029
      %v2110 = vmul.f32 %v1870, %v2030
      %v2111 = vlaneseq
      %v2112 = vshrl.u32 %v2111, 7
      %v2113 = vsub.s32 2, %v2112
      %v2114 = vrot.slane %v282, %v2113
      %v2115 = vmul.f32 %v2031, %v2114
      %v2116 = vmul.f32 %v2032, %v2114
      %v2117 = vmul.f32 %v2033, %v2114
      %v2118 = vmul.f32 %v2034, %v2114
      %v2119 = vmul.f32 %v2035, %v2114
      %v2120 = vmul.f32 %v2036, %v2114
      %v2121 = vmul.f32 %v2037, %v2114
      %v2122 = vmul.f32 %v2038, %v2114
      %v2123 = vmul.f32 %v2039, %v2114
      %v2124 = vmul.f32 %v2040, %v2114
      %v2125 = vmul.f32 %v2041, %v2114
      %v2126 = vmul.f32 %v2042, %v2114
      %v2127 = vmul.f32 %v2043, %v2114
      %v2128 = vmul.f32 %v2044, %v2114
      %v2129 = vmul.f32 %v2045, %v2114
      %v2130 = vmul.f32 %v2046, %v2114
      %v2131 = vmul.f32 %v2047, %v2114
      %v2132 = vmul.f32 %v2048, %v2114
      %v2133 = vmul.f32 %v2049, %v2114
      %v2134 = vmul.f32 %v2050, %v2114
      %v2135 = vmul.f32 %v2051, %v2114
      %v2136 = vmul.f32 %v2052, %v2114
      %v2137 = vmul.f32 %v2053, %v2114
      %v2138 = vmul.f32 %v2054, %v2114
      %v2139 = vmul.f32 %v2055, %v2114
      %v2140 = vmul.f32 %v2056, %v2114
      %v2141 = vmul.f32 %v2057, %v2114
      %v2142 = vmul.f32 %v2058, %v2114
      %v2143 = vmul.f32 %v2059, %v2114
      %v2144 = vmul.f32 %v2060, %v2114
      %v2145 = vmul.f32 %v2061, %v2114
      %v2146 = vmul.f32 %v2062, %v2114
      %v2147 = vmul.f32 %v2063, %v2114
      %v2148 = vmul.f32 %v2064, %v2114
      %v2149 = vmul.f32 %v2065, %v2114
      %v2150 = vmul.f32 %v2066, %v2114
      %v2151 = vmul.f32 %v2067, %v2114
      %v2152 = vmul.f32 %v2068, %v2114
      %v2153 = vmul.f32 %v2069, %v2114
      %v2154 = vmul.f32 %v2070, %v2114
      %v2155 = vmul.f32 %v2071, %v2114
      %v2156 = vmul.f32 %v2072, %v2114
      %v2157 = vmul.f32 %v2073, %v2114
      %v2158 = vmul.f32 %v2074, %v2114
      %v2159 = vmul.f32 %v2075, %v2114
      %v2160 = vmul.f32 %v2076, %v2114
      %v2161 = vmul.f32 %v2077, %v2114
      %v2162 = vmul.f32 %v2078, %v2114
      %v2163 = vmul.f32 %v2079, %v2114
      %v2164 = vmul.f32 %v2080, %v2114
      %v2165 = vmul.f32 %v2081, %v2114
      %v2166 = vmul.f32 %v2082, %v2114
      %v2167 = vmul.f32 %v2083, %v2114
      %v2168 = vmul.f32 %v2084, %v2114
      %v2169 = vmul.f32 %v2085, %v2114
      %v2170 = vmul.f32 %v2086, %v2114
      %v2171 = vmul.f32 %v2087, %v2114
      %v2172 = vmul.f32 %v2088, %v2114
      %v2173 = vmul.f32 %v2089, %v2114
      %v2174 = vmul.f32 %v2090, %v2114
      %v2175 = vmul.f32 %v2091, %v2114
      %v2176 = vmul.f32 %v2092, %v2114
      %v2177 = vmul.f32 %v2093, %v2114
      %v2178 = vmul.f32 %v2094, %v2114
      %v2179 = vmul.f32 %v2095, %v2114
      %v2180 = vmul.f32 %v2096, %v2114
      %v2181 = vmul.f32 %v2097, %v2114
      %v2182 = vmul.f32 %v2098, %v2114
      %v2183 = vmul.f32 %v2099, %v2114
      %v2184 = vmul.f32 %v2100, %v2114
      %v2185 = vmul.f32 %v2101, %v2114
      %v2186 = vmul.f32 %v2102, %v2114
      %v2187 = vmul.f32 %v2103, %v2114
      %v2188 = vmul.f32 %v2104, %v2114
      %v2189 = vmul.f32 %v2105, %v2114
      %v2190 = vmul.f32 %v2106, %v2114
      %v2191 = vmul.f32 %v2107, %v2114
      %v2192 = vmul.f32 %v2108, %v2114
      %v2193 = vmul.f32 %v2109, %v2114
      %v2194 = vmul.f32 %v2110, %v2114
      %v2195 = vlaneseq
      %v2196 = vshrl.u32 %v2195, 7
      %v2197 = vsub.s32 2, %v2196
      %v2198 = vrot.slane %v283, %v2197
      %v2199 = vadd.f32 %v2115, %v2198
      %v2200 = vadd.f32 %v2116, %v2198
      %v2201 = vadd.f32 %v2117, %v2198
      %v2202 = vadd.f32 %v2118, %v2198
      %v2203 = vadd.f32 %v2119, %v2198
      %v2204 = vadd.f32 %v2120, %v2198
      %v2205 = vadd.f32 %v2121, %v2198
      %v2206 = vadd.f32 %v2122, %v2198
      %v2207 = vadd.f32 %v2123, %v2198
      %v2208 = vadd.f32 %v2124, %v2198
      %v2209 = vadd.f32 %v2125, %v2198
      %v2210 = vadd.f32 %v2126, %v2198
      %v2211 = vadd.f32 %v2127, %v2198
      %v2212 = vadd.f32 %v2128, %v2198
      %v2213 = vadd.f32 %v2129, %v2198
      %v2214 = vadd.f32 %v2130, %v2198
      %v2215 = vadd.f32 %v2131, %v2198
      %v2216 = vadd.f32 %v2132, %v2198
      %v2217 = vadd.f32 %v2133, %v2198
      %v2218 = vadd.f32 %v2134, %v2198
      %v2219 = vadd.f32 %v2135, %v2198
      %v2220 = vadd.f32 %v2136, %v2198
      %v2221 = vadd.f32 %v2137, %v2198
      %v2222 = vadd.f32 %v2138, %v2198
      %v2223 = vadd.f32 %v2139, %v2198
      %v2224 = vadd.f32 %v2140, %v2198
      %v2225 = vadd.f32 %v2141, %v2198
      %v2226 = vadd.f32 %v2142, %v2198
      %v2227 = vadd.f32 %v2143, %v2198
      %v2228 = vadd.f32 %v2144, %v2198
      %v2229 = vadd.f32 %v2145, %v2198
      %v2230 = vadd.f32 %v2146, %v2198
      %v2231 = vadd.f32 %v2147, %v2198
      %v2232 = vadd.f32 %v2148, %v2198
      %v2233 = vadd.f32 %v2149, %v2198
      %v2234 = vadd.f32 %v2150, %v2198
      %v2235 = vadd.f32 %v2151, %v2198
      %v2236 = vadd.f32 %v2152, %v2198
      %v2237 = vadd.f32 %v2153, %v2198
      %v2238 = vadd.f32 %v2154, %v2198
      %v2239 = vadd.f32 %v2155, %v2198
      %v2240 = vadd.f32 %v2156, %v2198
      %v2241 = vadd.f32 %v2157, %v2198
      %v2242 = vadd.f32 %v2158, %v2198
      %v2243 = vadd.f32 %v2159, %v2198
      %v2244 = vadd.f32 %v2160, %v2198
      %v2245 = vadd.f32 %v2161, %v2198
      %v2246 = vadd.f32 %v2162, %v2198
      %v2247 = vadd.f32 %v2163, %v2198
      %v2248 = vadd.f32 %v2164, %v2198
      %v2249 = vadd.f32 %v2165, %v2198
      %v2250 = vadd.f32 %v2166, %v2198
      %v2251 = vadd.f32 %v2167, %v2198
      %v2252 = vadd.f32 %v2168, %v2198
      %v2253 = vadd.f32 %v2169, %v2198
      %v2254 = vadd.f32 %v2170, %v2198
      %v2255 = vadd.f32 %v2171, %v2198
      %v2256 = vadd.f32 %v2172, %v2198
      %v2257 = vadd.f32 %v2173, %v2198
      %v2258 = vadd.f32 %v2174, %v2198
      %v2259 = vadd.f32 %v2175, %v2198
      %v2260 = vadd.f32 %v2176, %v2198
      %v2261 = vadd.f32 %v2177, %v2198
      %v2262 = vadd.f32 %v2178, %v2198
      %v2263 = vadd.f32 %v2179, %v2198
      %v2264 = vadd.f32 %v2180, %v2198
      %v2265 = vadd.f32 %v2181, %v2198
      %v2266 = vadd.f32 %v2182, %v2198
      %v2267 = vadd.f32 %v2183, %v2198
      %v2268 = vadd.f32 %v2184, %v2198
      %v2269 = vadd.f32 %v2185, %v2198
      %v2270 = vadd.f32 %v2186, %v2198
      %v2271 = vadd.f32 %v2187, %v2198
      %v2272 = vadd.f32 %v2188, %v2198
      %v2273 = vadd.f32 %v2189, %v2198
      %v2274 = vadd.f32 %v2190, %v2198
      %v2275 = vadd.f32 %v2191, %v2198
      %v2276 = vadd.f32 %v2192, %v2198
      %v2277 = vadd.f32 %v2193, %v2198
      %v2278 = vadd.f32 %v2194, %v2198
      %v2279 = vmax.f32 %v2199, 0.0
      %v2280 = vmax.f32 %v2200, 0.0
      %v2281 = vmax.f32 %v2201, 0.0
      %v2282 = vmax.f32 %v2202, 0.0
      %v2283 = vmax.f32 %v2203, 0.0
      %v2284 = vmax.f32 %v2204, 0.0
      %v2285 = vmax.f32 %v2205, 0.0
      %v2286 = vmax.f32 %v2206, 0.0
      %v2287 = vmax.f32 %v2207, 0.0
      %v2288 = vmax.f32 %v2208, 0.0
      %v2289 = vmax.f32 %v2209, 0.0
      %v2290 = vmax.f32 %v2210, 0.0
      %v2291 = vmax.f32 %v2211, 0.0
      %v2292 = vmax.f32 %v2212, 0.0
      %v2293 = vmax.f32 %v2213, 0.0
      %v2294 = vmax.f32 %v2214, 0.0
      %v2295 = vmax.f32 %v2215, 0.0
      %v2296 = vmax.f32 %v2216, 0.0
      %v2297 = vmax.f32 %v2217, 0.0
      %v2298 = vmax.f32 %v2218, 0.0
      %v2299 = vmax.f32 %v2219, 0.0
      %v2300 = vmax.f32 %v2220, 0.0
      %v2301 = vmax.f32 %v2221, 0.0
      %v2302 = vmax.f32 %v2222, 0.0
      %v2303 = vmax.f32 %v2223, 0.0
      %v2304 = vmax.f32 %v2224, 0.0
      %v2305 = vmax.f32 %v2225, 0.0
      %v2306 = vmax.f32 %v2226, 0.0
      %v2307 = vmax.f32 %v2227, 0.0
      %v2308 = vmax.f32 %v2228, 0.0
      %v2309 = vmax.f32 %v2229, 0.0
      %v2310 = vmax.f32 %v2230, 0.0
      %v2311 = vmax.f32 %v2231, 0.0
      %v2312 = vmax.f32 %v2232, 0.0
      %v2313 = vmax.f32 %v2233, 0.0
      %v2314 = vmax.f32 %v2234, 0.0
      %v2315 = vmax.f32 %v2235, 0.0
      %v2316 = vmax.f32 %v2236, 0.0
      %v2317 = vmax.f32 %v2237, 0.0
      %v2318 = vmax.f32 %v2238, 0.0
      %v2319 = vmax.f32 %v2239, 0.0
      %v2320 = vmax.f32 %v2240, 0.0
      %v2321 = vmax.f32 %v2241, 0.0
      %v2322 = vmax.f32 %v2242, 0.0
      %v2323 = vmax.f32 %v2243, 0.0
      %v2324 = vmax.f32 %v2244, 0.0
      %v2325 = vmax.f32 %v2245, 0.0
      %v2326 = vmax.f32 %v2246, 0.0
      %v2327 = vmax.f32 %v2247, 0.0
      %v2328 = vmax.f32 %v2248, 0.0
      %v2329 = vmax.f32 %v2249, 0.0
      %v2330 = vmax.f32 %v2250, 0.0
      %v2331 = vmax.f32 %v2251, 0.0
      %v2332 = vmax.f32 %v2252, 0.0
      %v2333 = vmax.f32 %v2253, 0.0
      %v2334 = vmax.f32 %v2254, 0.0
      %v2335 = vmax.f32 %v2255, 0.0
      %v2336 = vmax.f32 %v2256, 0.0
      %v2337 = vmax.f32 %v2257, 0.0
      %v2338 = vmax.f32 %v2258, 0.0
      %v2339 = vmax.f32 %v2259, 0.0
      %v2340 = vmax.f32 %v2260, 0.0
      %v2341 = vmax.f32 %v2261, 0.0
      %v2342 = vmax.f32 %v2262, 0.0
      %v2343 = vmax.f32 %v2263, 0.0
      %v2344 = vmax.f32 %v2264, 0.0
      %v2345 = vmax.f32 %v2265, 0.0
      %v2346 = vmax.f32 %v2266, 0.0
      %v2347 = vmax.f32 %v2267, 0.0
      %v2348 = vmax.f32 %v2268, 0.0
      %v2349 = vmax.f32 %v2269, 0.0
      %v2350 = vmax.f32 %v2270, 0.0
      %v2351 = vmax.f32 %v2271, 0.0
      %v2352 = vmax.f32 %v2272, 0.0
      %v2353 = vmax.f32 %v2273, 0.0
      %v2354 = vmax.f32 %v2274, 0.0
      %v2355 = vmax.f32 %v2275, 0.0
      %v2356 = vmax.f32 %v2276, 0.0
      %v2357 = vmax.f32 %v2277, 0.0
      %v2358 = vmax.f32 %v2278, 0.0
      %v2359 = vmax.f32 %v594, 0.0
      %v2360 = vmax.f32 %v598, 0.0
      %v2361 = vmax.f32 %v604, 0.0
      %v2362 = vmax.f32 %v608, 0.0
      %v2363 = vmax.f32 %v614, 0.0
      %v2364 = vmax.f32 %v618, 0.0
      %v2365 = vmax.f32 %v624, 0.0
      %v2366 = vmax.f32 %v628, 0.0
      %v2367 = vmax.f32 %v634, 0.0
      %v2368 = vmax.f32 %v638, 0.0
      %v2369 = vmax.f32 %v644, 0.0
      %v2370 = vmax.f32 %v648, 0.0
      %v2371 = vmax.f32 %v654, 0.0
      %v2372 = vmax.f32 %v658, 0.0
      %v2373 = vmax.f32 %v664, 0.0
      %v2374 = vmax.f32 %v668, 0.0
      %v2375 = vmax.f32 %v674, 0.0
      %v2376 = vmax.f32 %v678, 0.0
      %v2377 = vmax.f32 %v684, 0.0
      %v2378 = vmax.f32 %v688, 0.0
      %v2379 = vmax.f32 %v694, 0.0
      %v2380 = vmax.f32 %v698, 0.0
      %v2381 = vmax.f32 %v704, 0.0
      %v2382 = vmax.f32 %v708, 0.0
      %v2383 = vmax.f32 %v714, 0.0
      %v2384 = vmax.f32 %v718, 0.0
      %v2385 = vmax.f32 %v724, 0.0
      %v2386 = vmax.f32 %v728, 0.0
      %v2387 = vmax.f32 %v734, 0.0
      %v2388 = vmax.f32 %v738, 0.0
      %v2389 = vmax.f32 %v744, 0.0
      %v2390 = vmax.f32 %v748, 0.0
      %v2391 = vmax.f32 %v754, 0.0
      %v2392 = vmax.f32 %v758, 0.0
      %v2393 = vmax.f32 %v764, 0.0
      %v2394 = vmax.f32 %v768, 0.0
      %v2395 = vmax.f32 %v774, 0.0
      %v2396 = vmax.f32 %v778, 0.0
      %v2397 = vmax.f32 %v784, 0.0
      %v2398 = vmax.f32 %v788, 0.0
      %v2399 = vmax.f32 %v794, 0.0
      %v2400 = vmax.f32 %v798, 0.0
      %v2401 = vmax.f32 %v804, 0.0
      %v2402 = vmax.f32 %v808, 0.0
      %v2403 = vmax.f32 %v814, 0.0
      %v2404 = vmax.f32 %v818, 0.0
      %v2405 = vmax.f32 %v824, 0.0
      %v2406 = vmax.f32 %v828, 0.0
      %v2407 = vmax.f32 %v834, 0.0
      %v2408 = vmax.f32 %v838, 0.0
      %v2409 = vmax.f32 %v844, 0.0
      %v2410 = vmax.f32 %v848, 0.0
      %v2411 = vmax.f32 %v854, 0.0
      %v2412 = vmax.f32 %v858, 0.0
      %v2413 = vmax.f32 %v864, 0.0
      %v2414 = vmax.f32 %v868, 0.0
      %v2415 = vmax.f32 %v874, 0.0
      %v2416 = vmax.f32 %v878, 0.0
      %v2417 = vmax.f32 %v884, 0.0
      %v2418 = vmax.f32 %v888, 0.0
      %v2419 = vmax.f32 %v894, 0.0
      %v2420 = vmax.f32 %v898, 0.0
      %v2421 = vmax.f32 %v904, 0.0
      %v2422 = vmax.f32 %v908, 0.0
      %v2423 = vmax.f32 %v914, 0.0
      %v2424 = vmax.f32 %v918, 0.0
      %v2425 = vmax.f32 %v924, 0.0
      %v2426 = vmax.f32 %v928, 0.0
      %v2427 = vmax.f32 %v934, 0.0
      %v2428 = vmax.f32 %v938, 0.0
      %v2429 = vmax.f32 %v944, 0.0
      %v2430 = vmax.f32 %v948, 0.0
      %v2431 = vmax.f32 %v954, 0.0
      %v2432 = vmax.f32 %v958, 0.0
      %v2433 = vmax.f32 %v964, 0.0
      %v2434 = vmax.f32 %v968, 0.0
      %v2435 = vmax.f32 %v974, 0.0
      %v2436 = vmax.f32 %v978, 0.0
      %v2437 = vmax.f32 %v984, 0.0
      %v2438 = vmax.f32 %v988, 0.0
      %v2439 = vpack.c.bf16 %v2280, %v2279
      %v2440 = vpack.c.bf16 %v2282, %v2281
      %v2441 = vpack.c.bf16 %v2284, %v2283
      %v2442 = vpack.c.bf16 %v2286, %v2285
      %v2443 = vpack.c.bf16 %v2288, %v2287
      %v2444 = vpack.c.bf16 %v2290, %v2289
      %v2445 = vpack.c.bf16 %v2292, %v2291
      %v2446 = vpack.c.bf16 %v2294, %v2293
      %v2447 = vpack.c.bf16 %v2296, %v2295
      %v2448 = vpack.c.bf16 %v2298, %v2297
      %v2449 = vpack.c.bf16 %v2300, %v2299
      %v2450 = vpack.c.bf16 %v2302, %v2301
      %v2451 = vpack.c.bf16 %v2304, %v2303
      %v2452 = vpack.c.bf16 %v2306, %v2305
      %v2453 = vpack.c.bf16 %v2308, %v2307
      %v2454 = vpack.c.bf16 %v2310, %v2309
      %v2455 = vpack.c.bf16 %v2312, %v2311
      %v2456 = vpack.c.bf16 %v2314, %v2313
      %v2457 = vpack.c.bf16 %v2316, %v2315
      %v2458 = vpack.c.bf16 %v2318, %v2317
      %v2459 = vpack.c.bf16 %v2320, %v2319
      %v2460 = vpack.c.bf16 %v2322, %v2321
      %v2461 = vpack.c.bf16 %v2324, %v2323
      %v2462 = vpack.c.bf16 %v2326, %v2325
      %v2463 = vpack.c.bf16 %v2328, %v2327
      %v2464 = vpack.c.bf16 %v2330, %v2329
      %v2465 = vpack.c.bf16 %v2332, %v2331
      %v2466 = vpack.c.bf16 %v2334, %v2333
      %v2467 = vpack.c.bf16 %v2336, %v2335
      %v2468 = vpack.c.bf16 %v2338, %v2337
      %v2469 = vpack.c.bf16 %v2340, %v2339
      %v2470 = vpack.c.bf16 %v2342, %v2341
      %v2471 = vpack.c.bf16 %v2344, %v2343
      %v2472 = vpack.c.bf16 %v2346, %v2345
      %v2473 = vpack.c.bf16 %v2348, %v2347
      %v2474 = vpack.c.bf16 %v2350, %v2349
      %v2475 = vpack.c.bf16 %v2352, %v2351
      %v2476 = vpack.c.bf16 %v2354, %v2353
      %v2477 = vpack.c.bf16 %v2356, %v2355
      %v2478 = vpack.c.bf16 %v2358, %v2357
      %v2479 = vpack.c.bf16 %v2360, %v2359
      %v2480 = vpack.c.bf16 %v2362, %v2361
      %v2481 = vpack.c.bf16 %v2364, %v2363
      %v2482 = vpack.c.bf16 %v2366, %v2365
      %v2483 = vpack.c.bf16 %v2368, %v2367
      %v2484 = vpack.c.bf16 %v2370, %v2369
      %v2485 = vpack.c.bf16 %v2372, %v2371
      %v2486 = vpack.c.bf16 %v2374, %v2373
      %v2487 = vpack.c.bf16 %v2376, %v2375
      %v2488 = vpack.c.bf16 %v2378, %v2377
      %v2489 = vpack.c.bf16 %v2380, %v2379
      %v2490 = vpack.c.bf16 %v2382, %v2381
      %v2491 = vpack.c.bf16 %v2384, %v2383
      %v2492 = vpack.c.bf16 %v2386, %v2385
      %v2493 = vpack.c.bf16 %v2388, %v2387
      %v2494 = vpack.c.bf16 %v2390, %v2389
      %v2495 = vpack.c.bf16 %v2392, %v2391
      %v2496 = vpack.c.bf16 %v2394, %v2393
      %v2497 = vpack.c.bf16 %v2396, %v2395
      %v2498 = vpack.c.bf16 %v2398, %v2397
      %v2499 = vpack.c.bf16 %v2400, %v2399
      %v2500 = vpack.c.bf16 %v2402, %v2401
      %v2501 = vpack.c.bf16 %v2404, %v2403
      %v2502 = vpack.c.bf16 %v2406, %v2405
      %v2503 = vpack.c.bf16 %v2408, %v2407
      %v2504 = vpack.c.bf16 %v2410, %v2409
      %v2505 = vpack.c.bf16 %v2412, %v2411
      %v2506 = vpack.c.bf16 %v2414, %v2413
      %v2507 = vpack.c.bf16 %v2416, %v2415
      %v2508 = vpack.c.bf16 %v2418, %v2417
      %v2509 = vpack.c.bf16 %v2420, %v2419
      %v2510 = vpack.c.bf16 %v2422, %v2421
      %v2511 = vpack.c.bf16 %v2424, %v2423
      %v2512 = vpack.c.bf16 %v2426, %v2425
      %v2513 = vpack.c.bf16 %v2428, %v2427
      %v2514 = vpack.c.bf16 %v2430, %v2429
      %v2515 = vpack.c.bf16 %v2432, %v2431
      %v2516 = vpack.c.bf16 %v2434, %v2433
      %v2517 = vpack.c.bf16 %v2436, %v2435
      %v2518 = vpack.c.bf16 %v2438, %v2437
      %v2519 = vld [vmem:[%s4] sm:$0xff]
      %v2520 = vld [vmem:[%s4 + $0x8] sm:$0xff]
      %v2521 = vld [vmem:[%s4 + $0x10] sm:$0xff]
      %v2522 = vld [vmem:[%s4 + $0x18] sm:$0xff]
      %v2523 = vld [vmem:[%s4 + $0x20] sm:$0xff]
      %v2524 = vld [vmem:[%s4 + $0x28] sm:$0xff]
      %v2525 = vld [vmem:[%s4 + $0x30] sm:$0xff]
      %v2526 = vld [vmem:[%s4 + $0x38] sm:$0xff]
      %v2527 = vld [vmem:[%s4 + $0x40] sm:$0xff]
      %v2528 = vld [vmem:[%s4 + $0x48] sm:$0xff]
      %v2529 = vld [vmem:[%s4 + $0x50] sm:$0xff]
      %v2530 = vld [vmem:[%s4 + $0x58] sm:$0xff]
      %v2531 = vld [vmem:[%s4 + $0x60] sm:$0xff]
      %v2532 = vld [vmem:[%s4 + $0x68] sm:$0xff]
      %v2533 = vld [vmem:[%s4 + $0x70] sm:$0xff]
      %v2534 = vld [vmem:[%s4 + $0x78] sm:$0xff]
      %v2535 = vld [vmem:[%s4 + $0x80] sm:$0xff]
      %v2536 = vld [vmem:[%s4 + $0x88] sm:$0xff]
      %v2537 = vld [vmem:[%s4 + $0x90] sm:$0xff]
      %v2538 = vld [vmem:[%s4 + $0x98] sm:$0xff]
      %v2539 = vld [vmem:[%s4 + $0xa0] sm:$0xff]
      %v2540 = vld [vmem:[%s4 + $0xa8] sm:$0xff]
      %v2541 = vld [vmem:[%s4 + $0xb0] sm:$0xff]
      %v2542 = vld [vmem:[%s4 + $0xb8] sm:$0xff]
      %v2543 = vld [vmem:[%s4 + $0xc0] sm:$0xff]
      %v2544 = vld [vmem:[%s4 + $0xc8] sm:$0xff]
      %v2545 = vld [vmem:[%s4 + $0xd0] sm:$0xff]
      %v2546 = vld [vmem:[%s4 + $0xd8] sm:$0xff]
      %v2547 = vld [vmem:[%s4 + $0xe0] sm:$0xff]
      %v2548 = vld [vmem:[%s4 + $0xe8] sm:$0xff]
      %v2549 = vld [vmem:[%s4 + $0xf0] sm:$0xff]
      %v2550 = vld [vmem:[%s4 + $0xf8] sm:$0xff]
      %v2551 = vlaneseq
      %v2552 = vshrl.u32 %v2551, 7
      %v2553 = vsub.s32 1, %v2552
      %v2554 = vrot.slane %v282, %v2553
      %v2555 = vlaneseq
      %v2556 = vshrl.u32 %v2555, 7
      %v2557 = vsub.s32 1, %v2556
      %v2558 = vrot.slane %v283, %v2557
      %v2591 = vunpack.c.l.b16 %v2519
      %v2592 = vunpack.c.h.b16 %v2519
      %v2593 = vunpack.c.l.b16 %v2520
      %v2594 = vunpack.c.h.b16 %v2520
      %v2595 = vunpack.c.l.b16 %v2521
      %v2596 = vunpack.c.h.b16 %v2521
      %v2597 = vunpack.c.l.b16 %v2522
      %v2598 = vunpack.c.h.b16 %v2522
      %v2599 = vunpack.c.l.b16 %v2523
      %v2600 = vunpack.c.h.b16 %v2523
      %v2601 = vunpack.c.l.b16 %v2524
      %v2602 = vunpack.c.h.b16 %v2524
      %v2603 = vunpack.c.l.b16 %v2525
      %v2604 = vunpack.c.h.b16 %v2525
      %v2605 = vunpack.c.l.b16 %v2526
      %v2606 = vunpack.c.h.b16 %v2526
      %v2607 = vunpack.c.l.b16 %v2527
      %v2608 = vunpack.c.h.b16 %v2527
      %v2609 = vunpack.c.l.b16 %v2528
      %v2610 = vunpack.c.h.b16 %v2528
      %v2611 = vunpack.c.l.b16 %v2529
      %v2612 = vunpack.c.h.b16 %v2529
      %v2613 = vunpack.c.l.b16 %v2530
      %v2614 = vunpack.c.h.b16 %v2530
      %v2615 = vunpack.c.l.b16 %v2531
      %v2616 = vunpack.c.h.b16 %v2531
      %v2617 = vunpack.c.l.b16 %v2532
      %v2618 = vunpack.c.h.b16 %v2532
      %v2619 = vunpack.c.l.b16 %v2533
      %v2620 = vunpack.c.h.b16 %v2533
      %v2621 = vunpack.c.l.b16 %v2534
      %v2622 = vunpack.c.h.b16 %v2534
      %v2623 = vunpack.c.l.b16 %v2535
      %v2624 = vunpack.c.h.b16 %v2535
      %v2625 = vunpack.c.l.b16 %v2536
      %v2626 = vunpack.c.h.b16 %v2536
      %v2627 = vunpack.c.l.b16 %v2537
      %v2628 = vunpack.c.h.b16 %v2537
      %v2629 = vunpack.c.l.b16 %v2538
      %v2630 = vunpack.c.h.b16 %v2538
      %v2631 = vunpack.c.l.b16 %v2539
      %v2632 = vunpack.c.h.b16 %v2539
      %v2633 = vunpack.c.l.b16 %v2540
      %v2634 = vunpack.c.h.b16 %v2540
      %v2635 = vunpack.c.l.b16 %v2541
      %v2636 = vunpack.c.h.b16 %v2541
      %v2637 = vunpack.c.l.b16 %v2542
      %v2638 = vunpack.c.h.b16 %v2542
      %v2639 = vunpack.c.l.b16 %v2543
      %v2640 = vunpack.c.h.b16 %v2543
      %v2641 = vunpack.c.l.b16 %v2544
      %v2642 = vunpack.c.h.b16 %v2544
      %v2643 = vunpack.c.l.b16 %v2545
      %v2644 = vunpack.c.h.b16 %v2545
      %v2645 = vunpack.c.l.b16 %v2546
      %v2646 = vunpack.c.h.b16 %v2546
      %v2647 = vunpack.c.l.b16 %v2547
      %v2648 = vunpack.c.h.b16 %v2547
      %v2649 = vunpack.c.l.b16 %v2548
      %v2650 = vunpack.c.h.b16 %v2548
      %v2651 = vunpack.c.l.b16 %v2549
      %v2652 = vunpack.c.h.b16 %v2549
      %v2653 = vunpack.c.l.b16 %v2550
      %v2654 = vunpack.c.h.b16 %v2550
      %v2655 = vpack.c.b16 %v2593, %v2591
      %v2656 = vpack.c.b16 %v2594, %v2592
      %v2657 = vpack.c.b16 %v2597, %v2595
      %v2658 = vpack.c.b16 %v2598, %v2596
      %v2659 = vpack.c.b16 %v2601, %v2599
      %v2660 = vpack.c.b16 %v2602, %v2600
      %v2661 = vpack.c.b16 %v2605, %v2603
      %v2662 = vpack.c.b16 %v2606, %v2604
      %v2663 = vpack.c.b16 %v2609, %v2607
      %v2664 = vpack.c.b16 %v2610, %v2608
      %v2665 = vpack.c.b16 %v2613, %v2611
      %v2666 = vpack.c.b16 %v2614, %v2612
      %v2667 = vpack.c.b16 %v2617, %v2615
      %v2668 = vpack.c.b16 %v2618, %v2616
      %v2669 = vpack.c.b16 %v2621, %v2619
      %v2670 = vpack.c.b16 %v2622, %v2620
      %v2671 = vpack.c.b16 %v2625, %v2623
      %v2672 = vpack.c.b16 %v2626, %v2624
      %v2673 = vpack.c.b16 %v2629, %v2627
      %v2674 = vpack.c.b16 %v2630, %v2628
      %v2675 = vpack.c.b16 %v2633, %v2631
      %v2676 = vpack.c.b16 %v2634, %v2632
      %v2677 = vpack.c.b16 %v2637, %v2635
      %v2678 = vpack.c.b16 %v2638, %v2636
      %v2679 = vpack.c.b16 %v2641, %v2639
      %v2680 = vpack.c.b16 %v2642, %v2640
      %v2681 = vpack.c.b16 %v2645, %v2643
      %v2682 = vpack.c.b16 %v2646, %v2644
      %v2683 = vpack.c.b16 %v2649, %v2647
      %v2684 = vpack.c.b16 %v2650, %v2648
      %v2685 = vpack.c.b16 %v2653, %v2651
      %v2686 = vpack.c.b16 %v2654, %v2652
      %2719 = vmatprep.subr.bf16.mxu0 %v2656
      %2720 = vmatpush1.bf16.msra.mxu0 %v2655
      %2721 = vmatprep.subr.bf16.mxu0 %v2658
      %2722 = vmatpush1.bf16.msra.mxu0 %v2657
      %2723 = vmatprep.subr.bf16.mxu0 %v2660
      %2724 = vmatpush1.bf16.msra.mxu0 %v2659
      %2725 = vmatprep.subr.bf16.mxu0 %v2662
      %2726 = vmatpush1.bf16.msra.mxu0 %v2661
      %2727 = vmatprep.subr.bf16.mxu0 %v2664
      %2728 = vmatpush1.bf16.msra.mxu0 %v2663
      %2729 = vmatprep.subr.bf16.mxu0 %v2666
      %2730 = vmatpush1.bf16.msra.mxu0 %v2665
      %2731 = vmatprep.subr.bf16.mxu0 %v2668
      %2732 = vmatpush1.bf16.msra.mxu0 %v2667
      %2733 = vmatprep.subr.bf16.mxu0 %v2670
      %2734 = vmatpush1.bf16.msra.mxu0 %v2669
      %2735 = vmatprep.subr.bf16.mxu0 %v2672
      %2736 = vmatpush1.bf16.msra.mxu0 %v2671
      %2737 = vmatprep.subr.bf16.mxu0 %v2674
      %2738 = vmatpush1.bf16.msra.mxu0 %v2673
      %2739 = vmatprep.subr.bf16.mxu0 %v2676
      %2740 = vmatpush1.bf16.msra.mxu0 %v2675
      %2741 = vmatprep.subr.bf16.mxu0 %v2678
      %2742 = vmatpush1.bf16.msra.mxu0 %v2677
      %2743 = vmatprep.subr.bf16.mxu0 %v2680
      %2744 = vmatpush1.bf16.msra.mxu0 %v2679
      %2745 = vmatprep.subr.bf16.mxu0 %v2682
      %2746 = vmatpush1.bf16.msra.mxu0 %v2681
      %2747 = vmatprep.subr.bf16.mxu0 %v2684
      %2748 = vmatpush1.bf16.msra.mxu0 %v2683
      %2749 = vmatprep.subr.bf16.mxu0 %v2686
      %2750 = vmatpush1.bf16.msra.mxu0 %v2685
      %2751 = vmatprep.mubr.bf16.mxu0 %v2479
      %2752 = vmatmul.mubr.bf16.gmra.mrb[0].mxu0 %v2439
      %v2753 = vpop.f32.mrb[0].mxu0
      %v2754 = vadd.f32 %v2554, %v2753
      %v2755 = vpop.f32.mrb[0].mxu0
      %v2756 = vadd.f32 %v2558, %v2755
      %v2757 = vpop.f32.mrb[0].mxu0
      %v2758 = vadd.f32 %v2554, %v2757
      %v2759 = vpop.f32.mrb[0].mxu0
      %v2760 = vadd.f32 %v2558, %v2759
      %2761 = vmatprep.mubr.bf16.mxu0 %v2480
      %2762 = vmatmul.mubr.bf16.gmra.mrb[0].mxu0 %v2440
      %v2763 = vpop.f32.mrb[0].mxu0
      %v2764 = vadd.f32 %v2554, %v2763
      %v2765 = vpop.f32.mrb[0].mxu0
      %v2766 = vadd.f32 %v2558, %v2765
      %v2767 = vpop.f32.mrb[0].mxu0
      %v2768 = vadd.f32 %v2554, %v2767
      %v2769 = vpop.f32.mrb[0].mxu0
      %v2770 = vadd.f32 %v2558, %v2769
      %2771 = vmatprep.mubr.bf16.mxu0 %v2481
      %2772 = vmatmul.mubr.bf16.gmra.mrb[0].mxu0 %v2441
      %v2773 = vpop.f32.mrb[0].mxu0
      %v2774 = vadd.f32 %v2554, %v2773
      %v2775 = vpop.f32.mrb[0].mxu0
      %v2776 = vadd.f32 %v2558, %v2775
      %v2777 = vpop.f32.mrb[0].mxu0
      %v2778 = vadd.f32 %v2554, %v2777
      %v2779 = vpop.f32.mrb[0].mxu0
      %v2780 = vadd.f32 %v2558, %v2779
      %2781 = vmatprep.mubr.bf16.mxu0 %v2482
      %2782 = vmatmul.mubr.bf16.gmra.mrb[0].mxu0 %v2442
      %v2783 = vpop.f32.mrb[0].mxu0
      %v2784 = vadd.f32 %v2554, %v2783
      %v2785 = vpop.f32.mrb[0].mxu0
      %v2786 = vadd.f32 %v2558, %v2785
      %v2787 = vpop.f32.mrb[0].mxu0
      %v2788 = vadd.f32 %v2554, %v2787
      %v2789 = vpop.f32.mrb[0].mxu0
      %v2790 = vadd.f32 %v2558, %v2789
      %2791 = vmatprep.mubr.bf16.mxu0 %v2483
      %2792 = vmatmul.mubr.bf16.gmra.mrb[0].mxu0 %v2443
      %v2793 = vpop.f32.mrb[0].mxu0
      %v2794 = vadd.f32 %v2554, %v2793
      %v2795 = vpop.f32.mrb[0].mxu0
      %v2796 = vadd.f32 %v2558, %v2795
      %v2797 = vpop.f32.mrb[0].mxu0
      %v2798 = vadd.f32 %v2554, %v2797
      %v2799 = vpop.f32.mrb[0].mxu0
      %v2800 = vadd.f32 %v2558, %v2799
      %2801 = vmatprep.mubr.bf16.mxu0 %v2484
      %2802 = vmatmul.mubr.bf16.gmra.mrb[0].mxu0 %v2444
      %v2803 = vpop.f32.mrb[0].mxu0
      %v2804 = vadd.f32 %v2554, %v2803
      %v2805 = vpop.f32.mrb[0].mxu0
      %v2806 = vadd.f32 %v2558, %v2805
      %v2807 = vpop.f32.mrb[0].mxu0
      %v2808 = vadd.f32 %v2554, %v2807
      %v2809 = vpop.f32.mrb[0].mxu0
      %v2810 = vadd.f32 %v2558, %v2809
      %2811 = vmatprep.mubr.bf16.mxu0 %v2485
      %2812 = vmatmul.mubr.bf16.gmra.mrb[0].mxu0 %v2445
      %v2813 = vpop.f32.mrb[0].mxu0
      %v2814 = vadd.f32 %v2554, %v2813
      %v2815 = vpop.f32.mrb[0].mxu0
      %v2816 = vadd.f32 %v2558, %v2815
      %v2817 = vpop.f32.mrb[0].mxu0
      %v2818 = vadd.f32 %v2554, %v2817
      %v2819 = vpop.f32.mrb[0].mxu0
      %v2820 = vadd.f32 %v2558, %v2819
      %2821 = vmatprep.mubr.bf16.mxu0 %v2486
      %2822 = vmatmul.mubr.bf16.gmra.mrb[0].mxu0 %v2446
      %v2823 = vpop.f32.mrb[0].mxu0
      %v2824 = vadd.f32 %v2554, %v2823
      %v2825 = vpop.f32.mrb[0].mxu0
      %v2826 = vadd.f32 %v2558, %v2825
      %v2827 = vpop.f32.mrb[0].mxu0
      %v2828 = vadd.f32 %v2554, %v2827
      %v2829 = vpop.f32.mrb[0].mxu0
      %v2830 = vadd.f32 %v2558, %v2829
      %2831 = vmatprep.mubr.bf16.mxu0 %v2487
      %2832 = vmatmul.mubr.bf16.gmra.mrb[0].mxu0 %v2447
      %v2833 = vpop.f32.mrb[0].mxu0
      %v2834 = vadd.f32 %v2554, %v2833
      %v2835 = vpop.f32.mrb[0].mxu0
      %v2836 = vadd.f32 %v2558, %v2835
      %v2837 = vpop.f32.mrb[0].mxu0
      %v2838 = vadd.f32 %v2554, %v2837
      %v2839 = vpop.f32.mrb[0].mxu0
      %v2840 = vadd.f32 %v2558, %v2839
      %2841 = vmatprep.mubr.bf16.mxu0 %v2488
      %2842 = vmatmul.mubr.bf16.gmra.mrb[0].mxu0 %v2448
      %v2843 = vpop.f32.mrb[0].mxu0
      %v2844 = vadd.f32 %v2554, %v2843
      %v2845 = vpop.f32.mrb[0].mxu0
      %v2846 = vadd.f32 %v2558, %v2845
      %v2847 = vpop.f32.mrb[0].mxu0
      %v2848 = vadd.f32 %v2554, %v2847
      %v2849 = vpop.f32.mrb[0].mxu0
      %v2850 = vadd.f32 %v2558, %v2849
      %2851 = vmatprep.mubr.bf16.mxu0 %v2489
      %2852 = vmatmul.mubr.bf16.gmra.mrb[0].mxu0 %v2449
      %v2853 = vpop.f32.mrb[0].mxu0
      %v2854 = vadd.f32 %v2554, %v2853
      %v2855 = vpop.f32.mrb[0].mxu0
      %v2856 = vadd.f32 %v2558, %v2855
      %v2857 = vpop.f32.mrb[0].mxu0
      %v2858 = vadd.f32 %v2554, %v2857
      %v2859 = vpop.f32.mrb[0].mxu0
      %v2860 = vadd.f32 %v2558, %v2859
      %2861 = vmatprep.mubr.bf16.mxu0 %v2490
      %2862 = vmatmul.mubr.bf16.gmra.mrb[0].mxu0 %v2450
      %v2863 = vpop.f32.mrb[0].mxu0
      %v2864 = vadd.f32 %v2554, %v2863
      %v2865 = vpop.f32.mrb[0].mxu0
      %v2866 = vadd.f32 %v2558, %v2865
      %v2867 = vpop.f32.mrb[0].mxu0
      %v2868 = vadd.f32 %v2554, %v2867
      %v2869 = vpop.f32.mrb[0].mxu0
      %v2870 = vadd.f32 %v2558, %v2869
      %2871 = vmatprep.mubr.bf16.mxu0 %v2491
      %2872 = vmatmul.mubr.bf16.gmra.mrb[0].mxu0 %v2451
      %v2873 = vpop.f32.mrb[0].mxu0
      %v2874 = vadd.f32 %v2554, %v2873
      %v2875 = vpop.f32.mrb[0].mxu0
      %v2876 = vadd.f32 %v2558, %v2875
      %v2877 = vpop.f32.mrb[0].mxu0
      %v2878 = vadd.f32 %v2554, %v2877
      %v2879 = vpop.f32.mrb[0].mxu0
      %v2880 = vadd.f32 %v2558, %v2879
      %2881 = vmatprep.mubr.bf16.mxu0 %v2492
      %2882 = vmatmul.mubr.bf16.gmra.mrb[0].mxu0 %v2452
      %v2883 = vpop.f32.mrb[0].mxu0
      %v2884 = vadd.f32 %v2554, %v2883
      %v2885 = vpop.f32.mrb[0].mxu0
      %v2886 = vadd.f32 %v2558, %v2885
      %v2887 = vpop.f32.mrb[0].mxu0
      %v2888 = vadd.f32 %v2554, %v2887
      %v2889 = vpop.f32.mrb[0].mxu0
      %v2890 = vadd.f32 %v2558, %v2889
      %2891 = vmatprep.mubr.bf16.mxu0 %v2493
      %2892 = vmatmul.mubr.bf16.gmra.mrb[0].mxu0 %v2453
      %v2893 = vpop.f32.mrb[0].mxu0
      %v2894 = vadd.f32 %v2554, %v2893
      %v2895 = vpop.f32.mrb[0].mxu0
      %v2896 = vadd.f32 %v2558, %v2895
      %v2897 = vpop.f32.mrb[0].mxu0
      %v2898 = vadd.f32 %v2554, %v2897
      %v2899 = vpop.f32.mrb[0].mxu0
      %v2900 = vadd.f32 %v2558, %v2899
      %2901 = vmatprep.mubr.bf16.mxu0 %v2494
      %2902 = vmatmul.mubr.bf16.gmra.mrb[0].mxu0 %v2454
      %v2903 = vpop.f32.mrb[0].mxu0
      %v2904 = vadd.f32 %v2554, %v2903
      %v2905 = vpop.f32.mrb[0].mxu0
      %v2906 = vadd.f32 %v2558, %v2905
      %v2907 = vpop.f32.mrb[0].mxu0
      %v2908 = vadd.f32 %v2554, %v2907
      %v2909 = vpop.f32.mrb[0].mxu0
      %v2910 = vadd.f32 %v2558, %v2909
      %2911 = vmatprep.mubr.bf16.mxu0 %v2495
      %2912 = vmatmul.mubr.bf16.gmra.mrb[0].mxu0 %v2455
      %v2913 = vpop.f32.mrb[0].mxu0
      %v2914 = vadd.f32 %v2554, %v2913
      %v2915 = vpop.f32.mrb[0].mxu0
      %v2916 = vadd.f32 %v2558, %v2915
      %v2917 = vpop.f32.mrb[0].mxu0
      %v2918 = vadd.f32 %v2554, %v2917
      %v2919 = vpop.f32.mrb[0].mxu0
      %v2920 = vadd.f32 %v2558, %v2919
      %2921 = vmatprep.mubr.bf16.mxu0 %v2496
      %2922 = vmatmul.mubr.bf16.gmra.mrb[0].mxu0 %v2456
      %v2923 = vpop.f32.mrb[0].mxu0
      %v2924 = vadd.f32 %v2554, %v2923
      %v2925 = vpop.f32.mrb[0].mxu0
      %v2926 = vadd.f32 %v2558, %v2925
      %v2927 = vpop.f32.mrb[0].mxu0
      %v2928 = vadd.f32 %v2554, %v2927
      %v2929 = vpop.f32.mrb[0].mxu0
      %v2930 = vadd.f32 %v2558, %v2929
      %2931 = vmatprep.mubr.bf16.mxu0 %v2497
      %2932 = vmatmul.mubr.bf16.gmra.mrb[0].mxu0 %v2457
      %v2933 = vpop.f32.mrb[0].mxu0
      %v2934 = vadd.f32 %v2554, %v2933
      %v2935 = vpop.f32.mrb[0].mxu0
      %v2936 = vadd.f32 %v2558, %v2935
      %v2937 = vpop.f32.mrb[0].mxu0
      %v2938 = vadd.f32 %v2554, %v2937
      %v2939 = vpop.f32.mrb[0].mxu0
      %v2940 = vadd.f32 %v2558, %v2939
      %2941 = vmatprep.mubr.bf16.mxu0 %v2498
      %2942 = vmatmul.mubr.bf16.gmra.mrb[0].mxu0 %v2458
      %v2943 = vpop.f32.mrb[0].mxu0
      %v2944 = vadd.f32 %v2554, %v2943
      %v2945 = vpop.f32.mrb[0].mxu0
      %v2946 = vadd.f32 %v2558, %v2945
      %v2947 = vpop.f32.mrb[0].mxu0
      %v2948 = vadd.f32 %v2554, %v2947
      %v2949 = vpop.f32.mrb[0].mxu0
      %v2950 = vadd.f32 %v2558, %v2949
      %2951 = vmatprep.mubr.bf16.mxu0 %v2499
      %2952 = vmatmul.mubr.bf16.gmra.mrb[0].mxu0 %v2459
      %v2953 = vpop.f32.mrb[0].mxu0
      %v2954 = vadd.f32 %v2554, %v2953
      %v2955 = vpop.f32.mrb[0].mxu0
      %v2956 = vadd.f32 %v2558, %v2955
      %v2957 = vpop.f32.mrb[0].mxu0
      %v2958 = vadd.f32 %v2554, %v2957
      %v2959 = vpop.f32.mrb[0].mxu0
      %v2960 = vadd.f32 %v2558, %v2959
      %2961 = vmatprep.mubr.bf16.mxu0 %v2500
      %2962 = vmatmul.mubr.bf16.gmra.mrb[0].mxu0 %v2460
      %v2963 = vpop.f32.mrb[0].mxu0
      %v2964 = vadd.f32 %v2554, %v2963
      %v2965 = vpop.f32.mrb[0].mxu0
      %v2966 = vadd.f32 %v2558, %v2965
      %v2967 = vpop.f32.mrb[0].mxu0
      %v2968 = vadd.f32 %v2554, %v2967
      %v2969 = vpop.f32.mrb[0].mxu0
      %v2970 = vadd.f32 %v2558, %v2969
      %2971 = vmatprep.mubr.bf16.mxu0 %v2501
      %2972 = vmatmul.mubr.bf16.gmra.mrb[0].mxu0 %v2461
      %v2973 = vpop.f32.mrb[0].mxu0
      %v2974 = vadd.f32 %v2554, %v2973
      %v2975 = vpop.f32.mrb[0].mxu0
      %v2976 = vadd.f32 %v2558, %v2975
      %v2977 = vpop.f32.mrb[0].mxu0
      %v2978 = vadd.f32 %v2554, %v2977
      %v2979 = vpop.f32.mrb[0].mxu0
      %v2980 = vadd.f32 %v2558, %v2979
      %2981 = vmatprep.mubr.bf16.mxu0 %v2502
      %2982 = vmatmul.mubr.bf16.gmra.mrb[0].mxu0 %v2462
      %v2983 = vpop.f32.mrb[0].mxu0
      %v2984 = vadd.f32 %v2554, %v2983
      %v2985 = vpop.f32.mrb[0].mxu0
      %v2986 = vadd.f32 %v2558, %v2985
      %v2987 = vpop.f32.mrb[0].mxu0
      %v2988 = vadd.f32 %v2554, %v2987
      %v2989 = vpop.f32.mrb[0].mxu0
      %v2990 = vadd.f32 %v2558, %v2989
      %2991 = vmatprep.mubr.bf16.mxu0 %v2503
      %2992 = vmatmul.mubr.bf16.gmra.mrb[0].mxu0 %v2463
      %v2993 = vpop.f32.mrb[0].mxu0
      %v2994 = vadd.f32 %v2554, %v2993
      %v2995 = vpop.f32.mrb[0].mxu0
      %v2996 = vadd.f32 %v2558, %v2995
      %v2997 = vpop.f32.mrb[0].mxu0
      %v2998 = vadd.f32 %v2554, %v2997
      %v2999 = vpop.f32.mrb[0].mxu0
      %v3000 = vadd.f32 %v2558, %v2999
      %3001 = vmatprep.mubr.bf16.mxu0 %v2504
      %3002 = vmatmul.mubr.bf16.gmra.mrb[0].mxu0 %v2464
      %v3003 = vpop.f32.mrb[0].mxu0
      %v3004 = vadd.f32 %v2554, %v3003
      %v3005 = vpop.f32.mrb[0].mxu0
      %v3006 = vadd.f32 %v2558, %v3005
      %v3007 = vpop.f32.mrb[0].mxu0
      %v3008 = vadd.f32 %v2554, %v3007
      %v3009 = vpop.f32.mrb[0].mxu0
      %v3010 = vadd.f32 %v2558, %v3009
      %3011 = vmatprep.mubr.bf16.mxu0 %v2505
      %3012 = vmatmul.mubr.bf16.gmra.mrb[0].mxu0 %v2465
      %v3013 = vpop.f32.mrb[0].mxu0
      %v3014 = vadd.f32 %v2554, %v3013
      %v3015 = vpop.f32.mrb[0].mxu0
      %v3016 = vadd.f32 %v2558, %v3015
      %v3017 = vpop.f32.mrb[0].mxu0
      %v3018 = vadd.f32 %v2554, %v3017
      %v3019 = vpop.f32.mrb[0].mxu0
      %v3020 = vadd.f32 %v2558, %v3019
      %3021 = vmatprep.mubr.bf16.mxu0 %v2506
      %3022 = vmatmul.mubr.bf16.gmra.mrb[0].mxu0 %v2466
      %v3023 = vpop.f32.mrb[0].mxu0
      %v3024 = vadd.f32 %v2554, %v3023
      %v3025 = vpop.f32.mrb[0].mxu0
      %v3026 = vadd.f32 %v2558, %v3025
      %v3027 = vpop.f32.mrb[0].mxu0
      %v3028 = vadd.f32 %v2554, %v3027
      %v3029 = vpop.f32.mrb[0].mxu0
      %v3030 = vadd.f32 %v2558, %v3029
      %3031 = vmatprep.mubr.bf16.mxu0 %v2507
      %3032 = vmatmul.mubr.bf16.gmra.mrb[0].mxu0 %v2467
      %v3033 = vpop.f32.mrb[0].mxu0
      %v3034 = vadd.f32 %v2554, %v3033
      %v3035 = vpop.f32.mrb[0].mxu0
      %v3036 = vadd.f32 %v2558, %v3035
      %v3037 = vpop.f32.mrb[0].mxu0
      %v3038 = vadd.f32 %v2554, %v3037
      %v3039 = vpop.f32.mrb[0].mxu0
      %v3040 = vadd.f32 %v2558, %v3039
      %3041 = vmatprep.mubr.bf16.mxu0 %v2508
      %3042 = vmatmul.mubr.bf16.gmra.mrb[0].mxu0 %v2468
      %v3043 = vpop.f32.mrb[0].mxu0
      %v3044 = vadd.f32 %v2554, %v3043
      %v3045 = vpop.f32.mrb[0].mxu0
      %v3046 = vadd.f32 %v2558, %v3045
      %v3047 = vpop.f32.mrb[0].mxu0
      %v3048 = vadd.f32 %v2554, %v3047
      %v3049 = vpop.f32.mrb[0].mxu0
      %v3050 = vadd.f32 %v2558, %v3049
      %3051 = vmatprep.mubr.bf16.mxu0 %v2509
      %3052 = vmatmul.mubr.bf16.gmra.mrb[0].mxu0 %v2469
      %v3053 = vpop.f32.mrb[0].mxu0
      %v3054 = vadd.f32 %v2554, %v3053
      %v3055 = vpop.f32.mrb[0].mxu0
      %v3056 = vadd.f32 %v2558, %v3055
      %v3057 = vpop.f32.mrb[0].mxu0
      %v3058 = vadd.f32 %v2554, %v3057
      %v3059 = vpop.f32.mrb[0].mxu0
      %v3060 = vadd.f32 %v2558, %v3059
      %3061 = vmatprep.mubr.bf16.mxu0 %v2510
      %3062 = vmatmul.mubr.bf16.gmra.mrb[0].mxu0 %v2470
      %v3063 = vpop.f32.mrb[0].mxu0
      %v3064 = vadd.f32 %v2554, %v3063
      %v3065 = vpop.f32.mrb[0].mxu0
      %v3066 = vadd.f32 %v2558, %v3065
      %v3067 = vpop.f32.mrb[0].mxu0
      %v3068 = vadd.f32 %v2554, %v3067
      %v3069 = vpop.f32.mrb[0].mxu0
      %v3070 = vadd.f32 %v2558, %v3069
      %3071 = vmatprep.mubr.bf16.mxu0 %v2511
      %3072 = vmatmul.mubr.bf16.gmra.mrb[0].mxu0 %v2471
      %v3073 = vpop.f32.mrb[0].mxu0
      %v3074 = vadd.f32 %v2554, %v3073
      %v3075 = vpop.f32.mrb[0].mxu0
      %v3076 = vadd.f32 %v2558, %v3075
      %v3077 = vpop.f32.mrb[0].mxu0
      %v3078 = vadd.f32 %v2554, %v3077
      %v3079 = vpop.f32.mrb[0].mxu0
      %v3080 = vadd.f32 %v2558, %v3079
      %3081 = vmatprep.mubr.bf16.mxu0 %v2512
      %3082 = vmatmul.mubr.bf16.gmra.mrb[0].mxu0 %v2472
      %v3083 = vpop.f32.mrb[0].mxu0
      %v3084 = vadd.f32 %v2554, %v3083
      %v3085 = vpop.f32.mrb[0].mxu0
      %v3086 = vadd.f32 %v2558, %v3085
      %v3087 = vpop.f32.mrb[0].mxu0
      %v3088 = vadd.f32 %v2554, %v3087
      %v3089 = vpop.f32.mrb[0].mxu0
      %v3090 = vadd.f32 %v2558, %v3089
      %3091 = vmatprep.mubr.bf16.mxu0 %v2513
      %3092 = vmatmul.mubr.bf16.gmra.mrb[0].mxu0 %v2473
      %v3093 = vpop.f32.mrb[0].mxu0
      %v3094 = vadd.f32 %v2554, %v3093
      %v3095 = vpop.f32.mrb[0].mxu0
      %v3096 = vadd.f32 %v2558, %v3095
      %v3097 = vpop.f32.mrb[0].mxu0
      %v3098 = vadd.f32 %v2554, %v3097
      %v3099 = vpop.f32.mrb[0].mxu0
      %v3100 = vadd.f32 %v2558, %v3099
      %3101 = vmatprep.mubr.bf16.mxu0 %v2514
      %3102 = vmatmul.mubr.bf16.gmra.mrb[0].mxu0 %v2474
      %v3103 = vpop.f32.mrb[0].mxu0
      %v3104 = vadd.f32 %v2554, %v3103
      %v3105 = vpop.f32.mrb[0].mxu0
      %v3106 = vadd.f32 %v2558, %v3105
      %v3107 = vpop.f32.mrb[0].mxu0
      %v3108 = vadd.f32 %v2554, %v3107
      %v3109 = vpop.f32.mrb[0].mxu0
      %v3110 = vadd.f32 %v2558, %v3109
      %3111 = vmatprep.mubr.bf16.mxu0 %v2515
      %3112 = vmatmul.mubr.bf16.gmra.mrb[0].mxu0 %v2475
      %v3113 = vpop.f32.mrb[0].mxu0
      %v3114 = vadd.f32 %v2554, %v3113
      %v3115 = vpop.f32.mrb[0].mxu0
      %v3116 = vadd.f32 %v2558, %v3115
      %v3117 = vpop.f32.mrb[0].mxu0
      %v3118 = vadd.f32 %v2554, %v3117
      %v3119 = vpop.f32.mrb[0].mxu0
      %v3120 = vadd.f32 %v2558, %v3119
      %3121 = vmatprep.mubr.bf16.mxu0 %v2516
      %3122 = vmatmul.mubr.bf16.gmra.mrb[0].mxu0 %v2476
      %v3123 = vpop.f32.mrb[0].mxu0
      %v3124 = vadd.f32 %v2554, %v3123
      %v3125 = vpop.f32.mrb[0].mxu0
      %v3126 = vadd.f32 %v2558, %v3125
      %v3127 = vpop.f32.mrb[0].mxu0
      %v3128 = vadd.f32 %v2554, %v3127
      %v3129 = vpop.f32.mrb[0].mxu0
      %v3130 = vadd.f32 %v2558, %v3129
      %3131 = vmatprep.mubr.bf16.mxu0 %v2517
      %3132 = vmatmul.mubr.bf16.gmra.mrb[0].mxu0 %v2477
      %v3133 = vpop.f32.mrb[0].mxu0
      %v3134 = vadd.f32 %v2554, %v3133
      %v3135 = vpop.f32.mrb[0].mxu0
      %v3136 = vadd.f32 %v2558, %v3135
      %v3137 = vpop.f32.mrb[0].mxu0
      %v3138 = vadd.f32 %v2554, %v3137
      %v3139 = vpop.f32.mrb[0].mxu0
      %v3140 = vadd.f32 %v2558, %v3139
      %3141 = vmatprep.mubr.bf16.mxu0 %v2518
      %3142 = vmatmul.mubr.bf16.gmra.mrb[0].mxu0 %v2478
      %v3143 = vpop.f32.mrb[0].mxu0
      %v3144 = vadd.f32 %v2554, %v3143
      %v3145 = vpop.f32.mrb[0].mxu0
      %v3146 = vadd.f32 %v2558, %v3145
      %v3147 = vpop.f32.mrb[0].mxu0
      %v3148 = vadd.f32 %v2554, %v3147
      %v3149 = vpop.f32.mrb[0].mxu0
      %v3150 = vadd.f32 %v2558, %v3149
      %3151 = vdwg.mxu0
      %3152 = vadd.xlane.f32.xlu0 %v2756
      %v3153 = vpop.xlane.xlu0 %3152
      %3154 = vadd.xlane.f32.xlu0 %v2760
      %v3155 = vpop.xlane.xlu0 %3154
      %3156 = vadd.xlane.f32.xlu0 %v2766
      %v3157 = vpop.xlane.xlu0 %3156
      %3158 = vadd.xlane.f32.xlu0 %v2770
      %v3159 = vpop.xlane.xlu0 %3158
      %3160 = vadd.xlane.f32.xlu0 %v2776
      %v3161 = vpop.xlane.xlu0 %3160
      %3162 = vadd.xlane.f32.xlu0 %v2780
      %v3163 = vpop.xlane.xlu0 %3162
      %3164 = vadd.xlane.f32.xlu0 %v2786
      %v3165 = vpop.xlane.xlu0 %3164
      %3166 = vadd.xlane.f32.xlu0 %v2790
      %v3167 = vpop.xlane.xlu0 %3166
      %3168 = vadd.xlane.f32.xlu0 %v2796
      %v3169 = vpop.xlane.xlu0 %3168
      %3170 = vadd.xlane.f32.xlu0 %v2800
      %v3171 = vpop.xlane.xlu0 %3170
      %3172 = vadd.xlane.f32.xlu0 %v2806
      %v3173 = vpop.xlane.xlu0 %3172
      %3174 = vadd.xlane.f32.xlu0 %v2810
      %v3175 = vpop.xlane.xlu0 %3174
      %3176 = vadd.xlane.f32.xlu0 %v2816
      %v3177 = vpop.xlane.xlu0 %3176
      %3178 = vadd.xlane.f32.xlu0 %v2820
      %v3179 = vpop.xlane.xlu0 %3178
      %3180 = vadd.xlane.f32.xlu0 %v2826
      %v3181 = vpop.xlane.xlu0 %3180
      %3182 = vadd.xlane.f32.xlu0 %v2830
      %v3183 = vpop.xlane.xlu0 %3182
      %3184 = vadd.xlane.f32.xlu0 %v2836
      %v3185 = vpop.xlane.xlu0 %3184
      %3186 = vadd.xlane.f32.xlu0 %v2840
      %v3187 = vpop.xlane.xlu0 %3186
      %3188 = vadd.xlane.f32.xlu0 %v2846
      %v3189 = vpop.xlane.xlu0 %3188
      %3190 = vadd.xlane.f32.xlu0 %v2850
      %v3191 = vpop.xlane.xlu0 %3190
      %3192 = vadd.xlane.f32.xlu0 %v2856
      %v3193 = vpop.xlane.xlu0 %3192
      %3194 = vadd.xlane.f32.xlu0 %v2860
      %v3195 = vpop.xlane.xlu0 %3194
      %3196 = vadd.xlane.f32.xlu0 %v2866
      %v3197 = vpop.xlane.xlu0 %3196
      %3198 = vadd.xlane.f32.xlu0 %v2870
      %v3199 = vpop.xlane.xlu0 %3198
      %3200 = vadd.xlane.f32.xlu0 %v2876
      %v3201 = vpop.xlane.xlu0 %3200
      %3202 = vadd.xlane.f32.xlu0 %v2880
      %v3203 = vpop.xlane.xlu0 %3202
      %3204 = vadd.xlane.f32.xlu0 %v2886
      %v3205 = vpop.xlane.xlu0 %3204
      %3206 = vadd.xlane.f32.xlu0 %v2890
      %v3207 = vpop.xlane.xlu0 %3206
      %3208 = vadd.xlane.f32.xlu0 %v2896
      %v3209 = vpop.xlane.xlu0 %3208
      %3210 = vadd.xlane.f32.xlu0 %v2900
      %v3211 = vpop.xlane.xlu0 %3210
      %3212 = vadd.xlane.f32.xlu0 %v2906
      %v3213 = vpop.xlane.xlu0 %3212
      %3214 = vadd.xlane.f32.xlu0 %v2910
      %v3215 = vpop.xlane.xlu0 %3214
      %3216 = vadd.xlane.f32.xlu0 %v2916
      %v3217 = vpop.xlane.xlu0 %3216
      %3218 = vadd.xlane.f32.xlu0 %v2920
      %v3219 = vpop.xlane.xlu0 %3218
      %3220 = vadd.xlane.f32.xlu0 %v2926
      %v3221 = vpop.xlane.xlu0 %3220
      %3222 = vadd.xlane.f32.xlu0 %v2930
      %v3223 = vpop.xlane.xlu0 %3222
      %3224 = vadd.xlane.f32.xlu0 %v2936
      %v3225 = vpop.xlane.xlu0 %3224
      %3226 = vadd.xlane.f32.xlu0 %v2940
      %v3227 = vpop.xlane.xlu0 %3226
      %3228 = vadd.xlane.f32.xlu0 %v2946
      %v3229 = vpop.xlane.xlu0 %3228
      %3230 = vadd.xlane.f32.xlu0 %v2950
      %v3231 = vpop.xlane.xlu0 %3230
      %3232 = vadd.xlane.f32.xlu0 %v2956
      %v3233 = vpop.xlane.xlu0 %3232
      %3234 = vadd.xlane.f32.xlu0 %v2960
      %v3235 = vpop.xlane.xlu0 %3234
      %3236 = vadd.xlane.f32.xlu0 %v2966
      %v3237 = vpop.xlane.xlu0 %3236
      %3238 = vadd.xlane.f32.xlu0 %v2970
      %v3239 = vpop.xlane.xlu0 %3238
      %3240 = vadd.xlane.f32.xlu0 %v2976
      %v3241 = vpop.xlane.xlu0 %3240
      %3242 = vadd.xlane.f32.xlu0 %v2980
      %v3243 = vpop.xlane.xlu0 %3242
      %3244 = vadd.xlane.f32.xlu0 %v2986
      %v3245 = vpop.xlane.xlu0 %3244
      %3246 = vadd.xlane.f32.xlu0 %v2990
      %v3247 = vpop.xlane.xlu0 %3246
      %3248 = vadd.xlane.f32.xlu0 %v2996
      %v3249 = vpop.xlane.xlu0 %3248
      %3250 = vadd.xlane.f32.xlu0 %v3000
      %v3251 = vpop.xlane.xlu0 %3250
      %3252 = vadd.xlane.f32.xlu0 %v3006
      %v3253 = vpop.xlane.xlu0 %3252
      %3254 = vadd.xlane.f32.xlu0 %v3010
      %v3255 = vpop.xlane.xlu0 %3254
      %3256 = vadd.xlane.f32.xlu0 %v3016
      %v3257 = vpop.xlane.xlu0 %3256
      %3258 = vadd.xlane.f32.xlu0 %v3020
      %v3259 = vpop.xlane.xlu0 %3258
      %3260 = vadd.xlane.f32.xlu0 %v3026
      %v3261 = vpop.xlane.xlu0 %3260
      %3262 = vadd.xlane.f32.xlu0 %v3030
      %v3263 = vpop.xlane.xlu0 %3262
      %3264 = vadd.xlane.f32.xlu0 %v3036
      %v3265 = vpop.xlane.xlu0 %3264
      %3266 = vadd.xlane.f32.xlu0 %v3040
      %v3267 = vpop.xlane.xlu0 %3266
      %3268 = vadd.xlane.f32.xlu0 %v3046
      %v3269 = vpop.xlane.xlu0 %3268
      %3270 = vadd.xlane.f32.xlu0 %v3050
      %v3271 = vpop.xlane.xlu0 %3270
      %3272 = vadd.xlane.f32.xlu0 %v3056
      %v3273 = vpop.xlane.xlu0 %3272
      %3274 = vadd.xlane.f32.xlu0 %v3060
      %v3275 = vpop.xlane.xlu0 %3274
      %3276 = vadd.xlane.f32.xlu0 %v3066
      %v3277 = vpop.xlane.xlu0 %3276
      %3278 = vadd.xlane.f32.xlu0 %v3070
      %v3279 = vpop.xlane.xlu0 %3278
      %3280 = vadd.xlane.f32.xlu0 %v3076
      %v3281 = vpop.xlane.xlu0 %3280
      %3282 = vadd.xlane.f32.xlu0 %v3080
      %v3283 = vpop.xlane.xlu0 %3282
      %3284 = vadd.xlane.f32.xlu0 %v3086
      %v3285 = vpop.xlane.xlu0 %3284
      %3286 = vadd.xlane.f32.xlu0 %v3090
      %v3287 = vpop.xlane.xlu0 %3286
      %3288 = vadd.xlane.f32.xlu0 %v3096
      %v3289 = vpop.xlane.xlu0 %3288
      %3290 = vadd.xlane.f32.xlu0 %v3100
      %v3291 = vpop.xlane.xlu0 %3290
      %3292 = vadd.xlane.f32.xlu0 %v3106
      %v3293 = vpop.xlane.xlu0 %3292
      %3294 = vadd.xlane.f32.xlu0 %v3110
      %v3295 = vpop.xlane.xlu0 %3294
      %3296 = vadd.xlane.f32.xlu0 %v3116
      %v3297 = vpop.xlane.xlu0 %3296
      %3298 = vadd.xlane.f32.xlu0 %v3120
      %v3299 = vpop.xlane.xlu0 %3298
      %3300 = vadd.xlane.f32.xlu0 %v3126
      %v3301 = vpop.xlane.xlu0 %3300
      %3302 = vadd.xlane.f32.xlu0 %v3130
      %v3303 = vpop.xlane.xlu0 %3302
      %3304 = vadd.xlane.f32.xlu0 %v3136
      %v3305 = vpop.xlane.xlu0 %3304
      %3306 = vadd.xlane.f32.xlu0 %v3140
      %v3307 = vpop.xlane.xlu0 %3306
      %3308 = vadd.xlane.f32.xlu0 %v3146
      %v3309 = vpop.xlane.xlu0 %3308
      %3310 = vadd.xlane.f32.xlu0 %v3150
      %v3311 = vpop.xlane.xlu0 %3310
      %v3312 = vmul.f32 %v3153, %v1150
      %v3313 = vmul.f32 %v3155, %v1150
      %v3314 = vmul.f32 %v3157, %v1150
      %v3315 = vmul.f32 %v3159, %v1150
      %v3316 = vmul.f32 %v3161, %v1150
      %v3317 = vmul.f32 %v3163, %v1150
      %v3318 = vmul.f32 %v3165, %v1150
      %v3319 = vmul.f32 %v3167, %v1150
      %v3320 = vmul.f32 %v3169, %v1150
      %v3321 = vmul.f32 %v3171, %v1150
      %v3322 = vmul.f32 %v3173, %v1150
      %v3323 = vmul.f32 %v3175, %v1150
      %v3324 = vmul.f32 %v3177, %v1150
      %v3325 = vmul.f32 %v3179, %v1150
      %v3326 = vmul.f32 %v3181, %v1150
      %v3327 = vmul.f32 %v3183, %v1150
      %v3328 = vmul.f32 %v3185, %v1150
      %v3329 = vmul.f32 %v3187, %v1150
      %v3330 = vmul.f32 %v3189, %v1150
      %v3331 = vmul.f32 %v3191, %v1150
      %v3332 = vmul.f32 %v3193, %v1150
      %v3333 = vmul.f32 %v3195, %v1150
      %v3334 = vmul.f32 %v3197, %v1150
      %v3335 = vmul.f32 %v3199, %v1150
      %v3336 = vmul.f32 %v3201, %v1150
      %v3337 = vmul.f32 %v3203, %v1150
      %v3338 = vmul.f32 %v3205, %v1150
      %v3339 = vmul.f32 %v3207, %v1150
      %v3340 = vmul.f32 %v3209, %v1150
      %v3341 = vmul.f32 %v3211, %v1150
      %v3342 = vmul.f32 %v3213, %v1150
      %v3343 = vmul.f32 %v3215, %v1150
      %v3344 = vmul.f32 %v3217, %v1150
      %v3345 = vmul.f32 %v3219, %v1150
      %v3346 = vmul.f32 %v3221, %v1150
      %v3347 = vmul.f32 %v3223, %v1150
      %v3348 = vmul.f32 %v3225, %v1150
      %v3349 = vmul.f32 %v3227, %v1150
      %v3350 = vmul.f32 %v3229, %v1150
      %v3351 = vmul.f32 %v3231, %v1150
      %v3352 = vmul.f32 %v3233, %v1150
      %v3353 = vmul.f32 %v3235, %v1150
      %v3354 = vmul.f32 %v3237, %v1150
      %v3355 = vmul.f32 %v3239, %v1150
      %v3356 = vmul.f32 %v3241, %v1150
      %v3357 = vmul.f32 %v3243, %v1150
      %v3358 = vmul.f32 %v3245, %v1150
      %v3359 = vmul.f32 %v3247, %v1150
      %v3360 = vmul.f32 %v3249, %v1150
      %v3361 = vmul.f32 %v3251, %v1150
      %v3362 = vmul.f32 %v3253, %v1150
      %v3363 = vmul.f32 %v3255, %v1150
      %v3364 = vmul.f32 %v3257, %v1150
      %v3365 = vmul.f32 %v3259, %v1150
      %v3366 = vmul.f32 %v3261, %v1150
      %v3367 = vmul.f32 %v3263, %v1150
      %v3368 = vmul.f32 %v3265, %v1150
      %v3369 = vmul.f32 %v3267, %v1150
      %v3370 = vmul.f32 %v3269, %v1150
      %v3371 = vmul.f32 %v3271, %v1150
      %v3372 = vmul.f32 %v3273, %v1150
      %v3373 = vmul.f32 %v3275, %v1150
      %v3374 = vmul.f32 %v3277, %v1150
      %v3375 = vmul.f32 %v3279, %v1150
      %v3376 = vmul.f32 %v3281, %v1150
      %v3377 = vmul.f32 %v3283, %v1150
      %v3378 = vmul.f32 %v3285, %v1150
      %v3379 = vmul.f32 %v3287, %v1150
      %v3380 = vmul.f32 %v3289, %v1150
      %v3381 = vmul.f32 %v3291, %v1150
      %v3382 = vmul.f32 %v3293, %v1150
      %v3383 = vmul.f32 %v3295, %v1150
      %v3384 = vmul.f32 %v3297, %v1150
      %v3385 = vmul.f32 %v3299, %v1150
      %v3386 = vmul.f32 %v3301, %v1150
      %v3387 = vmul.f32 %v3303, %v1150
      %v3388 = vmul.f32 %v3305, %v1150
      %v3389 = vmul.f32 %v3307, %v1150
      %v3390 = vmul.f32 %v3309, %v1150
      %v3391 = vmul.f32 %v3311, %v1150
      %v3392 = vmul.f32 %v2756, %v2756
      %v3393 = vmul.f32 %v2760, %v2760
      %v3394 = vmul.f32 %v2766, %v2766
      %v3395 = vmul.f32 %v2770, %v2770
      %v3396 = vmul.f32 %v2776, %v2776
      %v3397 = vmul.f32 %v2780, %v2780
      %v3398 = vmul.f32 %v2786, %v2786
      %v3399 = vmul.f32 %v2790, %v2790
      %v3400 = vmul.f32 %v2796, %v2796
      %v3401 = vmul.f32 %v2800, %v2800
      %v3402 = vmul.f32 %v2806, %v2806
      %v3403 = vmul.f32 %v2810, %v2810
      %v3404 = vmul.f32 %v2816, %v2816
      %v3405 = vmul.f32 %v2820, %v2820
      %v3406 = vmul.f32 %v2826, %v2826
      %v3407 = vmul.f32 %v2830, %v2830
      %v3408 = vmul.f32 %v2836, %v2836
      %v3409 = vmul.f32 %v2840, %v2840
      %v3410 = vmul.f32 %v2846, %v2846
      %v3411 = vmul.f32 %v2850, %v2850
      %v3412 = vmul.f32 %v2856, %v2856
      %v3413 = vmul.f32 %v2860, %v2860
      %v3414 = vmul.f32 %v2866, %v2866
      %v3415 = vmul.f32 %v2870, %v2870
      %v3416 = vmul.f32 %v2876, %v2876
      %v3417 = vmul.f32 %v2880, %v2880
      %v3418 = vmul.f32 %v2886, %v2886
      %v3419 = vmul.f32 %v2890, %v2890
      %v3420 = vmul.f32 %v2896, %v2896
      %v3421 = vmul.f32 %v2900, %v2900
      %v3422 = vmul.f32 %v2906, %v2906
      %v3423 = vmul.f32 %v2910, %v2910
      %v3424 = vmul.f32 %v2916, %v2916
      %v3425 = vmul.f32 %v2920, %v2920
      %v3426 = vmul.f32 %v2926, %v2926
      %v3427 = vmul.f32 %v2930, %v2930
      %v3428 = vmul.f32 %v2936, %v2936
      %v3429 = vmul.f32 %v2940, %v2940
      %v3430 = vmul.f32 %v2946, %v2946
      %v3431 = vmul.f32 %v2950, %v2950
      %v3432 = vmul.f32 %v2956, %v2956
      %v3433 = vmul.f32 %v2960, %v2960
      %v3434 = vmul.f32 %v2966, %v2966
      %v3435 = vmul.f32 %v2970, %v2970
      %v3436 = vmul.f32 %v2976, %v2976
      %v3437 = vmul.f32 %v2980, %v2980
      %v3438 = vmul.f32 %v2986, %v2986
      %v3439 = vmul.f32 %v2990, %v2990
      %v3440 = vmul.f32 %v2996, %v2996
      %v3441 = vmul.f32 %v3000, %v3000
      %v3442 = vmul.f32 %v3006, %v3006
      %v3443 = vmul.f32 %v3010, %v3010
      %v3444 = vmul.f32 %v3016, %v3016
      %v3445 = vmul.f32 %v3020, %v3020
      %v3446 = vmul.f32 %v3026, %v3026
      %v3447 = vmul.f32 %v3030, %v3030
      %v3448 = vmul.f32 %v3036, %v3036
      %v3449 = vmul.f32 %v3040, %v3040
      %v3450 = vmul.f32 %v3046, %v3046
      %v3451 = vmul.f32 %v3050, %v3050
      %v3452 = vmul.f32 %v3056, %v3056
      %v3453 = vmul.f32 %v3060, %v3060
      %v3454 = vmul.f32 %v3066, %v3066
      %v3455 = vmul.f32 %v3070, %v3070
      %v3456 = vmul.f32 %v3076, %v3076
      %v3457 = vmul.f32 %v3080, %v3080
      %v3458 = vmul.f32 %v3086, %v3086
      %v3459 = vmul.f32 %v3090, %v3090
      %v3460 = vmul.f32 %v3096, %v3096
      %v3461 = vmul.f32 %v3100, %v3100
      %v3462 = vmul.f32 %v3106, %v3106
      %v3463 = vmul.f32 %v3110, %v3110
      %v3464 = vmul.f32 %v3116, %v3116
      %v3465 = vmul.f32 %v3120, %v3120
      %v3466 = vmul.f32 %v3126, %v3126
      %v3467 = vmul.f32 %v3130, %v3130
      %v3468 = vmul.f32 %v3136, %v3136
      %v3469 = vmul.f32 %v3140, %v3140
      %v3470 = vmul.f32 %v3146, %v3146
      %v3471 = vmul.f32 %v3150, %v3150
      %3472 = vadd.xlane.f32.xlu0 %v3392
      %v3473 = vpop.xlane.xlu0 %3472
      %3474 = vadd.xlane.f32.xlu0 %v3393
      %v3475 = vpop.xlane.xlu0 %3474
      %3476 = vadd.xlane.f32.xlu0 %v3394
      %v3477 = vpop.xlane.xlu0 %3476
      %3478 = vadd.xlane.f32.xlu0 %v3395
      %v3479 = vpop.xlane.xlu0 %3478
      %3480 = vadd.xlane.f32.xlu0 %v3396
      %v3481 = vpop.xlane.xlu0 %3480
      %3482 = vadd.xlane.f32.xlu0 %v3397
      %v3483 = vpop.xlane.xlu0 %3482
      %3484 = vadd.xlane.f32.xlu0 %v3398
      %v3485 = vpop.xlane.xlu0 %3484
      %3486 = vadd.xlane.f32.xlu0 %v3399
      %v3487 = vpop.xlane.xlu0 %3486
      %3488 = vadd.xlane.f32.xlu0 %v3400
      %v3489 = vpop.xlane.xlu0 %3488
      %3490 = vadd.xlane.f32.xlu0 %v3401
      %v3491 = vpop.xlane.xlu0 %3490
      %3492 = vadd.xlane.f32.xlu0 %v3402
      %v3493 = vpop.xlane.xlu0 %3492
      %3494 = vadd.xlane.f32.xlu0 %v3403
      %v3495 = vpop.xlane.xlu0 %3494
      %3496 = vadd.xlane.f32.xlu0 %v3404
      %v3497 = vpop.xlane.xlu0 %3496
      %3498 = vadd.xlane.f32.xlu0 %v3405
      %v3499 = vpop.xlane.xlu0 %3498
      %3500 = vadd.xlane.f32.xlu0 %v3406
      %v3501 = vpop.xlane.xlu0 %3500
      %3502 = vadd.xlane.f32.xlu0 %v3407
      %v3503 = vpop.xlane.xlu0 %3502
      %3504 = vadd.xlane.f32.xlu0 %v3408
      %v3505 = vpop.xlane.xlu0 %3504
      %3506 = vadd.xlane.f32.xlu0 %v3409
      %v3507 = vpop.xlane.xlu0 %3506
      %3508 = vadd.xlane.f32.xlu0 %v3410
      %v3509 = vpop.xlane.xlu0 %3508
      %3510 = vadd.xlane.f32.xlu0 %v3411
      %v3511 = vpop.xlane.xlu0 %3510
      %3512 = vadd.xlane.f32.xlu0 %v3412
      %v3513 = vpop.xlane.xlu0 %3512
      %3514 = vadd.xlane.f32.xlu0 %v3413
      %v3515 = vpop.xlane.xlu0 %3514
      %3516 = vadd.xlane.f32.xlu0 %v3414
      %v3517 = vpop.xlane.xlu0 %3516
      %3518 = vadd.xlane.f32.xlu0 %v3415
      %v3519 = vpop.xlane.xlu0 %3518
      %3520 = vadd.xlane.f32.xlu0 %v3416
      %v3521 = vpop.xlane.xlu0 %3520
      %3522 = vadd.xlane.f32.xlu0 %v3417
      %v3523 = vpop.xlane.xlu0 %3522
      %3524 = vadd.xlane.f32.xlu0 %v3418
      %v3525 = vpop.xlane.xlu0 %3524
      %3526 = vadd.xlane.f32.xlu0 %v3419
      %v3527 = vpop.xlane.xlu0 %3526
      %3528 = vadd.xlane.f32.xlu0 %v3420
      %v3529 = vpop.xlane.xlu0 %3528
      %3530 = vadd.xlane.f32.xlu0 %v3421
      %v3531 = vpop.xlane.xlu0 %3530
      %3532 = vadd.xlane.f32.xlu0 %v3422
      %v3533 = vpop.xlane.xlu0 %3532
      %3534 = vadd.xlane.f32.xlu0 %v3423
      %v3535 = vpop.xlane.xlu0 %3534
      %3536 = vadd.xlane.f32.xlu0 %v3424
      %v3537 = vpop.xlane.xlu0 %3536
      %3538 = vadd.xlane.f32.xlu0 %v3425
      %v3539 = vpop.xlane.xlu0 %3538
      %3540 = vadd.xlane.f32.xlu0 %v3426
      %v3541 = vpop.xlane.xlu0 %3540
      %3542 = vadd.xlane.f32.xlu0 %v3427
      %v3543 = vpop.xlane.xlu0 %3542
      %3544 = vadd.xlane.f32.xlu0 %v3428
      %v3545 = vpop.xlane.xlu0 %3544
      %3546 = vadd.xlane.f32.xlu0 %v3429
      %v3547 = vpop.xlane.xlu0 %3546
      %3548 = vadd.xlane.f32.xlu0 %v3430
      %v3549 = vpop.xlane.xlu0 %3548
      %3550 = vadd.xlane.f32.xlu0 %v3431
      %v3551 = vpop.xlane.xlu0 %3550
      %3552 = vadd.xlane.f32.xlu0 %v3432
      %v3553 = vpop.xlane.xlu0 %3552
      %3554 = vadd.xlane.f32.xlu0 %v3433
      %v3555 = vpop.xlane.xlu0 %3554
      %3556 = vadd.xlane.f32.xlu0 %v3434
      %v3557 = vpop.xlane.xlu0 %3556
      %3558 = vadd.xlane.f32.xlu0 %v3435
      %v3559 = vpop.xlane.xlu0 %3558
      %3560 = vadd.xlane.f32.xlu0 %v3436
      %v3561 = vpop.xlane.xlu0 %3560
      %3562 = vadd.xlane.f32.xlu0 %v3437
      %v3563 = vpop.xlane.xlu0 %3562
      %3564 = vadd.xlane.f32.xlu0 %v3438
      %v3565 = vpop.xlane.xlu0 %3564
      %3566 = vadd.xlane.f32.xlu0 %v3439
      %v3567 = vpop.xlane.xlu0 %3566
      %3568 = vadd.xlane.f32.xlu0 %v3440
      %v3569 = vpop.xlane.xlu0 %3568
      %3570 = vadd.xlane.f32.xlu0 %v3441
      %v3571 = vpop.xlane.xlu0 %3570
      %3572 = vadd.xlane.f32.xlu0 %v3442
      %v3573 = vpop.xlane.xlu0 %3572
      %3574 = vadd.xlane.f32.xlu0 %v3443
      %v3575 = vpop.xlane.xlu0 %3574
      %3576 = vadd.xlane.f32.xlu0 %v3444
      %v3577 = vpop.xlane.xlu0 %3576
      %3578 = vadd.xlane.f32.xlu0 %v3445
      %v3579 = vpop.xlane.xlu0 %3578
      %3580 = vadd.xlane.f32.xlu0 %v3446
      %v3581 = vpop.xlane.xlu0 %3580
      %3582 = vadd.xlane.f32.xlu0 %v3447
      %v3583 = vpop.xlane.xlu0 %3582
      %3584 = vadd.xlane.f32.xlu0 %v3448
      %v3585 = vpop.xlane.xlu0 %3584
      %3586 = vadd.xlane.f32.xlu0 %v3449
      %v3587 = vpop.xlane.xlu0 %3586
      %3588 = vadd.xlane.f32.xlu0 %v3450
      %v3589 = vpop.xlane.xlu0 %3588
      %3590 = vadd.xlane.f32.xlu0 %v3451
      %v3591 = vpop.xlane.xlu0 %3590
      %3592 = vadd.xlane.f32.xlu0 %v3452
      %v3593 = vpop.xlane.xlu0 %3592
      %3594 = vadd.xlane.f32.xlu0 %v3453
      %v3595 = vpop.xlane.xlu0 %3594
      %3596 = vadd.xlane.f32.xlu0 %v3454
      %v3597 = vpop.xlane.xlu0 %3596
      %3598 = vadd.xlane.f32.xlu0 %v3455
      %v3599 = vpop.xlane.xlu0 %3598
      %3600 = vadd.xlane.f32.xlu0 %v3456
      %v3601 = vpop.xlane.xlu0 %3600
      %3602 = vadd.xlane.f32.xlu0 %v3457
      %v3603 = vpop.xlane.xlu0 %3602
      %3604 = vadd.xlane.f32.xlu0 %v3458
      %v3605 = vpop.xlane.xlu0 %3604
      %3606 = vadd.xlane.f32.xlu0 %v3459
      %v3607 = vpop.xlane.xlu0 %3606
      %3608 = vadd.xlane.f32.xlu0 %v3460
      %v3609 = vpop.xlane.xlu0 %3608
      %3610 = vadd.xlane.f32.xlu0 %v3461
      %v3611 = vpop.xlane.xlu0 %3610
      %3612 = vadd.xlane.f32.xlu0 %v3462
      %v3613 = vpop.xlane.xlu0 %3612
      %3614 = vadd.xlane.f32.xlu0 %v3463
      %v3615 = vpop.xlane.xlu0 %3614
      %3616 = vadd.xlane.f32.xlu0 %v3464
      %v3617 = vpop.xlane.xlu0 %3616
      %3618 = vadd.xlane.f32.xlu0 %v3465
      %v3619 = vpop.xlane.xlu0 %3618
      %3620 = vadd.xlane.f32.xlu0 %v3466
      %v3621 = vpop.xlane.xlu0 %3620
      %3622 = vadd.xlane.f32.xlu0 %v3467
      %v3623 = vpop.xlane.xlu0 %3622
      %3624 = vadd.xlane.f32.xlu0 %v3468
      %v3625 = vpop.xlane.xlu0 %3624
      %3626 = vadd.xlane.f32.xlu0 %v3469
      %v3627 = vpop.xlane.xlu0 %3626
      %3628 = vadd.xlane.f32.xlu0 %v3470
      %v3629 = vpop.xlane.xlu0 %3628
      %3630 = vadd.xlane.f32.xlu0 %v3471
      %v3631 = vpop.xlane.xlu0 %3630
      %v3632 = vmul.f32 %v3473, %v1150
      %v3633 = vmul.f32 %v3475, %v1150
      %v3634 = vmul.f32 %v3477, %v1150
      %v3635 = vmul.f32 %v3479, %v1150
      %v3636 = vmul.f32 %v3481, %v1150
      %v3637 = vmul.f32 %v3483, %v1150
      %v3638 = vmul.f32 %v3485, %v1150
      %v3639 = vmul.f32 %v3487, %v1150
      %v3640 = vmul.f32 %v3489, %v1150
      %v3641 = vmul.f32 %v3491, %v1150
      %v3642 = vmul.f32 %v3493, %v1150
      %v3643 = vmul.f32 %v3495, %v1150
      %v3644 = vmul.f32 %v3497, %v1150
      %v3645 = vmul.f32 %v3499, %v1150
      %v3646 = vmul.f32 %v3501, %v1150
      %v3647 = vmul.f32 %v3503, %v1150
      %v3648 = vmul.f32 %v3505, %v1150
      %v3649 = vmul.f32 %v3507, %v1150
      %v3650 = vmul.f32 %v3509, %v1150
      %v3651 = vmul.f32 %v3511, %v1150
      %v3652 = vmul.f32 %v3513, %v1150
      %v3653 = vmul.f32 %v3515, %v1150
      %v3654 = vmul.f32 %v3517, %v1150
      %v3655 = vmul.f32 %v3519, %v1150
      %v3656 = vmul.f32 %v3521, %v1150
      %v3657 = vmul.f32 %v3523, %v1150
      %v3658 = vmul.f32 %v3525, %v1150
      %v3659 = vmul.f32 %v3527, %v1150
      %v3660 = vmul.f32 %v3529, %v1150
      %v3661 = vmul.f32 %v3531, %v1150
      %v3662 = vmul.f32 %v3533, %v1150
      %v3663 = vmul.f32 %v3535, %v1150
      %v3664 = vmul.f32 %v3537, %v1150
      %v3665 = vmul.f32 %v3539, %v1150
      %v3666 = vmul.f32 %v3541, %v1150
      %v3667 = vmul.f32 %v3543, %v1150
      %v3668 = vmul.f32 %v3545, %v1150
      %v3669 = vmul.f32 %v3547, %v1150
      %v3670 = vmul.f32 %v3549, %v1150
      %v3671 = vmul.f32 %v3551, %v1150
      %v3672 = vmul.f32 %v3553, %v1150
      %v3673 = vmul.f32 %v3555, %v1150
      %v3674 = vmul.f32 %v3557, %v1150
      %v3675 = vmul.f32 %v3559, %v1150
      %v3676 = vmul.f32 %v3561, %v1150
      %v3677 = vmul.f32 %v3563, %v1150
      %v3678 = vmul.f32 %v3565, %v1150
      %v3679 = vmul.f32 %v3567, %v1150
      %v3680 = vmul.f32 %v3569, %v1150
      %v3681 = vmul.f32 %v3571, %v1150
      %v3682 = vmul.f32 %v3573, %v1150
      %v3683 = vmul.f32 %v3575, %v1150
      %v3684 = vmul.f32 %v3577, %v1150
      %v3685 = vmul.f32 %v3579, %v1150
      %v3686 = vmul.f32 %v3581, %v1150
      %v3687 = vmul.f32 %v3583, %v1150
      %v3688 = vmul.f32 %v3585, %v1150
      %v3689 = vmul.f32 %v3587, %v1150
      %v3690 = vmul.f32 %v3589, %v1150
      %v3691 = vmul.f32 %v3591, %v1150
      %v3692 = vmul.f32 %v3593, %v1150
      %v3693 = vmul.f32 %v3595, %v1150
      %v3694 = vmul.f32 %v3597, %v1150
      %v3695 = vmul.f32 %v3599, %v1150
      %v3696 = vmul.f32 %v3601, %v1150
      %v3697 = vmul.f32 %v3603, %v1150
      %v3698 = vmul.f32 %v3605, %v1150
      %v3699 = vmul.f32 %v3607, %v1150
      %v3700 = vmul.f32 %v3609, %v1150
      %v3701 = vmul.f32 %v3611, %v1150
      %v3702 = vmul.f32 %v3613, %v1150
      %v3703 = vmul.f32 %v3615, %v1150
      %v3704 = vmul.f32 %v3617, %v1150
      %v3705 = vmul.f32 %v3619, %v1150
      %v3706 = vmul.f32 %v3621, %v1150
      %v3707 = vmul.f32 %v3623, %v1150
      %v3708 = vmul.f32 %v3625, %v1150
      %v3709 = vmul.f32 %v3627, %v1150
      %v3710 = vmul.f32 %v3629, %v1150
      %v3711 = vmul.f32 %v3631, %v1150
      %v3712 = vmul.f32 %v3312, %v3312
      %v3713 = vmul.f32 %v3313, %v3313
      %v3714 = vmul.f32 %v3314, %v3314
      %v3715 = vmul.f32 %v3315, %v3315
      %v3716 = vmul.f32 %v3316, %v3316
      %v3717 = vmul.f32 %v3317, %v3317
      %v3718 = vmul.f32 %v3318, %v3318
      %v3719 = vmul.f32 %v3319, %v3319
      %v3720 = vmul.f32 %v3320, %v3320
      %v3721 = vmul.f32 %v3321, %v3321
      %v3722 = vmul.f32 %v3322, %v3322
      %v3723 = vmul.f32 %v3323, %v3323
      %v3724 = vmul.f32 %v3324, %v3324
      %v3725 = vmul.f32 %v3325, %v3325
      %v3726 = vmul.f32 %v3326, %v3326
      %v3727 = vmul.f32 %v3327, %v3327
      %v3728 = vmul.f32 %v3328, %v3328
      %v3729 = vmul.f32 %v3329, %v3329
      %v3730 = vmul.f32 %v3330, %v3330
      %v3731 = vmul.f32 %v3331, %v3331
      %v3732 = vmul.f32 %v3332, %v3332
      %v3733 = vmul.f32 %v3333, %v3333
      %v3734 = vmul.f32 %v3334, %v3334
      %v3735 = vmul.f32 %v3335, %v3335
      %v3736 = vmul.f32 %v3336, %v3336
      %v3737 = vmul.f32 %v3337, %v3337
      %v3738 = vmul.f32 %v3338, %v3338
      %v3739 = vmul.f32 %v3339, %v3339
      %v3740 = vmul.f32 %v3340, %v3340
      %v3741 = vmul.f32 %v3341, %v3341
      %v3742 = vmul.f32 %v3342, %v3342
      %v3743 = vmul.f32 %v3343, %v3343
      %v3744 = vmul.f32 %v3344, %v3344
      %v3745 = vmul.f32 %v3345, %v3345
      %v3746 = vmul.f32 %v3346, %v3346
      %v3747 = vmul.f32 %v3347, %v3347
      %v3748 = vmul.f32 %v3348, %v3348
      %v3749 = vmul.f32 %v3349, %v3349
      %v3750 = vmul.f32 %v3350, %v3350
      %v3751 = vmul.f32 %v3351, %v3351
      %v3752 = vmul.f32 %v3352, %v3352
      %v3753 = vmul.f32 %v3353, %v3353
      %v3754 = vmul.f32 %v3354, %v3354
      %v3755 = vmul.f32 %v3355, %v3355
      %v3756 = vmul.f32 %v3356, %v3356
      %v3757 = vmul.f32 %v3357, %v3357
      %v3758 = vmul.f32 %v3358, %v3358
      %v3759 = vmul.f32 %v3359, %v3359
      %v3760 = vmul.f32 %v3360, %v3360
      %v3761 = vmul.f32 %v3361, %v3361
      %v3762 = vmul.f32 %v3362, %v3362
      %v3763 = vmul.f32 %v3363, %v3363
      %v3764 = vmul.f32 %v3364, %v3364
      %v3765 = vmul.f32 %v3365, %v3365
      %v3766 = vmul.f32 %v3366, %v3366
      %v3767 = vmul.f32 %v3367, %v3367
      %v3768 = vmul.f32 %v3368, %v3368
      %v3769 = vmul.f32 %v3369, %v3369
      %v3770 = vmul.f32 %v3370, %v3370
      %v3771 = vmul.f32 %v3371, %v3371
      %v3772 = vmul.f32 %v3372, %v3372
      %v3773 = vmul.f32 %v3373, %v3373
      %v3774 = vmul.f32 %v3374, %v3374
      %v3775 = vmul.f32 %v3375, %v3375
      %v3776 = vmul.f32 %v3376, %v3376
      %v3777 = vmul.f32 %v3377, %v3377
      %v3778 = vmul.f32 %v3378, %v3378
      %v3779 = vmul.f32 %v3379, %v3379
      %v3780 = vmul.f32 %v3380, %v3380
      %v3781 = vmul.f32 %v3381, %v3381
      %v3782 = vmul.f32 %v3382, %v3382
      %v3783 = vmul.f32 %v3383, %v3383
      %v3784 = vmul.f32 %v3384, %v3384
      %v3785 = vmul.f32 %v3385, %v3385
      %v3786 = vmul.f32 %v3386, %v3386
      %v3787 = vmul.f32 %v3387, %v3387
      %v3788 = vmul.f32 %v3388, %v3388
      %v3789 = vmul.f32 %v3389, %v3389
      %v3790 = vmul.f32 %v3390, %v3390
      %v3791 = vmul.f32 %v3391, %v3391
      %v3792 = vsub.f32 %v3632, %v3712
      %v3793 = vsub.f32 %v3633, %v3713
      %v3794 = vsub.f32 %v3634, %v3714
      %v3795 = vsub.f32 %v3635, %v3715
      %v3796 = vsub.f32 %v3636, %v3716
      %v3797 = vsub.f32 %v3637, %v3717
      %v3798 = vsub.f32 %v3638, %v3718
      %v3799 = vsub.f32 %v3639, %v3719
      %v3800 = vsub.f32 %v3640, %v3720
      %v3801 = vsub.f32 %v3641, %v3721
      %v3802 = vsub.f32 %v3642, %v3722
      %v3803 = vsub.f32 %v3643, %v3723
      %v3804 = vsub.f32 %v3644, %v3724
      %v3805 = vsub.f32 %v3645, %v3725
      %v3806 = vsub.f32 %v3646, %v3726
      %v3807 = vsub.f32 %v3647, %v3727
      %v3808 = vsub.f32 %v3648, %v3728
      %v3809 = vsub.f32 %v3649, %v3729
      %v3810 = vsub.f32 %v3650, %v3730
      %v3811 = vsub.f32 %v3651, %v3731
      %v3812 = vsub.f32 %v3652, %v3732
      %v3813 = vsub.f32 %v3653, %v3733
      %v3814 = vsub.f32 %v3654, %v3734
      %v3815 = vsub.f32 %v3655, %v3735
      %v3816 = vsub.f32 %v3656, %v3736
      %v3817 = vsub.f32 %v3657, %v3737
      %v3818 = vsub.f32 %v3658, %v3738
      %v3819 = vsub.f32 %v3659, %v3739
      %v3820 = vsub.f32 %v3660, %v3740
      %v3821 = vsub.f32 %v3661, %v3741
      %v3822 = vsub.f32 %v3662, %v3742
      %v3823 = vsub.f32 %v3663, %v3743
      %v3824 = vsub.f32 %v3664, %v3744
      %v3825 = vsub.f32 %v3665, %v3745
      %v3826 = vsub.f32 %v3666, %v3746
      %v3827 = vsub.f32 %v3667, %v3747
      %v3828 = vsub.f32 %v3668, %v3748
      %v3829 = vsub.f32 %v3669, %v3749
      %v3830 = vsub.f32 %v3670, %v3750
      %v3831 = vsub.f32 %v3671, %v3751
      %v3832 = vsub.f32 %v3672, %v3752
      %v3833 = vsub.f32 %v3673, %v3753
      %v3834 = vsub.f32 %v3674, %v3754
      %v3835 = vsub.f32 %v3675, %v3755
      %v3836 = vsub.f32 %v3676, %v3756
      %v3837 = vsub.f32 %v3677, %v3757
      %v3838 = vsub.f32 %v3678, %v3758
      %v3839 = vsub.f32 %v3679, %v3759
      %v3840 = vsub.f32 %v3680, %v3760
      %v3841 = vsub.f32 %v3681, %v3761
      %v3842 = vsub.f32 %v3682, %v3762
      %v3843 = vsub.f32 %v3683, %v3763
      %v3844 = vsub.f32 %v3684, %v3764
      %v3845 = vsub.f32 %v3685, %v3765
      %v3846 = vsub.f32 %v3686, %v3766
      %v3847 = vsub.f32 %v3687, %v3767
      %v3848 = vsub.f32 %v3688, %v3768
      %v3849 = vsub.f32 %v3689, %v3769
      %v3850 = vsub.f32 %v3690, %v3770
      %v3851 = vsub.f32 %v3691, %v3771
      %v3852 = vsub.f32 %v3692, %v3772
      %v3853 = vsub.f32 %v3693, %v3773
      %v3854 = vsub.f32 %v3694, %v3774
      %v3855 = vsub.f32 %v3695, %v3775
      %v3856 = vsub.f32 %v3696, %v3776
      %v3857 = vsub.f32 %v3697, %v3777
      %v3858 = vsub.f32 %v3698, %v3778
      %v3859 = vsub.f32 %v3699, %v3779
      %v3860 = vsub.f32 %v3700, %v3780
      %v3861 = vsub.f32 %v3701, %v3781
      %v3862 = vsub.f32 %v3702, %v3782
      %v3863 = vsub.f32 %v3703, %v3783
      %v3864 = vsub.f32 %v3704, %v3784
      %v3865 = vsub.f32 %v3705, %v3785
      %v3866 = vsub.f32 %v3706, %v3786
      %v3867 = vsub.f32 %v3707, %v3787
      %v3868 = vsub.f32 %v3708, %v3788
      %v3869 = vsub.f32 %v3709, %v3789
      %v3870 = vsub.f32 %v3710, %v3790
      %v3871 = vsub.f32 %v3711, %v3791
      %v3872 = vmax.f32 %v3792, 0.0
      %v3873 = vmax.f32 %v3793, 0.0
      %v3874 = vmax.f32 %v3794, 0.0
      %v3875 = vmax.f32 %v3795, 0.0
      %v3876 = vmax.f32 %v3796, 0.0
      %v3877 = vmax.f32 %v3797, 0.0
      %v3878 = vmax.f32 %v3798, 0.0
      %v3879 = vmax.f32 %v3799, 0.0
      %v3880 = vmax.f32 %v3800, 0.0
      %v3881 = vmax.f32 %v3801, 0.0
      %v3882 = vmax.f32 %v3802, 0.0
      %v3883 = vmax.f32 %v3803, 0.0
      %v3884 = vmax.f32 %v3804, 0.0
      %v3885 = vmax.f32 %v3805, 0.0
      %v3886 = vmax.f32 %v3806, 0.0
      %v3887 = vmax.f32 %v3807, 0.0
      %v3888 = vmax.f32 %v3808, 0.0
      %v3889 = vmax.f32 %v3809, 0.0
      %v3890 = vmax.f32 %v3810, 0.0
      %v3891 = vmax.f32 %v3811, 0.0
      %v3892 = vmax.f32 %v3812, 0.0
      %v3893 = vmax.f32 %v3813, 0.0
      %v3894 = vmax.f32 %v3814, 0.0
      %v3895 = vmax.f32 %v3815, 0.0
      %v3896 = vmax.f32 %v3816, 0.0
      %v3897 = vmax.f32 %v3817, 0.0
      %v3898 = vmax.f32 %v3818, 0.0
      %v3899 = vmax.f32 %v3819, 0.0
      %v3900 = vmax.f32 %v3820, 0.0
      %v3901 = vmax.f32 %v3821, 0.0
      %v3902 = vmax.f32 %v3822, 0.0
      %v3903 = vmax.f32 %v3823, 0.0
      %v3904 = vmax.f32 %v3824, 0.0
      %v3905 = vmax.f32 %v3825, 0.0
      %v3906 = vmax.f32 %v3826, 0.0
      %v3907 = vmax.f32 %v3827, 0.0
      %v3908 = vmax.f32 %v3828, 0.0
      %v3909 = vmax.f32 %v3829, 0.0
      %v3910 = vmax.f32 %v3830, 0.0
      %v3911 = vmax.f32 %v3831, 0.0
      %v3912 = vmax.f32 %v3832, 0.0
      %v3913 = vmax.f32 %v3833, 0.0
      %v3914 = vmax.f32 %v3834, 0.0
      %v3915 = vmax.f32 %v3835, 0.0
      %v3916 = vmax.f32 %v3836, 0.0
      %v3917 = vmax.f32 %v3837, 0.0
      %v3918 = vmax.f32 %v3838, 0.0
      %v3919 = vmax.f32 %v3839, 0.0
      %v3920 = vmax.f32 %v3840, 0.0
      %v3921 = vmax.f32 %v3841, 0.0
      %v3922 = vmax.f32 %v3842, 0.0
      %v3923 = vmax.f32 %v3843, 0.0
      %v3924 = vmax.f32 %v3844, 0.0
      %v3925 = vmax.f32 %v3845, 0.0
      %v3926 = vmax.f32 %v3846, 0.0
      %v3927 = vmax.f32 %v3847, 0.0
      %v3928 = vmax.f32 %v3848, 0.0
      %v3929 = vmax.f32 %v3849, 0.0
      %v3930 = vmax.f32 %v3850, 0.0
      %v3931 = vmax.f32 %v3851, 0.0
      %v3932 = vmax.f32 %v3852, 0.0
      %v3933 = vmax.f32 %v3853, 0.0
      %v3934 = vmax.f32 %v3854, 0.0
      %v3935 = vmax.f32 %v3855, 0.0
      %v3936 = vmax.f32 %v3856, 0.0
      %v3937 = vmax.f32 %v3857, 0.0
      %v3938 = vmax.f32 %v3858, 0.0
      %v3939 = vmax.f32 %v3859, 0.0
      %v3940 = vmax.f32 %v3860, 0.0
      %v3941 = vmax.f32 %v3861, 0.0
      %v3942 = vmax.f32 %v3862, 0.0
      %v3943 = vmax.f32 %v3863, 0.0
      %v3944 = vmax.f32 %v3864, 0.0
      %v3945 = vmax.f32 %v3865, 0.0
      %v3946 = vmax.f32 %v3866, 0.0
      %v3947 = vmax.f32 %v3867, 0.0
      %v3948 = vmax.f32 %v3868, 0.0
      %v3949 = vmax.f32 %v3869, 0.0
      %v3950 = vmax.f32 %v3870, 0.0
      %v3951 = vmax.f32 %v3871, 0.0
      %v3952 = vsub.f32 %v2756, %v3312
      %v3953 = vsub.f32 %v2760, %v3313
      %v3954 = vsub.f32 %v2766, %v3314
      %v3955 = vsub.f32 %v2770, %v3315
      %v3956 = vsub.f32 %v2776, %v3316
      %v3957 = vsub.f32 %v2780, %v3317
      %v3958 = vsub.f32 %v2786, %v3318
      %v3959 = vsub.f32 %v2790, %v3319
      %v3960 = vsub.f32 %v2796, %v3320
      %v3961 = vsub.f32 %v2800, %v3321
      %v3962 = vsub.f32 %v2806, %v3322
      %v3963 = vsub.f32 %v2810, %v3323
      %v3964 = vsub.f32 %v2816, %v3324
      %v3965 = vsub.f32 %v2820, %v3325
      %v3966 = vsub.f32 %v2826, %v3326
      %v3967 = vsub.f32 %v2830, %v3327
      %v3968 = vsub.f32 %v2836, %v3328
      %v3969 = vsub.f32 %v2840, %v3329
      %v3970 = vsub.f32 %v2846, %v3330
      %v3971 = vsub.f32 %v2850, %v3331
      %v3972 = vsub.f32 %v2856, %v3332
      %v3973 = vsub.f32 %v2860, %v3333
      %v3974 = vsub.f32 %v2866, %v3334
      %v3975 = vsub.f32 %v2870, %v3335
      %v3976 = vsub.f32 %v2876, %v3336
      %v3977 = vsub.f32 %v2880, %v3337
      %v3978 = vsub.f32 %v2886, %v3338
      %v3979 = vsub.f32 %v2890, %v3339
      %v3980 = vsub.f32 %v2896, %v3340
      %v3981 = vsub.f32 %v2900, %v3341
      %v3982 = vsub.f32 %v2906, %v3342
      %v3983 = vsub.f32 %v2910, %v3343
      %v3984 = vsub.f32 %v2916, %v3344
      %v3985 = vsub.f32 %v2920, %v3345
      %v3986 = vsub.f32 %v2926, %v3346
      %v3987 = vsub.f32 %v2930, %v3347
      %v3988 = vsub.f32 %v2936, %v3348
      %v3989 = vsub.f32 %v2940, %v3349
      %v3990 = vsub.f32 %v2946, %v3350
      %v3991 = vsub.f32 %v2950, %v3351
      %v3992 = vsub.f32 %v2956, %v3352
      %v3993 = vsub.f32 %v2960, %v3353
      %v3994 = vsub.f32 %v2966, %v3354
      %v3995 = vsub.f32 %v2970, %v3355
      %v3996 = vsub.f32 %v2976, %v3356
      %v3997 = vsub.f32 %v2980, %v3357
      %v3998 = vsub.f32 %v2986, %v3358
      %v3999 = vsub.f32 %v2990, %v3359
      %v4000 = vsub.f32 %v2996, %v3360
      %v4001 = vsub.f32 %v3000, %v3361
      %v4002 = vsub.f32 %v3006, %v3362
      %v4003 = vsub.f32 %v3010, %v3363
      %v4004 = vsub.f32 %v3016, %v3364
      %v4005 = vsub.f32 %v3020, %v3365
      %v4006 = vsub.f32 %v3026, %v3366
      %v4007 = vsub.f32 %v3030, %v3367
      %v4008 = vsub.f32 %v3036, %v3368
      %v4009 = vsub.f32 %v3040, %v3369
      %v4010 = vsub.f32 %v3046, %v3370
      %v4011 = vsub.f32 %v3050, %v3371
      %v4012 = vsub.f32 %v3056, %v3372
      %v4013 = vsub.f32 %v3060, %v3373
      %v4014 = vsub.f32 %v3066, %v3374
      %v4015 = vsub.f32 %v3070, %v3375
      %v4016 = vsub.f32 %v3076, %v3376
      %v4017 = vsub.f32 %v3080, %v3377
      %v4018 = vsub.f32 %v3086, %v3378
      %v4019 = vsub.f32 %v3090, %v3379
      %v4020 = vsub.f32 %v3096, %v3380
      %v4021 = vsub.f32 %v3100, %v3381
      %v4022 = vsub.f32 %v3106, %v3382
      %v4023 = vsub.f32 %v3110, %v3383
      %v4024 = vsub.f32 %v3116, %v3384
      %v4025 = vsub.f32 %v3120, %v3385
      %v4026 = vsub.f32 %v3126, %v3386
      %v4027 = vsub.f32 %v3130, %v3387
      %v4028 = vsub.f32 %v3136, %v3388
      %v4029 = vsub.f32 %v3140, %v3389
      %v4030 = vsub.f32 %v3146, %v3390
      %v4031 = vsub.f32 %v3150, %v3391
      %v4032 = vadd.f32 %v3872, 1e-05
      %v4033 = vadd.f32 %v3873, 1e-05
      %v4034 = vadd.f32 %v3874, 1e-05
      %v4035 = vadd.f32 %v3875, 1e-05
      %v4036 = vadd.f32 %v3876, 1e-05
      %v4037 = vadd.f32 %v3877, 1e-05
      %v4038 = vadd.f32 %v3878, 1e-05
      %v4039 = vadd.f32 %v3879, 1e-05
      %v4040 = vadd.f32 %v3880, 1e-05
      %v4041 = vadd.f32 %v3881, 1e-05
      %v4042 = vadd.f32 %v3882, 1e-05
      %v4043 = vadd.f32 %v3883, 1e-05
      %v4044 = vadd.f32 %v3884, 1e-05
      %v4045 = vadd.f32 %v3885, 1e-05
      %v4046 = vadd.f32 %v3886, 1e-05
      %v4047 = vadd.f32 %v3887, 1e-05
      %v4048 = vadd.f32 %v3888, 1e-05
      %v4049 = vadd.f32 %v3889, 1e-05
      %v4050 = vadd.f32 %v3890, 1e-05
      %v4051 = vadd.f32 %v3891, 1e-05
      %v4052 = vadd.f32 %v3892, 1e-05
      %v4053 = vadd.f32 %v3893, 1e-05
      %v4054 = vadd.f32 %v3894, 1e-05
      %v4055 = vadd.f32 %v3895, 1e-05
      %v4056 = vadd.f32 %v3896, 1e-05
      %v4057 = vadd.f32 %v3897, 1e-05
      %v4058 = vadd.f32 %v3898, 1e-05
      %v4059 = vadd.f32 %v3899, 1e-05
      %v4060 = vadd.f32 %v3900, 1e-05
      %v4061 = vadd.f32 %v3901, 1e-05
      %v4062 = vadd.f32 %v3902, 1e-05
      %v4063 = vadd.f32 %v3903, 1e-05
      %v4064 = vadd.f32 %v3904, 1e-05
      %v4065 = vadd.f32 %v3905, 1e-05
      %v4066 = vadd.f32 %v3906, 1e-05
      %v4067 = vadd.f32 %v3907, 1e-05
      %v4068 = vadd.f32 %v3908, 1e-05
      %v4069 = vadd.f32 %v3909, 1e-05
      %v4070 = vadd.f32 %v3910, 1e-05
      %v4071 = vadd.f32 %v3911, 1e-05
      %v4072 = vadd.f32 %v3912, 1e-05
      %v4073 = vadd.f32 %v3913, 1e-05
      %v4074 = vadd.f32 %v3914, 1e-05
      %v4075 = vadd.f32 %v3915, 1e-05
      %v4076 = vadd.f32 %v3916, 1e-05
      %v4077 = vadd.f32 %v3917, 1e-05
      %v4078 = vadd.f32 %v3918, 1e-05
      %v4079 = vadd.f32 %v3919, 1e-05
      %v4080 = vadd.f32 %v3920, 1e-05
      %v4081 = vadd.f32 %v3921, 1e-05
      %v4082 = vadd.f32 %v3922, 1e-05
      %v4083 = vadd.f32 %v3923, 1e-05
      %v4084 = vadd.f32 %v3924, 1e-05
      %v4085 = vadd.f32 %v3925, 1e-05
      %v4086 = vadd.f32 %v3926, 1e-05
      %v4087 = vadd.f32 %v3927, 1e-05
      %v4088 = vadd.f32 %v3928, 1e-05
      %v4089 = vadd.f32 %v3929, 1e-05
      %v4090 = vadd.f32 %v3930, 1e-05
      %v4091 = vadd.f32 %v3931, 1e-05
      %v4092 = vadd.f32 %v3932, 1e-05
      %v4093 = vadd.f32 %v3933, 1e-05
      %v4094 = vadd.f32 %v3934, 1e-05
      %v4095 = vadd.f32 %v3935, 1e-05
      %v4096 = vadd.f32 %v3936, 1e-05
      %v4097 = vadd.f32 %v3937, 1e-05
      %v4098 = vadd.f32 %v3938, 1e-05
      %v4099 = vadd.f32 %v3939, 1e-05
      %v4100 = vadd.f32 %v3940, 1e-05
      %v4101 = vadd.f32 %v3941, 1e-05
      %v4102 = vadd.f32 %v3942, 1e-05
      %v4103 = vadd.f32 %v3943, 1e-05
      %v4104 = vadd.f32 %v3944, 1e-05
      %v4105 = vadd.f32 %v3945, 1e-05
      %v4106 = vadd.f32 %v3946, 1e-05
      %v4107 = vadd.f32 %v3947, 1e-05
      %v4108 = vadd.f32 %v3948, 1e-05
      %v4109 = vadd.f32 %v3949, 1e-05
      %v4110 = vadd.f32 %v3950, 1e-05
      %v4111 = vadd.f32 %v3951, 1e-05
      %v4112 = vrsqrt.pop %v4032
      %v4113 = vrsqrt.pop %v4033
      %v4114 = vrsqrt.pop %v4034
      %v4115 = vrsqrt.pop %v4035
      %v4116 = vrsqrt.pop %v4036
      %v4117 = vrsqrt.pop %v4037
      %v4118 = vrsqrt.pop %v4038
      %v4119 = vrsqrt.pop %v4039
      %v4120 = vrsqrt.pop %v4040
      %v4121 = vrsqrt.pop %v4041
      %v4122 = vrsqrt.pop %v4042
      %v4123 = vrsqrt.pop %v4043
      %v4124 = vrsqrt.pop %v4044
      %v4125 = vrsqrt.pop %v4045
      %v4126 = vrsqrt.pop %v4046
      %v4127 = vrsqrt.pop %v4047
      %v4128 = vrsqrt.pop %v4048
      %v4129 = vrsqrt.pop %v4049
      %v4130 = vrsqrt.pop %v4050
      %v4131 = vrsqrt.pop %v4051
      %v4132 = vrsqrt.pop %v4052
      %v4133 = vrsqrt.pop %v4053
      %v4134 = vrsqrt.pop %v4054
      %v4135 = vrsqrt.pop %v4055
      %v4136 = vrsqrt.pop %v4056
      %v4137 = vrsqrt.pop %v4057
      %v4138 = vrsqrt.pop %v4058
      %v4139 = vrsqrt.pop %v4059
      %v4140 = vrsqrt.pop %v4060
      %v4141 = vrsqrt.pop %v4061
      %v4142 = vrsqrt.pop %v4062
      %v4143 = vrsqrt.pop %v4063
      %v4144 = vrsqrt.pop %v4064
      %v4145 = vrsqrt.pop %v4065
      %v4146 = vrsqrt.pop %v4066
      %v4147 = vrsqrt.pop %v4067
      %v4148 = vrsqrt.pop %v4068
      %v4149 = vrsqrt.pop %v4069
      %v4150 = vrsqrt.pop %v4070
      %v4151 = vrsqrt.pop %v4071
      %v4152 = vrsqrt.pop %v4072
      %v4153 = vrsqrt.pop %v4073
      %v4154 = vrsqrt.pop %v4074
      %v4155 = vrsqrt.pop %v4075
      %v4156 = vrsqrt.pop %v4076
      %v4157 = vrsqrt.pop %v4077
      %v4158 = vrsqrt.pop %v4078
      %v4159 = vrsqrt.pop %v4079
      %v4160 = vrsqrt.pop %v4080
      %v4161 = vrsqrt.pop %v4081
      %v4162 = vrsqrt.pop %v4082
      %v4163 = vrsqrt.pop %v4083
      %v4164 = vrsqrt.pop %v4084
      %v4165 = vrsqrt.pop %v4085
      %v4166 = vrsqrt.pop %v4086
      %v4167 = vrsqrt.pop %v4087
      %v4168 = vrsqrt.pop %v4088
      %v4169 = vrsqrt.pop %v4089
      %v4170 = vrsqrt.pop %v4090
      %v4171 = vrsqrt.pop %v4091
      %v4172 = vrsqrt.pop %v4092
      %v4173 = vrsqrt.pop %v4093
      %v4174 = vrsqrt.pop %v4094
      %v4175 = vrsqrt.pop %v4095
      %v4176 = vrsqrt.pop %v4096
      %v4177 = vrsqrt.pop %v4097
      %v4178 = vrsqrt.pop %v4098
      %v4179 = vrsqrt.pop %v4099
      %v4180 = vrsqrt.pop %v4100
      %v4181 = vrsqrt.pop %v4101
      %v4182 = vrsqrt.pop %v4102
      %v4183 = vrsqrt.pop %v4103
      %v4184 = vrsqrt.pop %v4104
      %v4185 = vrsqrt.pop %v4105
      %v4186 = vrsqrt.pop %v4106
      %v4187 = vrsqrt.pop %v4107
      %v4188 = vrsqrt.pop %v4108
      %v4189 = vrsqrt.pop %v4109
      %v4190 = vrsqrt.pop %v4110
      %v4191 = vrsqrt.pop %v4111
      %v4192 = vmul.f32 %v3952, %v4112
      %v4193 = vmul.f32 %v3953, %v4113
      %v4194 = vmul.f32 %v3954, %v4114
      %v4195 = vmul.f32 %v3955, %v4115
      %v4196 = vmul.f32 %v3956, %v4116
      %v4197 = vmul.f32 %v3957, %v4117
      %v4198 = vmul.f32 %v3958, %v4118
      %v4199 = vmul.f32 %v3959, %v4119
      %v4200 = vmul.f32 %v3960, %v4120
      %v4201 = vmul.f32 %v3961, %v4121
      %v4202 = vmul.f32 %v3962, %v4122
      %v4203 = vmul.f32 %v3963, %v4123
      %v4204 = vmul.f32 %v3964, %v4124
      %v4205 = vmul.f32 %v3965, %v4125
      %v4206 = vmul.f32 %v3966, %v4126
      %v4207 = vmul.f32 %v3967, %v4127
      %v4208 = vmul.f32 %v3968, %v4128
      %v4209 = vmul.f32 %v3969, %v4129
      %v4210 = vmul.f32 %v3970, %v4130
      %v4211 = vmul.f32 %v3971, %v4131
      %v4212 = vmul.f32 %v3972, %v4132
      %v4213 = vmul.f32 %v3973, %v4133
      %v4214 = vmul.f32 %v3974, %v4134
      %v4215 = vmul.f32 %v3975, %v4135
      %v4216 = vmul.f32 %v3976, %v4136
      %v4217 = vmul.f32 %v3977, %v4137
      %v4218 = vmul.f32 %v3978, %v4138
      %v4219 = vmul.f32 %v3979, %v4139
      %v4220 = vmul.f32 %v3980, %v4140
      %v4221 = vmul.f32 %v3981, %v4141
      %v4222 = vmul.f32 %v3982, %v4142
      %v4223 = vmul.f32 %v3983, %v4143
      %v4224 = vmul.f32 %v3984, %v4144
      %v4225 = vmul.f32 %v3985, %v4145
      %v4226 = vmul.f32 %v3986, %v4146
      %v4227 = vmul.f32 %v3987, %v4147
      %v4228 = vmul.f32 %v3988, %v4148
      %v4229 = vmul.f32 %v3989, %v4149
      %v4230 = vmul.f32 %v3990, %v4150
      %v4231 = vmul.f32 %v3991, %v4151
      %v4232 = vmul.f32 %v3992, %v4152
      %v4233 = vmul.f32 %v3993, %v4153
      %v4234 = vmul.f32 %v3994, %v4154
      %v4235 = vmul.f32 %v3995, %v4155
      %v4236 = vmul.f32 %v3996, %v4156
      %v4237 = vmul.f32 %v3997, %v4157
      %v4238 = vmul.f32 %v3998, %v4158
      %v4239 = vmul.f32 %v3999, %v4159
      %v4240 = vmul.f32 %v4000, %v4160
      %v4241 = vmul.f32 %v4001, %v4161
      %v4242 = vmul.f32 %v4002, %v4162
      %v4243 = vmul.f32 %v4003, %v4163
      %v4244 = vmul.f32 %v4004, %v4164
      %v4245 = vmul.f32 %v4005, %v4165
      %v4246 = vmul.f32 %v4006, %v4166
      %v4247 = vmul.f32 %v4007, %v4167
      %v4248 = vmul.f32 %v4008, %v4168
      %v4249 = vmul.f32 %v4009, %v4169
      %v4250 = vmul.f32 %v4010, %v4170
      %v4251 = vmul.f32 %v4011, %v4171
      %v4252 = vmul.f32 %v4012, %v4172
      %v4253 = vmul.f32 %v4013, %v4173
      %v4254 = vmul.f32 %v4014, %v4174
      %v4255 = vmul.f32 %v4015, %v4175
      %v4256 = vmul.f32 %v4016, %v4176
      %v4257 = vmul.f32 %v4017, %v4177
      %v4258 = vmul.f32 %v4018, %v4178
      %v4259 = vmul.f32 %v4019, %v4179
      %v4260 = vmul.f32 %v4020, %v4180
      %v4261 = vmul.f32 %v4021, %v4181
      %v4262 = vmul.f32 %v4022, %v4182
      %v4263 = vmul.f32 %v4023, %v4183
      %v4264 = vmul.f32 %v4024, %v4184
      %v4265 = vmul.f32 %v4025, %v4185
      %v4266 = vmul.f32 %v4026, %v4186
      %v4267 = vmul.f32 %v4027, %v4187
      %v4268 = vmul.f32 %v4028, %v4188
      %v4269 = vmul.f32 %v4029, %v4189
      %v4270 = vmul.f32 %v4030, %v4190
      %v4271 = vmul.f32 %v4031, %v4191
      %v4272 = vlaneseq
      %v4273 = vshrl.u32 %v4272, 7
      %v4274 = vsub.s32 3, %v4273
      %v4275 = vrot.slane %v282, %v4274
      %v4276 = vmul.f32 %v4192, %v4275
      %v4277 = vmul.f32 %v4193, %v4275
      %v4278 = vmul.f32 %v4194, %v4275
      %v4279 = vmul.f32 %v4195, %v4275
      %v4280 = vmul.f32 %v4196, %v4275
      %v4281 = vmul.f32 %v4197, %v4275
      %v4282 = vmul.f32 %v4198, %v4275
      %v4283 = vmul.f32 %v4199, %v4275
      %v4284 = vmul.f32 %v4200, %v4275
      %v4285 = vmul.f32 %v4201, %v4275
      %v4286 = vmul.f32 %v4202, %v4275
      %v4287 = vmul.f32 %v4203, %v4275
      %v4288 = vmul.f32 %v4204, %v4275
      %v4289 = vmul.f32 %v4205, %v4275
      %v4290 = vmul.f32 %v4206, %v4275
      %v4291 = vmul.f32 %v4207, %v4275
      %v4292 = vmul.f32 %v4208, %v4275
      %v4293 = vmul.f32 %v4209, %v4275
      %v4294 = vmul.f32 %v4210, %v4275
      %v4295 = vmul.f32 %v4211, %v4275
      %v4296 = vmul.f32 %v4212, %v4275
      %v4297 = vmul.f32 %v4213, %v4275
      %v4298 = vmul.f32 %v4214, %v4275
      %v4299 = vmul.f32 %v4215, %v4275
      %v4300 = vmul.f32 %v4216, %v4275
      %v4301 = vmul.f32 %v4217, %v4275
      %v4302 = vmul.f32 %v4218, %v4275
      %v4303 = vmul.f32 %v4219, %v4275
      %v4304 = vmul.f32 %v4220, %v4275
      %v4305 = vmul.f32 %v4221, %v4275
      %v4306 = vmul.f32 %v4222, %v4275
      %v4307 = vmul.f32 %v4223, %v4275
      %v4308 = vmul.f32 %v4224, %v4275
      %v4309 = vmul.f32 %v4225, %v4275
      %v4310 = vmul.f32 %v4226, %v4275
      %v4311 = vmul.f32 %v4227, %v4275
      %v4312 = vmul.f32 %v4228, %v4275
      %v4313 = vmul.f32 %v4229, %v4275
      %v4314 = vmul.f32 %v4230, %v4275
      %v4315 = vmul.f32 %v4231, %v4275
      %v4316 = vmul.f32 %v4232, %v4275
      %v4317 = vmul.f32 %v4233, %v4275
      %v4318 = vmul.f32 %v4234, %v4275
      %v4319 = vmul.f32 %v4235, %v4275
      %v4320 = vmul.f32 %v4236, %v4275
      %v4321 = vmul.f32 %v4237, %v4275
      %v4322 = vmul.f32 %v4238, %v4275
      %v4323 = vmul.f32 %v4239, %v4275
      %v4324 = vmul.f32 %v4240, %v4275
      %v4325 = vmul.f32 %v4241, %v4275
      %v4326 = vmul.f32 %v4242, %v4275
      %v4327 = vmul.f32 %v4243, %v4275
      %v4328 = vmul.f32 %v4244, %v4275
      %v4329 = vmul.f32 %v4245, %v4275
      %v4330 = vmul.f32 %v4246, %v4275
      %v4331 = vmul.f32 %v4247, %v4275
      %v4332 = vmul.f32 %v4248, %v4275
      %v4333 = vmul.f32 %v4249, %v4275
      %v4334 = vmul.f32 %v4250, %v4275
      %v4335 = vmul.f32 %v4251, %v4275
      %v4336 = vmul.f32 %v4252, %v4275
      %v4337 = vmul.f32 %v4253, %v4275
      %v4338 = vmul.f32 %v4254, %v4275
      %v4339 = vmul.f32 %v4255, %v4275
      %v4340 = vmul.f32 %v4256, %v4275
      %v4341 = vmul.f32 %v4257, %v4275
      %v4342 = vmul.f32 %v4258, %v4275
      %v4343 = vmul.f32 %v4259, %v4275
      %v4344 = vmul.f32 %v4260, %v4275
      %v4345 = vmul.f32 %v4261, %v4275
      %v4346 = vmul.f32 %v4262, %v4275
      %v4347 = vmul.f32 %v4263, %v4275
      %v4348 = vmul.f32 %v4264, %v4275
      %v4349 = vmul.f32 %v4265, %v4275
      %v4350 = vmul.f32 %v4266, %v4275
      %v4351 = vmul.f32 %v4267, %v4275
      %v4352 = vmul.f32 %v4268, %v4275
      %v4353 = vmul.f32 %v4269, %v4275
      %v4354 = vmul.f32 %v4270, %v4275
      %v4355 = vmul.f32 %v4271, %v4275
      %v4356 = vlaneseq
      %v4357 = vshrl.u32 %v4356, 7
      %v4358 = vsub.s32 3, %v4357
      %v4359 = vrot.slane %v283, %v4358
      %v4360 = vadd.f32 %v4276, %v4359
      %v4361 = vadd.f32 %v4277, %v4359
      %v4362 = vadd.f32 %v4278, %v4359
      %v4363 = vadd.f32 %v4279, %v4359
      %v4364 = vadd.f32 %v4280, %v4359
      %v4365 = vadd.f32 %v4281, %v4359
      %v4366 = vadd.f32 %v4282, %v4359
      %v4367 = vadd.f32 %v4283, %v4359
      %v4368 = vadd.f32 %v4284, %v4359
      %v4369 = vadd.f32 %v4285, %v4359
      %v4370 = vadd.f32 %v4286, %v4359
      %v4371 = vadd.f32 %v4287, %v4359
      %v4372 = vadd.f32 %v4288, %v4359
      %v4373 = vadd.f32 %v4289, %v4359
      %v4374 = vadd.f32 %v4290, %v4359
      %v4375 = vadd.f32 %v4291, %v4359
      %v4376 = vadd.f32 %v4292, %v4359
      %v4377 = vadd.f32 %v4293, %v4359
      %v4378 = vadd.f32 %v4294, %v4359
      %v4379 = vadd.f32 %v4295, %v4359
      %v4380 = vadd.f32 %v4296, %v4359
      %v4381 = vadd.f32 %v4297, %v4359
      %v4382 = vadd.f32 %v4298, %v4359
      %v4383 = vadd.f32 %v4299, %v4359
      %v4384 = vadd.f32 %v4300, %v4359
      %v4385 = vadd.f32 %v4301, %v4359
      %v4386 = vadd.f32 %v4302, %v4359
      %v4387 = vadd.f32 %v4303, %v4359
      %v4388 = vadd.f32 %v4304, %v4359
      %v4389 = vadd.f32 %v4305, %v4359
      %v4390 = vadd.f32 %v4306, %v4359
      %v4391 = vadd.f32 %v4307, %v4359
      %v4392 = vadd.f32 %v4308, %v4359
      %v4393 = vadd.f32 %v4309, %v4359
      %v4394 = vadd.f32 %v4310, %v4359
      %v4395 = vadd.f32 %v4311, %v4359
      %v4396 = vadd.f32 %v4312, %v4359
      %v4397 = vadd.f32 %v4313, %v4359
      %v4398 = vadd.f32 %v4314, %v4359
      %v4399 = vadd.f32 %v4315, %v4359
      %v4400 = vadd.f32 %v4316, %v4359
      %v4401 = vadd.f32 %v4317, %v4359
      %v4402 = vadd.f32 %v4318, %v4359
      %v4403 = vadd.f32 %v4319, %v4359
      %v4404 = vadd.f32 %v4320, %v4359
      %v4405 = vadd.f32 %v4321, %v4359
      %v4406 = vadd.f32 %v4322, %v4359
      %v4407 = vadd.f32 %v4323, %v4359
      %v4408 = vadd.f32 %v4324, %v4359
      %v4409 = vadd.f32 %v4325, %v4359
      %v4410 = vadd.f32 %v4326, %v4359
      %v4411 = vadd.f32 %v4327, %v4359
      %v4412 = vadd.f32 %v4328, %v4359
      %v4413 = vadd.f32 %v4329, %v4359
      %v4414 = vadd.f32 %v4330, %v4359
      %v4415 = vadd.f32 %v4331, %v4359
      %v4416 = vadd.f32 %v4332, %v4359
      %v4417 = vadd.f32 %v4333, %v4359
      %v4418 = vadd.f32 %v4334, %v4359
      %v4419 = vadd.f32 %v4335, %v4359
      %v4420 = vadd.f32 %v4336, %v4359
      %v4421 = vadd.f32 %v4337, %v4359
      %v4422 = vadd.f32 %v4338, %v4359
      %v4423 = vadd.f32 %v4339, %v4359
      %v4424 = vadd.f32 %v4340, %v4359
      %v4425 = vadd.f32 %v4341, %v4359
      %v4426 = vadd.f32 %v4342, %v4359
      %v4427 = vadd.f32 %v4343, %v4359
      %v4428 = vadd.f32 %v4344, %v4359
      %v4429 = vadd.f32 %v4345, %v4359
      %v4430 = vadd.f32 %v4346, %v4359
      %v4431 = vadd.f32 %v4347, %v4359
      %v4432 = vadd.f32 %v4348, %v4359
      %v4433 = vadd.f32 %v4349, %v4359
      %v4434 = vadd.f32 %v4350, %v4359
      %v4435 = vadd.f32 %v4351, %v4359
      %v4436 = vadd.f32 %v4352, %v4359
      %v4437 = vadd.f32 %v4353, %v4359
      %v4438 = vadd.f32 %v4354, %v4359
      %v4439 = vadd.f32 %v4355, %v4359
      %v4440 = vmax.f32 %v4360, 0.0
      %v4441 = vmax.f32 %v4361, 0.0
      %v4442 = vmax.f32 %v4362, 0.0
      %v4443 = vmax.f32 %v4363, 0.0
      %v4444 = vmax.f32 %v4364, 0.0
      %v4445 = vmax.f32 %v4365, 0.0
      %v4446 = vmax.f32 %v4366, 0.0
      %v4447 = vmax.f32 %v4367, 0.0
      %v4448 = vmax.f32 %v4368, 0.0
      %v4449 = vmax.f32 %v4369, 0.0
      %v4450 = vmax.f32 %v4370, 0.0
      %v4451 = vmax.f32 %v4371, 0.0
      %v4452 = vmax.f32 %v4372, 0.0
      %v4453 = vmax.f32 %v4373, 0.0
      %v4454 = vmax.f32 %v4374, 0.0
      %v4455 = vmax.f32 %v4375, 0.0
      %v4456 = vmax.f32 %v4376, 0.0
      %v4457 = vmax.f32 %v4377, 0.0
      %v4458 = vmax.f32 %v4378, 0.0
      %v4459 = vmax.f32 %v4379, 0.0
      %v4460 = vmax.f32 %v4380, 0.0
      %v4461 = vmax.f32 %v4381, 0.0
      %v4462 = vmax.f32 %v4382, 0.0
      %v4463 = vmax.f32 %v4383, 0.0
      %v4464 = vmax.f32 %v4384, 0.0
      %v4465 = vmax.f32 %v4385, 0.0
      %v4466 = vmax.f32 %v4386, 0.0
      %v4467 = vmax.f32 %v4387, 0.0
      %v4468 = vmax.f32 %v4388, 0.0
      %v4469 = vmax.f32 %v4389, 0.0
      %v4470 = vmax.f32 %v4390, 0.0
      %v4471 = vmax.f32 %v4391, 0.0
      %v4472 = vmax.f32 %v4392, 0.0
      %v4473 = vmax.f32 %v4393, 0.0
      %v4474 = vmax.f32 %v4394, 0.0
      %v4475 = vmax.f32 %v4395, 0.0
      %v4476 = vmax.f32 %v4396, 0.0
      %v4477 = vmax.f32 %v4397, 0.0
      %v4478 = vmax.f32 %v4398, 0.0
      %v4479 = vmax.f32 %v4399, 0.0
      %v4480 = vmax.f32 %v4400, 0.0
      %v4481 = vmax.f32 %v4401, 0.0
      %v4482 = vmax.f32 %v4402, 0.0
      %v4483 = vmax.f32 %v4403, 0.0
      %v4484 = vmax.f32 %v4404, 0.0
      %v4485 = vmax.f32 %v4405, 0.0
      %v4486 = vmax.f32 %v4406, 0.0
      %v4487 = vmax.f32 %v4407, 0.0
      %v4488 = vmax.f32 %v4408, 0.0
      %v4489 = vmax.f32 %v4409, 0.0
      %v4490 = vmax.f32 %v4410, 0.0
      %v4491 = vmax.f32 %v4411, 0.0
      %v4492 = vmax.f32 %v4412, 0.0
      %v4493 = vmax.f32 %v4413, 0.0
      %v4494 = vmax.f32 %v4414, 0.0
      %v4495 = vmax.f32 %v4415, 0.0
      %v4496 = vmax.f32 %v4416, 0.0
      %v4497 = vmax.f32 %v4417, 0.0
      %v4498 = vmax.f32 %v4418, 0.0
      %v4499 = vmax.f32 %v4419, 0.0
      %v4500 = vmax.f32 %v4420, 0.0
      %v4501 = vmax.f32 %v4421, 0.0
      %v4502 = vmax.f32 %v4422, 0.0
      %v4503 = vmax.f32 %v4423, 0.0
      %v4504 = vmax.f32 %v4424, 0.0
      %v4505 = vmax.f32 %v4425, 0.0
      %v4506 = vmax.f32 %v4426, 0.0
      %v4507 = vmax.f32 %v4427, 0.0
      %v4508 = vmax.f32 %v4428, 0.0
      %v4509 = vmax.f32 %v4429, 0.0
      %v4510 = vmax.f32 %v4430, 0.0
      %v4511 = vmax.f32 %v4431, 0.0
      %v4512 = vmax.f32 %v4432, 0.0
      %v4513 = vmax.f32 %v4433, 0.0
      %v4514 = vmax.f32 %v4434, 0.0
      %v4515 = vmax.f32 %v4435, 0.0
      %v4516 = vmax.f32 %v4436, 0.0
      %v4517 = vmax.f32 %v4437, 0.0
      %v4518 = vmax.f32 %v4438, 0.0
      %v4519 = vmax.f32 %v4439, 0.0
      %v4520 = vpack.c.bf16 %v4441, %v4440
      %v4521 = vpack.c.bf16 %v4443, %v4442
      %v4522 = vpack.c.bf16 %v4445, %v4444
      %v4523 = vpack.c.bf16 %v4447, %v4446
      %v4524 = vpack.c.bf16 %v4449, %v4448
      %v4525 = vpack.c.bf16 %v4451, %v4450
      %v4526 = vpack.c.bf16 %v4453, %v4452
      %v4527 = vpack.c.bf16 %v4455, %v4454
      %v4528 = vpack.c.bf16 %v4457, %v4456
      %v4529 = vpack.c.bf16 %v4459, %v4458
      %v4530 = vpack.c.bf16 %v4461, %v4460
      %v4531 = vpack.c.bf16 %v4463, %v4462
      %v4532 = vpack.c.bf16 %v4465, %v4464
      %v4533 = vpack.c.bf16 %v4467, %v4466
      %v4534 = vpack.c.bf16 %v4469, %v4468
      %v4535 = vpack.c.bf16 %v4471, %v4470
      %v4536 = vpack.c.bf16 %v4473, %v4472
      %v4537 = vpack.c.bf16 %v4475, %v4474
      %v4538 = vpack.c.bf16 %v4477, %v4476
      %v4539 = vpack.c.bf16 %v4479, %v4478
      %v4540 = vpack.c.bf16 %v4481, %v4480
      %v4541 = vpack.c.bf16 %v4483, %v4482
      %v4542 = vpack.c.bf16 %v4485, %v4484
      %v4543 = vpack.c.bf16 %v4487, %v4486
      %v4544 = vpack.c.bf16 %v4489, %v4488
      %v4545 = vpack.c.bf16 %v4491, %v4490
      %v4546 = vpack.c.bf16 %v4493, %v4492
      %v4547 = vpack.c.bf16 %v4495, %v4494
      %v4548 = vpack.c.bf16 %v4497, %v4496
      %v4549 = vpack.c.bf16 %v4499, %v4498
      %v4550 = vpack.c.bf16 %v4501, %v4500
      %v4551 = vpack.c.bf16 %v4503, %v4502
      %v4552 = vpack.c.bf16 %v4505, %v4504
      %v4553 = vpack.c.bf16 %v4507, %v4506
      %v4554 = vpack.c.bf16 %v4509, %v4508
      %v4555 = vpack.c.bf16 %v4511, %v4510
      %v4556 = vpack.c.bf16 %v4513, %v4512
      %v4557 = vpack.c.bf16 %v4515, %v4514
      %v4558 = vpack.c.bf16 %v4517, %v4516
      %v4559 = vpack.c.bf16 %v4519, %v4518
      %v4560 = vld [vmem:[%s5] sm:$0xf]
      %v4561 = vld [vmem:[%s5 + $0x4] sm:$0xf]
      %v4562 = vld [vmem:[%s5 + $0x8] sm:$0xf]
      %v4563 = vld [vmem:[%s5 + $0xc] sm:$0xf]
      %v4564 = vld [vmem:[%s5 + $0x10] sm:$0xf]
      %v4565 = vld [vmem:[%s5 + $0x14] sm:$0xf]
      %v4566 = vld [vmem:[%s5 + $0x18] sm:$0xf]
      %v4567 = vld [vmem:[%s5 + $0x1c] sm:$0xf]
      %v4568 = vld [vmem:[%s5 + $0x20] sm:$0xf]
      %v4569 = vld [vmem:[%s5 + $0x24] sm:$0xf]
      %v4570 = vld [vmem:[%s5 + $0x28] sm:$0xf]
      %v4571 = vld [vmem:[%s5 + $0x2c] sm:$0xf]
      %v4572 = vld [vmem:[%s5 + $0x30] sm:$0xf]
      %v4573 = vld [vmem:[%s5 + $0x34] sm:$0xf]
      %v4574 = vld [vmem:[%s5 + $0x38] sm:$0xf]
      %v4575 = vld [vmem:[%s5 + $0x3c] sm:$0xf]
      %v4576 = vlaneseq
      %v4577 = vshrl.u32 %v4576, 7
      %v4578 = vsub.s32 5, %v4577
      %v4579 = vrot.slane %v282, %v4578
      %v4596 = vunpack.c.l.b16 %v4560
      %v4597 = vunpack.c.l.b16 %v4561
      %v4598 = vunpack.c.l.b16 %v4562
      %v4599 = vunpack.c.l.b16 %v4563
      %v4600 = vunpack.c.l.b16 %v4564
      %v4601 = vunpack.c.l.b16 %v4565
      %v4602 = vunpack.c.l.b16 %v4566
      %v4603 = vunpack.c.l.b16 %v4567
      %v4604 = vunpack.c.l.b16 %v4568
      %v4605 = vunpack.c.l.b16 %v4569
      %v4606 = vunpack.c.l.b16 %v4570
      %v4607 = vunpack.c.l.b16 %v4571
      %v4608 = vunpack.c.l.b16 %v4572
      %v4609 = vunpack.c.l.b16 %v4573
      %v4610 = vunpack.c.l.b16 %v4574
      %v4611 = vunpack.c.l.b16 %v4575
      %v4612 = vpack.c.b16 %v4597, %v4596
      %v4613 = vpack.c.b16 %v4599, %v4598
      %v4614 = vpack.c.b16 %v4601, %v4600
      %v4615 = vpack.c.b16 %v4603, %v4602
      %v4616 = vpack.c.b16 %v4605, %v4604
      %v4617 = vpack.c.b16 %v4607, %v4606
      %v4618 = vpack.c.b16 %v4609, %v4608
      %v4619 = vpack.c.b16 %v4611, %v4610
      %4628 = vmatprep.subr.bf16.mxu0 0
      %4629 = vmatpush1.bf16.msra.mxu0 %v4612
      %4630 = vmatprep.subr.bf16.mxu0 0
      %4631 = vmatpush1.bf16.msra.mxu0 %v4613
      %4632 = vmatprep.subr.bf16.mxu0 0
      %4633 = vmatpush1.bf16.msra.mxu0 %v4614
      %4634 = vmatprep.subr.bf16.mxu0 0
      %4635 = vmatpush1.bf16.msra.mxu0 %v4615
      %4636 = vmatprep.subr.bf16.mxu0 0
      %4637 = vmatpush1.bf16.msra.mxu0 %v4616
      %4638 = vmatprep.subr.bf16.mxu0 0
      %4639 = vmatpush1.bf16.msra.mxu0 %v4617
      %4640 = vmatprep.subr.bf16.mxu0 0
      %4641 = vmatpush1.bf16.msra.mxu0 %v4618
      %4642 = vmatprep.subr.bf16.mxu0 0
      %4643 = vmatpush1.bf16.msra.mxu0 %v4619
      %4644 = vmatprep.subr.bf16.mxu0 0
      %4645 = vmatpush1.bf16.msra.mxu0 0
      %4646 = vmatprep.subr.bf16.mxu0 0
      %4647 = vmatpush1.bf16.msra.mxu0 0
      %4648 = vmatprep.subr.bf16.mxu0 0
      %4649 = vmatpush1.bf16.msra.mxu0 0
      %4650 = vmatprep.subr.bf16.mxu0 0
      %4651 = vmatpush1.bf16.msra.mxu0 0
      %4652 = vmatprep.subr.bf16.mxu0 0
      %4653 = vmatpush1.bf16.msra.mxu0 0
      %4654 = vmatprep.subr.bf16.mxu0 0
      %4655 = vmatpush1.bf16.msra.mxu0 0
      %4656 = vmatprep.subr.bf16.mxu0 0
      %4657 = vmatpush1.bf16.msra.mxu0 0
      %4658 = vmatprep.subr.bf16.mxu0 0
      %4659 = vmatpush1.bf16.msra.mxu0 0
      %4660 = vmatprep.mubr.bf16.mxu0 0
      %4661 = vmatmul.mubr.bf16.gmra.mrb[0].mxu0 %v4520
      %v4662 = vpop.f32.mrb[0].mxu0
      %v4663 = vadd.f32 %v4579, %v4662
      %v4664 = vpop.f32.mrb[0].mxu0
      %v4665 = vpop.f32.mrb[0].mxu0
      %v4666 = vadd.f32 %v4579, %v4665
      %v4667 = vpop.f32.mrb[0].mxu0
      %4668 = vmatprep.mubr.bf16.mxu0 0
      %4669 = vmatmul.mubr.bf16.gmra.mrb[0].mxu0 %v4521
      %v4670 = vpop.f32.mrb[0].mxu0
      %v4671 = vadd.f32 %v4579, %v4670
      %v4672 = vpop.f32.mrb[0].mxu0
      %v4673 = vpop.f32.mrb[0].mxu0
      %v4674 = vadd.f32 %v4579, %v4673
      %v4675 = vpop.f32.mrb[0].mxu0
      %4676 = vmatprep.mubr.bf16.mxu0 0
      %4677 = vmatmul.mubr.bf16.gmra.mrb[0].mxu0 %v4522
      %v4678 = vpop.f32.mrb[0].mxu0
      %v4679 = vadd.f32 %v4579, %v4678
      %v4680 = vpop.f32.mrb[0].mxu0
      %v4681 = vpop.f32.mrb[0].mxu0
      %v4682 = vadd.f32 %v4579, %v4681
      %v4683 = vpop.f32.mrb[0].mxu0
      %4684 = vmatprep.mubr.bf16.mxu0 0
      %4685 = vmatmul.mubr.bf16.gmra.mrb[0].mxu0 %v4523
      %v4686 = vpop.f32.mrb[0].mxu0
      %v4687 = vadd.f32 %v4579, %v4686
      %v4688 = vpop.f32.mrb[0].mxu0
      %v4689 = vpop.f32.mrb[0].mxu0
      %v4690 = vadd.f32 %v4579, %v4689
      %v4691 = vpop.f32.mrb[0].mxu0
      %4692 = vmatprep.mubr.bf16.mxu0 0
      %4693 = vmatmul.mubr.bf16.gmra.mrb[0].mxu0 %v4524
      %v4694 = vpop.f32.mrb[0].mxu0
      %v4695 = vadd.f32 %v4579, %v4694
      %v4696 = vpop.f32.mrb[0].mxu0
      %v4697 = vpop.f32.mrb[0].mxu0
      %v4698 = vadd.f32 %v4579, %v4697
      %v4699 = vpop.f32.mrb[0].mxu0
      %4700 = vmatprep.mubr.bf16.mxu0 0
      %4701 = vmatmul.mubr.bf16.gmra.mrb[0].mxu0 %v4525
      %v4702 = vpop.f32.mrb[0].mxu0
      %v4703 = vadd.f32 %v4579, %v4702
      %v4704 = vpop.f32.mrb[0].mxu0
      %v4705 = vpop.f32.mrb[0].mxu0
      %v4706 = vadd.f32 %v4579, %v4705
      %v4707 = vpop.f32.mrb[0].mxu0
      %4708 = vmatprep.mubr.bf16.mxu0 0
      %4709 = vmatmul.mubr.bf16.gmra.mrb[0].mxu0 %v4526
      %v4710 = vpop.f32.mrb[0].mxu0
      %v4711 = vadd.f32 %v4579, %v4710
      %v4712 = vpop.f32.mrb[0].mxu0
      %v4713 = vpop.f32.mrb[0].mxu0
      %v4714 = vadd.f32 %v4579, %v4713
      %v4715 = vpop.f32.mrb[0].mxu0
      %4716 = vmatprep.mubr.bf16.mxu0 0
      %4717 = vmatmul.mubr.bf16.gmra.mrb[0].mxu0 %v4527
      %v4718 = vpop.f32.mrb[0].mxu0
      %v4719 = vadd.f32 %v4579, %v4718
      %v4720 = vpop.f32.mrb[0].mxu0
      %v4721 = vpop.f32.mrb[0].mxu0
      %v4722 = vadd.f32 %v4579, %v4721
      %v4723 = vpop.f32.mrb[0].mxu0
      %4724 = vmatprep.mubr.bf16.mxu0 0
      %4725 = vmatmul.mubr.bf16.gmra.mrb[0].mxu0 %v4528
      %v4726 = vpop.f32.mrb[0].mxu0
      %v4727 = vadd.f32 %v4579, %v4726
      %v4728 = vpop.f32.mrb[0].mxu0
      %v4729 = vpop.f32.mrb[0].mxu0
      %v4730 = vadd.f32 %v4579, %v4729
      %v4731 = vpop.f32.mrb[0].mxu0
      %4732 = vmatprep.mubr.bf16.mxu0 0
      %4733 = vmatmul.mubr.bf16.gmra.mrb[0].mxu0 %v4529
      %v4734 = vpop.f32.mrb[0].mxu0
      %v4735 = vadd.f32 %v4579, %v4734
      %v4736 = vpop.f32.mrb[0].mxu0
      %v4737 = vpop.f32.mrb[0].mxu0
      %v4738 = vadd.f32 %v4579, %v4737
      %v4739 = vpop.f32.mrb[0].mxu0
      %4740 = vmatprep.mubr.bf16.mxu0 0
      %4741 = vmatmul.mubr.bf16.gmra.mrb[0].mxu0 %v4530
      %v4742 = vpop.f32.mrb[0].mxu0
      %v4743 = vadd.f32 %v4579, %v4742
      %v4744 = vpop.f32.mrb[0].mxu0
      %v4745 = vpop.f32.mrb[0].mxu0
      %v4746 = vadd.f32 %v4579, %v4745
      %v4747 = vpop.f32.mrb[0].mxu0
      %4748 = vmatprep.mubr.bf16.mxu0 0
      %4749 = vmatmul.mubr.bf16.gmra.mrb[0].mxu0 %v4531
      %v4750 = vpop.f32.mrb[0].mxu0
      %v4751 = vadd.f32 %v4579, %v4750
      %v4752 = vpop.f32.mrb[0].mxu0
      %v4753 = vpop.f32.mrb[0].mxu0
      %v4754 = vadd.f32 %v4579, %v4753
      %v4755 = vpop.f32.mrb[0].mxu0
      %4756 = vmatprep.mubr.bf16.mxu0 0
      %4757 = vmatmul.mubr.bf16.gmra.mrb[0].mxu0 %v4532
      %v4758 = vpop.f32.mrb[0].mxu0
      %v4759 = vadd.f32 %v4579, %v4758
      %v4760 = vpop.f32.mrb[0].mxu0
      %v4761 = vpop.f32.mrb[0].mxu0
      %v4762 = vadd.f32 %v4579, %v4761
      %v4763 = vpop.f32.mrb[0].mxu0
      %4764 = vmatprep.mubr.bf16.mxu0 0
      %4765 = vmatmul.mubr.bf16.gmra.mrb[0].mxu0 %v4533
      %v4766 = vpop.f32.mrb[0].mxu0
      %v4767 = vadd.f32 %v4579, %v4766
      %v4768 = vpop.f32.mrb[0].mxu0
      %v4769 = vpop.f32.mrb[0].mxu0
      %v4770 = vadd.f32 %v4579, %v4769
      %v4771 = vpop.f32.mrb[0].mxu0
      %4772 = vmatprep.mubr.bf16.mxu0 0
      %4773 = vmatmul.mubr.bf16.gmra.mrb[0].mxu0 %v4534
      %v4774 = vpop.f32.mrb[0].mxu0
      %v4775 = vadd.f32 %v4579, %v4774
      %v4776 = vpop.f32.mrb[0].mxu0
      %v4777 = vpop.f32.mrb[0].mxu0
      %v4778 = vadd.f32 %v4579, %v4777
      %v4779 = vpop.f32.mrb[0].mxu0
      %4780 = vmatprep.mubr.bf16.mxu0 0
      %4781 = vmatmul.mubr.bf16.gmra.mrb[0].mxu0 %v4535
      %v4782 = vpop.f32.mrb[0].mxu0
      %v4783 = vadd.f32 %v4579, %v4782
      %v4784 = vpop.f32.mrb[0].mxu0
      %v4785 = vpop.f32.mrb[0].mxu0
      %v4786 = vadd.f32 %v4579, %v4785
      %v4787 = vpop.f32.mrb[0].mxu0
      %4788 = vmatprep.mubr.bf16.mxu0 0
      %4789 = vmatmul.mubr.bf16.gmra.mrb[0].mxu0 %v4536
      %v4790 = vpop.f32.mrb[0].mxu0
      %v4791 = vadd.f32 %v4579, %v4790
      %v4792 = vpop.f32.mrb[0].mxu0
      %v4793 = vpop.f32.mrb[0].mxu0
      %v4794 = vadd.f32 %v4579, %v4793
      %v4795 = vpop.f32.mrb[0].mxu0
      %4796 = vmatprep.mubr.bf16.mxu0 0
      %4797 = vmatmul.mubr.bf16.gmra.mrb[0].mxu0 %v4537
      %v4798 = vpop.f32.mrb[0].mxu0
      %v4799 = vadd.f32 %v4579, %v4798
      %v4800 = vpop.f32.mrb[0].mxu0
      %v4801 = vpop.f32.mrb[0].mxu0
      %v4802 = vadd.f32 %v4579, %v4801
      %v4803 = vpop.f32.mrb[0].mxu0
      %4804 = vmatprep.mubr.bf16.mxu0 0
      %4805 = vmatmul.mubr.bf16.gmra.mrb[0].mxu0 %v4538
      %v4806 = vpop.f32.mrb[0].mxu0
      %v4807 = vadd.f32 %v4579, %v4806
      %v4808 = vpop.f32.mrb[0].mxu0
      %v4809 = vpop.f32.mrb[0].mxu0
      %v4810 = vadd.f32 %v4579, %v4809
      %v4811 = vpop.f32.mrb[0].mxu0
      %4812 = vmatprep.mubr.bf16.mxu0 0
      %4813 = vmatmul.mubr.bf16.gmra.mrb[0].mxu0 %v4539
      %v4814 = vpop.f32.mrb[0].mxu0
      %v4815 = vadd.f32 %v4579, %v4814
      %v4816 = vpop.f32.mrb[0].mxu0
      %v4817 = vpop.f32.mrb[0].mxu0
      %v4818 = vadd.f32 %v4579, %v4817
      %v4819 = vpop.f32.mrb[0].mxu0
      %4820 = vmatprep.mubr.bf16.mxu0 0
      %4821 = vmatmul.mubr.bf16.gmra.mrb[0].mxu0 %v4540
      %v4822 = vpop.f32.mrb[0].mxu0
      %v4823 = vadd.f32 %v4579, %v4822
      %v4824 = vpop.f32.mrb[0].mxu0
      %v4825 = vpop.f32.mrb[0].mxu0
      %v4826 = vadd.f32 %v4579, %v4825
      %v4827 = vpop.f32.mrb[0].mxu0
      %4828 = vmatprep.mubr.bf16.mxu0 0
      %4829 = vmatmul.mubr.bf16.gmra.mrb[0].mxu0 %v4541
      %v4830 = vpop.f32.mrb[0].mxu0
      %v4831 = vadd.f32 %v4579, %v4830
      %v4832 = vpop.f32.mrb[0].mxu0
      %v4833 = vpop.f32.mrb[0].mxu0
      %v4834 = vadd.f32 %v4579, %v4833
      %v4835 = vpop.f32.mrb[0].mxu0
      %4836 = vmatprep.mubr.bf16.mxu0 0
      %4837 = vmatmul.mubr.bf16.gmra.mrb[0].mxu0 %v4542
      %v4838 = vpop.f32.mrb[0].mxu0
      %v4839 = vadd.f32 %v4579, %v4838
      %v4840 = vpop.f32.mrb[0].mxu0
      %v4841 = vpop.f32.mrb[0].mxu0
      %v4842 = vadd.f32 %v4579, %v4841
      %v4843 = vpop.f32.mrb[0].mxu0
      %4844 = vmatprep.mubr.bf16.mxu0 0
      %4845 = vmatmul.mubr.bf16.gmra.mrb[0].mxu0 %v4543
      %v4846 = vpop.f32.mrb[0].mxu0
      %v4847 = vadd.f32 %v4579, %v4846
      %v4848 = vpop.f32.mrb[0].mxu0
      %v4849 = vpop.f32.mrb[0].mxu0
      %v4850 = vadd.f32 %v4579, %v4849
      %v4851 = vpop.f32.mrb[0].mxu0
      %4852 = vmatprep.mubr.bf16.mxu0 0
      %4853 = vmatmul.mubr.bf16.gmra.mrb[0].mxu0 %v4544
      %v4854 = vpop.f32.mrb[0].mxu0
      %v4855 = vadd.f32 %v4579, %v4854
      %v4856 = vpop.f32.mrb[0].mxu0
      %v4857 = vpop.f32.mrb[0].mxu0
      %v4858 = vadd.f32 %v4579, %v4857
      %v4859 = vpop.f32.mrb[0].mxu0
      %4860 = vmatprep.mubr.bf16.mxu0 0
      %4861 = vmatmul.mubr.bf16.gmra.mrb[0].mxu0 %v4545
      %v4862 = vpop.f32.mrb[0].mxu0
      %v4863 = vadd.f32 %v4579, %v4862
      %v4864 = vpop.f32.mrb[0].mxu0
      %v4865 = vpop.f32.mrb[0].mxu0
      %v4866 = vadd.f32 %v4579, %v4865
      %v4867 = vpop.f32.mrb[0].mxu0
      %4868 = vmatprep.mubr.bf16.mxu0 0
      %4869 = vmatmul.mubr.bf16.gmra.mrb[0].mxu0 %v4546
      %v4870 = vpop.f32.mrb[0].mxu0
      %v4871 = vadd.f32 %v4579, %v4870
      %v4872 = vpop.f32.mrb[0].mxu0
      %v4873 = vpop.f32.mrb[0].mxu0
      %v4874 = vadd.f32 %v4579, %v4873
      %v4875 = vpop.f32.mrb[0].mxu0
      %4876 = vmatprep.mubr.bf16.mxu0 0
      %4877 = vmatmul.mubr.bf16.gmra.mrb[0].mxu0 %v4547
      %v4878 = vpop.f32.mrb[0].mxu0
      %v4879 = vadd.f32 %v4579, %v4878
      %v4880 = vpop.f32.mrb[0].mxu0
      %v4881 = vpop.f32.mrb[0].mxu0
      %v4882 = vadd.f32 %v4579, %v4881
      %v4883 = vpop.f32.mrb[0].mxu0
      %4884 = vmatprep.mubr.bf16.mxu0 0
      %4885 = vmatmul.mubr.bf16.gmra.mrb[0].mxu0 %v4548
      %v4886 = vpop.f32.mrb[0].mxu0
      %v4887 = vadd.f32 %v4579, %v4886
      %v4888 = vpop.f32.mrb[0].mxu0
      %v4889 = vpop.f32.mrb[0].mxu0
      %v4890 = vadd.f32 %v4579, %v4889
      %v4891 = vpop.f32.mrb[0].mxu0
      %4892 = vmatprep.mubr.bf16.mxu0 0
      %4893 = vmatmul.mubr.bf16.gmra.mrb[0].mxu0 %v4549
      %v4894 = vpop.f32.mrb[0].mxu0
      %v4895 = vadd.f32 %v4579, %v4894
      %v4896 = vpop.f32.mrb[0].mxu0
      %v4897 = vpop.f32.mrb[0].mxu0
      %v4898 = vadd.f32 %v4579, %v4897
      %v4899 = vpop.f32.mrb[0].mxu0
      %4900 = vmatprep.mubr.bf16.mxu0 0
      %4901 = vmatmul.mubr.bf16.gmra.mrb[0].mxu0 %v4550
      %v4902 = vpop.f32.mrb[0].mxu0
      %v4903 = vadd.f32 %v4579, %v4902
      %v4904 = vpop.f32.mrb[0].mxu0
      %v4905 = vpop.f32.mrb[0].mxu0
      %v4906 = vadd.f32 %v4579, %v4905
      %v4907 = vpop.f32.mrb[0].mxu0
      %4908 = vmatprep.mubr.bf16.mxu0 0
      %4909 = vmatmul.mubr.bf16.gmra.mrb[0].mxu0 %v4551
      %v4910 = vpop.f32.mrb[0].mxu0
      %v4911 = vadd.f32 %v4579, %v4910
      %v4912 = vpop.f32.mrb[0].mxu0
      %v4913 = vpop.f32.mrb[0].mxu0
      %v4914 = vadd.f32 %v4579, %v4913
      %v4915 = vpop.f32.mrb[0].mxu0
      %4916 = vmatprep.mubr.bf16.mxu0 0
      %4917 = vmatmul.mubr.bf16.gmra.mrb[0].mxu0 %v4552
      %v4918 = vpop.f32.mrb[0].mxu0
      %v4919 = vadd.f32 %v4579, %v4918
      %v4920 = vpop.f32.mrb[0].mxu0
      %v4921 = vpop.f32.mrb[0].mxu0
      %v4922 = vadd.f32 %v4579, %v4921
      %v4923 = vpop.f32.mrb[0].mxu0
      %4924 = vmatprep.mubr.bf16.mxu0 0
      %4925 = vmatmul.mubr.bf16.gmra.mrb[0].mxu0 %v4553
      %v4926 = vpop.f32.mrb[0].mxu0
      %v4927 = vadd.f32 %v4579, %v4926
      %v4928 = vpop.f32.mrb[0].mxu0
      %v4929 = vpop.f32.mrb[0].mxu0
      %v4930 = vadd.f32 %v4579, %v4929
      %v4931 = vpop.f32.mrb[0].mxu0
      %4932 = vmatprep.mubr.bf16.mxu0 0
      %4933 = vmatmul.mubr.bf16.gmra.mrb[0].mxu0 %v4554
      %v4934 = vpop.f32.mrb[0].mxu0
      %v4935 = vadd.f32 %v4579, %v4934
      %v4936 = vpop.f32.mrb[0].mxu0
      %v4937 = vpop.f32.mrb[0].mxu0
      %v4938 = vadd.f32 %v4579, %v4937
      %v4939 = vpop.f32.mrb[0].mxu0
      %4940 = vmatprep.mubr.bf16.mxu0 0
      %4941 = vmatmul.mubr.bf16.gmra.mrb[0].mxu0 %v4555
      %v4942 = vpop.f32.mrb[0].mxu0
      %v4943 = vadd.f32 %v4579, %v4942
      %v4944 = vpop.f32.mrb[0].mxu0
      %v4945 = vpop.f32.mrb[0].mxu0
      %v4946 = vadd.f32 %v4579, %v4945
      %v4947 = vpop.f32.mrb[0].mxu0
      %4948 = vmatprep.mubr.bf16.mxu0 0
      %4949 = vmatmul.mubr.bf16.gmra.mrb[0].mxu0 %v4556
      %v4950 = vpop.f32.mrb[0].mxu0
      %v4951 = vadd.f32 %v4579, %v4950
      %v4952 = vpop.f32.mrb[0].mxu0
      %v4953 = vpop.f32.mrb[0].mxu0
      %v4954 = vadd.f32 %v4579, %v4953
      %v4955 = vpop.f32.mrb[0].mxu0
      %4956 = vmatprep.mubr.bf16.mxu0 0
      %4957 = vmatmul.mubr.bf16.gmra.mrb[0].mxu0 %v4557
      %v4958 = vpop.f32.mrb[0].mxu0
      %v4959 = vadd.f32 %v4579, %v4958
      %v4960 = vpop.f32.mrb[0].mxu0
      %v4961 = vpop.f32.mrb[0].mxu0
      %v4962 = vadd.f32 %v4579, %v4961
      %v4963 = vpop.f32.mrb[0].mxu0
      %4964 = vmatprep.mubr.bf16.mxu0 0
      %4965 = vmatmul.mubr.bf16.gmra.mrb[0].mxu0 %v4558
      %v4966 = vpop.f32.mrb[0].mxu0
      %v4967 = vadd.f32 %v4579, %v4966
      %v4968 = vpop.f32.mrb[0].mxu0
      %v4969 = vpop.f32.mrb[0].mxu0
      %v4970 = vadd.f32 %v4579, %v4969
      %v4971 = vpop.f32.mrb[0].mxu0
      %4972 = vmatprep.mubr.bf16.mxu0 0
      %4973 = vmatmul.mubr.bf16.gmra.mrb[0].mxu0 %v4559
      %v4974 = vpop.f32.mrb[0].mxu0
      %v4975 = vadd.f32 %v4579, %v4974
      %v4976 = vpop.f32.mrb[0].mxu0
      %v4977 = vpop.f32.mrb[0].mxu0
      %v4978 = vadd.f32 %v4579, %v4977
      %v4979 = vpop.f32.mrb[0].mxu0
      %4980 = vdwg.mxu0
      %v4981 = vadd.f32 %v4663, %v2754
      %v4982 = vadd.f32 %v4666, %v2758
      %v4983 = vadd.f32 %v4671, %v2764
      %v4984 = vadd.f32 %v4674, %v2768
      %v4985 = vadd.f32 %v4679, %v2774
      %v4986 = vadd.f32 %v4682, %v2778
      %v4987 = vadd.f32 %v4687, %v2784
      %v4988 = vadd.f32 %v4690, %v2788
      %v4989 = vadd.f32 %v4695, %v2794
      %v4990 = vadd.f32 %v4698, %v2798
      %v4991 = vadd.f32 %v4703, %v2804
      %v4992 = vadd.f32 %v4706, %v2808
      %v4993 = vadd.f32 %v4711, %v2814
      %v4994 = vadd.f32 %v4714, %v2818
      %v4995 = vadd.f32 %v4719, %v2824
      %v4996 = vadd.f32 %v4722, %v2828
      %v4997 = vadd.f32 %v4727, %v2834
      %v4998 = vadd.f32 %v4730, %v2838
      %v4999 = vadd.f32 %v4735, %v2844
      %v5000 = vadd.f32 %v4738, %v2848
      %v5001 = vadd.f32 %v4743, %v2854
      %v5002 = vadd.f32 %v4746, %v2858
      %v5003 = vadd.f32 %v4751, %v2864
      %v5004 = vadd.f32 %v4754, %v2868
      %v5005 = vadd.f32 %v4759, %v2874
      %v5006 = vadd.f32 %v4762, %v2878
      %v5007 = vadd.f32 %v4767, %v2884
      %v5008 = vadd.f32 %v4770, %v2888
      %v5009 = vadd.f32 %v4775, %v2894
      %v5010 = vadd.f32 %v4778, %v2898
      %v5011 = vadd.f32 %v4783, %v2904
      %v5012 = vadd.f32 %v4786, %v2908
      %v5013 = vadd.f32 %v4791, %v2914
      %v5014 = vadd.f32 %v4794, %v2918
      %v5015 = vadd.f32 %v4799, %v2924
      %v5016 = vadd.f32 %v4802, %v2928
      %v5017 = vadd.f32 %v4807, %v2934
      %v5018 = vadd.f32 %v4810, %v2938
      %v5019 = vadd.f32 %v4815, %v2944
      %v5020 = vadd.f32 %v4818, %v2948
      %v5021 = vadd.f32 %v4823, %v2954
      %v5022 = vadd.f32 %v4826, %v2958
      %v5023 = vadd.f32 %v4831, %v2964
      %v5024 = vadd.f32 %v4834, %v2968
      %v5025 = vadd.f32 %v4839, %v2974
      %v5026 = vadd.f32 %v4842, %v2978
      %v5027 = vadd.f32 %v4847, %v2984
      %v5028 = vadd.f32 %v4850, %v2988
      %v5029 = vadd.f32 %v4855, %v2994
      %v5030 = vadd.f32 %v4858, %v2998
      %v5031 = vadd.f32 %v4863, %v3004
      %v5032 = vadd.f32 %v4866, %v3008
      %v5033 = vadd.f32 %v4871, %v3014
      %v5034 = vadd.f32 %v4874, %v3018
      %v5035 = vadd.f32 %v4879, %v3024
      %v5036 = vadd.f32 %v4882, %v3028
      %v5037 = vadd.f32 %v4887, %v3034
      %v5038 = vadd.f32 %v4890, %v3038
      %v5039 = vadd.f32 %v4895, %v3044
      %v5040 = vadd.f32 %v4898, %v3048
      %v5041 = vadd.f32 %v4903, %v3054
      %v5042 = vadd.f32 %v4906, %v3058
      %v5043 = vadd.f32 %v4911, %v3064
      %v5044 = vadd.f32 %v4914, %v3068
      %v5045 = vadd.f32 %v4919, %v3074
      %v5046 = vadd.f32 %v4922, %v3078
      %v5047 = vadd.f32 %v4927, %v3084
      %v5048 = vadd.f32 %v4930, %v3088
      %v5049 = vadd.f32 %v4935, %v3094
      %v5050 = vadd.f32 %v4938, %v3098
      %v5051 = vadd.f32 %v4943, %v3104
      %v5052 = vadd.f32 %v4946, %v3108
      %v5053 = vadd.f32 %v4951, %v3114
      %v5054 = vadd.f32 %v4954, %v3118
      %v5055 = vadd.f32 %v4959, %v3124
      %v5056 = vadd.f32 %v4962, %v3128
      %v5057 = vadd.f32 %v4967, %v3134
      %v5058 = vadd.f32 %v4970, %v3138
      %v5059 = vadd.f32 %v4975, %v3144
      %v5060 = vadd.f32 %v4978, %v3148
      %v5061 = vpack.c.bf16 %v4982, %v4981
      %v5062 = vpack.c.bf16 %v4984, %v4983
      %v5063 = vpack.c.bf16 %v4986, %v4985
      %v5064 = vpack.c.bf16 %v4988, %v4987
      %v5065 = vpack.c.bf16 %v4990, %v4989
      %v5066 = vpack.c.bf16 %v4992, %v4991
      %v5067 = vpack.c.bf16 %v4994, %v4993
      %v5068 = vpack.c.bf16 %v4996, %v4995
      %v5069 = vpack.c.bf16 %v4998, %v4997
      %v5070 = vpack.c.bf16 %v5000, %v4999
      %v5071 = vpack.c.bf16 %v5002, %v5001
      %v5072 = vpack.c.bf16 %v5004, %v5003
      %v5073 = vpack.c.bf16 %v5006, %v5005
      %v5074 = vpack.c.bf16 %v5008, %v5007
      %v5075 = vpack.c.bf16 %v5010, %v5009
      %v5076 = vpack.c.bf16 %v5012, %v5011
      %v5077 = vpack.c.bf16 %v5014, %v5013
      %v5078 = vpack.c.bf16 %v5016, %v5015
      %v5079 = vpack.c.bf16 %v5018, %v5017
      %v5080 = vpack.c.bf16 %v5020, %v5019
      %v5081 = vpack.c.bf16 %v5022, %v5021
      %v5082 = vpack.c.bf16 %v5024, %v5023
      %v5083 = vpack.c.bf16 %v5026, %v5025
      %v5084 = vpack.c.bf16 %v5028, %v5027
      %v5085 = vpack.c.bf16 %v5030, %v5029
      %v5086 = vpack.c.bf16 %v5032, %v5031
      %v5087 = vpack.c.bf16 %v5034, %v5033
      %v5088 = vpack.c.bf16 %v5036, %v5035
      %v5089 = vpack.c.bf16 %v5038, %v5037
      %v5090 = vpack.c.bf16 %v5040, %v5039
      %v5091 = vpack.c.bf16 %v5042, %v5041
      %v5092 = vpack.c.bf16 %v5044, %v5043
      %v5093 = vpack.c.bf16 %v5046, %v5045
      %v5094 = vpack.c.bf16 %v5048, %v5047
      %v5095 = vpack.c.bf16 %v5050, %v5049
      %v5096 = vpack.c.bf16 %v5052, %v5051
      %v5097 = vpack.c.bf16 %v5054, %v5053
      %v5098 = vpack.c.bf16 %v5056, %v5055
      %v5099 = vpack.c.bf16 %v5058, %v5057
      %v5100 = vpack.c.bf16 %v5060, %v5059
      %s5101 = scalar_lea.vmem %s5, 64
      %v5102 = vld [vmem:[%s5101] sm:$0xf]
      %v5103 = vld [vmem:[%s5101 + $0x4] sm:$0xf]
      %v5104 = vld [vmem:[%s5101 + $0x8] sm:$0xf]
      %v5105 = vld [vmem:[%s5101 + $0xc] sm:$0xf]
      %v5106 = vld [vmem:[%s5101 + $0x10] sm:$0xf]
      %v5107 = vld [vmem:[%s5101 + $0x14] sm:$0xf]
      %v5108 = vld [vmem:[%s5101 + $0x18] sm:$0xf]
      %v5109 = vld [vmem:[%s5101 + $0x1c] sm:$0xf]
      %v5110 = vld [vmem:[%s5101 + $0x20] sm:$0xf]
      %v5111 = vld [vmem:[%s5101 + $0x24] sm:$0xf]
      %v5112 = vld [vmem:[%s5101 + $0x28] sm:$0xf]
      %v5113 = vld [vmem:[%s5101 + $0x2c] sm:$0xf]
      %v5114 = vld [vmem:[%s5101 + $0x30] sm:$0xf]
      %v5115 = vld [vmem:[%s5101 + $0x34] sm:$0xf]
      %v5116 = vld [vmem:[%s5101 + $0x38] sm:$0xf]
      %v5117 = vld [vmem:[%s5101 + $0x3c] sm:$0xf]
      %v5118 = vlaneseq
      %v5119 = vshrl.u32 %v5118, 7
      %v5120 = vsub.s32 5, %v5119
      %v5121 = vrot.slane %v283, %v5120
      %v5138 = vunpack.c.l.b16 %v5102
      %v5139 = vunpack.c.l.b16 %v5103
      %v5140 = vunpack.c.l.b16 %v5104
      %v5141 = vunpack.c.l.b16 %v5105
      %v5142 = vunpack.c.l.b16 %v5106
      %v5143 = vunpack.c.l.b16 %v5107
      %v5144 = vunpack.c.l.b16 %v5108
      %v5145 = vunpack.c.l.b16 %v5109
      %v5146 = vunpack.c.l.b16 %v5110
      %v5147 = vunpack.c.l.b16 %v5111
      %v5148 = vunpack.c.l.b16 %v5112
      %v5149 = vunpack.c.l.b16 %v5113
      %v5150 = vunpack.c.l.b16 %v5114
      %v5151 = vunpack.c.l.b16 %v5115
      %v5152 = vunpack.c.l.b16 %v5116
      %v5153 = vunpack.c.l.b16 %v5117
      %v5154 = vpack.c.b16 %v5139, %v5138
      %v5155 = vpack.c.b16 %v5141, %v5140
      %v5156 = vpack.c.b16 %v5143, %v5142
      %v5157 = vpack.c.b16 %v5145, %v5144
      %v5158 = vpack.c.b16 %v5147, %v5146
      %v5159 = vpack.c.b16 %v5149, %v5148
      %v5160 = vpack.c.b16 %v5151, %v5150
      %v5161 = vpack.c.b16 %v5153, %v5152
      %5170 = vmatprep.subr.bf16.mxu0 0
      %5171 = vmatpush1.bf16.msra.mxu0 %v5154
      %5172 = vmatprep.subr.bf16.mxu0 0
      %5173 = vmatpush1.bf16.msra.mxu0 %v5155
      %5174 = vmatprep.subr.bf16.mxu0 0
      %5175 = vmatpush1.bf16.msra.mxu0 %v5156
      %5176 = vmatprep.subr.bf16.mxu0 0
      %5177 = vmatpush1.bf16.msra.mxu0 %v5157
      %5178 = vmatprep.subr.bf16.mxu0 0
      %5179 = vmatpush1.bf16.msra.mxu0 %v5158
      %5180 = vmatprep.subr.bf16.mxu0 0
      %5181 = vmatpush1.bf16.msra.mxu0 %v5159
      %5182 = vmatprep.subr.bf16.mxu0 0
      %5183 = vmatpush1.bf16.msra.mxu0 %v5160
      %5184 = vmatprep.subr.bf16.mxu0 0
      %5185 = vmatpush1.bf16.msra.mxu0 %v5161
      %5186 = vmatprep.subr.bf16.mxu0 0
      %5187 = vmatpush1.bf16.msra.mxu0 0
      %5188 = vmatprep.subr.bf16.mxu0 0
      %5189 = vmatpush1.bf16.msra.mxu0 0
      %5190 = vmatprep.subr.bf16.mxu0 0
      %5191 = vmatpush1.bf16.msra.mxu0 0
      %5192 = vmatprep.subr.bf16.mxu0 0
      %5193 = vmatpush1.bf16.msra.mxu0 0
      %5194 = vmatprep.subr.bf16.mxu0 0
      %5195 = vmatpush1.bf16.msra.mxu0 0
      %5196 = vmatprep.subr.bf16.mxu0 0
      %5197 = vmatpush1.bf16.msra.mxu0 0
      %5198 = vmatprep.subr.bf16.mxu0 0
      %5199 = vmatpush1.bf16.msra.mxu0 0
      %5200 = vmatprep.subr.bf16.mxu0 0
      %5201 = vmatpush1.bf16.msra.mxu0 0
      %5202 = vmatprep.mubr.bf16.mxu0 0
      %5203 = vmatmul.mubr.bf16.gmra.mrb[0].mxu0 %v5061
      %v5204 = vpop.f32.mrb[0].mxu0
      %v5205 = vadd.f32 %v5121, %v5204
      %v5206 = vpop.f32.mrb[0].mxu0
      %v5207 = vpop.f32.mrb[0].mxu0
      %v5208 = vadd.f32 %v5121, %v5207
      %v5209 = vpop.f32.mrb[0].mxu0
      %5210 = vmatprep.mubr.bf16.mxu0 0
      %5211 = vmatmul.mubr.bf16.gmra.mrb[0].mxu0 %v5062
      %v5212 = vpop.f32.mrb[0].mxu0
      %v5213 = vadd.f32 %v5121, %v5212
      %v5214 = vpop.f32.mrb[0].mxu0
      %v5215 = vpop.f32.mrb[0].mxu0
      %v5216 = vadd.f32 %v5121, %v5215
      %v5217 = vpop.f32.mrb[0].mxu0
      %5218 = vmatprep.mubr.bf16.mxu0 0
      %5219 = vmatmul.mubr.bf16.gmra.mrb[0].mxu0 %v5063
      %v5220 = vpop.f32.mrb[0].mxu0
      %v5221 = vadd.f32 %v5121, %v5220
      %v5222 = vpop.f32.mrb[0].mxu0
      %v5223 = vpop.f32.mrb[0].mxu0
      %v5224 = vadd.f32 %v5121, %v5223
      %v5225 = vpop.f32.mrb[0].mxu0
      %5226 = vmatprep.mubr.bf16.mxu0 0
      %5227 = vmatmul.mubr.bf16.gmra.mrb[0].mxu0 %v5064
      %v5228 = vpop.f32.mrb[0].mxu0
      %v5229 = vadd.f32 %v5121, %v5228
      %v5230 = vpop.f32.mrb[0].mxu0
      %v5231 = vpop.f32.mrb[0].mxu0
      %v5232 = vadd.f32 %v5121, %v5231
      %v5233 = vpop.f32.mrb[0].mxu0
      %5234 = vmatprep.mubr.bf16.mxu0 0
      %5235 = vmatmul.mubr.bf16.gmra.mrb[0].mxu0 %v5065
      %v5236 = vpop.f32.mrb[0].mxu0
      %v5237 = vadd.f32 %v5121, %v5236
      %v5238 = vpop.f32.mrb[0].mxu0
      %v5239 = vpop.f32.mrb[0].mxu0
      %v5240 = vadd.f32 %v5121, %v5239
      %v5241 = vpop.f32.mrb[0].mxu0
      %5242 = vmatprep.mubr.bf16.mxu0 0
      %5243 = vmatmul.mubr.bf16.gmra.mrb[0].mxu0 %v5066
      %v5244 = vpop.f32.mrb[0].mxu0
      %v5245 = vadd.f32 %v5121, %v5244
      %v5246 = vpop.f32.mrb[0].mxu0
      %v5247 = vpop.f32.mrb[0].mxu0
      %v5248 = vadd.f32 %v5121, %v5247
      %v5249 = vpop.f32.mrb[0].mxu0
      %5250 = vmatprep.mubr.bf16.mxu0 0
      %5251 = vmatmul.mubr.bf16.gmra.mrb[0].mxu0 %v5067
      %v5252 = vpop.f32.mrb[0].mxu0
      %v5253 = vadd.f32 %v5121, %v5252
      %v5254 = vpop.f32.mrb[0].mxu0
      %v5255 = vpop.f32.mrb[0].mxu0
      %v5256 = vadd.f32 %v5121, %v5255
      %v5257 = vpop.f32.mrb[0].mxu0
      %5258 = vmatprep.mubr.bf16.mxu0 0
      %5259 = vmatmul.mubr.bf16.gmra.mrb[0].mxu0 %v5068
      %v5260 = vpop.f32.mrb[0].mxu0
      %v5261 = vadd.f32 %v5121, %v5260
      %v5262 = vpop.f32.mrb[0].mxu0
      %v5263 = vpop.f32.mrb[0].mxu0
      %v5264 = vadd.f32 %v5121, %v5263
      %v5265 = vpop.f32.mrb[0].mxu0
      %5266 = vmatprep.mubr.bf16.mxu0 0
      %5267 = vmatmul.mubr.bf16.gmra.mrb[0].mxu0 %v5069
      %v5268 = vpop.f32.mrb[0].mxu0
      %v5269 = vadd.f32 %v5121, %v5268
      %v5270 = vpop.f32.mrb[0].mxu0
      %v5271 = vpop.f32.mrb[0].mxu0
      %v5272 = vadd.f32 %v5121, %v5271
      %v5273 = vpop.f32.mrb[0].mxu0
      %5274 = vmatprep.mubr.bf16.mxu0 0
      %5275 = vmatmul.mubr.bf16.gmra.mrb[0].mxu0 %v5070
      %v5276 = vpop.f32.mrb[0].mxu0
      %v5277 = vadd.f32 %v5121, %v5276
      %v5278 = vpop.f32.mrb[0].mxu0
      %v5279 = vpop.f32.mrb[0].mxu0
      %v5280 = vadd.f32 %v5121, %v5279
      %v5281 = vpop.f32.mrb[0].mxu0
      %5282 = vmatprep.mubr.bf16.mxu0 0
      %5283 = vmatmul.mubr.bf16.gmra.mrb[0].mxu0 %v5071
      %v5284 = vpop.f32.mrb[0].mxu0
      %v5285 = vadd.f32 %v5121, %v5284
      %v5286 = vpop.f32.mrb[0].mxu0
      %v5287 = vpop.f32.mrb[0].mxu0
      %v5288 = vadd.f32 %v5121, %v5287
      %v5289 = vpop.f32.mrb[0].mxu0
      %5290 = vmatprep.mubr.bf16.mxu0 0
      %5291 = vmatmul.mubr.bf16.gmra.mrb[0].mxu0 %v5072
      %v5292 = vpop.f32.mrb[0].mxu0
      %v5293 = vadd.f32 %v5121, %v5292
      %v5294 = vpop.f32.mrb[0].mxu0
      %v5295 = vpop.f32.mrb[0].mxu0
      %v5296 = vadd.f32 %v5121, %v5295
      %v5297 = vpop.f32.mrb[0].mxu0
      %5298 = vmatprep.mubr.bf16.mxu0 0
      %5299 = vmatmul.mubr.bf16.gmra.mrb[0].mxu0 %v5073
      %v5300 = vpop.f32.mrb[0].mxu0
      %v5301 = vadd.f32 %v5121, %v5300
      %v5302 = vpop.f32.mrb[0].mxu0
      %v5303 = vpop.f32.mrb[0].mxu0
      %v5304 = vadd.f32 %v5121, %v5303
      %v5305 = vpop.f32.mrb[0].mxu0
      %5306 = vmatprep.mubr.bf16.mxu0 0
      %5307 = vmatmul.mubr.bf16.gmra.mrb[0].mxu0 %v5074
      %v5308 = vpop.f32.mrb[0].mxu0
      %v5309 = vadd.f32 %v5121, %v5308
      %v5310 = vpop.f32.mrb[0].mxu0
      %v5311 = vpop.f32.mrb[0].mxu0
      %v5312 = vadd.f32 %v5121, %v5311
      %v5313 = vpop.f32.mrb[0].mxu0
      %5314 = vmatprep.mubr.bf16.mxu0 0
      %5315 = vmatmul.mubr.bf16.gmra.mrb[0].mxu0 %v5075
      %v5316 = vpop.f32.mrb[0].mxu0
      %v5317 = vadd.f32 %v5121, %v5316
      %v5318 = vpop.f32.mrb[0].mxu0
      %v5319 = vpop.f32.mrb[0].mxu0
      %v5320 = vadd.f32 %v5121, %v5319
      %v5321 = vpop.f32.mrb[0].mxu0
      %5322 = vmatprep.mubr.bf16.mxu0 0
      %5323 = vmatmul.mubr.bf16.gmra.mrb[0].mxu0 %v5076
      %v5324 = vpop.f32.mrb[0].mxu0
      %v5325 = vadd.f32 %v5121, %v5324
      %v5326 = vpop.f32.mrb[0].mxu0
      %v5327 = vpop.f32.mrb[0].mxu0
      %v5328 = vadd.f32 %v5121, %v5327
      %v5329 = vpop.f32.mrb[0].mxu0
      %5330 = vmatprep.mubr.bf16.mxu0 0
      %5331 = vmatmul.mubr.bf16.gmra.mrb[0].mxu0 %v5077
      %v5332 = vpop.f32.mrb[0].mxu0
      %v5333 = vadd.f32 %v5121, %v5332
      %v5334 = vpop.f32.mrb[0].mxu0
      %v5335 = vpop.f32.mrb[0].mxu0
      %v5336 = vadd.f32 %v5121, %v5335
      %v5337 = vpop.f32.mrb[0].mxu0
      %5338 = vmatprep.mubr.bf16.mxu0 0
      %5339 = vmatmul.mubr.bf16.gmra.mrb[0].mxu0 %v5078
      %v5340 = vpop.f32.mrb[0].mxu0
      %v5341 = vadd.f32 %v5121, %v5340
      %v5342 = vpop.f32.mrb[0].mxu0
      %v5343 = vpop.f32.mrb[0].mxu0
      %v5344 = vadd.f32 %v5121, %v5343
      %v5345 = vpop.f32.mrb[0].mxu0
      %5346 = vmatprep.mubr.bf16.mxu0 0
      %5347 = vmatmul.mubr.bf16.gmra.mrb[0].mxu0 %v5079
      %v5348 = vpop.f32.mrb[0].mxu0
      %v5349 = vadd.f32 %v5121, %v5348
      %v5350 = vpop.f32.mrb[0].mxu0
      %v5351 = vpop.f32.mrb[0].mxu0
      %v5352 = vadd.f32 %v5121, %v5351
      %v5353 = vpop.f32.mrb[0].mxu0
      %5354 = vmatprep.mubr.bf16.mxu0 0
      %5355 = vmatmul.mubr.bf16.gmra.mrb[0].mxu0 %v5080
      %v5356 = vpop.f32.mrb[0].mxu0
      %v5357 = vadd.f32 %v5121, %v5356
      %v5358 = vpop.f32.mrb[0].mxu0
      %v5359 = vpop.f32.mrb[0].mxu0
      %v5360 = vadd.f32 %v5121, %v5359
      %v5361 = vpop.f32.mrb[0].mxu0
      %5362 = vmatprep.mubr.bf16.mxu0 0
      %5363 = vmatmul.mubr.bf16.gmra.mrb[0].mxu0 %v5081
      %v5364 = vpop.f32.mrb[0].mxu0
      %v5365 = vadd.f32 %v5121, %v5364
      %v5366 = vpop.f32.mrb[0].mxu0
      %v5367 = vpop.f32.mrb[0].mxu0
      %v5368 = vadd.f32 %v5121, %v5367
      %v5369 = vpop.f32.mrb[0].mxu0
      %5370 = vmatprep.mubr.bf16.mxu0 0
      %5371 = vmatmul.mubr.bf16.gmra.mrb[0].mxu0 %v5082
      %v5372 = vpop.f32.mrb[0].mxu0
      %v5373 = vadd.f32 %v5121, %v5372
      %v5374 = vpop.f32.mrb[0].mxu0
      %v5375 = vpop.f32.mrb[0].mxu0
      %v5376 = vadd.f32 %v5121, %v5375
      %v5377 = vpop.f32.mrb[0].mxu0
      %5378 = vmatprep.mubr.bf16.mxu0 0
      %5379 = vmatmul.mubr.bf16.gmra.mrb[0].mxu0 %v5083
      %v5380 = vpop.f32.mrb[0].mxu0
      %v5381 = vadd.f32 %v5121, %v5380
      %v5382 = vpop.f32.mrb[0].mxu0
      %v5383 = vpop.f32.mrb[0].mxu0
      %v5384 = vadd.f32 %v5121, %v5383
      %v5385 = vpop.f32.mrb[0].mxu0
      %5386 = vmatprep.mubr.bf16.mxu0 0
      %5387 = vmatmul.mubr.bf16.gmra.mrb[0].mxu0 %v5084
      %v5388 = vpop.f32.mrb[0].mxu0
      %v5389 = vadd.f32 %v5121, %v5388
      %v5390 = vpop.f32.mrb[0].mxu0
      %v5391 = vpop.f32.mrb[0].mxu0
      %v5392 = vadd.f32 %v5121, %v5391
      %v5393 = vpop.f32.mrb[0].mxu0
      %5394 = vmatprep.mubr.bf16.mxu0 0
      %5395 = vmatmul.mubr.bf16.gmra.mrb[0].mxu0 %v5085
      %v5396 = vpop.f32.mrb[0].mxu0
      %v5397 = vadd.f32 %v5121, %v5396
      %v5398 = vpop.f32.mrb[0].mxu0
      %v5399 = vpop.f32.mrb[0].mxu0
      %v5400 = vadd.f32 %v5121, %v5399
      %v5401 = vpop.f32.mrb[0].mxu0
      %5402 = vmatprep.mubr.bf16.mxu0 0
      %5403 = vmatmul.mubr.bf16.gmra.mrb[0].mxu0 %v5086
      %v5404 = vpop.f32.mrb[0].mxu0
      %v5405 = vadd.f32 %v5121, %v5404
      %v5406 = vpop.f32.mrb[0].mxu0
      %v5407 = vpop.f32.mrb[0].mxu0
      %v5408 = vadd.f32 %v5121, %v5407
      %v5409 = vpop.f32.mrb[0].mxu0
      %5410 = vmatprep.mubr.bf16.mxu0 0
      %5411 = vmatmul.mubr.bf16.gmra.mrb[0].mxu0 %v5087
      %v5412 = vpop.f32.mrb[0].mxu0
      %v5413 = vadd.f32 %v5121, %v5412
      %v5414 = vpop.f32.mrb[0].mxu0
      %v5415 = vpop.f32.mrb[0].mxu0
      %v5416 = vadd.f32 %v5121, %v5415
      %v5417 = vpop.f32.mrb[0].mxu0
      %5418 = vmatprep.mubr.bf16.mxu0 0
      %5419 = vmatmul.mubr.bf16.gmra.mrb[0].mxu0 %v5088
      %v5420 = vpop.f32.mrb[0].mxu0
      %v5421 = vadd.f32 %v5121, %v5420
      %v5422 = vpop.f32.mrb[0].mxu0
      %v5423 = vpop.f32.mrb[0].mxu0
      %v5424 = vadd.f32 %v5121, %v5423
      %v5425 = vpop.f32.mrb[0].mxu0
      %5426 = vmatprep.mubr.bf16.mxu0 0
      %5427 = vmatmul.mubr.bf16.gmra.mrb[0].mxu0 %v5089
      %v5428 = vpop.f32.mrb[0].mxu0
      %v5429 = vadd.f32 %v5121, %v5428
      %v5430 = vpop.f32.mrb[0].mxu0
      %v5431 = vpop.f32.mrb[0].mxu0
      %v5432 = vadd.f32 %v5121, %v5431
      %v5433 = vpop.f32.mrb[0].mxu0
      %5434 = vmatprep.mubr.bf16.mxu0 0
      %5435 = vmatmul.mubr.bf16.gmra.mrb[0].mxu0 %v5090
      %v5436 = vpop.f32.mrb[0].mxu0
      %v5437 = vadd.f32 %v5121, %v5436
      %v5438 = vpop.f32.mrb[0].mxu0
      %v5439 = vpop.f32.mrb[0].mxu0
      %v5440 = vadd.f32 %v5121, %v5439
      %v5441 = vpop.f32.mrb[0].mxu0
      %5442 = vmatprep.mubr.bf16.mxu0 0
      %5443 = vmatmul.mubr.bf16.gmra.mrb[0].mxu0 %v5091
      %v5444 = vpop.f32.mrb[0].mxu0
      %v5445 = vadd.f32 %v5121, %v5444
      %v5446 = vpop.f32.mrb[0].mxu0
      %v5447 = vpop.f32.mrb[0].mxu0
      %v5448 = vadd.f32 %v5121, %v5447
      %v5449 = vpop.f32.mrb[0].mxu0
      %5450 = vmatprep.mubr.bf16.mxu0 0
      %5451 = vmatmul.mubr.bf16.gmra.mrb[0].mxu0 %v5092
      %v5452 = vpop.f32.mrb[0].mxu0
      %v5453 = vadd.f32 %v5121, %v5452
      %v5454 = vpop.f32.mrb[0].mxu0
      %v5455 = vpop.f32.mrb[0].mxu0
      %v5456 = vadd.f32 %v5121, %v5455
      %v5457 = vpop.f32.mrb[0].mxu0
      %5458 = vmatprep.mubr.bf16.mxu0 0
      %5459 = vmatmul.mubr.bf16.gmra.mrb[0].mxu0 %v5093
      %v5460 = vpop.f32.mrb[0].mxu0
      %v5461 = vadd.f32 %v5121, %v5460
      %v5462 = vpop.f32.mrb[0].mxu0
      %v5463 = vpop.f32.mrb[0].mxu0
      %v5464 = vadd.f32 %v5121, %v5463
      %v5465 = vpop.f32.mrb[0].mxu0
      %5466 = vmatprep.mubr.bf16.mxu0 0
      %5467 = vmatmul.mubr.bf16.gmra.mrb[0].mxu0 %v5094
      %v5468 = vpop.f32.mrb[0].mxu0
      %v5469 = vadd.f32 %v5121, %v5468
      %v5470 = vpop.f32.mrb[0].mxu0
      %v5471 = vpop.f32.mrb[0].mxu0
      %v5472 = vadd.f32 %v5121, %v5471
      %v5473 = vpop.f32.mrb[0].mxu0
      %5474 = vmatprep.mubr.bf16.mxu0 0
      %5475 = vmatmul.mubr.bf16.gmra.mrb[0].mxu0 %v5095
      %v5476 = vpop.f32.mrb[0].mxu0
      %v5477 = vadd.f32 %v5121, %v5476
      %v5478 = vpop.f32.mrb[0].mxu0
      %v5479 = vpop.f32.mrb[0].mxu0
      %v5480 = vadd.f32 %v5121, %v5479
      %v5481 = vpop.f32.mrb[0].mxu0
      %5482 = vmatprep.mubr.bf16.mxu0 0
      %5483 = vmatmul.mubr.bf16.gmra.mrb[0].mxu0 %v5096
      %v5484 = vpop.f32.mrb[0].mxu0
      %v5485 = vadd.f32 %v5121, %v5484
      %v5486 = vpop.f32.mrb[0].mxu0
      %v5487 = vpop.f32.mrb[0].mxu0
      %v5488 = vadd.f32 %v5121, %v5487
      %v5489 = vpop.f32.mrb[0].mxu0
      %5490 = vmatprep.mubr.bf16.mxu0 0
      %5491 = vmatmul.mubr.bf16.gmra.mrb[0].mxu0 %v5097
      %v5492 = vpop.f32.mrb[0].mxu0
      %v5493 = vadd.f32 %v5121, %v5492
      %v5494 = vpop.f32.mrb[0].mxu0
      %v5495 = vpop.f32.mrb[0].mxu0
      %v5496 = vadd.f32 %v5121, %v5495
      %v5497 = vpop.f32.mrb[0].mxu0
      %5498 = vmatprep.mubr.bf16.mxu0 0
      %5499 = vmatmul.mubr.bf16.gmra.mrb[0].mxu0 %v5098
      %v5500 = vpop.f32.mrb[0].mxu0
      %v5501 = vadd.f32 %v5121, %v5500
      %v5502 = vpop.f32.mrb[0].mxu0
      %v5503 = vpop.f32.mrb[0].mxu0
      %v5504 = vadd.f32 %v5121, %v5503
      %v5505 = vpop.f32.mrb[0].mxu0
      %5506 = vmatprep.mubr.bf16.mxu0 0
      %5507 = vmatmul.mubr.bf16.gmra.mrb[0].mxu0 %v5099
      %v5508 = vpop.f32.mrb[0].mxu0
      %v5509 = vadd.f32 %v5121, %v5508
      %v5510 = vpop.f32.mrb[0].mxu0
      %v5511 = vpop.f32.mrb[0].mxu0
      %v5512 = vadd.f32 %v5121, %v5511
      %v5513 = vpop.f32.mrb[0].mxu0
      %5514 = vmatprep.mubr.bf16.mxu0 0
      %5515 = vmatmul.mubr.bf16.gmra.mrb[0].mxu0 %v5100
      %v5516 = vpop.f32.mrb[0].mxu0
      %v5517 = vadd.f32 %v5121, %v5516
      %v5518 = vpop.f32.mrb[0].mxu0
      %v5519 = vpop.f32.mrb[0].mxu0
      %v5520 = vadd.f32 %v5121, %v5519
      %v5521 = vpop.f32.mrb[0].mxu0
      %5522 = vdwg.mxu0
      %5523 = vadd.xlane.f32.xlu0 %v5205
      %v5524 = vpop.xlane.xlu0 %5523
      %5525 = vadd.xlane.f32.xlu0 %v5208
      %v5526 = vpop.xlane.xlu0 %5525
      %5527 = vadd.xlane.f32.xlu0 %v5213
      %v5528 = vpop.xlane.xlu0 %5527
      %5529 = vadd.xlane.f32.xlu0 %v5216
      %v5530 = vpop.xlane.xlu0 %5529
      %5531 = vadd.xlane.f32.xlu0 %v5221
      %v5532 = vpop.xlane.xlu0 %5531
      %5533 = vadd.xlane.f32.xlu0 %v5224
      %v5534 = vpop.xlane.xlu0 %5533
      %5535 = vadd.xlane.f32.xlu0 %v5229
      %v5536 = vpop.xlane.xlu0 %5535
      %5537 = vadd.xlane.f32.xlu0 %v5232
      %v5538 = vpop.xlane.xlu0 %5537
      %5539 = vadd.xlane.f32.xlu0 %v5237
      %v5540 = vpop.xlane.xlu0 %5539
      %5541 = vadd.xlane.f32.xlu0 %v5240
      %v5542 = vpop.xlane.xlu0 %5541
      %5543 = vadd.xlane.f32.xlu0 %v5245
      %v5544 = vpop.xlane.xlu0 %5543
      %5545 = vadd.xlane.f32.xlu0 %v5248
      %v5546 = vpop.xlane.xlu0 %5545
      %5547 = vadd.xlane.f32.xlu0 %v5253
      %v5548 = vpop.xlane.xlu0 %5547
      %5549 = vadd.xlane.f32.xlu0 %v5256
      %v5550 = vpop.xlane.xlu0 %5549
      %5551 = vadd.xlane.f32.xlu0 %v5261
      %v5552 = vpop.xlane.xlu0 %5551
      %5553 = vadd.xlane.f32.xlu0 %v5264
      %v5554 = vpop.xlane.xlu0 %5553
      %5555 = vadd.xlane.f32.xlu0 %v5269
      %v5556 = vpop.xlane.xlu0 %5555
      %5557 = vadd.xlane.f32.xlu0 %v5272
      %v5558 = vpop.xlane.xlu0 %5557
      %5559 = vadd.xlane.f32.xlu0 %v5277
      %v5560 = vpop.xlane.xlu0 %5559
      %5561 = vadd.xlane.f32.xlu0 %v5280
      %v5562 = vpop.xlane.xlu0 %5561
      %5563 = vadd.xlane.f32.xlu0 %v5285
      %v5564 = vpop.xlane.xlu0 %5563
      %5565 = vadd.xlane.f32.xlu0 %v5288
      %v5566 = vpop.xlane.xlu0 %5565
      %5567 = vadd.xlane.f32.xlu0 %v5293
      %v5568 = vpop.xlane.xlu0 %5567
      %5569 = vadd.xlane.f32.xlu0 %v5296
      %v5570 = vpop.xlane.xlu0 %5569
      %5571 = vadd.xlane.f32.xlu0 %v5301
      %v5572 = vpop.xlane.xlu0 %5571
      %5573 = vadd.xlane.f32.xlu0 %v5304
      %v5574 = vpop.xlane.xlu0 %5573
      %5575 = vadd.xlane.f32.xlu0 %v5309
      %v5576 = vpop.xlane.xlu0 %5575
      %5577 = vadd.xlane.f32.xlu0 %v5312
      %v5578 = vpop.xlane.xlu0 %5577
      %5579 = vadd.xlane.f32.xlu0 %v5317
      %v5580 = vpop.xlane.xlu0 %5579
      %5581 = vadd.xlane.f32.xlu0 %v5320
      %v5582 = vpop.xlane.xlu0 %5581
      %5583 = vadd.xlane.f32.xlu0 %v5325
      %v5584 = vpop.xlane.xlu0 %5583
      %5585 = vadd.xlane.f32.xlu0 %v5328
      %v5586 = vpop.xlane.xlu0 %5585
      %5587 = vadd.xlane.f32.xlu0 %v5333
      %v5588 = vpop.xlane.xlu0 %5587
      %5589 = vadd.xlane.f32.xlu0 %v5336
      %v5590 = vpop.xlane.xlu0 %5589
      %5591 = vadd.xlane.f32.xlu0 %v5341
      %v5592 = vpop.xlane.xlu0 %5591
      %5593 = vadd.xlane.f32.xlu0 %v5344
      %v5594 = vpop.xlane.xlu0 %5593
      %5595 = vadd.xlane.f32.xlu0 %v5349
      %v5596 = vpop.xlane.xlu0 %5595
      %5597 = vadd.xlane.f32.xlu0 %v5352
      %v5598 = vpop.xlane.xlu0 %5597
      %5599 = vadd.xlane.f32.xlu0 %v5357
      %v5600 = vpop.xlane.xlu0 %5599
      %5601 = vadd.xlane.f32.xlu0 %v5360
      %v5602 = vpop.xlane.xlu0 %5601
      %5603 = vadd.xlane.f32.xlu0 %v5365
      %v5604 = vpop.xlane.xlu0 %5603
      %5605 = vadd.xlane.f32.xlu0 %v5368
      %v5606 = vpop.xlane.xlu0 %5605
      %5607 = vadd.xlane.f32.xlu0 %v5373
      %v5608 = vpop.xlane.xlu0 %5607
      %5609 = vadd.xlane.f32.xlu0 %v5376
      %v5610 = vpop.xlane.xlu0 %5609
      %5611 = vadd.xlane.f32.xlu0 %v5381
      %v5612 = vpop.xlane.xlu0 %5611
      %5613 = vadd.xlane.f32.xlu0 %v5384
      %v5614 = vpop.xlane.xlu0 %5613
      %5615 = vadd.xlane.f32.xlu0 %v5389
      %v5616 = vpop.xlane.xlu0 %5615
      %5617 = vadd.xlane.f32.xlu0 %v5392
      %v5618 = vpop.xlane.xlu0 %5617
      %5619 = vadd.xlane.f32.xlu0 %v5397
      %v5620 = vpop.xlane.xlu0 %5619
      %5621 = vadd.xlane.f32.xlu0 %v5400
      %v5622 = vpop.xlane.xlu0 %5621
      %5623 = vadd.xlane.f32.xlu0 %v5405
      %v5624 = vpop.xlane.xlu0 %5623
      %5625 = vadd.xlane.f32.xlu0 %v5408
      %v5626 = vpop.xlane.xlu0 %5625
      %5627 = vadd.xlane.f32.xlu0 %v5413
      %v5628 = vpop.xlane.xlu0 %5627
      %5629 = vadd.xlane.f32.xlu0 %v5416
      %v5630 = vpop.xlane.xlu0 %5629
      %5631 = vadd.xlane.f32.xlu0 %v5421
      %v5632 = vpop.xlane.xlu0 %5631
      %5633 = vadd.xlane.f32.xlu0 %v5424
      %v5634 = vpop.xlane.xlu0 %5633
      %5635 = vadd.xlane.f32.xlu0 %v5429
      %v5636 = vpop.xlane.xlu0 %5635
      %5637 = vadd.xlane.f32.xlu0 %v5432
      %v5638 = vpop.xlane.xlu0 %5637
      %5639 = vadd.xlane.f32.xlu0 %v5437
      %v5640 = vpop.xlane.xlu0 %5639
      %5641 = vadd.xlane.f32.xlu0 %v5440
      %v5642 = vpop.xlane.xlu0 %5641
      %5643 = vadd.xlane.f32.xlu0 %v5445
      %v5644 = vpop.xlane.xlu0 %5643
      %5645 = vadd.xlane.f32.xlu0 %v5448
      %v5646 = vpop.xlane.xlu0 %5645
      %5647 = vadd.xlane.f32.xlu0 %v5453
      %v5648 = vpop.xlane.xlu0 %5647
      %5649 = vadd.xlane.f32.xlu0 %v5456
      %v5650 = vpop.xlane.xlu0 %5649
      %5651 = vadd.xlane.f32.xlu0 %v5461
      %v5652 = vpop.xlane.xlu0 %5651
      %5653 = vadd.xlane.f32.xlu0 %v5464
      %v5654 = vpop.xlane.xlu0 %5653
      %5655 = vadd.xlane.f32.xlu0 %v5469
      %v5656 = vpop.xlane.xlu0 %5655
      %5657 = vadd.xlane.f32.xlu0 %v5472
      %v5658 = vpop.xlane.xlu0 %5657
      %5659 = vadd.xlane.f32.xlu0 %v5477
      %v5660 = vpop.xlane.xlu0 %5659
      %5661 = vadd.xlane.f32.xlu0 %v5480
      %v5662 = vpop.xlane.xlu0 %5661
      %5663 = vadd.xlane.f32.xlu0 %v5485
      %v5664 = vpop.xlane.xlu0 %5663
      %5665 = vadd.xlane.f32.xlu0 %v5488
      %v5666 = vpop.xlane.xlu0 %5665
      %5667 = vadd.xlane.f32.xlu0 %v5493
      %v5668 = vpop.xlane.xlu0 %5667
      %5669 = vadd.xlane.f32.xlu0 %v5496
      %v5670 = vpop.xlane.xlu0 %5669
      %5671 = vadd.xlane.f32.xlu0 %v5501
      %v5672 = vpop.xlane.xlu0 %5671
      %5673 = vadd.xlane.f32.xlu0 %v5504
      %v5674 = vpop.xlane.xlu0 %5673
      %5675 = vadd.xlane.f32.xlu0 %v5509
      %v5676 = vpop.xlane.xlu0 %5675
      %5677 = vadd.xlane.f32.xlu0 %v5512
      %v5678 = vpop.xlane.xlu0 %5677
      %5679 = vadd.xlane.f32.xlu0 %v5517
      %v5680 = vpop.xlane.xlu0 %5679
      %5681 = vadd.xlane.f32.xlu0 %v5520
      %v5682 = vpop.xlane.xlu0 %5681
      %v5683 = vmul.f32 %v5524, %v1150
      %v5684 = vmul.f32 %v5526, %v1150
      %v5685 = vmul.f32 %v5528, %v1150
      %v5686 = vmul.f32 %v5530, %v1150
      %v5687 = vmul.f32 %v5532, %v1150
      %v5688 = vmul.f32 %v5534, %v1150
      %v5689 = vmul.f32 %v5536, %v1150
      %v5690 = vmul.f32 %v5538, %v1150
      %v5691 = vmul.f32 %v5540, %v1150
      %v5692 = vmul.f32 %v5542, %v1150
      %v5693 = vmul.f32 %v5544, %v1150
      %v5694 = vmul.f32 %v5546, %v1150
      %v5695 = vmul.f32 %v5548, %v1150
      %v5696 = vmul.f32 %v5550, %v1150
      %v5697 = vmul.f32 %v5552, %v1150
      %v5698 = vmul.f32 %v5554, %v1150
      %v5699 = vmul.f32 %v5556, %v1150
      %v5700 = vmul.f32 %v5558, %v1150
      %v5701 = vmul.f32 %v5560, %v1150
      %v5702 = vmul.f32 %v5562, %v1150
      %v5703 = vmul.f32 %v5564, %v1150
      %v5704 = vmul.f32 %v5566, %v1150
      %v5705 = vmul.f32 %v5568, %v1150
      %v5706 = vmul.f32 %v5570, %v1150
      %v5707 = vmul.f32 %v5572, %v1150
      %v5708 = vmul.f32 %v5574, %v1150
      %v5709 = vmul.f32 %v5576, %v1150
      %v5710 = vmul.f32 %v5578, %v1150
      %v5711 = vmul.f32 %v5580, %v1150
      %v5712 = vmul.f32 %v5582, %v1150
      %v5713 = vmul.f32 %v5584, %v1150
      %v5714 = vmul.f32 %v5586, %v1150
      %v5715 = vmul.f32 %v5588, %v1150
      %v5716 = vmul.f32 %v5590, %v1150
      %v5717 = vmul.f32 %v5592, %v1150
      %v5718 = vmul.f32 %v5594, %v1150
      %v5719 = vmul.f32 %v5596, %v1150
      %v5720 = vmul.f32 %v5598, %v1150
      %v5721 = vmul.f32 %v5600, %v1150
      %v5722 = vmul.f32 %v5602, %v1150
      %v5723 = vmul.f32 %v5604, %v1150
      %v5724 = vmul.f32 %v5606, %v1150
      %v5725 = vmul.f32 %v5608, %v1150
      %v5726 = vmul.f32 %v5610, %v1150
      %v5727 = vmul.f32 %v5612, %v1150
      %v5728 = vmul.f32 %v5614, %v1150
      %v5729 = vmul.f32 %v5616, %v1150
      %v5730 = vmul.f32 %v5618, %v1150
      %v5731 = vmul.f32 %v5620, %v1150
      %v5732 = vmul.f32 %v5622, %v1150
      %v5733 = vmul.f32 %v5624, %v1150
      %v5734 = vmul.f32 %v5626, %v1150
      %v5735 = vmul.f32 %v5628, %v1150
      %v5736 = vmul.f32 %v5630, %v1150
      %v5737 = vmul.f32 %v5632, %v1150
      %v5738 = vmul.f32 %v5634, %v1150
      %v5739 = vmul.f32 %v5636, %v1150
      %v5740 = vmul.f32 %v5638, %v1150
      %v5741 = vmul.f32 %v5640, %v1150
      %v5742 = vmul.f32 %v5642, %v1150
      %v5743 = vmul.f32 %v5644, %v1150
      %v5744 = vmul.f32 %v5646, %v1150
      %v5745 = vmul.f32 %v5648, %v1150
      %v5746 = vmul.f32 %v5650, %v1150
      %v5747 = vmul.f32 %v5652, %v1150
      %v5748 = vmul.f32 %v5654, %v1150
      %v5749 = vmul.f32 %v5656, %v1150
      %v5750 = vmul.f32 %v5658, %v1150
      %v5751 = vmul.f32 %v5660, %v1150
      %v5752 = vmul.f32 %v5662, %v1150
      %v5753 = vmul.f32 %v5664, %v1150
      %v5754 = vmul.f32 %v5666, %v1150
      %v5755 = vmul.f32 %v5668, %v1150
      %v5756 = vmul.f32 %v5670, %v1150
      %v5757 = vmul.f32 %v5672, %v1150
      %v5758 = vmul.f32 %v5674, %v1150
      %v5759 = vmul.f32 %v5676, %v1150
      %v5760 = vmul.f32 %v5678, %v1150
      %v5761 = vmul.f32 %v5680, %v1150
      %v5762 = vmul.f32 %v5682, %v1150
      %v5763 = vmul.f32 %v5205, %v5205
      %v5764 = vmul.f32 %v5208, %v5208
      %v5765 = vmul.f32 %v5213, %v5213
      %v5766 = vmul.f32 %v5216, %v5216
      %v5767 = vmul.f32 %v5221, %v5221
      %v5768 = vmul.f32 %v5224, %v5224
      %v5769 = vmul.f32 %v5229, %v5229
      %v5770 = vmul.f32 %v5232, %v5232
      %v5771 = vmul.f32 %v5237, %v5237
      %v5772 = vmul.f32 %v5240, %v5240
      %v5773 = vmul.f32 %v5245, %v5245
      %v5774 = vmul.f32 %v5248, %v5248
      %v5775 = vmul.f32 %v5253, %v5253
      %v5776 = vmul.f32 %v5256, %v5256
      %v5777 = vmul.f32 %v5261, %v5261
      %v5778 = vmul.f32 %v5264, %v5264
      %v5779 = vmul.f32 %v5269, %v5269
      %v5780 = vmul.f32 %v5272, %v5272
      %v5781 = vmul.f32 %v5277, %v5277
      %v5782 = vmul.f32 %v5280, %v5280
      %v5783 = vmul.f32 %v5285, %v5285
      %v5784 = vmul.f32 %v5288, %v5288
      %v5785 = vmul.f32 %v5293, %v5293
      %v5786 = vmul.f32 %v5296, %v5296
      %v5787 = vmul.f32 %v5301, %v5301
      %v5788 = vmul.f32 %v5304, %v5304
      %v5789 = vmul.f32 %v5309, %v5309
      %v5790 = vmul.f32 %v5312, %v5312
      %v5791 = vmul.f32 %v5317, %v5317
      %v5792 = vmul.f32 %v5320, %v5320
      %v5793 = vmul.f32 %v5325, %v5325
      %v5794 = vmul.f32 %v5328, %v5328
      %v5795 = vmul.f32 %v5333, %v5333
      %v5796 = vmul.f32 %v5336, %v5336
      %v5797 = vmul.f32 %v5341, %v5341
      %v5798 = vmul.f32 %v5344, %v5344
      %v5799 = vmul.f32 %v5349, %v5349
      %v5800 = vmul.f32 %v5352, %v5352
      %v5801 = vmul.f32 %v5357, %v5357
      %v5802 = vmul.f32 %v5360, %v5360
      %v5803 = vmul.f32 %v5365, %v5365
      %v5804 = vmul.f32 %v5368, %v5368
      %v5805 = vmul.f32 %v5373, %v5373
      %v5806 = vmul.f32 %v5376, %v5376
      %v5807 = vmul.f32 %v5381, %v5381
      %v5808 = vmul.f32 %v5384, %v5384
      %v5809 = vmul.f32 %v5389, %v5389
      %v5810 = vmul.f32 %v5392, %v5392
      %v5811 = vmul.f32 %v5397, %v5397
      %v5812 = vmul.f32 %v5400, %v5400
      %v5813 = vmul.f32 %v5405, %v5405
      %v5814 = vmul.f32 %v5408, %v5408
      %v5815 = vmul.f32 %v5413, %v5413
      %v5816 = vmul.f32 %v5416, %v5416
      %v5817 = vmul.f32 %v5421, %v5421
      %v5818 = vmul.f32 %v5424, %v5424
      %v5819 = vmul.f32 %v5429, %v5429
      %v5820 = vmul.f32 %v5432, %v5432
      %v5821 = vmul.f32 %v5437, %v5437
      %v5822 = vmul.f32 %v5440, %v5440
      %v5823 = vmul.f32 %v5445, %v5445
      %v5824 = vmul.f32 %v5448, %v5448
      %v5825 = vmul.f32 %v5453, %v5453
      %v5826 = vmul.f32 %v5456, %v5456
      %v5827 = vmul.f32 %v5461, %v5461
      %v5828 = vmul.f32 %v5464, %v5464
      %v5829 = vmul.f32 %v5469, %v5469
      %v5830 = vmul.f32 %v5472, %v5472
      %v5831 = vmul.f32 %v5477, %v5477
      %v5832 = vmul.f32 %v5480, %v5480
      %v5833 = vmul.f32 %v5485, %v5485
      %v5834 = vmul.f32 %v5488, %v5488
      %v5835 = vmul.f32 %v5493, %v5493
      %v5836 = vmul.f32 %v5496, %v5496
      %v5837 = vmul.f32 %v5501, %v5501
      %v5838 = vmul.f32 %v5504, %v5504
      %v5839 = vmul.f32 %v5509, %v5509
      %v5840 = vmul.f32 %v5512, %v5512
      %v5841 = vmul.f32 %v5517, %v5517
      %v5842 = vmul.f32 %v5520, %v5520
      %5843 = vadd.xlane.f32.xlu0 %v5763
      %v5844 = vpop.xlane.xlu0 %5843
      %5845 = vadd.xlane.f32.xlu0 %v5764
      %v5846 = vpop.xlane.xlu0 %5845
      %5847 = vadd.xlane.f32.xlu0 %v5765
      %v5848 = vpop.xlane.xlu0 %5847
      %5849 = vadd.xlane.f32.xlu0 %v5766
      %v5850 = vpop.xlane.xlu0 %5849
      %5851 = vadd.xlane.f32.xlu0 %v5767
      %v5852 = vpop.xlane.xlu0 %5851
      %5853 = vadd.xlane.f32.xlu0 %v5768
      %v5854 = vpop.xlane.xlu0 %5853
      %5855 = vadd.xlane.f32.xlu0 %v5769
      %v5856 = vpop.xlane.xlu0 %5855
      %5857 = vadd.xlane.f32.xlu0 %v5770
      %v5858 = vpop.xlane.xlu0 %5857
      %5859 = vadd.xlane.f32.xlu0 %v5771
      %v5860 = vpop.xlane.xlu0 %5859
      %5861 = vadd.xlane.f32.xlu0 %v5772
      %v5862 = vpop.xlane.xlu0 %5861
      %5863 = vadd.xlane.f32.xlu0 %v5773
      %v5864 = vpop.xlane.xlu0 %5863
      %5865 = vadd.xlane.f32.xlu0 %v5774
      %v5866 = vpop.xlane.xlu0 %5865
      %5867 = vadd.xlane.f32.xlu0 %v5775
      %v5868 = vpop.xlane.xlu0 %5867
      %5869 = vadd.xlane.f32.xlu0 %v5776
      %v5870 = vpop.xlane.xlu0 %5869
      %5871 = vadd.xlane.f32.xlu0 %v5777
      %v5872 = vpop.xlane.xlu0 %5871
      %5873 = vadd.xlane.f32.xlu0 %v5778
      %v5874 = vpop.xlane.xlu0 %5873
      %5875 = vadd.xlane.f32.xlu0 %v5779
      %v5876 = vpop.xlane.xlu0 %5875
      %5877 = vadd.xlane.f32.xlu0 %v5780
      %v5878 = vpop.xlane.xlu0 %5877
      %5879 = vadd.xlane.f32.xlu0 %v5781
      %v5880 = vpop.xlane.xlu0 %5879
      %5881 = vadd.xlane.f32.xlu0 %v5782
      %v5882 = vpop.xlane.xlu0 %5881
      %5883 = vadd.xlane.f32.xlu0 %v5783
      %v5884 = vpop.xlane.xlu0 %5883
      %5885 = vadd.xlane.f32.xlu0 %v5784
      %v5886 = vpop.xlane.xlu0 %5885
      %5887 = vadd.xlane.f32.xlu0 %v5785
      %v5888 = vpop.xlane.xlu0 %5887
      %5889 = vadd.xlane.f32.xlu0 %v5786
      %v5890 = vpop.xlane.xlu0 %5889
      %5891 = vadd.xlane.f32.xlu0 %v5787
      %v5892 = vpop.xlane.xlu0 %5891
      %5893 = vadd.xlane.f32.xlu0 %v5788
      %v5894 = vpop.xlane.xlu0 %5893
      %5895 = vadd.xlane.f32.xlu0 %v5789
      %v5896 = vpop.xlane.xlu0 %5895
      %5897 = vadd.xlane.f32.xlu0 %v5790
      %v5898 = vpop.xlane.xlu0 %5897
      %5899 = vadd.xlane.f32.xlu0 %v5791
      %v5900 = vpop.xlane.xlu0 %5899
      %5901 = vadd.xlane.f32.xlu0 %v5792
      %v5902 = vpop.xlane.xlu0 %5901
      %5903 = vadd.xlane.f32.xlu0 %v5793
      %v5904 = vpop.xlane.xlu0 %5903
      %5905 = vadd.xlane.f32.xlu0 %v5794
      %v5906 = vpop.xlane.xlu0 %5905
      %5907 = vadd.xlane.f32.xlu0 %v5795
      %v5908 = vpop.xlane.xlu0 %5907
      %5909 = vadd.xlane.f32.xlu0 %v5796
      %v5910 = vpop.xlane.xlu0 %5909
      %5911 = vadd.xlane.f32.xlu0 %v5797
      %v5912 = vpop.xlane.xlu0 %5911
      %5913 = vadd.xlane.f32.xlu0 %v5798
      %v5914 = vpop.xlane.xlu0 %5913
      %5915 = vadd.xlane.f32.xlu0 %v5799
      %v5916 = vpop.xlane.xlu0 %5915
      %5917 = vadd.xlane.f32.xlu0 %v5800
      %v5918 = vpop.xlane.xlu0 %5917
      %5919 = vadd.xlane.f32.xlu0 %v5801
      %v5920 = vpop.xlane.xlu0 %5919
      %5921 = vadd.xlane.f32.xlu0 %v5802
      %v5922 = vpop.xlane.xlu0 %5921
      %5923 = vadd.xlane.f32.xlu0 %v5803
      %v5924 = vpop.xlane.xlu0 %5923
      %5925 = vadd.xlane.f32.xlu0 %v5804
      %v5926 = vpop.xlane.xlu0 %5925
      %5927 = vadd.xlane.f32.xlu0 %v5805
      %v5928 = vpop.xlane.xlu0 %5927
      %5929 = vadd.xlane.f32.xlu0 %v5806
      %v5930 = vpop.xlane.xlu0 %5929
      %5931 = vadd.xlane.f32.xlu0 %v5807
      %v5932 = vpop.xlane.xlu0 %5931
      %5933 = vadd.xlane.f32.xlu0 %v5808
      %v5934 = vpop.xlane.xlu0 %5933
      %5935 = vadd.xlane.f32.xlu0 %v5809
      %v5936 = vpop.xlane.xlu0 %5935
      %5937 = vadd.xlane.f32.xlu0 %v5810
      %v5938 = vpop.xlane.xlu0 %5937
      %5939 = vadd.xlane.f32.xlu0 %v5811
      %v5940 = vpop.xlane.xlu0 %5939
      %5941 = vadd.xlane.f32.xlu0 %v5812
      %v5942 = vpop.xlane.xlu0 %5941
      %5943 = vadd.xlane.f32.xlu0 %v5813
      %v5944 = vpop.xlane.xlu0 %5943
      %5945 = vadd.xlane.f32.xlu0 %v5814
      %v5946 = vpop.xlane.xlu0 %5945
      %5947 = vadd.xlane.f32.xlu0 %v5815
      %v5948 = vpop.xlane.xlu0 %5947
      %5949 = vadd.xlane.f32.xlu0 %v5816
      %v5950 = vpop.xlane.xlu0 %5949
      %5951 = vadd.xlane.f32.xlu0 %v5817
      %v5952 = vpop.xlane.xlu0 %5951
      %5953 = vadd.xlane.f32.xlu0 %v5818
      %v5954 = vpop.xlane.xlu0 %5953
      %5955 = vadd.xlane.f32.xlu0 %v5819
      %v5956 = vpop.xlane.xlu0 %5955
      %5957 = vadd.xlane.f32.xlu0 %v5820
      %v5958 = vpop.xlane.xlu0 %5957
      %5959 = vadd.xlane.f32.xlu0 %v5821
      %v5960 = vpop.xlane.xlu0 %5959
      %5961 = vadd.xlane.f32.xlu0 %v5822
      %v5962 = vpop.xlane.xlu0 %5961
      %5963 = vadd.xlane.f32.xlu0 %v5823
      %v5964 = vpop.xlane.xlu0 %5963
      %5965 = vadd.xlane.f32.xlu0 %v5824
      %v5966 = vpop.xlane.xlu0 %5965
      %5967 = vadd.xlane.f32.xlu0 %v5825
      %v5968 = vpop.xlane.xlu0 %5967
      %5969 = vadd.xlane.f32.xlu0 %v5826
      %v5970 = vpop.xlane.xlu0 %5969
      %5971 = vadd.xlane.f32.xlu0 %v5827
      %v5972 = vpop.xlane.xlu0 %5971
      %5973 = vadd.xlane.f32.xlu0 %v5828
      %v5974 = vpop.xlane.xlu0 %5973
      %5975 = vadd.xlane.f32.xlu0 %v5829
      %v5976 = vpop.xlane.xlu0 %5975
      %5977 = vadd.xlane.f32.xlu0 %v5830
      %v5978 = vpop.xlane.xlu0 %5977
      %5979 = vadd.xlane.f32.xlu0 %v5831
      %v5980 = vpop.xlane.xlu0 %5979
      %5981 = vadd.xlane.f32.xlu0 %v5832
      %v5982 = vpop.xlane.xlu0 %5981
      %5983 = vadd.xlane.f32.xlu0 %v5833
      %v5984 = vpop.xlane.xlu0 %5983
      %5985 = vadd.xlane.f32.xlu0 %v5834
      %v5986 = vpop.xlane.xlu0 %5985
      %5987 = vadd.xlane.f32.xlu0 %v5835
      %v5988 = vpop.xlane.xlu0 %5987
      %5989 = vadd.xlane.f32.xlu0 %v5836
      %v5990 = vpop.xlane.xlu0 %5989
      %5991 = vadd.xlane.f32.xlu0 %v5837
      %v5992 = vpop.xlane.xlu0 %5991
      %5993 = vadd.xlane.f32.xlu0 %v5838
      %v5994 = vpop.xlane.xlu0 %5993
      %5995 = vadd.xlane.f32.xlu0 %v5839
      %v5996 = vpop.xlane.xlu0 %5995
      %5997 = vadd.xlane.f32.xlu0 %v5840
      %v5998 = vpop.xlane.xlu0 %5997
      %5999 = vadd.xlane.f32.xlu0 %v5841
      %v6000 = vpop.xlane.xlu0 %5999
      %6001 = vadd.xlane.f32.xlu0 %v5842
      %v6002 = vpop.xlane.xlu0 %6001
      %v6003 = vmul.f32 %v5844, %v1150
      %v6004 = vmul.f32 %v5846, %v1150
      %v6005 = vmul.f32 %v5848, %v1150
      %v6006 = vmul.f32 %v5850, %v1150
      %v6007 = vmul.f32 %v5852, %v1150
      %v6008 = vmul.f32 %v5854, %v1150
      %v6009 = vmul.f32 %v5856, %v1150
      %v6010 = vmul.f32 %v5858, %v1150
      %v6011 = vmul.f32 %v5860, %v1150
      %v6012 = vmul.f32 %v5862, %v1150
      %v6013 = vmul.f32 %v5864, %v1150
      %v6014 = vmul.f32 %v5866, %v1150
      %v6015 = vmul.f32 %v5868, %v1150
      %v6016 = vmul.f32 %v5870, %v1150
      %v6017 = vmul.f32 %v5872, %v1150
      %v6018 = vmul.f32 %v5874, %v1150
      %v6019 = vmul.f32 %v5876, %v1150
      %v6020 = vmul.f32 %v5878, %v1150
      %v6021 = vmul.f32 %v5880, %v1150
      %v6022 = vmul.f32 %v5882, %v1150
      %v6023 = vmul.f32 %v5884, %v1150
      %v6024 = vmul.f32 %v5886, %v1150
      %v6025 = vmul.f32 %v5888, %v1150
      %v6026 = vmul.f32 %v5890, %v1150
      %v6027 = vmul.f32 %v5892, %v1150
      %v6028 = vmul.f32 %v5894, %v1150
      %v6029 = vmul.f32 %v5896, %v1150
      %v6030 = vmul.f32 %v5898, %v1150
      %v6031 = vmul.f32 %v5900, %v1150
      %v6032 = vmul.f32 %v5902, %v1150
      %v6033 = vmul.f32 %v5904, %v1150
      %v6034 = vmul.f32 %v5906, %v1150
      %v6035 = vmul.f32 %v5908, %v1150
      %v6036 = vmul.f32 %v5910, %v1150
      %v6037 = vmul.f32 %v5912, %v1150
      %v6038 = vmul.f32 %v5914, %v1150
      %v6039 = vmul.f32 %v5916, %v1150
      %v6040 = vmul.f32 %v5918, %v1150
      %v6041 = vmul.f32 %v5920, %v1150
      %v6042 = vmul.f32 %v5922, %v1150
      %v6043 = vmul.f32 %v5924, %v1150
      %v6044 = vmul.f32 %v5926, %v1150
      %v6045 = vmul.f32 %v5928, %v1150
      %v6046 = vmul.f32 %v5930, %v1150
      %v6047 = vmul.f32 %v5932, %v1150
      %v6048 = vmul.f32 %v5934, %v1150
      %v6049 = vmul.f32 %v5936, %v1150
      %v6050 = vmul.f32 %v5938, %v1150
      %v6051 = vmul.f32 %v5940, %v1150
      %v6052 = vmul.f32 %v5942, %v1150
      %v6053 = vmul.f32 %v5944, %v1150
      %v6054 = vmul.f32 %v5946, %v1150
      %v6055 = vmul.f32 %v5948, %v1150
      %v6056 = vmul.f32 %v5950, %v1150
      %v6057 = vmul.f32 %v5952, %v1150
      %v6058 = vmul.f32 %v5954, %v1150
      %v6059 = vmul.f32 %v5956, %v1150
      %v6060 = vmul.f32 %v5958, %v1150
      %v6061 = vmul.f32 %v5960, %v1150
      %v6062 = vmul.f32 %v5962, %v1150
      %v6063 = vmul.f32 %v5964, %v1150
      %v6064 = vmul.f32 %v5966, %v1150
      %v6065 = vmul.f32 %v5968, %v1150
      %v6066 = vmul.f32 %v5970, %v1150
      %v6067 = vmul.f32 %v5972, %v1150
      %v6068 = vmul.f32 %v5974, %v1150
      %v6069 = vmul.f32 %v5976, %v1150
      %v6070 = vmul.f32 %v5978, %v1150
      %v6071 = vmul.f32 %v5980, %v1150
      %v6072 = vmul.f32 %v5982, %v1150
      %v6073 = vmul.f32 %v5984, %v1150
      %v6074 = vmul.f32 %v5986, %v1150
      %v6075 = vmul.f32 %v5988, %v1150
      %v6076 = vmul.f32 %v5990, %v1150
      %v6077 = vmul.f32 %v5992, %v1150
      %v6078 = vmul.f32 %v5994, %v1150
      %v6079 = vmul.f32 %v5996, %v1150
      %v6080 = vmul.f32 %v5998, %v1150
      %v6081 = vmul.f32 %v6000, %v1150
      %v6082 = vmul.f32 %v6002, %v1150
      %v6083 = vmul.f32 %v5683, %v5683
      %v6084 = vmul.f32 %v5684, %v5684
      %v6085 = vmul.f32 %v5685, %v5685
      %v6086 = vmul.f32 %v5686, %v5686
      %v6087 = vmul.f32 %v5687, %v5687
      %v6088 = vmul.f32 %v5688, %v5688
      %v6089 = vmul.f32 %v5689, %v5689
      %v6090 = vmul.f32 %v5690, %v5690
      %v6091 = vmul.f32 %v5691, %v5691
      %v6092 = vmul.f32 %v5692, %v5692
      %v6093 = vmul.f32 %v5693, %v5693
      %v6094 = vmul.f32 %v5694, %v5694
      %v6095 = vmul.f32 %v5695, %v5695
      %v6096 = vmul.f32 %v5696, %v5696
      %v6097 = vmul.f32 %v5697, %v5697
      %v6098 = vmul.f32 %v5698, %v5698
      %v6099 = vmul.f32 %v5699, %v5699
      %v6100 = vmul.f32 %v5700, %v5700
      %v6101 = vmul.f32 %v5701, %v5701
      %v6102 = vmul.f32 %v5702, %v5702
      %v6103 = vmul.f32 %v5703, %v5703
      %v6104 = vmul.f32 %v5704, %v5704
      %v6105 = vmul.f32 %v5705, %v5705
      %v6106 = vmul.f32 %v5706, %v5706
      %v6107 = vmul.f32 %v5707, %v5707
      %v6108 = vmul.f32 %v5708, %v5708
      %v6109 = vmul.f32 %v5709, %v5709
      %v6110 = vmul.f32 %v5710, %v5710
      %v6111 = vmul.f32 %v5711, %v5711
      %v6112 = vmul.f32 %v5712, %v5712
      %v6113 = vmul.f32 %v5713, %v5713
      %v6114 = vmul.f32 %v5714, %v5714
      %v6115 = vmul.f32 %v5715, %v5715
      %v6116 = vmul.f32 %v5716, %v5716
      %v6117 = vmul.f32 %v5717, %v5717
      %v6118 = vmul.f32 %v5718, %v5718
      %v6119 = vmul.f32 %v5719, %v5719
      %v6120 = vmul.f32 %v5720, %v5720
      %v6121 = vmul.f32 %v5721, %v5721
      %v6122 = vmul.f32 %v5722, %v5722
      %v6123 = vmul.f32 %v5723, %v5723
      %v6124 = vmul.f32 %v5724, %v5724
      %v6125 = vmul.f32 %v5725, %v5725
      %v6126 = vmul.f32 %v5726, %v5726
      %v6127 = vmul.f32 %v5727, %v5727
      %v6128 = vmul.f32 %v5728, %v5728
      %v6129 = vmul.f32 %v5729, %v5729
      %v6130 = vmul.f32 %v5730, %v5730
      %v6131 = vmul.f32 %v5731, %v5731
      %v6132 = vmul.f32 %v5732, %v5732
      %v6133 = vmul.f32 %v5733, %v5733
      %v6134 = vmul.f32 %v5734, %v5734
      %v6135 = vmul.f32 %v5735, %v5735
      %v6136 = vmul.f32 %v5736, %v5736
      %v6137 = vmul.f32 %v5737, %v5737
      %v6138 = vmul.f32 %v5738, %v5738
      %v6139 = vmul.f32 %v5739, %v5739
      %v6140 = vmul.f32 %v5740, %v5740
      %v6141 = vmul.f32 %v5741, %v5741
      %v6142 = vmul.f32 %v5742, %v5742
      %v6143 = vmul.f32 %v5743, %v5743
      %v6144 = vmul.f32 %v5744, %v5744
      %v6145 = vmul.f32 %v5745, %v5745
      %v6146 = vmul.f32 %v5746, %v5746
      %v6147 = vmul.f32 %v5747, %v5747
      %v6148 = vmul.f32 %v5748, %v5748
      %v6149 = vmul.f32 %v5749, %v5749
      %v6150 = vmul.f32 %v5750, %v5750
      %v6151 = vmul.f32 %v5751, %v5751
      %v6152 = vmul.f32 %v5752, %v5752
      %v6153 = vmul.f32 %v5753, %v5753
      %v6154 = vmul.f32 %v5754, %v5754
      %v6155 = vmul.f32 %v5755, %v5755
      %v6156 = vmul.f32 %v5756, %v5756
      %v6157 = vmul.f32 %v5757, %v5757
      %v6158 = vmul.f32 %v5758, %v5758
      %v6159 = vmul.f32 %v5759, %v5759
      %v6160 = vmul.f32 %v5760, %v5760
      %v6161 = vmul.f32 %v5761, %v5761
      %v6162 = vmul.f32 %v5762, %v5762
      %v6163 = vsub.f32 %v6003, %v6083
      %v6164 = vsub.f32 %v6004, %v6084
      %v6165 = vsub.f32 %v6005, %v6085
      %v6166 = vsub.f32 %v6006, %v6086
      %v6167 = vsub.f32 %v6007, %v6087
      %v6168 = vsub.f32 %v6008, %v6088
      %v6169 = vsub.f32 %v6009, %v6089
      %v6170 = vsub.f32 %v6010, %v6090
      %v6171 = vsub.f32 %v6011, %v6091
      %v6172 = vsub.f32 %v6012, %v6092
      %v6173 = vsub.f32 %v6013, %v6093
      %v6174 = vsub.f32 %v6014, %v6094
      %v6175 = vsub.f32 %v6015, %v6095
      %v6176 = vsub.f32 %v6016, %v6096
      %v6177 = vsub.f32 %v6017, %v6097
      %v6178 = vsub.f32 %v6018, %v6098
      %v6179 = vsub.f32 %v6019, %v6099
      %v6180 = vsub.f32 %v6020, %v6100
      %v6181 = vsub.f32 %v6021, %v6101
      %v6182 = vsub.f32 %v6022, %v6102
      %v6183 = vsub.f32 %v6023, %v6103
      %v6184 = vsub.f32 %v6024, %v6104
      %v6185 = vsub.f32 %v6025, %v6105
      %v6186 = vsub.f32 %v6026, %v6106
      %v6187 = vsub.f32 %v6027, %v6107
      %v6188 = vsub.f32 %v6028, %v6108
      %v6189 = vsub.f32 %v6029, %v6109
      %v6190 = vsub.f32 %v6030, %v6110
      %v6191 = vsub.f32 %v6031, %v6111
      %v6192 = vsub.f32 %v6032, %v6112
      %v6193 = vsub.f32 %v6033, %v6113
      %v6194 = vsub.f32 %v6034, %v6114
      %v6195 = vsub.f32 %v6035, %v6115
      %v6196 = vsub.f32 %v6036, %v6116
      %v6197 = vsub.f32 %v6037, %v6117
      %v6198 = vsub.f32 %v6038, %v6118
      %v6199 = vsub.f32 %v6039, %v6119
      %v6200 = vsub.f32 %v6040, %v6120
      %v6201 = vsub.f32 %v6041, %v6121
      %v6202 = vsub.f32 %v6042, %v6122
      %v6203 = vsub.f32 %v6043, %v6123
      %v6204 = vsub.f32 %v6044, %v6124
      %v6205 = vsub.f32 %v6045, %v6125
      %v6206 = vsub.f32 %v6046, %v6126
      %v6207 = vsub.f32 %v6047, %v6127
      %v6208 = vsub.f32 %v6048, %v6128
      %v6209 = vsub.f32 %v6049, %v6129
      %v6210 = vsub.f32 %v6050, %v6130
      %v6211 = vsub.f32 %v6051, %v6131
      %v6212 = vsub.f32 %v6052, %v6132
      %v6213 = vsub.f32 %v6053, %v6133
      %v6214 = vsub.f32 %v6054, %v6134
      %v6215 = vsub.f32 %v6055, %v6135
      %v6216 = vsub.f32 %v6056, %v6136
      %v6217 = vsub.f32 %v6057, %v6137
      %v6218 = vsub.f32 %v6058, %v6138
      %v6219 = vsub.f32 %v6059, %v6139
      %v6220 = vsub.f32 %v6060, %v6140
      %v6221 = vsub.f32 %v6061, %v6141
      %v6222 = vsub.f32 %v6062, %v6142
      %v6223 = vsub.f32 %v6063, %v6143
      %v6224 = vsub.f32 %v6064, %v6144
      %v6225 = vsub.f32 %v6065, %v6145
      %v6226 = vsub.f32 %v6066, %v6146
      %v6227 = vsub.f32 %v6067, %v6147
      %v6228 = vsub.f32 %v6068, %v6148
      %v6229 = vsub.f32 %v6069, %v6149
      %v6230 = vsub.f32 %v6070, %v6150
      %v6231 = vsub.f32 %v6071, %v6151
      %v6232 = vsub.f32 %v6072, %v6152
      %v6233 = vsub.f32 %v6073, %v6153
      %v6234 = vsub.f32 %v6074, %v6154
      %v6235 = vsub.f32 %v6075, %v6155
      %v6236 = vsub.f32 %v6076, %v6156
      %v6237 = vsub.f32 %v6077, %v6157
      %v6238 = vsub.f32 %v6078, %v6158
      %v6239 = vsub.f32 %v6079, %v6159
      %v6240 = vsub.f32 %v6080, %v6160
      %v6241 = vsub.f32 %v6081, %v6161
      %v6242 = vsub.f32 %v6082, %v6162
      %v6243 = vmax.f32 %v6163, 0.0
      %v6244 = vmax.f32 %v6164, 0.0
      %v6245 = vmax.f32 %v6165, 0.0
      %v6246 = vmax.f32 %v6166, 0.0
      %v6247 = vmax.f32 %v6167, 0.0
      %v6248 = vmax.f32 %v6168, 0.0
      %v6249 = vmax.f32 %v6169, 0.0
      %v6250 = vmax.f32 %v6170, 0.0
      %v6251 = vmax.f32 %v6171, 0.0
      %v6252 = vmax.f32 %v6172, 0.0
      %v6253 = vmax.f32 %v6173, 0.0
      %v6254 = vmax.f32 %v6174, 0.0
      %v6255 = vmax.f32 %v6175, 0.0
      %v6256 = vmax.f32 %v6176, 0.0
      %v6257 = vmax.f32 %v6177, 0.0
      %v6258 = vmax.f32 %v6178, 0.0
      %v6259 = vmax.f32 %v6179, 0.0
      %v6260 = vmax.f32 %v6180, 0.0
      %v6261 = vmax.f32 %v6181, 0.0
      %v6262 = vmax.f32 %v6182, 0.0
      %v6263 = vmax.f32 %v6183, 0.0
      %v6264 = vmax.f32 %v6184, 0.0
      %v6265 = vmax.f32 %v6185, 0.0
      %v6266 = vmax.f32 %v6186, 0.0
      %v6267 = vmax.f32 %v6187, 0.0
      %v6268 = vmax.f32 %v6188, 0.0
      %v6269 = vmax.f32 %v6189, 0.0
      %v6270 = vmax.f32 %v6190, 0.0
      %v6271 = vmax.f32 %v6191, 0.0
      %v6272 = vmax.f32 %v6192, 0.0
      %v6273 = vmax.f32 %v6193, 0.0
      %v6274 = vmax.f32 %v6194, 0.0
      %v6275 = vmax.f32 %v6195, 0.0
      %v6276 = vmax.f32 %v6196, 0.0
      %v6277 = vmax.f32 %v6197, 0.0
      %v6278 = vmax.f32 %v6198, 0.0
      %v6279 = vmax.f32 %v6199, 0.0
      %v6280 = vmax.f32 %v6200, 0.0
      %v6281 = vmax.f32 %v6201, 0.0
      %v6282 = vmax.f32 %v6202, 0.0
      %v6283 = vmax.f32 %v6203, 0.0
      %v6284 = vmax.f32 %v6204, 0.0
      %v6285 = vmax.f32 %v6205, 0.0
      %v6286 = vmax.f32 %v6206, 0.0
      %v6287 = vmax.f32 %v6207, 0.0
      %v6288 = vmax.f32 %v6208, 0.0
      %v6289 = vmax.f32 %v6209, 0.0
      %v6290 = vmax.f32 %v6210, 0.0
      %v6291 = vmax.f32 %v6211, 0.0
      %v6292 = vmax.f32 %v6212, 0.0
      %v6293 = vmax.f32 %v6213, 0.0
      %v6294 = vmax.f32 %v6214, 0.0
      %v6295 = vmax.f32 %v6215, 0.0
      %v6296 = vmax.f32 %v6216, 0.0
      %v6297 = vmax.f32 %v6217, 0.0
      %v6298 = vmax.f32 %v6218, 0.0
      %v6299 = vmax.f32 %v6219, 0.0
      %v6300 = vmax.f32 %v6220, 0.0
      %v6301 = vmax.f32 %v6221, 0.0
      %v6302 = vmax.f32 %v6222, 0.0
      %v6303 = vmax.f32 %v6223, 0.0
      %v6304 = vmax.f32 %v6224, 0.0
      %v6305 = vmax.f32 %v6225, 0.0
      %v6306 = vmax.f32 %v6226, 0.0
      %v6307 = vmax.f32 %v6227, 0.0
      %v6308 = vmax.f32 %v6228, 0.0
      %v6309 = vmax.f32 %v6229, 0.0
      %v6310 = vmax.f32 %v6230, 0.0
      %v6311 = vmax.f32 %v6231, 0.0
      %v6312 = vmax.f32 %v6232, 0.0
      %v6313 = vmax.f32 %v6233, 0.0
      %v6314 = vmax.f32 %v6234, 0.0
      %v6315 = vmax.f32 %v6235, 0.0
      %v6316 = vmax.f32 %v6236, 0.0
      %v6317 = vmax.f32 %v6237, 0.0
      %v6318 = vmax.f32 %v6238, 0.0
      %v6319 = vmax.f32 %v6239, 0.0
      %v6320 = vmax.f32 %v6240, 0.0
      %v6321 = vmax.f32 %v6241, 0.0
      %v6322 = vmax.f32 %v6242, 0.0
      %v6323 = vsub.f32 %v5205, %v5683
      %v6324 = vsub.f32 %v5208, %v5684
      %v6325 = vsub.f32 %v5213, %v5685
      %v6326 = vsub.f32 %v5216, %v5686
      %v6327 = vsub.f32 %v5221, %v5687
      %v6328 = vsub.f32 %v5224, %v5688
      %v6329 = vsub.f32 %v5229, %v5689
      %v6330 = vsub.f32 %v5232, %v5690
      %v6331 = vsub.f32 %v5237, %v5691
      %v6332 = vsub.f32 %v5240, %v5692
      %v6333 = vsub.f32 %v5245, %v5693
      %v6334 = vsub.f32 %v5248, %v5694
      %v6335 = vsub.f32 %v5253, %v5695
      %v6336 = vsub.f32 %v5256, %v5696
      %v6337 = vsub.f32 %v5261, %v5697
      %v6338 = vsub.f32 %v5264, %v5698
      %v6339 = vsub.f32 %v5269, %v5699
      %v6340 = vsub.f32 %v5272, %v5700
      %v6341 = vsub.f32 %v5277, %v5701
      %v6342 = vsub.f32 %v5280, %v5702
      %v6343 = vsub.f32 %v5285, %v5703
      %v6344 = vsub.f32 %v5288, %v5704
      %v6345 = vsub.f32 %v5293, %v5705
      %v6346 = vsub.f32 %v5296, %v5706
      %v6347 = vsub.f32 %v5301, %v5707
      %v6348 = vsub.f32 %v5304, %v5708
      %v6349 = vsub.f32 %v5309, %v5709
      %v6350 = vsub.f32 %v5312, %v5710
      %v6351 = vsub.f32 %v5317, %v5711
      %v6352 = vsub.f32 %v5320, %v5712
      %v6353 = vsub.f32 %v5325, %v5713
      %v6354 = vsub.f32 %v5328, %v5714
      %v6355 = vsub.f32 %v5333, %v5715
      %v6356 = vsub.f32 %v5336, %v5716
      %v6357 = vsub.f32 %v5341, %v5717
      %v6358 = vsub.f32 %v5344, %v5718
      %v6359 = vsub.f32 %v5349, %v5719
      %v6360 = vsub.f32 %v5352, %v5720
      %v6361 = vsub.f32 %v5357, %v5721
      %v6362 = vsub.f32 %v5360, %v5722
      %v6363 = vsub.f32 %v5365, %v5723
      %v6364 = vsub.f32 %v5368, %v5724
      %v6365 = vsub.f32 %v5373, %v5725
      %v6366 = vsub.f32 %v5376, %v5726
      %v6367 = vsub.f32 %v5381, %v5727
      %v6368 = vsub.f32 %v5384, %v5728
      %v6369 = vsub.f32 %v5389, %v5729
      %v6370 = vsub.f32 %v5392, %v5730
      %v6371 = vsub.f32 %v5397, %v5731
      %v6372 = vsub.f32 %v5400, %v5732
      %v6373 = vsub.f32 %v5405, %v5733
      %v6374 = vsub.f32 %v5408, %v5734
      %v6375 = vsub.f32 %v5413, %v5735
      %v6376 = vsub.f32 %v5416, %v5736
      %v6377 = vsub.f32 %v5421, %v5737
      %v6378 = vsub.f32 %v5424, %v5738
      %v6379 = vsub.f32 %v5429, %v5739
      %v6380 = vsub.f32 %v5432, %v5740
      %v6381 = vsub.f32 %v5437, %v5741
      %v6382 = vsub.f32 %v5440, %v5742
      %v6383 = vsub.f32 %v5445, %v5743
      %v6384 = vsub.f32 %v5448, %v5744
      %v6385 = vsub.f32 %v5453, %v5745
      %v6386 = vsub.f32 %v5456, %v5746
      %v6387 = vsub.f32 %v5461, %v5747
      %v6388 = vsub.f32 %v5464, %v5748
      %v6389 = vsub.f32 %v5469, %v5749
      %v6390 = vsub.f32 %v5472, %v5750
      %v6391 = vsub.f32 %v5477, %v5751
      %v6392 = vsub.f32 %v5480, %v5752
      %v6393 = vsub.f32 %v5485, %v5753
      %v6394 = vsub.f32 %v5488, %v5754
      %v6395 = vsub.f32 %v5493, %v5755
      %v6396 = vsub.f32 %v5496, %v5756
      %v6397 = vsub.f32 %v5501, %v5757
      %v6398 = vsub.f32 %v5504, %v5758
      %v6399 = vsub.f32 %v5509, %v5759
      %v6400 = vsub.f32 %v5512, %v5760
      %v6401 = vsub.f32 %v5517, %v5761
      %v6402 = vsub.f32 %v5520, %v5762
      %v6403 = vadd.f32 %v6243, 1e-05
      %v6404 = vadd.f32 %v6244, 1e-05
      %v6405 = vadd.f32 %v6245, 1e-05
      %v6406 = vadd.f32 %v6246, 1e-05
      %v6407 = vadd.f32 %v6247, 1e-05
      %v6408 = vadd.f32 %v6248, 1e-05
      %v6409 = vadd.f32 %v6249, 1e-05
      %v6410 = vadd.f32 %v6250, 1e-05
      %v6411 = vadd.f32 %v6251, 1e-05
      %v6412 = vadd.f32 %v6252, 1e-05
      %v6413 = vadd.f32 %v6253, 1e-05
      %v6414 = vadd.f32 %v6254, 1e-05
      %v6415 = vadd.f32 %v6255, 1e-05
      %v6416 = vadd.f32 %v6256, 1e-05
      %v6417 = vadd.f32 %v6257, 1e-05
      %v6418 = vadd.f32 %v6258, 1e-05
      %v6419 = vadd.f32 %v6259, 1e-05
      %v6420 = vadd.f32 %v6260, 1e-05
      %v6421 = vadd.f32 %v6261, 1e-05
      %v6422 = vadd.f32 %v6262, 1e-05
      %v6423 = vadd.f32 %v6263, 1e-05
      %v6424 = vadd.f32 %v6264, 1e-05
      %v6425 = vadd.f32 %v6265, 1e-05
      %v6426 = vadd.f32 %v6266, 1e-05
      %v6427 = vadd.f32 %v6267, 1e-05
      %v6428 = vadd.f32 %v6268, 1e-05
      %v6429 = vadd.f32 %v6269, 1e-05
      %v6430 = vadd.f32 %v6270, 1e-05
      %v6431 = vadd.f32 %v6271, 1e-05
      %v6432 = vadd.f32 %v6272, 1e-05
      %v6433 = vadd.f32 %v6273, 1e-05
      %v6434 = vadd.f32 %v6274, 1e-05
      %v6435 = vadd.f32 %v6275, 1e-05
      %v6436 = vadd.f32 %v6276, 1e-05
      %v6437 = vadd.f32 %v6277, 1e-05
      %v6438 = vadd.f32 %v6278, 1e-05
      %v6439 = vadd.f32 %v6279, 1e-05
      %v6440 = vadd.f32 %v6280, 1e-05
      %v6441 = vadd.f32 %v6281, 1e-05
      %v6442 = vadd.f32 %v6282, 1e-05
      %v6443 = vadd.f32 %v6283, 1e-05
      %v6444 = vadd.f32 %v6284, 1e-05
      %v6445 = vadd.f32 %v6285, 1e-05
      %v6446 = vadd.f32 %v6286, 1e-05
      %v6447 = vadd.f32 %v6287, 1e-05
      %v6448 = vadd.f32 %v6288, 1e-05
      %v6449 = vadd.f32 %v6289, 1e-05
      %v6450 = vadd.f32 %v6290, 1e-05
      %v6451 = vadd.f32 %v6291, 1e-05
      %v6452 = vadd.f32 %v6292, 1e-05
      %v6453 = vadd.f32 %v6293, 1e-05
      %v6454 = vadd.f32 %v6294, 1e-05
      %v6455 = vadd.f32 %v6295, 1e-05
      %v6456 = vadd.f32 %v6296, 1e-05
      %v6457 = vadd.f32 %v6297, 1e-05
      %v6458 = vadd.f32 %v6298, 1e-05
      %v6459 = vadd.f32 %v6299, 1e-05
      %v6460 = vadd.f32 %v6300, 1e-05
      %v6461 = vadd.f32 %v6301, 1e-05
      %v6462 = vadd.f32 %v6302, 1e-05
      %v6463 = vadd.f32 %v6303, 1e-05
      %v6464 = vadd.f32 %v6304, 1e-05
      %v6465 = vadd.f32 %v6305, 1e-05
      %v6466 = vadd.f32 %v6306, 1e-05
      %v6467 = vadd.f32 %v6307, 1e-05
      %v6468 = vadd.f32 %v6308, 1e-05
      %v6469 = vadd.f32 %v6309, 1e-05
      %v6470 = vadd.f32 %v6310, 1e-05
      %v6471 = vadd.f32 %v6311, 1e-05
      %v6472 = vadd.f32 %v6312, 1e-05
      %v6473 = vadd.f32 %v6313, 1e-05
      %v6474 = vadd.f32 %v6314, 1e-05
      %v6475 = vadd.f32 %v6315, 1e-05
      %v6476 = vadd.f32 %v6316, 1e-05
      %v6477 = vadd.f32 %v6317, 1e-05
      %v6478 = vadd.f32 %v6318, 1e-05
      %v6479 = vadd.f32 %v6319, 1e-05
      %v6480 = vadd.f32 %v6320, 1e-05
      %v6481 = vadd.f32 %v6321, 1e-05
      %v6482 = vadd.f32 %v6322, 1e-05
      %v6483 = vrsqrt.pop %v6403
      %v6484 = vrsqrt.pop %v6404
      %v6485 = vrsqrt.pop %v6405
      %v6486 = vrsqrt.pop %v6406
      %v6487 = vrsqrt.pop %v6407
      %v6488 = vrsqrt.pop %v6408
      %v6489 = vrsqrt.pop %v6409
      %v6490 = vrsqrt.pop %v6410
      %v6491 = vrsqrt.pop %v6411
      %v6492 = vrsqrt.pop %v6412
      %v6493 = vrsqrt.pop %v6413
      %v6494 = vrsqrt.pop %v6414
      %v6495 = vrsqrt.pop %v6415
      %v6496 = vrsqrt.pop %v6416
      %v6497 = vrsqrt.pop %v6417
      %v6498 = vrsqrt.pop %v6418
      %v6499 = vrsqrt.pop %v6419
      %v6500 = vrsqrt.pop %v6420
      %v6501 = vrsqrt.pop %v6421
      %v6502 = vrsqrt.pop %v6422
      %v6503 = vrsqrt.pop %v6423
      %v6504 = vrsqrt.pop %v6424
      %v6505 = vrsqrt.pop %v6425
      %v6506 = vrsqrt.pop %v6426
      %v6507 = vrsqrt.pop %v6427
      %v6508 = vrsqrt.pop %v6428
      %v6509 = vrsqrt.pop %v6429
      %v6510 = vrsqrt.pop %v6430
      %v6511 = vrsqrt.pop %v6431
      %v6512 = vrsqrt.pop %v6432
      %v6513 = vrsqrt.pop %v6433
      %v6514 = vrsqrt.pop %v6434
      %v6515 = vrsqrt.pop %v6435
      %v6516 = vrsqrt.pop %v6436
      %v6517 = vrsqrt.pop %v6437
      %v6518 = vrsqrt.pop %v6438
      %v6519 = vrsqrt.pop %v6439
      %v6520 = vrsqrt.pop %v6440
      %v6521 = vrsqrt.pop %v6441
      %v6522 = vrsqrt.pop %v6442
      %v6523 = vrsqrt.pop %v6443
      %v6524 = vrsqrt.pop %v6444
      %v6525 = vrsqrt.pop %v6445
      %v6526 = vrsqrt.pop %v6446
      %v6527 = vrsqrt.pop %v6447
      %v6528 = vrsqrt.pop %v6448
      %v6529 = vrsqrt.pop %v6449
      %v6530 = vrsqrt.pop %v6450
      %v6531 = vrsqrt.pop %v6451
      %v6532 = vrsqrt.pop %v6452
      %v6533 = vrsqrt.pop %v6453
      %v6534 = vrsqrt.pop %v6454
      %v6535 = vrsqrt.pop %v6455
      %v6536 = vrsqrt.pop %v6456
      %v6537 = vrsqrt.pop %v6457
      %v6538 = vrsqrt.pop %v6458
      %v6539 = vrsqrt.pop %v6459
      %v6540 = vrsqrt.pop %v6460
      %v6541 = vrsqrt.pop %v6461
      %v6542 = vrsqrt.pop %v6462
      %v6543 = vrsqrt.pop %v6463
      %v6544 = vrsqrt.pop %v6464
      %v6545 = vrsqrt.pop %v6465
      %v6546 = vrsqrt.pop %v6466
      %v6547 = vrsqrt.pop %v6467
      %v6548 = vrsqrt.pop %v6468
      %v6549 = vrsqrt.pop %v6469
      %v6550 = vrsqrt.pop %v6470
      %v6551 = vrsqrt.pop %v6471
      %v6552 = vrsqrt.pop %v6472
      %v6553 = vrsqrt.pop %v6473
      %v6554 = vrsqrt.pop %v6474
      %v6555 = vrsqrt.pop %v6475
      %v6556 = vrsqrt.pop %v6476
      %v6557 = vrsqrt.pop %v6477
      %v6558 = vrsqrt.pop %v6478
      %v6559 = vrsqrt.pop %v6479
      %v6560 = vrsqrt.pop %v6480
      %v6561 = vrsqrt.pop %v6481
      %v6562 = vrsqrt.pop %v6482
      %v6563 = vmul.f32 %v6323, %v6483
      %v6564 = vmul.f32 %v6324, %v6484
      %v6565 = vmul.f32 %v6325, %v6485
      %v6566 = vmul.f32 %v6326, %v6486
      %v6567 = vmul.f32 %v6327, %v6487
      %v6568 = vmul.f32 %v6328, %v6488
      %v6569 = vmul.f32 %v6329, %v6489
      %v6570 = vmul.f32 %v6330, %v6490
      %v6571 = vmul.f32 %v6331, %v6491
      %v6572 = vmul.f32 %v6332, %v6492
      %v6573 = vmul.f32 %v6333, %v6493
      %v6574 = vmul.f32 %v6334, %v6494
      %v6575 = vmul.f32 %v6335, %v6495
      %v6576 = vmul.f32 %v6336, %v6496
      %v6577 = vmul.f32 %v6337, %v6497
      %v6578 = vmul.f32 %v6338, %v6498
      %v6579 = vmul.f32 %v6339, %v6499
      %v6580 = vmul.f32 %v6340, %v6500
      %v6581 = vmul.f32 %v6341, %v6501
      %v6582 = vmul.f32 %v6342, %v6502
      %v6583 = vmul.f32 %v6343, %v6503
      %v6584 = vmul.f32 %v6344, %v6504
      %v6585 = vmul.f32 %v6345, %v6505
      %v6586 = vmul.f32 %v6346, %v6506
      %v6587 = vmul.f32 %v6347, %v6507
      %v6588 = vmul.f32 %v6348, %v6508
      %v6589 = vmul.f32 %v6349, %v6509
      %v6590 = vmul.f32 %v6350, %v6510
      %v6591 = vmul.f32 %v6351, %v6511
      %v6592 = vmul.f32 %v6352, %v6512
      %v6593 = vmul.f32 %v6353, %v6513
      %v6594 = vmul.f32 %v6354, %v6514
      %v6595 = vmul.f32 %v6355, %v6515
      %v6596 = vmul.f32 %v6356, %v6516
      %v6597 = vmul.f32 %v6357, %v6517
      %v6598 = vmul.f32 %v6358, %v6518
      %v6599 = vmul.f32 %v6359, %v6519
      %v6600 = vmul.f32 %v6360, %v6520
      %v6601 = vmul.f32 %v6361, %v6521
      %v6602 = vmul.f32 %v6362, %v6522
      %v6603 = vmul.f32 %v6363, %v6523
      %v6604 = vmul.f32 %v6364, %v6524
      %v6605 = vmul.f32 %v6365, %v6525
      %v6606 = vmul.f32 %v6366, %v6526
      %v6607 = vmul.f32 %v6367, %v6527
      %v6608 = vmul.f32 %v6368, %v6528
      %v6609 = vmul.f32 %v6369, %v6529
      %v6610 = vmul.f32 %v6370, %v6530
      %v6611 = vmul.f32 %v6371, %v6531
      %v6612 = vmul.f32 %v6372, %v6532
      %v6613 = vmul.f32 %v6373, %v6533
      %v6614 = vmul.f32 %v6374, %v6534
      %v6615 = vmul.f32 %v6375, %v6535
      %v6616 = vmul.f32 %v6376, %v6536
      %v6617 = vmul.f32 %v6377, %v6537
      %v6618 = vmul.f32 %v6378, %v6538
      %v6619 = vmul.f32 %v6379, %v6539
      %v6620 = vmul.f32 %v6380, %v6540
      %v6621 = vmul.f32 %v6381, %v6541
      %v6622 = vmul.f32 %v6382, %v6542
      %v6623 = vmul.f32 %v6383, %v6543
      %v6624 = vmul.f32 %v6384, %v6544
      %v6625 = vmul.f32 %v6385, %v6545
      %v6626 = vmul.f32 %v6386, %v6546
      %v6627 = vmul.f32 %v6387, %v6547
      %v6628 = vmul.f32 %v6388, %v6548
      %v6629 = vmul.f32 %v6389, %v6549
      %v6630 = vmul.f32 %v6390, %v6550
      %v6631 = vmul.f32 %v6391, %v6551
      %v6632 = vmul.f32 %v6392, %v6552
      %v6633 = vmul.f32 %v6393, %v6553
      %v6634 = vmul.f32 %v6394, %v6554
      %v6635 = vmul.f32 %v6395, %v6555
      %v6636 = vmul.f32 %v6396, %v6556
      %v6637 = vmul.f32 %v6397, %v6557
      %v6638 = vmul.f32 %v6398, %v6558
      %v6639 = vmul.f32 %v6399, %v6559
      %v6640 = vmul.f32 %v6400, %v6560
      %v6641 = vmul.f32 %v6401, %v6561
      %v6642 = vmul.f32 %v6402, %v6562
      %v6643 = vlaneseq
      %v6644 = vshrl.u32 %v6643, 7
      %v6645 = vsub.s32 4, %v6644
      %v6646 = vrot.slane %v282, %v6645
      %v6647 = vmul.f32 %v6563, %v6646
      %v6648 = vmul.f32 %v6564, %v6646
      %v6649 = vmul.f32 %v6565, %v6646
      %v6650 = vmul.f32 %v6566, %v6646
      %v6651 = vmul.f32 %v6567, %v6646
      %v6652 = vmul.f32 %v6568, %v6646
      %v6653 = vmul.f32 %v6569, %v6646
      %v6654 = vmul.f32 %v6570, %v6646
      %v6655 = vmul.f32 %v6571, %v6646
      %v6656 = vmul.f32 %v6572, %v6646
      %v6657 = vmul.f32 %v6573, %v6646
      %v6658 = vmul.f32 %v6574, %v6646
      %v6659 = vmul.f32 %v6575, %v6646
      %v6660 = vmul.f32 %v6576, %v6646
      %v6661 = vmul.f32 %v6577, %v6646
      %v6662 = vmul.f32 %v6578, %v6646
      %v6663 = vmul.f32 %v6579, %v6646
      %v6664 = vmul.f32 %v6580, %v6646
      %v6665 = vmul.f32 %v6581, %v6646
      %v6666 = vmul.f32 %v6582, %v6646
      %v6667 = vmul.f32 %v6583, %v6646
      %v6668 = vmul.f32 %v6584, %v6646
      %v6669 = vmul.f32 %v6585, %v6646
      %v6670 = vmul.f32 %v6586, %v6646
      %v6671 = vmul.f32 %v6587, %v6646
      %v6672 = vmul.f32 %v6588, %v6646
      %v6673 = vmul.f32 %v6589, %v6646
      %v6674 = vmul.f32 %v6590, %v6646
      %v6675 = vmul.f32 %v6591, %v6646
      %v6676 = vmul.f32 %v6592, %v6646
      %v6677 = vmul.f32 %v6593, %v6646
      %v6678 = vmul.f32 %v6594, %v6646
      %v6679 = vmul.f32 %v6595, %v6646
      %v6680 = vmul.f32 %v6596, %v6646
      %v6681 = vmul.f32 %v6597, %v6646
      %v6682 = vmul.f32 %v6598, %v6646
      %v6683 = vmul.f32 %v6599, %v6646
      %v6684 = vmul.f32 %v6600, %v6646
      %v6685 = vmul.f32 %v6601, %v6646
      %v6686 = vmul.f32 %v6602, %v6646
      %v6687 = vmul.f32 %v6603, %v6646
      %v6688 = vmul.f32 %v6604, %v6646
      %v6689 = vmul.f32 %v6605, %v6646
      %v6690 = vmul.f32 %v6606, %v6646
      %v6691 = vmul.f32 %v6607, %v6646
      %v6692 = vmul.f32 %v6608, %v6646
      %v6693 = vmul.f32 %v6609, %v6646
      %v6694 = vmul.f32 %v6610, %v6646
      %v6695 = vmul.f32 %v6611, %v6646
      %v6696 = vmul.f32 %v6612, %v6646
      %v6697 = vmul.f32 %v6613, %v6646
      %v6698 = vmul.f32 %v6614, %v6646
      %v6699 = vmul.f32 %v6615, %v6646
      %v6700 = vmul.f32 %v6616, %v6646
      %v6701 = vmul.f32 %v6617, %v6646
      %v6702 = vmul.f32 %v6618, %v6646
      %v6703 = vmul.f32 %v6619, %v6646
      %v6704 = vmul.f32 %v6620, %v6646
      %v6705 = vmul.f32 %v6621, %v6646
      %v6706 = vmul.f32 %v6622, %v6646
      %v6707 = vmul.f32 %v6623, %v6646
      %v6708 = vmul.f32 %v6624, %v6646
      %v6709 = vmul.f32 %v6625, %v6646
      %v6710 = vmul.f32 %v6626, %v6646
      %v6711 = vmul.f32 %v6627, %v6646
      %v6712 = vmul.f32 %v6628, %v6646
      %v6713 = vmul.f32 %v6629, %v6646
      %v6714 = vmul.f32 %v6630, %v6646
      %v6715 = vmul.f32 %v6631, %v6646
      %v6716 = vmul.f32 %v6632, %v6646
      %v6717 = vmul.f32 %v6633, %v6646
      %v6718 = vmul.f32 %v6634, %v6646
      %v6719 = vmul.f32 %v6635, %v6646
      %v6720 = vmul.f32 %v6636, %v6646
      %v6721 = vmul.f32 %v6637, %v6646
      %v6722 = vmul.f32 %v6638, %v6646
      %v6723 = vmul.f32 %v6639, %v6646
      %v6724 = vmul.f32 %v6640, %v6646
      %v6725 = vmul.f32 %v6641, %v6646
      %v6726 = vmul.f32 %v6642, %v6646
      %v6727 = vlaneseq
      %v6728 = vshrl.u32 %v6727, 7
      %v6729 = vsub.s32 4, %v6728
      %v6730 = vrot.slane %v283, %v6729
      %v6731 = vadd.f32 %v6647, %v6730
      %v6732 = vadd.f32 %v6648, %v6730
      %v6733 = vadd.f32 %v6649, %v6730
      %v6734 = vadd.f32 %v6650, %v6730
      %v6735 = vadd.f32 %v6651, %v6730
      %v6736 = vadd.f32 %v6652, %v6730
      %v6737 = vadd.f32 %v6653, %v6730
      %v6738 = vadd.f32 %v6654, %v6730
      %v6739 = vadd.f32 %v6655, %v6730
      %v6740 = vadd.f32 %v6656, %v6730
      %v6741 = vadd.f32 %v6657, %v6730
      %v6742 = vadd.f32 %v6658, %v6730
      %v6743 = vadd.f32 %v6659, %v6730
      %v6744 = vadd.f32 %v6660, %v6730
      %v6745 = vadd.f32 %v6661, %v6730
      %v6746 = vadd.f32 %v6662, %v6730
      %v6747 = vadd.f32 %v6663, %v6730
      %v6748 = vadd.f32 %v6664, %v6730
      %v6749 = vadd.f32 %v6665, %v6730
      %v6750 = vadd.f32 %v6666, %v6730
      %v6751 = vadd.f32 %v6667, %v6730
      %v6752 = vadd.f32 %v6668, %v6730
      %v6753 = vadd.f32 %v6669, %v6730
      %v6754 = vadd.f32 %v6670, %v6730
      %v6755 = vadd.f32 %v6671, %v6730
      %v6756 = vadd.f32 %v6672, %v6730
      %v6757 = vadd.f32 %v6673, %v6730
      %v6758 = vadd.f32 %v6674, %v6730
      %v6759 = vadd.f32 %v6675, %v6730
      %v6760 = vadd.f32 %v6676, %v6730
      %v6761 = vadd.f32 %v6677, %v6730
      %v6762 = vadd.f32 %v6678, %v6730
      %v6763 = vadd.f32 %v6679, %v6730
      %v6764 = vadd.f32 %v6680, %v6730
      %v6765 = vadd.f32 %v6681, %v6730
      %v6766 = vadd.f32 %v6682, %v6730
      %v6767 = vadd.f32 %v6683, %v6730
      %v6768 = vadd.f32 %v6684, %v6730
      %v6769 = vadd.f32 %v6685, %v6730
      %v6770 = vadd.f32 %v6686, %v6730
      %v6771 = vadd.f32 %v6687, %v6730
      %v6772 = vadd.f32 %v6688, %v6730
      %v6773 = vadd.f32 %v6689, %v6730
      %v6774 = vadd.f32 %v6690, %v6730
      %v6775 = vadd.f32 %v6691, %v6730
      %v6776 = vadd.f32 %v6692, %v6730
      %v6777 = vadd.f32 %v6693, %v6730
      %v6778 = vadd.f32 %v6694, %v6730
      %v6779 = vadd.f32 %v6695, %v6730
      %v6780 = vadd.f32 %v6696, %v6730
      %v6781 = vadd.f32 %v6697, %v6730
      %v6782 = vadd.f32 %v6698, %v6730
      %v6783 = vadd.f32 %v6699, %v6730
      %v6784 = vadd.f32 %v6700, %v6730
      %v6785 = vadd.f32 %v6701, %v6730
      %v6786 = vadd.f32 %v6702, %v6730
      %v6787 = vadd.f32 %v6703, %v6730
      %v6788 = vadd.f32 %v6704, %v6730
      %v6789 = vadd.f32 %v6705, %v6730
      %v6790 = vadd.f32 %v6706, %v6730
      %v6791 = vadd.f32 %v6707, %v6730
      %v6792 = vadd.f32 %v6708, %v6730
      %v6793 = vadd.f32 %v6709, %v6730
      %v6794 = vadd.f32 %v6710, %v6730
      %v6795 = vadd.f32 %v6711, %v6730
      %v6796 = vadd.f32 %v6712, %v6730
      %v6797 = vadd.f32 %v6713, %v6730
      %v6798 = vadd.f32 %v6714, %v6730
      %v6799 = vadd.f32 %v6715, %v6730
      %v6800 = vadd.f32 %v6716, %v6730
      %v6801 = vadd.f32 %v6717, %v6730
      %v6802 = vadd.f32 %v6718, %v6730
      %v6803 = vadd.f32 %v6719, %v6730
      %v6804 = vadd.f32 %v6720, %v6730
      %v6805 = vadd.f32 %v6721, %v6730
      %v6806 = vadd.f32 %v6722, %v6730
      %v6807 = vadd.f32 %v6723, %v6730
      %v6808 = vadd.f32 %v6724, %v6730
      %v6809 = vadd.f32 %v6725, %v6730
      %v6810 = vadd.f32 %v6726, %v6730
      %v6811 = vmax.f32 %v6731, 0.0
      %v6812 = vmax.f32 %v6732, 0.0
      %v6813 = vmax.f32 %v6733, 0.0
      %v6814 = vmax.f32 %v6734, 0.0
      %v6815 = vmax.f32 %v6735, 0.0
      %v6816 = vmax.f32 %v6736, 0.0
      %v6817 = vmax.f32 %v6737, 0.0
      %v6818 = vmax.f32 %v6738, 0.0
      %v6819 = vmax.f32 %v6739, 0.0
      %v6820 = vmax.f32 %v6740, 0.0
      %v6821 = vmax.f32 %v6741, 0.0
      %v6822 = vmax.f32 %v6742, 0.0
      %v6823 = vmax.f32 %v6743, 0.0
      %v6824 = vmax.f32 %v6744, 0.0
      %v6825 = vmax.f32 %v6745, 0.0
      %v6826 = vmax.f32 %v6746, 0.0
      %v6827 = vmax.f32 %v6747, 0.0
      %v6828 = vmax.f32 %v6748, 0.0
      %v6829 = vmax.f32 %v6749, 0.0
      %v6830 = vmax.f32 %v6750, 0.0
      %v6831 = vmax.f32 %v6751, 0.0
      %v6832 = vmax.f32 %v6752, 0.0
      %v6833 = vmax.f32 %v6753, 0.0
      %v6834 = vmax.f32 %v6754, 0.0
      %v6835 = vmax.f32 %v6755, 0.0
      %v6836 = vmax.f32 %v6756, 0.0
      %v6837 = vmax.f32 %v6757, 0.0
      %v6838 = vmax.f32 %v6758, 0.0
      %v6839 = vmax.f32 %v6759, 0.0
      %v6840 = vmax.f32 %v6760, 0.0
      %v6841 = vmax.f32 %v6761, 0.0
      %v6842 = vmax.f32 %v6762, 0.0
      %v6843 = vmax.f32 %v6763, 0.0
      %v6844 = vmax.f32 %v6764, 0.0
      %v6845 = vmax.f32 %v6765, 0.0
      %v6846 = vmax.f32 %v6766, 0.0
      %v6847 = vmax.f32 %v6767, 0.0
      %v6848 = vmax.f32 %v6768, 0.0
      %v6849 = vmax.f32 %v6769, 0.0
      %v6850 = vmax.f32 %v6770, 0.0
      %v6851 = vmax.f32 %v6771, 0.0
      %v6852 = vmax.f32 %v6772, 0.0
      %v6853 = vmax.f32 %v6773, 0.0
      %v6854 = vmax.f32 %v6774, 0.0
      %v6855 = vmax.f32 %v6775, 0.0
      %v6856 = vmax.f32 %v6776, 0.0
      %v6857 = vmax.f32 %v6777, 0.0
      %v6858 = vmax.f32 %v6778, 0.0
      %v6859 = vmax.f32 %v6779, 0.0
      %v6860 = vmax.f32 %v6780, 0.0
      %v6861 = vmax.f32 %v6781, 0.0
      %v6862 = vmax.f32 %v6782, 0.0
      %v6863 = vmax.f32 %v6783, 0.0
      %v6864 = vmax.f32 %v6784, 0.0
      %v6865 = vmax.f32 %v6785, 0.0
      %v6866 = vmax.f32 %v6786, 0.0
      %v6867 = vmax.f32 %v6787, 0.0
      %v6868 = vmax.f32 %v6788, 0.0
      %v6869 = vmax.f32 %v6789, 0.0
      %v6870 = vmax.f32 %v6790, 0.0
      %v6871 = vmax.f32 %v6791, 0.0
      %v6872 = vmax.f32 %v6792, 0.0
      %v6873 = vmax.f32 %v6793, 0.0
      %v6874 = vmax.f32 %v6794, 0.0
      %v6875 = vmax.f32 %v6795, 0.0
      %v6876 = vmax.f32 %v6796, 0.0
      %v6877 = vmax.f32 %v6797, 0.0
      %v6878 = vmax.f32 %v6798, 0.0
      %v6879 = vmax.f32 %v6799, 0.0
      %v6880 = vmax.f32 %v6800, 0.0
      %v6881 = vmax.f32 %v6801, 0.0
      %v6882 = vmax.f32 %v6802, 0.0
      %v6883 = vmax.f32 %v6803, 0.0
      %v6884 = vmax.f32 %v6804, 0.0
      %v6885 = vmax.f32 %v6805, 0.0
      %v6886 = vmax.f32 %v6806, 0.0
      %v6887 = vmax.f32 %v6807, 0.0
      %v6888 = vmax.f32 %v6808, 0.0
      %v6889 = vmax.f32 %v6809, 0.0
      %v6890 = vmax.f32 %v6810, 0.0
      %6891 = vxpose.xlu0.b32.start [1/16] %v6811, 128
      %6892 = vxpose.xlu0.b32.cont [2/16] %v6812, 128
      %6893 = vxpose.xlu0.b32.cont [3/16] %v6813, 128
      %6894 = vxpose.xlu0.b32.cont [4/16] %v6814, 128
      %6895 = vxpose.xlu0.b32.cont [5/16] %v6815, 128
      %6896 = vxpose.xlu0.b32.cont [6/16] %v6816, 128
      %6897 = vxpose.xlu0.b32.cont [7/16] %v6817, 128
      %6898 = vxpose.xlu0.b32.cont [8/16] %v6818, 128
      %6899 = vxpose.xlu0.b32.cont [9/16] %v6819, 128
      %6900 = vxpose.xlu0.b32.cont [10/16] %v6820, 128
      %6901 = vxpose.xlu0.b32.cont [11/16] %v6821, 128
      %6902 = vxpose.xlu0.b32.cont [12/16] %v6822, 128
      %6903 = vxpose.xlu0.b32.cont [13/16] %v6823, 128
      %6904 = vxpose.xlu0.b32.cont [14/16] %v6824, 128
      %6905 = vxpose.xlu0.b32.cont [15/16] %v6825, 128
      %6906 = vxpose.xlu0.b32.end [16/16] %v6826, 128
      %v6907 = vpop.trf.xlu0
      %v6908 = vpop.trf.xlu0
      %v6909 = vpop.trf.xlu0
      %v6910 = vpop.trf.xlu0
      %v6911 = vpop.trf.xlu0
      %v6912 = vpop.trf.xlu0
      %v6913 = vpop.trf.xlu0
      %v6914 = vpop.trf.xlu0
      %v6915 = vpop.trf.xlu0
      %v6916 = vpop.trf.xlu0
      %v6917 = vpop.trf.xlu0
      %v6918 = vpop.trf.xlu0
      %v6919 = vpop.trf.xlu0
      %v6920 = vpop.trf.xlu0
      %v6921 = vpop.trf.xlu0
      %v6922 = vpop.trf.xlu0
      %6923 = vxpose.xlu0.b32.start [1/16] %v6827, 128
      %6924 = vxpose.xlu0.b32.cont [2/16] %v6828, 128
      %6925 = vxpose.xlu0.b32.cont [3/16] %v6829, 128
      %6926 = vxpose.xlu0.b32.cont [4/16] %v6830, 128
      %6927 = vxpose.xlu0.b32.cont [5/16] %v6831, 128
      %6928 = vxpose.xlu0.b32.cont [6/16] %v6832, 128
      %6929 = vxpose.xlu0.b32.cont [7/16] %v6833, 128
      %6930 = vxpose.xlu0.b32.cont [8/16] %v6834, 128
      %6931 = vxpose.xlu0.b32.cont [9/16] %v6835, 128
      %6932 = vxpose.xlu0.b32.cont [10/16] %v6836, 128
      %6933 = vxpose.xlu0.b32.cont [11/16] %v6837, 128
      %6934 = vxpose.xlu0.b32.cont [12/16] %v6838, 128
      %6935 = vxpose.xlu0.b32.cont [13/16] %v6839, 128
      %6936 = vxpose.xlu0.b32.cont [14/16] %v6840, 128
      %6937 = vxpose.xlu0.b32.cont [15/16] %v6841, 128
      %6938 = vxpose.xlu0.b32.end [16/16] %v6842, 128
      %v6939 = vpop.trf.xlu0
      %v6940 = vpop.trf.xlu0
      %v6941 = vpop.trf.xlu0
      %v6942 = vpop.trf.xlu0
      %v6943 = vpop.trf.xlu0
      %v6944 = vpop.trf.xlu0
      %v6945 = vpop.trf.xlu0
      %v6946 = vpop.trf.xlu0
      %v6947 = vpop.trf.xlu0
      %v6948 = vpop.trf.xlu0
      %v6949 = vpop.trf.xlu0
      %v6950 = vpop.trf.xlu0
      %v6951 = vpop.trf.xlu0
      %v6952 = vpop.trf.xlu0
      %v6953 = vpop.trf.xlu0
      %v6954 = vpop.trf.xlu0
      %6955 = vxpose.xlu0.b32.start [1/16] %v6843, 128
      %6956 = vxpose.xlu0.b32.cont [2/16] %v6844, 128
      %6957 = vxpose.xlu0.b32.cont [3/16] %v6845, 128
      %6958 = vxpose.xlu0.b32.cont [4/16] %v6846, 128
      %6959 = vxpose.xlu0.b32.cont [5/16] %v6847, 128
      %6960 = vxpose.xlu0.b32.cont [6/16] %v6848, 128
      %6961 = vxpose.xlu0.b32.cont [7/16] %v6849, 128
      %6962 = vxpose.xlu0.b32.cont [8/16] %v6850, 128
      %6963 = vxpose.xlu0.b32.cont [9/16] %v6851, 128
      %6964 = vxpose.xlu0.b32.cont [10/16] %v6852, 128
      %6965 = vxpose.xlu0.b32.cont [11/16] %v6853, 128
      %6966 = vxpose.xlu0.b32.cont [12/16] %v6854, 128
      %6967 = vxpose.xlu0.b32.cont [13/16] %v6855, 128
      %6968 = vxpose.xlu0.b32.cont [14/16] %v6856, 128
      %6969 = vxpose.xlu0.b32.cont [15/16] %v6857, 128
      %6970 = vxpose.xlu0.b32.end [16/16] %v6858, 128
      %v6971 = vpop.trf.xlu0
      %v6972 = vpop.trf.xlu0
      %v6973 = vpop.trf.xlu0
      %v6974 = vpop.trf.xlu0
      %v6975 = vpop.trf.xlu0
      %v6976 = vpop.trf.xlu0
      %v6977 = vpop.trf.xlu0
      %v6978 = vpop.trf.xlu0
      %v6979 = vpop.trf.xlu0
      %v6980 = vpop.trf.xlu0
      %v6981 = vpop.trf.xlu0
      %v6982 = vpop.trf.xlu0
      %v6983 = vpop.trf.xlu0
      %v6984 = vpop.trf.xlu0
      %v6985 = vpop.trf.xlu0
      %v6986 = vpop.trf.xlu0
      %6987 = vxpose.xlu0.b32.start [1/16] %v6859, 128
      %6988 = vxpose.xlu0.b32.cont [2/16] %v6860, 128
      %6989 = vxpose.xlu0.b32.cont [3/16] %v6861, 128
      %6990 = vxpose.xlu0.b32.cont [4/16] %v6862, 128
      %6991 = vxpose.xlu0.b32.cont [5/16] %v6863, 128
      %6992 = vxpose.xlu0.b32.cont [6/16] %v6864, 128
      %6993 = vxpose.xlu0.b32.cont [7/16] %v6865, 128
      %6994 = vxpose.xlu0.b32.cont [8/16] %v6866, 128
      %6995 = vxpose.xlu0.b32.cont [9/16] %v6867, 128
      %6996 = vxpose.xlu0.b32.cont [10/16] %v6868, 128
      %6997 = vxpose.xlu0.b32.cont [11/16] %v6869, 128
      %6998 = vxpose.xlu0.b32.cont [12/16] %v6870, 128
      %6999 = vxpose.xlu0.b32.cont [13/16] %v6871, 128
      %7000 = vxpose.xlu0.b32.cont [14/16] %v6872, 128
      %7001 = vxpose.xlu0.b32.cont [15/16] %v6873, 128
      %7002 = vxpose.xlu0.b32.end [16/16] %v6874, 128
      %v7003 = vpop.trf.xlu0
      %v7004 = vpop.trf.xlu0
      %v7005 = vpop.trf.xlu0
      %v7006 = vpop.trf.xlu0
      %v7007 = vpop.trf.xlu0
      %v7008 = vpop.trf.xlu0
      %v7009 = vpop.trf.xlu0
      %v7010 = vpop.trf.xlu0
      %v7011 = vpop.trf.xlu0
      %v7012 = vpop.trf.xlu0
      %v7013 = vpop.trf.xlu0
      %v7014 = vpop.trf.xlu0
      %v7015 = vpop.trf.xlu0
      %v7016 = vpop.trf.xlu0
      %v7017 = vpop.trf.xlu0
      %v7018 = vpop.trf.xlu0
      %7019 = vxpose.xlu0.b32.start [1/16] %v6875, 128
      %7020 = vxpose.xlu0.b32.cont [2/16] %v6876, 128
      %7021 = vxpose.xlu0.b32.cont [3/16] %v6877, 128
      %7022 = vxpose.xlu0.b32.cont [4/16] %v6878, 128
      %7023 = vxpose.xlu0.b32.cont [5/16] %v6879, 128
      %7024 = vxpose.xlu0.b32.cont [6/16] %v6880, 128
      %7025 = vxpose.xlu0.b32.cont [7/16] %v6881, 128
      %7026 = vxpose.xlu0.b32.cont [8/16] %v6882, 128
      %7027 = vxpose.xlu0.b32.cont [9/16] %v6883, 128
      %7028 = vxpose.xlu0.b32.cont [10/16] %v6884, 128
      %7029 = vxpose.xlu0.b32.cont [11/16] %v6885, 128
      %7030 = vxpose.xlu0.b32.cont [12/16] %v6886, 128
      %7031 = vxpose.xlu0.b32.cont [13/16] %v6887, 128
      %7032 = vxpose.xlu0.b32.cont [14/16] %v6888, 128
      %7033 = vxpose.xlu0.b32.cont [15/16] %v6889, 128
      %7034 = vxpose.xlu0.b32.end [16/16] %v6890, 128
      %v7035 = vpop.trf.xlu0
      %v7036 = vpop.trf.xlu0
      %v7037 = vpop.trf.xlu0
      %v7038 = vpop.trf.xlu0
      %v7039 = vpop.trf.xlu0
      %v7040 = vpop.trf.xlu0
      %v7041 = vpop.trf.xlu0
      %v7042 = vpop.trf.xlu0
      %v7043 = vpop.trf.xlu0
      %v7044 = vpop.trf.xlu0
      %v7045 = vpop.trf.xlu0
      %v7046 = vpop.trf.xlu0
      %v7047 = vpop.trf.xlu0
      %v7048 = vpop.trf.xlu0
      %v7049 = vpop.trf.xlu0
      %v7050 = vpop.trf.xlu0
      %v7051 = vld [vmem:[%s6] sm:$0xff]
      %v7052 = vld [vmem:[%s6 + $0x8] sm:$0xff]
      %v7053 = vld [vmem:[%s6 + $0x10] sm:$0xff]
      %v7054 = vld [vmem:[%s6 + $0x18] sm:$0xff]
      %v7055 = vld [vmem:[%s6 + $0x20] sm:$0xff]
      %v7056 = vld [vmem:[%s6 + $0x28] sm:$0xff]
      %v7057 = vld [vmem:[%s6 + $0x30] sm:$0xff]
      %v7058 = vld [vmem:[%s6 + $0x38] sm:$0xff]
      %v7059 = vld [vmem:[%s6 + $0x40] sm:$0xff]
      %v7060 = vld [vmem:[%s6 + $0x48] sm:$0xff]
      %v7061 = vld [vmem:[%s6 + $0x50] sm:$0xff]
      %v7062 = vld [vmem:[%s6 + $0x58] sm:$0xff]
      %v7063 = vld [vmem:[%s6 + $0x60] sm:$0xff]
      %v7064 = vld [vmem:[%s6 + $0x68] sm:$0xff]
      %v7065 = vld [vmem:[%s6 + $0x70] sm:$0xff]
      %v7066 = vld [vmem:[%s6 + $0x78] sm:$0xff]
      %7068 = vset.pattern.permute.xlu0 0
      %7069 = vperm.xlu0 %7068, %v7051
      %v7070 = vpop.permute.xlu0 %7069
      %7073 = vset.pattern.permute.xlu0 0
      %7074 = vperm.xlu0 %7073, %v7052
      %v7075 = vpop.permute.xlu0 %7074
      %7078 = vset.pattern.permute.xlu0 0
      %7079 = vperm.xlu0 %7078, %v7053
      %v7080 = vpop.permute.xlu0 %7079
      %7083 = vset.pattern.permute.xlu0 0
      %7084 = vperm.xlu0 %7083, %v7054
      %v7085 = vpop.permute.xlu0 %7084
      %7088 = vset.pattern.permute.xlu0 0
      %7089 = vperm.xlu0 %7088, %v7055
      %v7090 = vpop.permute.xlu0 %7089
      %7093 = vset.pattern.permute.xlu0 0
      %7094 = vperm.xlu0 %7093, %v7056
      %v7095 = vpop.permute.xlu0 %7094
      %7098 = vset.pattern.permute.xlu0 0
      %7099 = vperm.xlu0 %7098, %v7057
      %v7100 = vpop.permute.xlu0 %7099
      %7103 = vset.pattern.permute.xlu0 0
      %7104 = vperm.xlu0 %7103, %v7058
      %v7105 = vpop.permute.xlu0 %7104
      %7108 = vset.pattern.permute.xlu0 0
      %7109 = vperm.xlu0 %7108, %v7059
      %v7110 = vpop.permute.xlu0 %7109
      %7113 = vset.pattern.permute.xlu0 0
      %7114 = vperm.xlu0 %7113, %v7060
      %v7115 = vpop.permute.xlu0 %7114
      %7118 = vset.pattern.permute.xlu0 0
      %7119 = vperm.xlu0 %7118, %v7061
      %v7120 = vpop.permute.xlu0 %7119
      %7123 = vset.pattern.permute.xlu0 0
      %7124 = vperm.xlu0 %7123, %v7062
      %v7125 = vpop.permute.xlu0 %7124
      %7128 = vset.pattern.permute.xlu0 0
      %7129 = vperm.xlu0 %7128, %v7063
      %v7130 = vpop.permute.xlu0 %7129
      %7133 = vset.pattern.permute.xlu0 0
      %7134 = vperm.xlu0 %7133, %v7064
      %v7135 = vpop.permute.xlu0 %7134
      %7138 = vset.pattern.permute.xlu0 0
      %7139 = vperm.xlu0 %7138, %v7065
      %v7140 = vpop.permute.xlu0 %7139
      %7143 = vset.pattern.permute.xlu0 0
      %7144 = vperm.xlu0 %7143, %v7066
      %v7145 = vpop.permute.xlu0 %7144
      %v7147 = vmul.f32 %v6907, %v7070
      %v7148 = vmul.f32 %v6939, %v7070
      %v7149 = vmul.f32 %v6971, %v7070
      %v7150 = vmul.f32 %v7003, %v7070
      %v7151 = vmul.f32 %v7035, %v7070
      %v7152 = vmul.f32 %v6908, %v7075
      %v7153 = vmul.f32 %v6940, %v7075
      %v7154 = vmul.f32 %v6972, %v7075
      %v7155 = vmul.f32 %v7004, %v7075
      %v7156 = vmul.f32 %v7036, %v7075
      %v7157 = vmul.f32 %v6909, %v7080
      %v7158 = vmul.f32 %v6941, %v7080
      %v7159 = vmul.f32 %v6973, %v7080
      %v7160 = vmul.f32 %v7005, %v7080
      %v7161 = vmul.f32 %v7037, %v7080
      %v7162 = vmul.f32 %v6910, %v7085
      %v7163 = vmul.f32 %v6942, %v7085
      %v7164 = vmul.f32 %v6974, %v7085
      %v7165 = vmul.f32 %v7006, %v7085
      %v7166 = vmul.f32 %v7038, %v7085
      %v7167 = vmul.f32 %v6911, %v7090
      %v7168 = vmul.f32 %v6943, %v7090
      %v7169 = vmul.f32 %v6975, %v7090
      %v7170 = vmul.f32 %v7007, %v7090
      %v7171 = vmul.f32 %v7039, %v7090
      %v7172 = vmul.f32 %v6912, %v7095
      %v7173 = vmul.f32 %v6944, %v7095
      %v7174 = vmul.f32 %v6976, %v7095
      %v7175 = vmul.f32 %v7008, %v7095
      %v7176 = vmul.f32 %v7040, %v7095
      %v7177 = vmul.f32 %v6913, %v7100
      %v7178 = vmul.f32 %v6945, %v7100
      %v7179 = vmul.f32 %v6977, %v7100
      %v7180 = vmul.f32 %v7009, %v7100
      %v7181 = vmul.f32 %v7041, %v7100
      %v7182 = vmul.f32 %v6914, %v7105
      %v7183 = vmul.f32 %v6946, %v7105
      %v7184 = vmul.f32 %v6978, %v7105
      %v7185 = vmul.f32 %v7010, %v7105
      %v7186 = vmul.f32 %v7042, %v7105
      %v7187 = vmul.f32 %v6915, %v7110
      %v7188 = vmul.f32 %v6947, %v7110
      %v7189 = vmul.f32 %v6979, %v7110
      %v7190 = vmul.f32 %v7011, %v7110
      %v7191 = vmul.f32 %v7043, %v7110
      %v7192 = vmul.f32 %v6916, %v7115
      %v7193 = vmul.f32 %v6948, %v7115
      %v7194 = vmul.f32 %v6980, %v7115
      %v7195 = vmul.f32 %v7012, %v7115
      %v7196 = vmul.f32 %v7044, %v7115
      %v7197 = vmul.f32 %v6917, %v7120
      %v7198 = vmul.f32 %v6949, %v7120
      %v7199 = vmul.f32 %v6981, %v7120
      %v7200 = vmul.f32 %v7013, %v7120
      %v7201 = vmul.f32 %v7045, %v7120
      %v7202 = vmul.f32 %v6918, %v7125
      %v7203 = vmul.f32 %v6950, %v7125
      %v7204 = vmul.f32 %v6982, %v7125
      %v7205 = vmul.f32 %v7014, %v7125
      %v7206 = vmul.f32 %v7046, %v7125
      %v7207 = vmul.f32 %v6919, %v7130
      %v7208 = vmul.f32 %v6951, %v7130
      %v7209 = vmul.f32 %v6983, %v7130
      %v7210 = vmul.f32 %v7015, %v7130
      %v7211 = vmul.f32 %v7047, %v7130
      %v7212 = vmul.f32 %v6920, %v7135
      %v7213 = vmul.f32 %v6952, %v7135
      %v7214 = vmul.f32 %v6984, %v7135
      %v7215 = vmul.f32 %v7016, %v7135
      %v7216 = vmul.f32 %v7048, %v7135
      %v7217 = vmul.f32 %v6921, %v7140
      %v7218 = vmul.f32 %v6953, %v7140
      %v7219 = vmul.f32 %v6985, %v7140
      %v7220 = vmul.f32 %v7017, %v7140
      %v7221 = vmul.f32 %v7049, %v7140
      %v7222 = vmul.f32 %v6922, %v7145
      %v7223 = vmul.f32 %v6954, %v7145
      %v7224 = vmul.f32 %v6986, %v7145
      %v7225 = vmul.f32 %v7018, %v7145
      %v7226 = vmul.f32 %v7050, %v7145
      %v7227 = vadd.f32 %v7147, %v7152
      %v7228 = vadd.f32 %v7227, %v7157
      %v7229 = vadd.f32 %v7228, %v7162
      %v7230 = vadd.f32 %v7229, %v7167
      %v7231 = vadd.f32 %v7230, %v7172
      %v7232 = vadd.f32 %v7231, %v7177
      %v7233 = vadd.f32 %v7232, %v7182
      %v7234 = vadd.f32 %v7233, %v7187
      %v7235 = vadd.f32 %v7234, %v7192
      %v7236 = vadd.f32 %v7235, %v7197
      %v7237 = vadd.f32 %v7236, %v7202
      %v7238 = vadd.f32 %v7237, %v7207
      %v7239 = vadd.f32 %v7238, %v7212
      %v7240 = vadd.f32 %v7239, %v7217
      %v7241 = vadd.f32 %v7240, %v7222
      %v7242 = vrot.slane %v7241, 4
      %v7243 = vadd.f32 %v7241, %v7242
      %v7244 = vrot.slane %v7243, 2
      %v7245 = vadd.f32 %v7243, %v7244
      %v7246 = vrot.slane %v7245, 1
      %v7247 = vadd.f32 %v7245, %v7246
      %v7248 = vadd.f32 %v7148, %v7153
      %v7249 = vadd.f32 %v7248, %v7158
      %v7250 = vadd.f32 %v7249, %v7163
      %v7251 = vadd.f32 %v7250, %v7168
      %v7252 = vadd.f32 %v7251, %v7173
      %v7253 = vadd.f32 %v7252, %v7178
      %v7254 = vadd.f32 %v7253, %v7183
      %v7255 = vadd.f32 %v7254, %v7188
      %v7256 = vadd.f32 %v7255, %v7193
      %v7257 = vadd.f32 %v7256, %v7198
      %v7258 = vadd.f32 %v7257, %v7203
      %v7259 = vadd.f32 %v7258, %v7208
      %v7260 = vadd.f32 %v7259, %v7213
      %v7261 = vadd.f32 %v7260, %v7218
      %v7262 = vadd.f32 %v7261, %v7223
      %v7263 = vrot.slane %v7262, 4
      %v7264 = vadd.f32 %v7262, %v7263
      %v7265 = vrot.slane %v7264, 2
      %v7266 = vadd.f32 %v7264, %v7265
      %v7267 = vrot.slane %v7266, 1
      %v7268 = vadd.f32 %v7266, %v7267
      %v7269 = vadd.f32 %v7149, %v7154
      %v7270 = vadd.f32 %v7269, %v7159
      %v7271 = vadd.f32 %v7270, %v7164
      %v7272 = vadd.f32 %v7271, %v7169
      %v7273 = vadd.f32 %v7272, %v7174
      %v7274 = vadd.f32 %v7273, %v7179
      %v7275 = vadd.f32 %v7274, %v7184
      %v7276 = vadd.f32 %v7275, %v7189
      %v7277 = vadd.f32 %v7276, %v7194
      %v7278 = vadd.f32 %v7277, %v7199
      %v7279 = vadd.f32 %v7278, %v7204
      %v7280 = vadd.f32 %v7279, %v7209
      %v7281 = vadd.f32 %v7280, %v7214
      %v7282 = vadd.f32 %v7281, %v7219
      %v7283 = vadd.f32 %v7282, %v7224
      %v7284 = vrot.slane %v7283, 4
      %v7285 = vadd.f32 %v7283, %v7284
      %v7286 = vrot.slane %v7285, 2
      %v7287 = vadd.f32 %v7285, %v7286
      %v7288 = vrot.slane %v7287, 1
      %v7289 = vadd.f32 %v7287, %v7288
      %v7290 = vadd.f32 %v7150, %v7155
      %v7291 = vadd.f32 %v7290, %v7160
      %v7292 = vadd.f32 %v7291, %v7165
      %v7293 = vadd.f32 %v7292, %v7170
      %v7294 = vadd.f32 %v7293, %v7175
      %v7295 = vadd.f32 %v7294, %v7180
      %v7296 = vadd.f32 %v7295, %v7185
      %v7297 = vadd.f32 %v7296, %v7190
      %v7298 = vadd.f32 %v7297, %v7195
      %v7299 = vadd.f32 %v7298, %v7200
      %v7300 = vadd.f32 %v7299, %v7205
      %v7301 = vadd.f32 %v7300, %v7210
      %v7302 = vadd.f32 %v7301, %v7215
      %v7303 = vadd.f32 %v7302, %v7220
      %v7304 = vadd.f32 %v7303, %v7225
      %v7305 = vrot.slane %v7304, 4
      %v7306 = vadd.f32 %v7304, %v7305
      %v7307 = vrot.slane %v7306, 2
      %v7308 = vadd.f32 %v7306, %v7307
      %v7309 = vrot.slane %v7308, 1
      %v7310 = vadd.f32 %v7308, %v7309
      %v7311 = vadd.f32 %v7151, %v7156
      %v7312 = vadd.f32 %v7311, %v7161
      %v7313 = vadd.f32 %v7312, %v7166
      %v7314 = vadd.f32 %v7313, %v7171
      %v7315 = vadd.f32 %v7314, %v7176
      %v7316 = vadd.f32 %v7315, %v7181
      %v7317 = vadd.f32 %v7316, %v7186
      %v7318 = vadd.f32 %v7317, %v7191
      %v7319 = vadd.f32 %v7318, %v7196
      %v7320 = vadd.f32 %v7319, %v7201
      %v7321 = vadd.f32 %v7320, %v7206
      %v7322 = vadd.f32 %v7321, %v7211
      %v7323 = vadd.f32 %v7322, %v7216
      %v7324 = vadd.f32 %v7323, %v7221
      %v7325 = vadd.f32 %v7324, %v7226
      %v7326 = vrot.slane %v7325, 4
      %v7327 = vadd.f32 %v7325, %v7326
      %v7328 = vrot.slane %v7327, 2
      %v7329 = vadd.f32 %v7327, %v7328
      %v7330 = vrot.slane %v7329, 1
      %v7331 = vadd.f32 %v7329, %v7330
      %s7332 = sld [smem:[#allocation2]]
      %v7333 = vstv %s7332
      %v7334 = vadd.f32 %v7247, %v7333
      %v7335 = vadd.f32 %v7268, %v7333
      %v7336 = vadd.f32 %v7289, %v7333
      %v7337 = vadd.f32 %v7310, %v7333
      %v7338 = vadd.f32 %v7331, %v7333
      %v7339 = vxor.u32 %v7334, 2147483648
      %v7340 = vxor.u32 %v7335, 2147483648
      %v7341 = vxor.u32 %v7336, 2147483648
      %v7342 = vxor.u32 %v7337, 2147483648
      %v7343 = vxor.u32 %v7338, 2147483648
      %v7344 = vmul.f32 %v7339, 1.442695
      %v7345 = vpow.pop %v7344
      %v7346 = vmul.f32 %v7340, 1.442695
      %v7347 = vpow.pop %v7346
      %v7348 = vmul.f32 %v7341, 1.442695
      %v7349 = vpow.pop %v7348
      %v7350 = vmul.f32 %v7342, 1.442695
      %v7351 = vpow.pop %v7350
      %v7352 = vmul.f32 %v7343, 1.442695
      %v7353 = vpow.pop %v7352
      %v7354 = vadd.f32 %v7345, 1.0
      %v7355 = vadd.f32 %v7347, 1.0
      %v7356 = vadd.f32 %v7349, 1.0
      %v7357 = vadd.f32 %v7351, 1.0
      %v7358 = vadd.f32 %v7353, 1.0
      %v7359 = vrcp.pop %v7354
      %v7360 = vmul.f32 1.0, %v7359
      %v7361 = vrcp.pop %v7355
      %v7362 = vmul.f32 1.0, %v7361
      %v7363 = vrcp.pop %v7356
      %v7364 = vmul.f32 1.0, %v7363
      %v7365 = vrcp.pop %v7357
      %v7366 = vmul.f32 1.0, %v7365
      %v7367 = vrcp.pop %v7358
      %v7368 = vmul.f32 1.0, %v7367
      %v7374 = vcombine.low %v7360, %v7362
      %v7375 = vcombine.low %v7364, %v7366
      %v7377 = vunpack.c.l.s4 1966171168
      %v7378 = vunpack.c.0.s8 %v7377
      %v7379 = vlaneseq
      %v7380 = vshrl.u32 %v7379, 7
      %v7381 = vsub.s32 %v7378, %v7380
      %v7382 = vrot.slane %v7374, %v7381
      %v7384 = vunpack.c.l.s4 1966171168
      %v7385 = vunpack.c.0.s8 %v7384
      %v7386 = vlaneseq
      %v7387 = vshrl.u32 %v7386, 7
      %v7388 = vsub.s32 %v7385, %v7387
      %v7389 = vrot.slane %v7375, %v7388
      %v7391 = vunpack.c.l.s4 1966171168
      %v7392 = vunpack.c.0.s8 %v7391
      %v7393 = vlaneseq
      %v7394 = vshrl.u32 %v7393, 7
      %v7395 = vsub.s32 %v7392, %v7394
      %v7396 = vrot.slane %v7368, %v7395
      %v7397 = vcombine.low %v7382, %v7389
      %v7399 = vunpack.c.l.s4 1966171168
      %v7400 = vunpack.c.0.s8 %v7399
      %v7401 = vlaneseq
      %v7402 = vshrl.u32 %v7401, 7
      %v7403 = vsub.s32 %v7400, %v7402
      %v7404 = vrot.slane %v7397, %v7403
      %v7406 = vunpack.c.l.s4 1966171168
      %v7407 = vunpack.c.0.s8 %v7406
      %v7408 = vlaneseq
      %v7409 = vshrl.u32 %v7408, 7
      %v7410 = vsub.s32 %v7407, %v7409
      %v7411 = vrot.slane %v7396, %v7410
      %v7412 = vcombine.low %v7404, %v7411
      %v7414 = vlaneseq
      %vm7415 = vcmp.ge.s32.totalorder %v7414, 0
      %vm7416 = vcmp.lt.s32.totalorder %v7414, 640
      %vm7417 = vmand %vm7415, %vm7416
      %7418 = vst.msk [vmem:[%s279] sm:$0x1f] %vm7417, %v7412
      %s7419 = smul.u32 5, %s19
      %p7420 = scmp.lt.s32.totalorder %s7419, 19
      %s7421 = scalar_select %p7420, %s7419, 19
      %s7422 = scalar_lea.vmem %s7, %s7421
      // Predicated region
      $region49: #{link_predictor.1} parent=47 // pred_check
        %p7423 = pneg %p189
      $region50: #{link_predictor.1} parent=47 // pred_check_branch
        %7425 = sbr.rel (%p7423) target = $region52
      $region51: #{link_predictor.1} parent=47 // pred_region
        %s7426 = smul.u32 5, %s19
      $region52: #{link_predictor.1} parent=47 // pred_fallthru
        _
    $region48: #{link_predictor.1} parent=5 // pred_fallthru
      _
    %p7427 = scmp.le.s32.totalorder 2, %s14
    // Predicated region
    $region53: #{link_predictor.1} parent=5 // pred_check
      %p7428 = pneg %p7427
    $region54: #{link_predictor.1} parent=5 // pred_check_branch
      %7430 = sbr.rel (%p7428) target = $region56
    $region55: #{link_predictor.1} parent=5 // pred_region
      %s7431 = ssub.s32 %s14, 2
      // Predicated region
      $region57: #{link_predictor.1} parent=55 // pred_check
        %p7432 = pneg %p195
      $region58: #{link_predictor.1} parent=55 // pred_check_branch
        %7434 = sbr.rel (%p7432) target = $region60
      $region59: #{link_predictor.1} parent=55 // pred_region
        %s7435 = smul.u32 5, %s20
        %p7436 = scmp.lt.s32.totalorder %s7435, 19
        %s7437 = scalar_select %p7436, %s7435, 19
        %s7438 = scalar_lea.vmem %s7, %s7437
      $region60: #{link_predictor.1} parent=55 // pred_fallthru
        _
    $region56: #{link_predictor.1} parent=5 // pred_fallthru
      _
  $region6: #{link_predictor.1} parent=0 // loop_footer
    %s18 = sadd.s32 1, %s14
  $region7: #{link_predictor.1} parent=0 // loop_footer_branch
    %13 = sbr.rel target = $region3
  $region8: #{link_predictor.1} parent=0 // loop_exit
    _

</llo_original>
